<compile_context>
chip_gen: v7x
topology: tpu7x:2x2x1
jax: 0.10.0
libtpu: 0.0.40
codegen_flags: <defaults>
</compile_context>

<pallas_src>
import jax
import jax.numpy as jnp
from jax.experimental import pallas as pl
from jax.experimental.pallas import tpu as pltpu


# Layer (fan_in, fan_out) sizes, in PyTorch module definition order.
_LAYER_SHAPES = [
    # RNN1.network: Linear(8,8)+Sigmoid, then 4x (Linear+ReLU)
    (8, 8), (8, 4), (4, 4), (4, 4), (4, 4),
    # hidden: Linear(12,12)+ReLU, Linear(12,4)+ReLU, Linear(4,4)+ReLU, Linear(4,4)
    (12, 12), (12, 4), (4, 4), (4, 4),
    # func: Linear(4,4)+ReLU, Linear(4,4)+ReLU, Linear(4,8)+ReLU, Linear(8,32),
    #       Softmax(-1), Linear(32,4)
    (4, 4), (4, 4), (4, 8), (8, 32), (32, 4),
]
_NUM_LAYERS = len(_LAYER_SHAPES)

# Packed-slab geometry (one [40,32] tile per slot):
#   rows 0:fan_in -> W^T ([fan_in, fan_out]); row 32 -> bias (max fan_in is 32,
#   so W occupies rows 0..31 at most and row 32 is always free).
#   Slot 14 holds the fused recurrent weight [w0_s | w5_S] ([4, 20]).
_FUSED_SLOT = _NUM_LAYERS
_NUM_SLOTS = _NUM_LAYERS + 1
_BIAS_ROW = 32
_SLAB_ROWS = 40      # 33 used rows, padded to a multiple of 8 sublanes
_SLAB_LANES = 32     # max fan_out is 32 (was 128 -> ~4x fewer DMA bytes)


# ----------------------------- Pallas kernel --------------------------------
def model_kernel(x_ref, p_ref, out_ref):
    """x_ref: [T, 4]   p_ref: [15, 40, 32] packed params   out_ref: [1, 4]."""

    def W(i):
        fi, fo = _LAYER_SHAPES[i]
        return p_ref[i, 0:fi, 0:fo]

    def B(i):
        _, fo = _LAYER_SHAPES[i]
        return p_ref[i, _BIAS_ROW:_BIAS_ROW + 1, 0:fo]

    def dot(a, b):
        return jnp.dot(a, b, preferred_element_type=jnp.float32)

    T = x_ref.shape[0]

    # ---- hoist every recurrent-loop parameter out of the unrolled loop (load once) ----
    w1, b1 = W(1), B(1)
    w2, b2 = W(2), B(2)
    w3, b3 = W(3), B(3)
    w4, b4 = W(4), B(4)
    w6, b6 = W(6), B(6)
    w7, b7 = W(7), B(7)
    w8, b8 = W(8), B(8)
    w5 = W(5)                                 # [12,12]: rows 0:4=S, 4:8=x, 8:12=s_rnn
    w5_R = w5[8:12, :]
    w_ss = p_ref[_FUSED_SLOT, 0:4, 0:20]      # fused [w0_s | w5_S]  ([4, 20])

    X = x_ref[...]                            # [T, 4]

    # ---- hoist the x-only matmul terms (and their biases) off the serial chain ----
    w0 = W(0)                                 # [8, 8]: rows 0:4=x, 4:8=s
    XW0 = dot(X, w0[0:4, :]) + B(0)           # [T, 8]   x-part (+b0) of RNN1 layer 0
    XW5c = dot(X, w5[4:8, :] + w5_R) + B(5)   # [T, 12]  x@w5_x + x@w5_R + b5 (b5 folded)

    s = jnp.zeros((1, 4), jnp.float32)
    y = jnp.zeros((1, 4), jnp.float32)

    # Recurrence (T is static and small -> full Python unroll for LLO visibility).
    for t in range(T):
        S = s
        xi = X[t:t + 1, :]                    # [1, 4]

        # One fused dot covers both "previous state" contributions:
        #   z[:, 0:8]  = s @ w0_s   (RNN1 layer-0 state part)
        #   z[:, 8:20] = S @ w5_S   (hidden layer-0 state part)
        z = dot(s, w_ss)                      # [1, 20]

        # RNN1.network(cat([xi, s])): Linear(8,8)+Sigmoid, 4x (Linear+ReLU); residual.
        h = jax.nn.sigmoid(XW0[t:t + 1, :] + z[:, 0:8])
        h = jnp.maximum(dot(h, w1) + b1, 0.0)
        h = jnp.maximum(dot(h, w2) + b2, 0.0)
        h = jnp.maximum(dot(h, w3) + b3, 0.0)
        h = jnp.maximum(dot(h, w4) + b4, 0.0)
        y = h + xi                            # RNN output; s_rnn = y (.detach() = identity)

        # hidden(cat([S, xi, y])): (12,12)+ReLU, (12,4)+ReLU, (4,4)+ReLU, (4,4)
        #   XW5c[t] + z[:,8:20] + h@w5_R == x@w5_x + S@w5_S + y@w5_R + b5
        hh = jnp.maximum(XW5c[t:t + 1, :] + z[:, 8:20] + dot(h, w5_R), 0.0)
        hh = jnp.maximum(dot(hh, w6) + b6, 0.0)
        hh = jnp.maximum(dot(hh, w7) + b7, 0.0)
        s = dot(hh, w8) + (b8 + S + y)        # state update: hh + b8 + S + y

    # func(y): (4,4)+ReLU, (4,4)+ReLU, (4,8)+ReLU, (8,32), Softmax(-1), (32,4)
    f = jnp.maximum(dot(y, W(9)) + B(9), 0.0)
    f = jnp.maximum(dot(f, W(10)) + B(10), 0.0)
    f = jnp.maximum(dot(f, W(11)) + B(11), 0.0)
    f = dot(f, W(12)) + B(12)
    f = f - jnp.max(f, axis=-1, keepdims=True)
    e = jnp.exp(f)
    # Exact division kept: pl.reciprocal(approx=True) risks the 1e-5 tolerance
    # and this is a one-off tail op with negligible cost.
    f = e / jnp.sum(e, axis=-1, keepdims=True)
    f = dot(f, W(13)) + B(13)

    out_ref[...] = f


# ------------------------------- wrapper -------------------------------------
def make_params(key):
    """Deterministic PyTorch-style init: U(-1/sqrt(fan_in), 1/sqrt(fan_in))."""
    params = []
    for (fan_in, fan_out) in _LAYER_SHAPES:
        key, kw, kb = jax.random.split(key, 3)
        bound = 1.0 / (fan_in ** 0.5)
        wt = jax.random.uniform(kw, (fan_in, fan_out), jnp.float32, -bound, bound)
        b = jax.random.uniform(kb, (1, fan_out), jnp.float32, -bound, bound)
        params.append(wt)
        params.append(b)
    return params


def pack_params(params):
    """Pack the 14 (W^T, b) pairs + fused [w0_s|w5_S] into one [15, 40, 32] f32 slab."""
    slab = jnp.zeros((_NUM_SLOTS, _SLAB_ROWS, _SLAB_LANES), jnp.float32)
    for i, (fan_in, fan_out) in enumerate(_LAYER_SHAPES):
        wt = params[2 * i]
        b = params[2 * i + 1]
        slab = slab.at[i, 0:fan_in, 0:fan_out].set(wt)
        slab = slab.at[i, _BIAS_ROW, 0:fan_out].set(b[0])
    w0 = params[0]       # [8, 8]
    w5 = params[10]      # [12, 12]
    slab = slab.at[_FUSED_SLOT, 0:4, 0:8].set(w0[4:8, :])    # w0_s
    slab = slab.at[_FUSED_SLOT, 0:4, 8:20].set(w5[0:4, :])   # w5_S
    return slab


def run_model(x_seq, slab):
    T = int(x_seq.shape[0])
    in_loop = 4 * 20 + 8 * 4 + 3 * (4 * 4) + 4 * 12 + 12 * 4 + 4 * 4 + 4 * 4
    hoisted = 4 * 8 + 4 * 12
    tail = sum(fi * fo for fi, fo in _LAYER_SHAPES[9:])
    cost = pl.CostEstimate(
        flops=2 * (T * (in_loop + hoisted) + tail),
        transcendentals=T * 8 + 32,                       # sigmoid per step + softmax tail
        bytes_accessed=int(x_seq.size * 4 + slab.size * 4 + 4 * 4),
    )
    out = pl.pallas_call(
        model_kernel,
        out_shape=jax.ShapeDtypeStruct((1, 4), jnp.float32),
        in_specs=[pl.BlockSpec(memory_space=pltpu.MemorySpace.VMEM),
                  pl.BlockSpec(memory_space=pltpu.MemorySpace.VMEM)],
        out_specs=pl.BlockSpec(memory_space=pltpu.MemorySpace.VMEM),
        cost_estimate=cost,
    )(x_seq, slab)
    return out.reshape(-1)  # matches PyTorch .flatten() -> shape (4,)


# -------------------------- pure-JAX reference --------------------------------
def reference(x_seq, params):
    def lin(v, i):
        return v @ params[2 * i] + params[2 * i + 1]

    s = jnp.zeros((1, 4), jnp.float32)
    y = jnp.zeros((1, 4), jnp.float32)
    for t in range(x_seq.shape[0]):
        xi = x_seq[t][None, :]
        S = s
        rin = jnp.concatenate([xi, s], axis=-1)
        h = jax.nn.sigmoid(lin(rin, 0))
        h = jax.nn.relu(lin(h, 1))
        h = jax.nn.relu(lin(h, 2))
        h = jax.nn.relu(lin(h, 3))
        h = jax.nn.relu(lin(h, 4))
        y = h + xi
        s_rnn = y
        hin = jnp.concatenate([S, xi, s_rnn], axis=-1)
        hh = jax.nn.relu(lin(hin, 5))
        hh = jax.nn.relu(lin(hh, 6))
        hh = jax.nn.relu(lin(hh, 7))
        hh = lin(hh, 8)
        s = hh + S + y
    f = jax.nn.relu(lin(y, 9))
    f = jax.nn.relu(lin(f, 10))
    f = jax.nn.relu(lin(f, 11))
    f = jax.nn.softmax(lin(f, 12), axis=-1)
    f = lin(f, 13)
    return f.reshape(-1)


if __name__ == "__main__":
    key = jax.random.PRNGKey(0)
    key, kx = jax.random.split(key)

    T = 8                                    # sequence length (length of the PyTorch list)
    x_seq = jax.random.normal(kx, (T, 4), jnp.float32)
    params = make_params(key)
    slab = pack_params(params)

    out = jax.block_until_ready(run_model(x_seq, slab))
    ref = reference(x_seq, params)

    assert out.shape == (4,)
    assert jnp.allclose(out, ref, atol=1e-5, rtol=1e-5), (out, ref)

    print("KERNEL_OK")
</pallas_src>

<mosaic_0001>
module attributes {stable_mosaic.version = 11 : i64} {
  func.func @model_kernel(%arg0: memref<8x4xf32, #tpu.memory_space<vmem>>, %arg1: memref<15x40x32xf32, #tpu.memory_space<vmem>>, %arg2: memref<1x4xf32, #tpu.memory_space<vmem>>) attributes {dimension_semantics = [], scalar_prefetch = 0 : i64, scratch_operands = 0 : i64, tpu.core_type = #tpu.core_type<tc>} {
    %c1 = arith.constant 1 : index
    %c0 = arith.constant 0 : index
    %c0_0 = arith.constant 0 : index
    %0 = vector.load %arg1[%c1, %c0, %c0_0] : memref<15x40x32xf32, #tpu.memory_space<vmem>>, vector<1x8x4xf32>
    %1 = vector.shape_cast %0 : vector<1x8x4xf32> to vector<8x4xf32>
    %c1_1 = arith.constant 1 : index
    %c32 = arith.constant 32 : index
    %c0_2 = arith.constant 0 : index
    %2 = vector.load %arg1[%c1_1, %c32, %c0_2] : memref<15x40x32xf32, #tpu.memory_space<vmem>>, vector<1x1x4xf32>
    %3 = vector.shape_cast %2 : vector<1x1x4xf32> to vector<1x4xf32>
    %c2 = arith.constant 2 : index
    %c0_3 = arith.constant 0 : index
    %c0_4 = arith.constant 0 : index
    %4 = vector.load %arg1[%c2, %c0_3, %c0_4] : memref<15x40x32xf32, #tpu.memory_space<vmem>>, vector<1x4x4xf32>
    %5 = vector.shape_cast %4 : vector<1x4x4xf32> to vector<4x4xf32>
    %c2_5 = arith.constant 2 : index
    %c32_6 = arith.constant 32 : index
    %c0_7 = arith.constant 0 : index
    %6 = vector.load %arg1[%c2_5, %c32_6, %c0_7] : memref<15x40x32xf32, #tpu.memory_space<vmem>>, vector<1x1x4xf32>
    %7 = vector.shape_cast %6 : vector<1x1x4xf32> to vector<1x4xf32>
    %c3 = arith.constant 3 : index
    %c0_8 = arith.constant 0 : index
    %c0_9 = arith.constant 0 : index
    %8 = vector.load %arg1[%c3, %c0_8, %c0_9] : memref<15x40x32xf32, #tpu.memory_space<vmem>>, vector<1x4x4xf32>
    %9 = vector.shape_cast %8 : vector<1x4x4xf32> to vector<4x4xf32>
    %c3_10 = arith.constant 3 : index
    %c32_11 = arith.constant 32 : index
    %c0_12 = arith.constant 0 : index
    %10 = vector.load %arg1[%c3_10, %c32_11, %c0_12] : memref<15x40x32xf32, #tpu.memory_space<vmem>>, vector<1x1x4xf32>
    %11 = vector.shape_cast %10 : vector<1x1x4xf32> to vector<1x4xf32>
    %c4 = arith.constant 4 : index
    %c0_13 = arith.constant 0 : index
    %c0_14 = arith.constant 0 : index
    %12 = vector.load %arg1[%c4, %c0_13, %c0_14] : memref<15x40x32xf32, #tpu.memory_space<vmem>>, vector<1x4x4xf32>
    %13 = vector.shape_cast %12 : vector<1x4x4xf32> to vector<4x4xf32>
    %c4_15 = arith.constant 4 : index
    %c32_16 = arith.constant 32 : index
    %c0_17 = arith.constant 0 : index
    %14 = vector.load %arg1[%c4_15, %c32_16, %c0_17] : memref<15x40x32xf32, #tpu.memory_space<vmem>>, vector<1x1x4xf32>
    %15 = vector.shape_cast %14 : vector<1x1x4xf32> to vector<1x4xf32>
    %c6 = arith.constant 6 : index
    %c0_18 = arith.constant 0 : index
    %c0_19 = arith.constant 0 : index
    %16 = vector.load %arg1[%c6, %c0_18, %c0_19] : memref<15x40x32xf32, #tpu.memory_space<vmem>>, vector<1x12x4xf32>
    %17 = vector.shape_cast %16 : vector<1x12x4xf32> to vector<12x4xf32>
    %c6_20 = arith.constant 6 : index
    %c32_21 = arith.constant 32 : index
    %c0_22 = arith.constant 0 : index
    %18 = vector.load %arg1[%c6_20, %c32_21, %c0_22] : memref<15x40x32xf32, #tpu.memory_space<vmem>>, vector<1x1x4xf32>
    %19 = vector.shape_cast %18 : vector<1x1x4xf32> to vector<1x4xf32>
    %c7 = arith.constant 7 : index
    %c0_23 = arith.constant 0 : index
    %c0_24 = arith.constant 0 : index
    %20 = vector.load %arg1[%c7, %c0_23, %c0_24] : memref<15x40x32xf32, #tpu.memory_space<vmem>>, vector<1x4x4xf32>
    %21 = vector.shape_cast %20 : vector<1x4x4xf32> to vector<4x4xf32>
    %c7_25 = arith.constant 7 : index
    %c32_26 = arith.constant 32 : index
    %c0_27 = arith.constant 0 : index
    %22 = vector.load %arg1[%c7_25, %c32_26, %c0_27] : memref<15x40x32xf32, #tpu.memory_space<vmem>>, vector<1x1x4xf32>
    %23 = vector.shape_cast %22 : vector<1x1x4xf32> to vector<1x4xf32>
    %c8 = arith.constant 8 : index
    %c0_28 = arith.constant 0 : index
    %c0_29 = arith.constant 0 : index
    %24 = vector.load %arg1[%c8, %c0_28, %c0_29] : memref<15x40x32xf32, #tpu.memory_space<vmem>>, vector<1x4x4xf32>
    %25 = vector.shape_cast %24 : vector<1x4x4xf32> to vector<4x4xf32>
    %c8_30 = arith.constant 8 : index
    %c32_31 = arith.constant 32 : index
    %c0_32 = arith.constant 0 : index
    %26 = vector.load %arg1[%c8_30, %c32_31, %c0_32] : memref<15x40x32xf32, #tpu.memory_space<vmem>>, vector<1x1x4xf32>
    %27 = vector.shape_cast %26 : vector<1x1x4xf32> to vector<1x4xf32>
    %c5 = arith.constant 5 : index
    %c0_33 = arith.constant 0 : index
    %c0_34 = arith.constant 0 : index
    %28 = vector.load %arg1[%c5, %c0_33, %c0_34] : memref<15x40x32xf32, #tpu.memory_space<vmem>>, vector<1x12x12xf32>
    %29 = vector.shape_cast %28 : vector<1x12x12xf32> to vector<12x12xf32>
    %30 = vector.extract_strided_slice %29 {offsets = [8, 0], sizes = [4, 12], strides = [1, 1]} : vector<12x12xf32> to vector<4x12xf32>
    %c14 = arith.constant 14 : index
    %c0_35 = arith.constant 0 : index
    %c0_36 = arith.constant 0 : index
    %31 = vector.load %arg1[%c14, %c0_35, %c0_36] : memref<15x40x32xf32, #tpu.memory_space<vmem>>, vector<1x4x20xf32>
    %32 = vector.shape_cast %31 : vector<1x4x20xf32> to vector<4x20xf32>
    %c0_37 = arith.constant 0 : index
    %c0_38 = arith.constant 0 : index
    %33 = vector.load %arg0[%c0_37, %c0_38] : memref<8x4xf32, #tpu.memory_space<vmem>>, vector<8x4xf32>
    %c0_39 = arith.constant 0 : index
    %c0_40 = arith.constant 0 : index
    %c0_41 = arith.constant 0 : index
    %34 = vector.load %arg1[%c0_39, %c0_40, %c0_41] : memref<15x40x32xf32, #tpu.memory_space<vmem>>, vector<1x8x8xf32>
    %35 = vector.shape_cast %34 : vector<1x8x8xf32> to vector<8x8xf32>
    %36 = vector.extract_strided_slice %35 {offsets = [0, 0], sizes = [4, 8], strides = [1, 1]} : vector<8x8xf32> to vector<4x8xf32>
    %cst = arith.constant dense<0.000000e+00> : vector<8x8xf32>
    %37 = tpu.matmul %33, %36, %cst {dimension_numbers = #tpu.dot_dimension_numbers<[1], [0], [0], [1], [0, 0, 1, 1], [], []>} : vector<8x4xf32>, vector<4x8xf32>, vector<8x8xf32> -> vector<8x8xf32>
    %c0_42 = arith.constant 0 : index
    %c32_43 = arith.constant 32 : index
    %c0_44 = arith.constant 0 : index
    %38 = vector.load %arg1[%c0_42, %c32_43, %c0_44] : memref<15x40x32xf32, #tpu.memory_space<vmem>>, vector<1x1x8xf32>
    %39 = vector.shape_cast %38 : vector<1x1x8xf32> to vector<1x8xf32>
    %40 = vector.broadcast %39 : vector<1x8xf32> to vector<8x8xf32>
    %41 = arith.addf %37, %40 : vector<8x8xf32>
    %42 = vector.extract_strided_slice %29 {offsets = [4, 0], sizes = [4, 12], strides = [1, 1]} : vector<12x12xf32> to vector<4x12xf32>
    %43 = arith.addf %42, %30 : vector<4x12xf32>
    %cst_45 = arith.constant dense<0.000000e+00> : vector<8x12xf32>
    %44 = tpu.matmul %33, %43, %cst_45 {dimension_numbers = #tpu.dot_dimension_numbers<[1], [0], [0], [1], [0, 0, 1, 1], [], []>} : vector<8x4xf32>, vector<4x12xf32>, vector<8x12xf32> -> vector<8x12xf32>
    %c5_46 = arith.constant 5 : index
    %c32_47 = arith.constant 32 : index
    %c0_48 = arith.constant 0 : index
    %45 = vector.load %arg1[%c5_46, %c32_47, %c0_48] : memref<15x40x32xf32, #tpu.memory_space<vmem>>, vector<1x1x12xf32>
    %46 = vector.shape_cast %45 : vector<1x1x12xf32> to vector<1x12xf32>
    %47 = vector.broadcast %46 : vector<1x12xf32> to vector<8x12xf32>
    %48 = arith.addf %44, %47 : vector<8x12xf32>
    %cst_49 = arith.constant 0.000000e+00 : f32
    %49 = vector.broadcast %cst_49 : f32 to vector<1x4xf32>
    %50 = vector.extract_strided_slice %33 {offsets = [0, 0], sizes = [1, 4], strides = [1, 1]} : vector<8x4xf32> to vector<1x4xf32>
    %cst_50 = arith.constant dense<0.000000e+00> : vector<1x20xf32>
    %51 = tpu.matmul %49, %32, %cst_50 {dimension_numbers = #tpu.dot_dimension_numbers<[1], [0], [0], [1], [0, 0, 1, 1], [], []>} : vector<1x4xf32>, vector<4x20xf32>, vector<1x20xf32> -> vector<1x20xf32>
    %52 = vector.extract_strided_slice %41 {offsets = [0, 0], sizes = [1, 8], strides = [1, 1]} : vector<8x8xf32> to vector<1x8xf32>
    %53 = vector.extract_strided_slice %51 {offsets = [0, 0], sizes = [1, 8], strides = [1, 1]} : vector<1x20xf32> to vector<1x8xf32>
    %54 = arith.addf %52, %53 : vector<1x8xf32>
    %55 = arith.negf %54 : vector<1x8xf32>
    %56 = math.exp %55 : vector<1x8xf32>
    %cst_51 = arith.constant 1.000000e+00 : f32
    %57 = vector.broadcast %cst_51 : f32 to vector<1x8xf32>
    %58 = arith.addf %57, %56 : vector<1x8xf32>
    %59 = arith.divf %57, %58 : vector<1x8xf32>
    %cst_52 = arith.constant dense<0.000000e+00> : vector<1x4xf32>
    %60 = tpu.matmul %59, %1, %cst_52 {dimension_numbers = #tpu.dot_dimension_numbers<[1], [0], [0], [1], [0, 0, 1, 1], [], []>} : vector<1x8xf32>, vector<8x4xf32>, vector<1x4xf32> -> vector<1x4xf32>
    %61 = arith.addf %60, %3 : vector<1x4xf32>
    %cst_53 = arith.constant 0.000000e+00 : f32
    %62 = vector.broadcast %cst_53 : f32 to vector<1x4xf32>
    %63 = arith.maximumf %61, %62 : vector<1x4xf32>
    %cst_54 = arith.constant dense<0.000000e+00> : vector<1x4xf32>
    %64 = tpu.matmul %63, %5, %cst_54 {dimension_numbers = #tpu.dot_dimension_numbers<[1], [0], [0], [1], [0, 0, 1, 1], [], []>} : vector<1x4xf32>, vector<4x4xf32>, vector<1x4xf32> -> vector<1x4xf32>
    %65 = arith.addf %64, %7 : vector<1x4xf32>
    %cst_55 = arith.constant 0.000000e+00 : f32
    %66 = vector.broadcast %cst_55 : f32 to vector<1x4xf32>
    %67 = arith.maximumf %65, %66 : vector<1x4xf32>
    %cst_56 = arith.constant dense<0.000000e+00> : vector<1x4xf32>
    %68 = tpu.matmul %67, %9, %cst_56 {dimension_numbers = #tpu.dot_dimension_numbers<[1], [0], [0], [1], [0, 0, 1, 1], [], []>} : vector<1x4xf32>, vector<4x4xf32>, vector<1x4xf32> -> vector<1x4xf32>
    %69 = arith.addf %68, %11 : vector<1x4xf32>
    %cst_57 = arith.constant 0.000000e+00 : f32
    %70 = vector.broadcast %cst_57 : f32 to vector<1x4xf32>
    %71 = arith.maximumf %69, %70 : vector<1x4xf32>
    %cst_58 = arith.constant dense<0.000000e+00> : vector<1x4xf32>
    %72 = tpu.matmul %71, %13, %cst_58 {dimension_numbers = #tpu.dot_dimension_numbers<[1], [0], [0], [1], [0, 0, 1, 1], [], []>} : vector<1x4xf32>, vector<4x4xf32>, vector<1x4xf32> -> vector<1x4xf32>
    %73 = arith.addf %72, %15 : vector<1x4xf32>
    %cst_59 = arith.constant 0.000000e+00 : f32
    %74 = vector.broadcast %cst_59 : f32 to vector<1x4xf32>
    %75 = arith.maximumf %73, %74 : vector<1x4xf32>
    %76 = arith.addf %75, %50 : vector<1x4xf32>
    %77 = vector.extract_strided_slice %48 {offsets = [0, 0], sizes = [1, 12], strides = [1, 1]} : vector<8x12xf32> to vector<1x12xf32>
    %78 = vector.extract_strided_slice %51 {offsets = [0, 8], sizes = [1, 12], strides = [1, 1]} : vector<1x20xf32> to vector<1x12xf32>
    %79 = arith.addf %77, %78 : vector<1x12xf32>
    %cst_60 = arith.constant dense<0.000000e+00> : vector<1x12xf32>
    %80 = tpu.matmul %75, %30, %cst_60 {dimension_numbers = #tpu.dot_dimension_numbers<[1], [0], [0], [1], [0, 0, 1, 1], [], []>} : vector<1x4xf32>, vector<4x12xf32>, vector<1x12xf32> -> vector<1x12xf32>
    %81 = arith.addf %79, %80 : vector<1x12xf32>
    %cst_61 = arith.constant 0.000000e+00 : f32
    %82 = vector.broadcast %cst_61 : f32 to vector<1x12xf32>
    %83 = arith.maximumf %81, %82 : vector<1x12xf32>
    %cst_62 = arith.constant dense<0.000000e+00> : vector<1x4xf32>
    %84 = tpu.matmul %83, %17, %cst_62 {dimension_numbers = #tpu.dot_dimension_numbers<[1], [0], [0], [1], [0, 0, 1, 1], [], []>} : vector<1x12xf32>, vector<12x4xf32>, vector<1x4xf32> -> vector<1x4xf32>
    %85 = arith.addf %84, %19 : vector<1x4xf32>
    %cst_63 = arith.constant 0.000000e+00 : f32
    %86 = vector.broadcast %cst_63 : f32 to vector<1x4xf32>
    %87 = arith.maximumf %85, %86 : vector<1x4xf32>
    %cst_64 = arith.constant dense<0.000000e+00> : vector<1x4xf32>
    %88 = tpu.matmul %87, %21, %cst_64 {dimension_numbers = #tpu.dot_dimension_numbers<[1], [0], [0], [1], [0, 0, 1, 1], [], []>} : vector<1x4xf32>, vector<4x4xf32>, vector<1x4xf32> -> vector<1x4xf32>
    %89 = arith.addf %88, %23 : vector<1x4xf32>
    %cst_65 = arith.constant 0.000000e+00 : f32
    %90 = vector.broadcast %cst_65 : f32 to vector<1x4xf32>
    %91 = arith.maximumf %89, %90 : vector<1x4xf32>
    %cst_66 = arith.constant dense<0.000000e+00> : vector<1x4xf32>
    %92 = tpu.matmul %91, %25, %cst_66 {dimension_numbers = #tpu.dot_dimension_numbers<[1], [0], [0], [1], [0, 0, 1, 1], [], []>} : vector<1x4xf32>, vector<4x4xf32>, vector<1x4xf32> -> vector<1x4xf32>
    %93 = arith.addf %27, %49 : vector<1x4xf32>
    %94 = arith.addf %93, %76 : vector<1x4xf32>
    %95 = arith.addf %92, %94 : vector<1x4xf32>
    %96 = vector.extract_strided_slice %33 {offsets = [1, 0], sizes = [1, 4], strides = [1, 1]} : vector<8x4xf32> to vector<1x4xf32>
    %cst_67 = arith.constant dense<0.000000e+00> : vector<1x20xf32>
    %97 = tpu.matmul %95, %32, %cst_67 {dimension_numbers = #tpu.dot_dimension_numbers<[1], [0], [0], [1], [0, 0, 1, 1], [], []>} : vector<1x4xf32>, vector<4x20xf32>, vector<1x20xf32> -> vector<1x20xf32>
    %98 = vector.extract_strided_slice %41 {offsets = [1, 0], sizes = [1, 8], strides = [1, 1]} : vector<8x8xf32> to vector<1x8xf32>
    %99 = vector.extract_strided_slice %97 {offsets = [0, 0], sizes = [1, 8], strides = [1, 1]} : vector<1x20xf32> to vector<1x8xf32>
    %100 = arith.addf %98, %99 : vector<1x8xf32>
    %101 = arith.negf %100 : vector<1x8xf32>
    %102 = math.exp %101 : vector<1x8xf32>
    %cst_68 = arith.constant 1.000000e+00 : f32
    %103 = vector.broadcast %cst_68 : f32 to vector<1x8xf32>
    %104 = arith.addf %103, %102 : vector<1x8xf32>
    %105 = arith.divf %103, %104 : vector<1x8xf32>
    %cst_69 = arith.constant dense<0.000000e+00> : vector<1x4xf32>
    %106 = tpu.matmul %105, %1, %cst_69 {dimension_numbers = #tpu.dot_dimension_numbers<[1], [0], [0], [1], [0, 0, 1, 1], [], []>} : vector<1x8xf32>, vector<8x4xf32>, vector<1x4xf32> -> vector<1x4xf32>
    %107 = arith.addf %106, %3 : vector<1x4xf32>
    %cst_70 = arith.constant 0.000000e+00 : f32
    %108 = vector.broadcast %cst_70 : f32 to vector<1x4xf32>
    %109 = arith.maximumf %107, %108 : vector<1x4xf32>
    %cst_71 = arith.constant dense<0.000000e+00> : vector<1x4xf32>
    %110 = tpu.matmul %109, %5, %cst_71 {dimension_numbers = #tpu.dot_dimension_numbers<[1], [0], [0], [1], [0, 0, 1, 1], [], []>} : vector<1x4xf32>, vector<4x4xf32>, vector<1x4xf32> -> vector<1x4xf32>
    %111 = arith.addf %110, %7 : vector<1x4xf32>
    %cst_72 = arith.constant 0.000000e+00 : f32
    %112 = vector.broadcast %cst_72 : f32 to vector<1x4xf32>
    %113 = arith.maximumf %111, %112 : vector<1x4xf32>
    %cst_73 = arith.constant dense<0.000000e+00> : vector<1x4xf32>
    %114 = tpu.matmul %113, %9, %cst_73 {dimension_numbers = #tpu.dot_dimension_numbers<[1], [0], [0], [1], [0, 0, 1, 1], [], []>} : vector<1x4xf32>, vector<4x4xf32>, vector<1x4xf32> -> vector<1x4xf32>
    %115 = arith.addf %114, %11 : vector<1x4xf32>
    %cst_74 = arith.constant 0.000000e+00 : f32
    %116 = vector.broadcast %cst_74 : f32 to vector<1x4xf32>
    %117 = arith.maximumf %115, %116 : vector<1x4xf32>
    %cst_75 = arith.constant dense<0.000000e+00> : vector<1x4xf32>
    %118 = tpu.matmul %117, %13, %cst_75 {dimension_numbers = #tpu.dot_dimension_numbers<[1], [0], [0], [1], [0, 0, 1, 1], [], []>} : vector<1x4xf32>, vector<4x4xf32>, vector<1x4xf32> -> vector<1x4xf32>
    %119 = arith.addf %118, %15 : vector<1x4xf32>
    %cst_76 = arith.constant 0.000000e+00 : f32
    %120 = vector.broadcast %cst_76 : f32 to vector<1x4xf32>
    %121 = arith.maximumf %119, %120 : vector<1x4xf32>
    %122 = arith.addf %121, %96 : vector<1x4xf32>
    %123 = vector.extract_strided_slice %48 {offsets = [1, 0], sizes = [1, 12], strides = [1, 1]} : vector<8x12xf32> to vector<1x12xf32>
    %124 = vector.extract_strided_slice %97 {offsets = [0, 8], sizes = [1, 12], strides = [1, 1]} : vector<1x20xf32> to vector<1x12xf32>
    %125 = arith.addf %123, %124 : vector<1x12xf32>
    %cst_77 = arith.constant dense<0.000000e+00> : vector<1x12xf32>
    %126 = tpu.matmul %121, %30, %cst_77 {dimension_numbers = #tpu.dot_dimension_numbers<[1], [0], [0], [1], [0, 0, 1, 1], [], []>} : vector<1x4xf32>, vector<4x12xf32>, vector<1x12xf32> -> vector<1x12xf32>
    %127 = arith.addf %125, %126 : vector<1x12xf32>
    %cst_78 = arith.constant 0.000000e+00 : f32
    %128 = vector.broadcast %cst_78 : f32 to vector<1x12xf32>
    %129 = arith.maximumf %127, %128 : vector<1x12xf32>
    %cst_79 = arith.constant dense<0.000000e+00> : vector<1x4xf32>
    %130 = tpu.matmul %129, %17, %cst_79 {dimension_numbers = #tpu.dot_dimension_numbers<[1], [0], [0], [1], [0, 0, 1, 1], [], []>} : vector<1x12xf32>, vector<12x4xf32>, vector<1x4xf32> -> vector<1x4xf32>
    %131 = arith.addf %130, %19 : vector<1x4xf32>
    %cst_80 = arith.constant 0.000000e+00 : f32
    %132 = vector.broadcast %cst_80 : f32 to vector<1x4xf32>
    %133 = arith.maximumf %131, %132 : vector<1x4xf32>
    %cst_81 = arith.constant dense<0.000000e+00> : vector<1x4xf32>
    %134 = tpu.matmul %133, %21, %cst_81 {dimension_numbers = #tpu.dot_dimension_numbers<[1], [0], [0], [1], [0, 0, 1, 1], [], []>} : vector<1x4xf32>, vector<4x4xf32>, vector<1x4xf32> -> vector<1x4xf32>
    %135 = arith.addf %134, %23 : vector<1x4xf32>
    %cst_82 = arith.constant 0.000000e+00 : f32
    %136 = vector.broadcast %cst_82 : f32 to vector<1x4xf32>
    %137 = arith.maximumf %135, %136 : vector<1x4xf32>
    %cst_83 = arith.constant dense<0.000000e+00> : vector<1x4xf32>
    %138 = tpu.matmul %137, %25, %cst_83 {dimension_numbers = #tpu.dot_dimension_numbers<[1], [0], [0], [1], [0, 0, 1, 1], [], []>} : vector<1x4xf32>, vector<4x4xf32>, vector<1x4xf32> -> vector<1x4xf32>
    %139 = arith.addf %27, %95 : vector<1x4xf32>
    %140 = arith.addf %139, %122 : vector<1x4xf32>
    %141 = arith.addf %138, %140 : vector<1x4xf32>
    %142 = vector.extract_strided_slice %33 {offsets = [2, 0], sizes = [1, 4], strides = [1, 1]} : vector<8x4xf32> to vector<1x4xf32>
    %cst_84 = arith.constant dense<0.000000e+00> : vector<1x20xf32>
    %143 = tpu.matmul %141, %32, %cst_84 {dimension_numbers = #tpu.dot_dimension_numbers<[1], [0], [0], [1], [0, 0, 1, 1], [], []>} : vector<1x4xf32>, vector<4x20xf32>, vector<1x20xf32> -> vector<1x20xf32>
    %144 = vector.extract_strided_slice %41 {offsets = [2, 0], sizes = [1, 8], strides = [1, 1]} : vector<8x8xf32> to vector<1x8xf32>
    %145 = vector.extract_strided_slice %143 {offsets = [0, 0], sizes = [1, 8], strides = [1, 1]} : vector<1x20xf32> to vector<1x8xf32>
    %146 = arith.addf %144, %145 : vector<1x8xf32>
    %147 = arith.negf %146 : vector<1x8xf32>
    %148 = math.exp %147 : vector<1x8xf32>
    %cst_85 = arith.constant 1.000000e+00 : f32
    %149 = vector.broadcast %cst_85 : f32 to vector<1x8xf32>
    %150 = arith.addf %149, %148 : vector<1x8xf32>
    %151 = arith.divf %149, %150 : vector<1x8xf32>
    %cst_86 = arith.constant dense<0.000000e+00> : vector<1x4xf32>
    %152 = tpu.matmul %151, %1, %cst_86 {dimension_numbers = #tpu.dot_dimension_numbers<[1], [0], [0], [1], [0, 0, 1, 1], [], []>} : vector<1x8xf32>, vector<8x4xf32>, vector<1x4xf32> -> vector<1x4xf32>
    %153 = arith.addf %152, %3 : vector<1x4xf32>
    %cst_87 = arith.constant 0.000000e+00 : f32
    %154 = vector.broadcast %cst_87 : f32 to vector<1x4xf32>
    %155 = arith.maximumf %153, %154 : vector<1x4xf32>
    %cst_88 = arith.constant dense<0.000000e+00> : vector<1x4xf32>
    %156 = tpu.matmul %155, %5, %cst_88 {dimension_numbers = #tpu.dot_dimension_numbers<[1], [0], [0], [1], [0, 0, 1, 1], [], []>} : vector<1x4xf32>, vector<4x4xf32>, vector<1x4xf32> -> vector<1x4xf32>
    %157 = arith.addf %156, %7 : vector<1x4xf32>
    %cst_89 = arith.constant 0.000000e+00 : f32
    %158 = vector.broadcast %cst_89 : f32 to vector<1x4xf32>
    %159 = arith.maximumf %157, %158 : vector<1x4xf32>
    %cst_90 = arith.constant dense<0.000000e+00> : vector<1x4xf32>
    %160 = tpu.matmul %159, %9, %cst_90 {dimension_numbers = #tpu.dot_dimension_numbers<[1], [0], [0], [1], [0, 0, 1, 1], [], []>} : vector<1x4xf32>, vector<4x4xf32>, vector<1x4xf32> -> vector<1x4xf32>
    %161 = arith.addf %160, %11 : vector<1x4xf32>
    %cst_91 = arith.constant 0.000000e+00 : f32
    %162 = vector.broadcast %cst_91 : f32 to vector<1x4xf32>
    %163 = arith.maximumf %161, %162 : vector<1x4xf32>
    %cst_92 = arith.constant dense<0.000000e+00> : vector<1x4xf32>
    %164 = tpu.matmul %163, %13, %cst_92 {dimension_numbers = #tpu.dot_dimension_numbers<[1], [0], [0], [1], [0, 0, 1, 1], [], []>} : vector<1x4xf32>, vector<4x4xf32>, vector<1x4xf32> -> vector<1x4xf32>
    %165 = arith.addf %164, %15 : vector<1x4xf32>
    %cst_93 = arith.constant 0.000000e+00 : f32
    %166 = vector.broadcast %cst_93 : f32 to vector<1x4xf32>
    %167 = arith.maximumf %165, %166 : vector<1x4xf32>
    %168 = arith.addf %167, %142 : vector<1x4xf32>
    %169 = vector.extract_strided_slice %48 {offsets = [2, 0], sizes = [1, 12], strides = [1, 1]} : vector<8x12xf32> to vector<1x12xf32>
    %170 = vector.extract_strided_slice %143 {offsets = [0, 8], sizes = [1, 12], strides = [1, 1]} : vector<1x20xf32> to vector<1x12xf32>
    %171 = arith.addf %169, %170 : vector<1x12xf32>
    %cst_94 = arith.constant dense<0.000000e+00> : vector<1x12xf32>
    %172 = tpu.matmul %167, %30, %cst_94 {dimension_numbers = #tpu.dot_dimension_numbers<[1], [0], [0], [1], [0, 0, 1, 1], [], []>} : vector<1x4xf32>, vector<4x12xf32>, vector<1x12xf32> -> vector<1x12xf32>
    %173 = arith.addf %171, %172 : vector<1x12xf32>
    %cst_95 = arith.constant 0.000000e+00 : f32
    %174 = vector.broadcast %cst_95 : f32 to vector<1x12xf32>
    %175 = arith.maximumf %173, %174 : vector<1x12xf32>
    %cst_96 = arith.constant dense<0.000000e+00> : vector<1x4xf32>
    %176 = tpu.matmul %175, %17, %cst_96 {dimension_numbers = #tpu.dot_dimension_numbers<[1], [0], [0], [1], [0, 0, 1, 1], [], []>} : vector<1x12xf32>, vector<12x4xf32>, vector<1x4xf32> -> vector<1x4xf32>
    %177 = arith.addf %176, %19 : vector<1x4xf32>
    %cst_97 = arith.constant 0.000000e+00 : f32
    %178 = vector.broadcast %cst_97 : f32 to vector<1x4xf32>
    %179 = arith.maximumf %177, %178 : vector<1x4xf32>
    %cst_98 = arith.constant dense<0.000000e+00> : vector<1x4xf32>
    %180 = tpu.matmul %179, %21, %cst_98 {dimension_numbers = #tpu.dot_dimension_numbers<[1], [0], [0], [1], [0, 0, 1, 1], [], []>} : vector<1x4xf32>, vector<4x4xf32>, vector<1x4xf32> -> vector<1x4xf32>
    %181 = arith.addf %180, %23 : vector<1x4xf32>
    %cst_99 = arith.constant 0.000000e+00 : f32
    %182 = vector.broadcast %cst_99 : f32 to vector<1x4xf32>
    %183 = arith.maximumf %181, %182 : vector<1x4xf32>
    %cst_100 = arith.constant dense<0.000000e+00> : vector<1x4xf32>
    %184 = tpu.matmul %183, %25, %cst_100 {dimension_numbers = #tpu.dot_dimension_numbers<[1], [0], [0], [1], [0, 0, 1, 1], [], []>} : vector<1x4xf32>, vector<4x4xf32>, vector<1x4xf32> -> vector<1x4xf32>
    %185 = arith.addf %27, %141 : vector<1x4xf32>
    %186 = arith.addf %185, %168 : vector<1x4xf32>
    %187 = arith.addf %184, %186 : vector<1x4xf32>
    %188 = vector.extract_strided_slice %33 {offsets = [3, 0], sizes = [1, 4], strides = [1, 1]} : vector<8x4xf32> to vector<1x4xf32>
    %cst_101 = arith.constant dense<0.000000e+00> : vector<1x20xf32>
    %189 = tpu.matmul %187, %32, %cst_101 {dimension_numbers = #tpu.dot_dimension_numbers<[1], [0], [0], [1], [0, 0, 1, 1], [], []>} : vector<1x4xf32>, vector<4x20xf32>, vector<1x20xf32> -> vector<1x20xf32>
    %190 = vector.extract_strided_slice %41 {offsets = [3, 0], sizes = [1, 8], strides = [1, 1]} : vector<8x8xf32> to vector<1x8xf32>
    %191 = vector.extract_strided_slice %189 {offsets = [0, 0], sizes = [1, 8], strides = [1, 1]} : vector<1x20xf32> to vector<1x8xf32>
    %192 = arith.addf %190, %191 : vector<1x8xf32>
    %193 = arith.negf %192 : vector<1x8xf32>
    %194 = math.exp %193 : vector<1x8xf32>
    %cst_102 = arith.constant 1.000000e+00 : f32
    %195 = vector.broadcast %cst_102 : f32 to vector<1x8xf32>
    %196 = arith.addf %195, %194 : vector<1x8xf32>
    %197 = arith.divf %195, %196 : vector<1x8xf32>
    %cst_103 = arith.constant dense<0.000000e+00> : vector<1x4xf32>
    %198 = tpu.matmul %197, %1, %cst_103 {dimension_numbers = #tpu.dot_dimension_numbers<[1], [0], [0], [1], [0, 0, 1, 1], [], []>} : vector<1x8xf32>, vector<8x4xf32>, vector<1x4xf32> -> vector<1x4xf32>
    %199 = arith.addf %198, %3 : vector<1x4xf32>
    %cst_104 = arith.constant 0.000000e+00 : f32
    %200 = vector.broadcast %cst_104 : f32 to vector<1x4xf32>
    %201 = arith.maximumf %199, %200 : vector<1x4xf32>
    %cst_105 = arith.constant dense<0.000000e+00> : vector<1x4xf32>
    %202 = tpu.matmul %201, %5, %cst_105 {dimension_numbers = #tpu.dot_dimension_numbers<[1], [0], [0], [1], [0, 0, 1, 1], [], []>} : vector<1x4xf32>, vector<4x4xf32>, vector<1x4xf32> -> vector<1x4xf32>
    %203 = arith.addf %202, %7 : vector<1x4xf32>
    %cst_106 = arith.constant 0.000000e+00 : f32
    %204 = vector.broadcast %cst_106 : f32 to vector<1x4xf32>
    %205 = arith.maximumf %203, %204 : vector<1x4xf32>
    %cst_107 = arith.constant dense<0.000000e+00> : vector<1x4xf32>
    %206 = tpu.matmul %205, %9, %cst_107 {dimension_numbers = #tpu.dot_dimension_numbers<[1], [0], [0], [1], [0, 0, 1, 1], [], []>} : vector<1x4xf32>, vector<4x4xf32>, vector<1x4xf32> -> vector<1x4xf32>
    %207 = arith.addf %206, %11 : vector<1x4xf32>
    %cst_108 = arith.constant 0.000000e+00 : f32
    %208 = vector.broadcast %cst_108 : f32 to vector<1x4xf32>
    %209 = arith.maximumf %207, %208 : vector<1x4xf32>
    %cst_109 = arith.constant dense<0.000000e+00> : vector<1x4xf32>
    %210 = tpu.matmul %209, %13, %cst_109 {dimension_numbers = #tpu.dot_dimension_numbers<[1], [0], [0], [1], [0, 0, 1, 1], [], []>} : vector<1x4xf32>, vector<4x4xf32>, vector<1x4xf32> -> vector<1x4xf32>
    %211 = arith.addf %210, %15 : vector<1x4xf32>
    %cst_110 = arith.constant 0.000000e+00 : f32
    %212 = vector.broadcast %cst_110 : f32 to vector<1x4xf32>
    %213 = arith.maximumf %211, %212 : vector<1x4xf32>
    %214 = arith.addf %213, %188 : vector<1x4xf32>
    %215 = vector.extract_strided_slice %48 {offsets = [3, 0], sizes = [1, 12], strides = [1, 1]} : vector<8x12xf32> to vector<1x12xf32>
    %216 = vector.extract_strided_slice %189 {offsets = [0, 8], sizes = [1, 12], strides = [1, 1]} : vector<1x20xf32> to vector<1x12xf32>
    %217 = arith.addf %215, %216 : vector<1x12xf32>
    %cst_111 = arith.constant dense<0.000000e+00> : vector<1x12xf32>
    %218 = tpu.matmul %213, %30, %cst_111 {dimension_numbers = #tpu.dot_dimension_numbers<[1], [0], [0], [1], [0, 0, 1, 1], [], []>} : vector<1x4xf32>, vector<4x12xf32>, vector<1x12xf32> -> vector<1x12xf32>
    %219 = arith.addf %217, %218 : vector<1x12xf32>
    %cst_112 = arith.constant 0.000000e+00 : f32
    %220 = vector.broadcast %cst_112 : f32 to vector<1x12xf32>
    %221 = arith.maximumf %219, %220 : vector<1x12xf32>
    %cst_113 = arith.constant dense<0.000000e+00> : vector<1x4xf32>
    %222 = tpu.matmul %221, %17, %cst_113 {dimension_numbers = #tpu.dot_dimension_numbers<[1], [0], [0], [1], [0, 0, 1, 1], [], []>} : vector<1x12xf32>, vector<12x4xf32>, vector<1x4xf32> -> vector<1x4xf32>
    %223 = arith.addf %222, %19 : vector<1x4xf32>
    %cst_114 = arith.constant 0.000000e+00 : f32
    %224 = vector.broadcast %cst_114 : f32 to vector<1x4xf32>
    %225 = arith.maximumf %223, %224 : vector<1x4xf32>
    %cst_115 = arith.constant dense<0.000000e+00> : vector<1x4xf32>
    %226 = tpu.matmul %225, %21, %cst_115 {dimension_numbers = #tpu.dot_dimension_numbers<[1], [0], [0], [1], [0, 0, 1, 1], [], []>} : vector<1x4xf32>, vector<4x4xf32>, vector<1x4xf32> -> vector<1x4xf32>
    %227 = arith.addf %226, %23 : vector<1x4xf32>
    %cst_116 = arith.constant 0.000000e+00 : f32
    %228 = vector.broadcast %cst_116 : f32 to vector<1x4xf32>
    %229 = arith.maximumf %227, %228 : vector<1x4xf32>
    %cst_117 = arith.constant dense<0.000000e+00> : vector<1x4xf32>
    %230 = tpu.matmul %229, %25, %cst_117 {dimension_numbers = #tpu.dot_dimension_numbers<[1], [0], [0], [1], [0, 0, 1, 1], [], []>} : vector<1x4xf32>, vector<4x4xf32>, vector<1x4xf32> -> vector<1x4xf32>
    %231 = arith.addf %27, %187 : vector<1x4xf32>
    %232 = arith.addf %231, %214 : vector<1x4xf32>
    %233 = arith.addf %230, %232 : vector<1x4xf32>
    %234 = vector.extract_strided_slice %33 {offsets = [4, 0], sizes = [1, 4], strides = [1, 1]} : vector<8x4xf32> to vector<1x4xf32>
    %cst_118 = arith.constant dense<0.000000e+00> : vector<1x20xf32>
    %235 = tpu.matmul %233, %32, %cst_118 {dimension_numbers = #tpu.dot_dimension_numbers<[1], [0], [0], [1], [0, 0, 1, 1], [], []>} : vector<1x4xf32>, vector<4x20xf32>, vector<1x20xf32> -> vector<1x20xf32>
    %236 = vector.extract_strided_slice %41 {offsets = [4, 0], sizes = [1, 8], strides = [1, 1]} : vector<8x8xf32> to vector<1x8xf32>
    %237 = vector.extract_strided_slice %235 {offsets = [0, 0], sizes = [1, 8], strides = [1, 1]} : vector<1x20xf32> to vector<1x8xf32>
    %238 = arith.addf %236, %237 : vector<1x8xf32>
    %239 = arith.negf %238 : vector<1x8xf32>
    %240 = math.exp %239 : vector<1x8xf32>
    %cst_119 = arith.constant 1.000000e+00 : f32
    %241 = vector.broadcast %cst_119 : f32 to vector<1x8xf32>
    %242 = arith.addf %241, %240 : vector<1x8xf32>
    %243 = arith.divf %241, %242 : vector<1x8xf32>
    %cst_120 = arith.constant dense<0.000000e+00> : vector<1x4xf32>
    %244 = tpu.matmul %243, %1, %cst_120 {dimension_numbers = #tpu.dot_dimension_numbers<[1], [0], [0], [1], [0, 0, 1, 1], [], []>} : vector<1x8xf32>, vector<8x4xf32>, vector<1x4xf32> -> vector<1x4xf32>
    %245 = arith.addf %244, %3 : vector<1x4xf32>
    %cst_121 = arith.constant 0.000000e+00 : f32
    %246 = vector.broadcast %cst_121 : f32 to vector<1x4xf32>
    %247 = arith.maximumf %245, %246 : vector<1x4xf32>
    %cst_122 = arith.constant dense<0.000000e+00> : vector<1x4xf32>
    %248 = tpu.matmul %247, %5, %cst_122 {dimension_numbers = #tpu.dot_dimension_numbers<[1], [0], [0], [1], [0, 0, 1, 1], [], []>} : vector<1x4xf32>, vector<4x4xf32>, vector<1x4xf32> -> vector<1x4xf32>
    %249 = arith.addf %248, %7 : vector<1x4xf32>
    %cst_123 = arith.constant 0.000000e+00 : f32
    %250 = vector.broadcast %cst_123 : f32 to vector<1x4xf32>
    %251 = arith.maximumf %249, %250 : vector<1x4xf32>
    %cst_124 = arith.constant dense<0.000000e+00> : vector<1x4xf32>
    %252 = tpu.matmul %251, %9, %cst_124 {dimension_numbers = #tpu.dot_dimension_numbers<[1], [0], [0], [1], [0, 0, 1, 1], [], []>} : vector<1x4xf32>, vector<4x4xf32>, vector<1x4xf32> -> vector<1x4xf32>
    %253 = arith.addf %252, %11 : vector<1x4xf32>
    %cst_125 = arith.constant 0.000000e+00 : f32
    %254 = vector.broadcast %cst_125 : f32 to vector<1x4xf32>
    %255 = arith.maximumf %253, %254 : vector<1x4xf32>
    %cst_126 = arith.constant dense<0.000000e+00> : vector<1x4xf32>
    %256 = tpu.matmul %255, %13, %cst_126 {dimension_numbers = #tpu.dot_dimension_numbers<[1], [0], [0], [1], [0, 0, 1, 1], [], []>} : vector<1x4xf32>, vector<4x4xf32>, vector<1x4xf32> -> vector<1x4xf32>
    %257 = arith.addf %256, %15 : vector<1x4xf32>
    %cst_127 = arith.constant 0.000000e+00 : f32
    %258 = vector.broadcast %cst_127 : f32 to vector<1x4xf32>
    %259 = arith.maximumf %257, %258 : vector<1x4xf32>
    %260 = arith.addf %259, %234 : vector<1x4xf32>
    %261 = vector.extract_strided_slice %48 {offsets = [4, 0], sizes = [1, 12], strides = [1, 1]} : vector<8x12xf32> to vector<1x12xf32>
    %262 = vector.extract_strided_slice %235 {offsets = [0, 8], sizes = [1, 12], strides = [1, 1]} : vector<1x20xf32> to vector<1x12xf32>
    %263 = arith.addf %261, %262 : vector<1x12xf32>
    %cst_128 = arith.constant dense<0.000000e+00> : vector<1x12xf32>
    %264 = tpu.matmul %259, %30, %cst_128 {dimension_numbers = #tpu.dot_dimension_numbers<[1], [0], [0], [1], [0, 0, 1, 1], [], []>} : vector<1x4xf32>, vector<4x12xf32>, vector<1x12xf32> -> vector<1x12xf32>
    %265 = arith.addf %263, %264 : vector<1x12xf32>
    %cst_129 = arith.constant 0.000000e+00 : f32
    %266 = vector.broadcast %cst_129 : f32 to vector<1x12xf32>
    %267 = arith.maximumf %265, %266 : vector<1x12xf32>
    %cst_130 = arith.constant dense<0.000000e+00> : vector<1x4xf32>
    %268 = tpu.matmul %267, %17, %cst_130 {dimension_numbers = #tpu.dot_dimension_numbers<[1], [0], [0], [1], [0, 0, 1, 1], [], []>} : vector<1x12xf32>, vector<12x4xf32>, vector<1x4xf32> -> vector<1x4xf32>
    %269 = arith.addf %268, %19 : vector<1x4xf32>
    %cst_131 = arith.constant 0.000000e+00 : f32
    %270 = vector.broadcast %cst_131 : f32 to vector<1x4xf32>
    %271 = arith.maximumf %269, %270 : vector<1x4xf32>
    %cst_132 = arith.constant dense<0.000000e+00> : vector<1x4xf32>
    %272 = tpu.matmul %271, %21, %cst_132 {dimension_numbers = #tpu.dot_dimension_numbers<[1], [0], [0], [1], [0, 0, 1, 1], [], []>} : vector<1x4xf32>, vector<4x4xf32>, vector<1x4xf32> -> vector<1x4xf32>
    %273 = arith.addf %272, %23 : vector<1x4xf32>
    %cst_133 = arith.constant 0.000000e+00 : f32
    %274 = vector.broadcast %cst_133 : f32 to vector<1x4xf32>
    %275 = arith.maximumf %273, %274 : vector<1x4xf32>
    %cst_134 = arith.constant dense<0.000000e+00> : vector<1x4xf32>
    %276 = tpu.matmul %275, %25, %cst_134 {dimension_numbers = #tpu.dot_dimension_numbers<[1], [0], [0], [1], [0, 0, 1, 1], [], []>} : vector<1x4xf32>, vector<4x4xf32>, vector<1x4xf32> -> vector<1x4xf32>
    %277 = arith.addf %27, %233 : vector<1x4xf32>
    %278 = arith.addf %277, %260 : vector<1x4xf32>
    %279 = arith.addf %276, %278 : vector<1x4xf32>
    %280 = vector.extract_strided_slice %33 {offsets = [5, 0], sizes = [1, 4], strides = [1, 1]} : vector<8x4xf32> to vector<1x4xf32>
    %cst_135 = arith.constant dense<0.000000e+00> : vector<1x20xf32>
    %281 = tpu.matmul %279, %32, %cst_135 {dimension_numbers = #tpu.dot_dimension_numbers<[1], [0], [0], [1], [0, 0, 1, 1], [], []>} : vector<1x4xf32>, vector<4x20xf32>, vector<1x20xf32> -> vector<1x20xf32>
    %282 = vector.extract_strided_slice %41 {offsets = [5, 0], sizes = [1, 8], strides = [1, 1]} : vector<8x8xf32> to vector<1x8xf32>
    %283 = vector.extract_strided_slice %281 {offsets = [0, 0], sizes = [1, 8], strides = [1, 1]} : vector<1x20xf32> to vector<1x8xf32>
    %284 = arith.addf %282, %283 : vector<1x8xf32>
    %285 = arith.negf %284 : vector<1x8xf32>
    %286 = math.exp %285 : vector<1x8xf32>
    %cst_136 = arith.constant 1.000000e+00 : f32
    %287 = vector.broadcast %cst_136 : f32 to vector<1x8xf32>
    %288 = arith.addf %287, %286 : vector<1x8xf32>
    %289 = arith.divf %287, %288 : vector<1x8xf32>
    %cst_137 = arith.constant dense<0.000000e+00> : vector<1x4xf32>
    %290 = tpu.matmul %289, %1, %cst_137 {dimension_numbers = #tpu.dot_dimension_numbers<[1], [0], [0], [1], [0, 0, 1, 1], [], []>} : vector<1x8xf32>, vector<8x4xf32>, vector<1x4xf32> -> vector<1x4xf32>
    %291 = arith.addf %290, %3 : vector<1x4xf32>
    %cst_138 = arith.constant 0.000000e+00 : f32
    %292 = vector.broadcast %cst_138 : f32 to vector<1x4xf32>
    %293 = arith.maximumf %291, %292 : vector<1x4xf32>
    %cst_139 = arith.constant dense<0.000000e+00> : vector<1x4xf32>
    %294 = tpu.matmul %293, %5, %cst_139 {dimension_numbers = #tpu.dot_dimension_numbers<[1], [0], [0], [1], [0, 0, 1, 1], [], []>} : vector<1x4xf32>, vector<4x4xf32>, vector<1x4xf32> -> vector<1x4xf32>
    %295 = arith.addf %294, %7 : vector<1x4xf32>
    %cst_140 = arith.constant 0.000000e+00 : f32
    %296 = vector.broadcast %cst_140 : f32 to vector<1x4xf32>
    %297 = arith.maximumf %295, %296 : vector<1x4xf32>
    %cst_141 = arith.constant dense<0.000000e+00> : vector<1x4xf32>
    %298 = tpu.matmul %297, %9, %cst_141 {dimension_numbers = #tpu.dot_dimension_numbers<[1], [0], [0], [1], [0, 0, 1, 1], [], []>} : vector<1x4xf32>, vector<4x4xf32>, vector<1x4xf32> -> vector<1x4xf32>
    %299 = arith.addf %298, %11 : vector<1x4xf32>
    %cst_142 = arith.constant 0.000000e+00 : f32
    %300 = vector.broadcast %cst_142 : f32 to vector<1x4xf32>
    %301 = arith.maximumf %299, %300 : vector<1x4xf32>
    %cst_143 = arith.constant dense<0.000000e+00> : vector<1x4xf32>
    %302 = tpu.matmul %301, %13, %cst_143 {dimension_numbers = #tpu.dot_dimension_numbers<[1], [0], [0], [1], [0, 0, 1, 1], [], []>} : vector<1x4xf32>, vector<4x4xf32>, vector<1x4xf32> -> vector<1x4xf32>
    %303 = arith.addf %302, %15 : vector<1x4xf32>
    %cst_144 = arith.constant 0.000000e+00 : f32
    %304 = vector.broadcast %cst_144 : f32 to vector<1x4xf32>
    %305 = arith.maximumf %303, %304 : vector<1x4xf32>
    %306 = arith.addf %305, %280 : vector<1x4xf32>
    %307 = vector.extract_strided_slice %48 {offsets = [5, 0], sizes = [1, 12], strides = [1, 1]} : vector<8x12xf32> to vector<1x12xf32>
    %308 = vector.extract_strided_slice %281 {offsets = [0, 8], sizes = [1, 12], strides = [1, 1]} : vector<1x20xf32> to vector<1x12xf32>
    %309 = arith.addf %307, %308 : vector<1x12xf32>
    %cst_145 = arith.constant dense<0.000000e+00> : vector<1x12xf32>
    %310 = tpu.matmul %305, %30, %cst_145 {dimension_numbers = #tpu.dot_dimension_numbers<[1], [0], [0], [1], [0, 0, 1, 1], [], []>} : vector<1x4xf32>, vector<4x12xf32>, vector<1x12xf32> -> vector<1x12xf32>
    %311 = arith.addf %309, %310 : vector<1x12xf32>
    %cst_146 = arith.constant 0.000000e+00 : f32
    %312 = vector.broadcast %cst_146 : f32 to vector<1x12xf32>
    %313 = arith.maximumf %311, %312 : vector<1x12xf32>
    %cst_147 = arith.constant dense<0.000000e+00> : vector<1x4xf32>
    %314 = tpu.matmul %313, %17, %cst_147 {dimension_numbers = #tpu.dot_dimension_numbers<[1], [0], [0], [1], [0, 0, 1, 1], [], []>} : vector<1x12xf32>, vector<12x4xf32>, vector<1x4xf32> -> vector<1x4xf32>
    %315 = arith.addf %314, %19 : vector<1x4xf32>
    %cst_148 = arith.constant 0.000000e+00 : f32
    %316 = vector.broadcast %cst_148 : f32 to vector<1x4xf32>
    %317 = arith.maximumf %315, %316 : vector<1x4xf32>
    %cst_149 = arith.constant dense<0.000000e+00> : vector<1x4xf32>
    %318 = tpu.matmul %317, %21, %cst_149 {dimension_numbers = #tpu.dot_dimension_numbers<[1], [0], [0], [1], [0, 0, 1, 1], [], []>} : vector<1x4xf32>, vector<4x4xf32>, vector<1x4xf32> -> vector<1x4xf32>
    %319 = arith.addf %318, %23 : vector<1x4xf32>
    %cst_150 = arith.constant 0.000000e+00 : f32
    %320 = vector.broadcast %cst_150 : f32 to vector<1x4xf32>
    %321 = arith.maximumf %319, %320 : vector<1x4xf32>
    %cst_151 = arith.constant dense<0.000000e+00> : vector<1x4xf32>
    %322 = tpu.matmul %321, %25, %cst_151 {dimension_numbers = #tpu.dot_dimension_numbers<[1], [0], [0], [1], [0, 0, 1, 1], [], []>} : vector<1x4xf32>, vector<4x4xf32>, vector<1x4xf32> -> vector<1x4xf32>
    %323 = arith.addf %27, %279 : vector<1x4xf32>
    %324 = arith.addf %323, %306 : vector<1x4xf32>
    %325 = arith.addf %322, %324 : vector<1x4xf32>
    %326 = vector.extract_strided_slice %33 {offsets = [6, 0], sizes = [1, 4], strides = [1, 1]} : vector<8x4xf32> to vector<1x4xf32>
    %cst_152 = arith.constant dense<0.000000e+00> : vector<1x20xf32>
    %327 = tpu.matmul %325, %32, %cst_152 {dimension_numbers = #tpu.dot_dimension_numbers<[1], [0], [0], [1], [0, 0, 1, 1], [], []>} : vector<1x4xf32>, vector<4x20xf32>, vector<1x20xf32> -> vector<1x20xf32>
    %328 = vector.extract_strided_slice %41 {offsets = [6, 0], sizes = [1, 8], strides = [1, 1]} : vector<8x8xf32> to vector<1x8xf32>
    %329 = vector.extract_strided_slice %327 {offsets = [0, 0], sizes = [1, 8], strides = [1, 1]} : vector<1x20xf32> to vector<1x8xf32>
    %330 = arith.addf %328, %329 : vector<1x8xf32>
    %331 = arith.negf %330 : vector<1x8xf32>
    %332 = math.exp %331 : vector<1x8xf32>
    %cst_153 = arith.constant 1.000000e+00 : f32
    %333 = vector.broadcast %cst_153 : f32 to vector<1x8xf32>
    %334 = arith.addf %333, %332 : vector<1x8xf32>
    %335 = arith.divf %333, %334 : vector<1x8xf32>
    %cst_154 = arith.constant dense<0.000000e+00> : vector<1x4xf32>
    %336 = tpu.matmul %335, %1, %cst_154 {dimension_numbers = #tpu.dot_dimension_numbers<[1], [0], [0], [1], [0, 0, 1, 1], [], []>} : vector<1x8xf32>, vector<8x4xf32>, vector<1x4xf32> -> vector<1x4xf32>
    %337 = arith.addf %336, %3 : vector<1x4xf32>
    %cst_155 = arith.constant 0.000000e+00 : f32
    %338 = vector.broadcast %cst_155 : f32 to vector<1x4xf32>
    %339 = arith.maximumf %337, %338 : vector<1x4xf32>
    %cst_156 = arith.constant dense<0.000000e+00> : vector<1x4xf32>
    %340 = tpu.matmul %339, %5, %cst_156 {dimension_numbers = #tpu.dot_dimension_numbers<[1], [0], [0], [1], [0, 0, 1, 1], [], []>} : vector<1x4xf32>, vector<4x4xf32>, vector<1x4xf32> -> vector<1x4xf32>
    %341 = arith.addf %340, %7 : vector<1x4xf32>
    %cst_157 = arith.constant 0.000000e+00 : f32
    %342 = vector.broadcast %cst_157 : f32 to vector<1x4xf32>
    %343 = arith.maximumf %341, %342 : vector<1x4xf32>
    %cst_158 = arith.constant dense<0.000000e+00> : vector<1x4xf32>
    %344 = tpu.matmul %343, %9, %cst_158 {dimension_numbers = #tpu.dot_dimension_numbers<[1], [0], [0], [1], [0, 0, 1, 1], [], []>} : vector<1x4xf32>, vector<4x4xf32>, vector<1x4xf32> -> vector<1x4xf32>
    %345 = arith.addf %344, %11 : vector<1x4xf32>
    %cst_159 = arith.constant 0.000000e+00 : f32
    %346 = vector.broadcast %cst_159 : f32 to vector<1x4xf32>
    %347 = arith.maximumf %345, %346 : vector<1x4xf32>
    %cst_160 = arith.constant dense<0.000000e+00> : vector<1x4xf32>
    %348 = tpu.matmul %347, %13, %cst_160 {dimension_numbers = #tpu.dot_dimension_numbers<[1], [0], [0], [1], [0, 0, 1, 1], [], []>} : vector<1x4xf32>, vector<4x4xf32>, vector<1x4xf32> -> vector<1x4xf32>
    %349 = arith.addf %348, %15 : vector<1x4xf32>
    %cst_161 = arith.constant 0.000000e+00 : f32
    %350 = vector.broadcast %cst_161 : f32 to vector<1x4xf32>
    %351 = arith.maximumf %349, %350 : vector<1x4xf32>
    %352 = arith.addf %351, %326 : vector<1x4xf32>
    %353 = vector.extract_strided_slice %48 {offsets = [6, 0], sizes = [1, 12], strides = [1, 1]} : vector<8x12xf32> to vector<1x12xf32>
    %354 = vector.extract_strided_slice %327 {offsets = [0, 8], sizes = [1, 12], strides = [1, 1]} : vector<1x20xf32> to vector<1x12xf32>
    %355 = arith.addf %353, %354 : vector<1x12xf32>
    %cst_162 = arith.constant dense<0.000000e+00> : vector<1x12xf32>
    %356 = tpu.matmul %351, %30, %cst_162 {dimension_numbers = #tpu.dot_dimension_numbers<[1], [0], [0], [1], [0, 0, 1, 1], [], []>} : vector<1x4xf32>, vector<4x12xf32>, vector<1x12xf32> -> vector<1x12xf32>
    %357 = arith.addf %355, %356 : vector<1x12xf32>
    %cst_163 = arith.constant 0.000000e+00 : f32
    %358 = vector.broadcast %cst_163 : f32 to vector<1x12xf32>
    %359 = arith.maximumf %357, %358 : vector<1x12xf32>
    %cst_164 = arith.constant dense<0.000000e+00> : vector<1x4xf32>
    %360 = tpu.matmul %359, %17, %cst_164 {dimension_numbers = #tpu.dot_dimension_numbers<[1], [0], [0], [1], [0, 0, 1, 1], [], []>} : vector<1x12xf32>, vector<12x4xf32>, vector<1x4xf32> -> vector<1x4xf32>
    %361 = arith.addf %360, %19 : vector<1x4xf32>
    %cst_165 = arith.constant 0.000000e+00 : f32
    %362 = vector.broadcast %cst_165 : f32 to vector<1x4xf32>
    %363 = arith.maximumf %361, %362 : vector<1x4xf32>
    %cst_166 = arith.constant dense<0.000000e+00> : vector<1x4xf32>
    %364 = tpu.matmul %363, %21, %cst_166 {dimension_numbers = #tpu.dot_dimension_numbers<[1], [0], [0], [1], [0, 0, 1, 1], [], []>} : vector<1x4xf32>, vector<4x4xf32>, vector<1x4xf32> -> vector<1x4xf32>
    %365 = arith.addf %364, %23 : vector<1x4xf32>
    %cst_167 = arith.constant 0.000000e+00 : f32
    %366 = vector.broadcast %cst_167 : f32 to vector<1x4xf32>
    %367 = arith.maximumf %365, %366 : vector<1x4xf32>
    %cst_168 = arith.constant dense<0.000000e+00> : vector<1x4xf32>
    %368 = tpu.matmul %367, %25, %cst_168 {dimension_numbers = #tpu.dot_dimension_numbers<[1], [0], [0], [1], [0, 0, 1, 1], [], []>} : vector<1x4xf32>, vector<4x4xf32>, vector<1x4xf32> -> vector<1x4xf32>
    %369 = arith.addf %27, %325 : vector<1x4xf32>
    %370 = arith.addf %369, %352 : vector<1x4xf32>
    %371 = arith.addf %368, %370 : vector<1x4xf32>
    %372 = vector.extract_strided_slice %33 {offsets = [7, 0], sizes = [1, 4], strides = [1, 1]} : vector<8x4xf32> to vector<1x4xf32>
    %cst_169 = arith.constant dense<0.000000e+00> : vector<1x20xf32>
    %373 = tpu.matmul %371, %32, %cst_169 {dimension_numbers = #tpu.dot_dimension_numbers<[1], [0], [0], [1], [0, 0, 1, 1], [], []>} : vector<1x4xf32>, vector<4x20xf32>, vector<1x20xf32> -> vector<1x20xf32>
    %374 = vector.extract_strided_slice %41 {offsets = [7, 0], sizes = [1, 8], strides = [1, 1]} : vector<8x8xf32> to vector<1x8xf32>
    %375 = vector.extract_strided_slice %373 {offsets = [0, 0], sizes = [1, 8], strides = [1, 1]} : vector<1x20xf32> to vector<1x8xf32>
    %376 = arith.addf %374, %375 : vector<1x8xf32>
    %377 = arith.negf %376 : vector<1x8xf32>
    %378 = math.exp %377 : vector<1x8xf32>
    %cst_170 = arith.constant 1.000000e+00 : f32
    %379 = vector.broadcast %cst_170 : f32 to vector<1x8xf32>
    %380 = arith.addf %379, %378 : vector<1x8xf32>
    %381 = arith.divf %379, %380 : vector<1x8xf32>
    %cst_171 = arith.constant dense<0.000000e+00> : vector<1x4xf32>
    %382 = tpu.matmul %381, %1, %cst_171 {dimension_numbers = #tpu.dot_dimension_numbers<[1], [0], [0], [1], [0, 0, 1, 1], [], []>} : vector<1x8xf32>, vector<8x4xf32>, vector<1x4xf32> -> vector<1x4xf32>
    %383 = arith.addf %382, %3 : vector<1x4xf32>
    %cst_172 = arith.constant 0.000000e+00 : f32
    %384 = vector.broadcast %cst_172 : f32 to vector<1x4xf32>
    %385 = arith.maximumf %383, %384 : vector<1x4xf32>
    %cst_173 = arith.constant dense<0.000000e+00> : vector<1x4xf32>
    %386 = tpu.matmul %385, %5, %cst_173 {dimension_numbers = #tpu.dot_dimension_numbers<[1], [0], [0], [1], [0, 0, 1, 1], [], []>} : vector<1x4xf32>, vector<4x4xf32>, vector<1x4xf32> -> vector<1x4xf32>
    %387 = arith.addf %386, %7 : vector<1x4xf32>
    %cst_174 = arith.constant 0.000000e+00 : f32
    %388 = vector.broadcast %cst_174 : f32 to vector<1x4xf32>
    %389 = arith.maximumf %387, %388 : vector<1x4xf32>
    %cst_175 = arith.constant dense<0.000000e+00> : vector<1x4xf32>
    %390 = tpu.matmul %389, %9, %cst_175 {dimension_numbers = #tpu.dot_dimension_numbers<[1], [0], [0], [1], [0, 0, 1, 1], [], []>} : vector<1x4xf32>, vector<4x4xf32>, vector<1x4xf32> -> vector<1x4xf32>
    %391 = arith.addf %390, %11 : vector<1x4xf32>
    %cst_176 = arith.constant 0.000000e+00 : f32
    %392 = vector.broadcast %cst_176 : f32 to vector<1x4xf32>
    %393 = arith.maximumf %391, %392 : vector<1x4xf32>
    %cst_177 = arith.constant dense<0.000000e+00> : vector<1x4xf32>
    %394 = tpu.matmul %393, %13, %cst_177 {dimension_numbers = #tpu.dot_dimension_numbers<[1], [0], [0], [1], [0, 0, 1, 1], [], []>} : vector<1x4xf32>, vector<4x4xf32>, vector<1x4xf32> -> vector<1x4xf32>
    %395 = arith.addf %394, %15 : vector<1x4xf32>
    %cst_178 = arith.constant 0.000000e+00 : f32
    %396 = vector.broadcast %cst_178 : f32 to vector<1x4xf32>
    %397 = arith.maximumf %395, %396 : vector<1x4xf32>
    %398 = arith.addf %397, %372 : vector<1x4xf32>
    %c9 = arith.constant 9 : index
    %c0_179 = arith.constant 0 : index
    %c0_180 = arith.constant 0 : index
    %399 = vector.load %arg1[%c9, %c0_179, %c0_180] : memref<15x40x32xf32, #tpu.memory_space<vmem>>, vector<1x4x4xf32>
    %400 = vector.shape_cast %399 : vector<1x4x4xf32> to vector<4x4xf32>
    %cst_181 = arith.constant dense<0.000000e+00> : vector<1x4xf32>
    %401 = tpu.matmul %398, %400, %cst_181 {dimension_numbers = #tpu.dot_dimension_numbers<[1], [0], [0], [1], [0, 0, 1, 1], [], []>} : vector<1x4xf32>, vector<4x4xf32>, vector<1x4xf32> -> vector<1x4xf32>
    %c9_182 = arith.constant 9 : index
    %c32_183 = arith.constant 32 : index
    %c0_184 = arith.constant 0 : index
    %402 = vector.load %arg1[%c9_182, %c32_183, %c0_184] : memref<15x40x32xf32, #tpu.memory_space<vmem>>, vector<1x1x4xf32>
    %403 = vector.shape_cast %402 : vector<1x1x4xf32> to vector<1x4xf32>
    %404 = arith.addf %401, %403 : vector<1x4xf32>
    %cst_185 = arith.constant 0.000000e+00 : f32
    %405 = vector.broadcast %cst_185 : f32 to vector<1x4xf32>
    %406 = arith.maximumf %404, %405 : vector<1x4xf32>
    %c10 = arith.constant 10 : index
    %c0_186 = arith.constant 0 : index
    %c0_187 = arith.constant 0 : index
    %407 = vector.load %arg1[%c10, %c0_186, %c0_187] : memref<15x40x32xf32, #tpu.memory_space<vmem>>, vector<1x4x4xf32>
    %408 = vector.shape_cast %407 : vector<1x4x4xf32> to vector<4x4xf32>
    %cst_188 = arith.constant dense<0.000000e+00> : vector<1x4xf32>
    %409 = tpu.matmul %406, %408, %cst_188 {dimension_numbers = #tpu.dot_dimension_numbers<[1], [0], [0], [1], [0, 0, 1, 1], [], []>} : vector<1x4xf32>, vector<4x4xf32>, vector<1x4xf32> -> vector<1x4xf32>
    %c10_189 = arith.constant 10 : index
    %c32_190 = arith.constant 32 : index
    %c0_191 = arith.constant 0 : index
    %410 = vector.load %arg1[%c10_189, %c32_190, %c0_191] : memref<15x40x32xf32, #tpu.memory_space<vmem>>, vector<1x1x4xf32>
    %411 = vector.shape_cast %410 : vector<1x1x4xf32> to vector<1x4xf32>
    %412 = arith.addf %409, %411 : vector<1x4xf32>
    %cst_192 = arith.constant 0.000000e+00 : f32
    %413 = vector.broadcast %cst_192 : f32 to vector<1x4xf32>
    %414 = arith.maximumf %412, %413 : vector<1x4xf32>
    %c11 = arith.constant 11 : index
    %c0_193 = arith.constant 0 : index
    %c0_194 = arith.constant 0 : index
    %415 = vector.load %arg1[%c11, %c0_193, %c0_194] : memref<15x40x32xf32, #tpu.memory_space<vmem>>, vector<1x4x8xf32>
    %416 = vector.shape_cast %415 : vector<1x4x8xf32> to vector<4x8xf32>
    %cst_195 = arith.constant dense<0.000000e+00> : vector<1x8xf32>
    %417 = tpu.matmul %414, %416, %cst_195 {dimension_numbers = #tpu.dot_dimension_numbers<[1], [0], [0], [1], [0, 0, 1, 1], [], []>} : vector<1x4xf32>, vector<4x8xf32>, vector<1x8xf32> -> vector<1x8xf32>
    %c11_196 = arith.constant 11 : index
    %c32_197 = arith.constant 32 : index
    %c0_198 = arith.constant 0 : index
    %418 = vector.load %arg1[%c11_196, %c32_197, %c0_198] : memref<15x40x32xf32, #tpu.memory_space<vmem>>, vector<1x1x8xf32>
    %419 = vector.shape_cast %418 : vector<1x1x8xf32> to vector<1x8xf32>
    %420 = arith.addf %417, %419 : vector<1x8xf32>
    %cst_199 = arith.constant 0.000000e+00 : f32
    %421 = vector.broadcast %cst_199 : f32 to vector<1x8xf32>
    %422 = arith.maximumf %420, %421 : vector<1x8xf32>
    %c12 = arith.constant 12 : index
    %c0_200 = arith.constant 0 : index
    %c0_201 = arith.constant 0 : index
    %423 = vector.load %arg1[%c12, %c0_200, %c0_201] : memref<15x40x32xf32, #tpu.memory_space<vmem>>, vector<1x8x32xf32>
    %424 = vector.shape_cast %423 : vector<1x8x32xf32> to vector<8x32xf32>
    %cst_202 = arith.constant dense<0.000000e+00> : vector<1x32xf32>
    %425 = tpu.matmul %422, %424, %cst_202 {dimension_numbers = #tpu.dot_dimension_numbers<[1], [0], [0], [1], [0, 0, 1, 1], [], []>} : vector<1x8xf32>, vector<8x32xf32>, vector<1x32xf32> -> vector<1x32xf32>
    %c12_203 = arith.constant 12 : index
    %c32_204 = arith.constant 32 : index
    %c0_205 = arith.constant 0 : index
    %426 = vector.load %arg1[%c12_203, %c32_204, %c0_205] : memref<15x40x32xf32, #tpu.memory_space<vmem>>, vector<1x1x32xf32>
    %427 = vector.shape_cast %426 : vector<1x1x32xf32> to vector<1x32xf32>
    %428 = arith.addf %425, %427 : vector<1x32xf32>
    %cst_206 = arith.constant dense<0xFF800000> : vector<1xf32>
    %429 = vector.multi_reduction <maximumf>, %428, %cst_206 [1] : vector<1x32xf32> to vector<1xf32>
    %430 = vector.shape_cast %429 : vector<1xf32> to vector<1x1xf32>
    %431 = vector.broadcast %430 : vector<1x1xf32> to vector<1x32xf32>
    %432 = arith.subf %428, %431 : vector<1x32xf32>
    %433 = math.exp %432 : vector<1x32xf32>
    %cst_207 = arith.constant dense<0.000000e+00> : vector<1xf32>
    %434 = vector.multi_reduction <add>, %433, %cst_207 [1] : vector<1x32xf32> to vector<1xf32>
    %435 = vector.shape_cast %434 : vector<1xf32> to vector<1x1xf32>
    %436 = vector.broadcast %435 : vector<1x1xf32> to vector<1x32xf32>
    %437 = arith.divf %433, %436 : vector<1x32xf32>
    %c13 = arith.constant 13 : index
    %c0_208 = arith.constant 0 : index
    %c0_209 = arith.constant 0 : index
    %438 = vector.load %arg1[%c13, %c0_208, %c0_209] : memref<15x40x32xf32, #tpu.memory_space<vmem>>, vector<1x32x4xf32>
    %439 = vector.shape_cast %438 : vector<1x32x4xf32> to vector<32x4xf32>
    %cst_210 = arith.constant dense<0.000000e+00> : vector<1x4xf32>
    %440 = tpu.matmul %437, %439, %cst_210 {dimension_numbers = #tpu.dot_dimension_numbers<[1], [0], [0], [1], [0, 0, 1, 1], [], []>} : vector<1x32xf32>, vector<32x4xf32>, vector<1x4xf32> -> vector<1x4xf32>
    %c13_211 = arith.constant 13 : index
    %c32_212 = arith.constant 32 : index
    %c0_213 = arith.constant 0 : index
    %441 = vector.load %arg1[%c13_211, %c32_212, %c0_213] : memref<15x40x32xf32, #tpu.memory_space<vmem>>, vector<1x1x4xf32>
    %442 = vector.shape_cast %441 : vector<1x1x4xf32> to vector<1x4xf32>
    %443 = arith.addf %440, %442 : vector<1x4xf32>
    %c0_214 = arith.constant 0 : index
    %c0_215 = arith.constant 0 : index
    %444 = vector.load %arg2[%c0_214, %c0_215] : memref<1x4xf32, #tpu.memory_space<vmem>>, vector<1x4xf32>
    tpu.vector_store %arg2[%c0_214, %c0_215], %443 {strides = array<i32>} : memref<1x4xf32, #tpu.memory_space<vmem>>, vector<1x4xf32>,
    return
  }
}

</mosaic_0001>

<llo_original>
// kernel: tpu_custom_call.1
$region0: #{tpu_custom_call.1}
  #allocation0 [shape = 'u32[]', space=smem, size = 0x4, offset = 0x4, fixed_abs, tag = 'smem constant byte address 0x4 - core index']
  #allocation1 [shape = 'u32[144,128]{1,0:T(1,128)}', space=vmem, size = 0x12000, scoped, tag = 'internal scratch']
  %s0 = inlined_call_operand.vmem [shape: f32[8,4], index: 0, kind: input, shape index: {}]
  %s1 = inlined_call_operand.vmem [shape: f32[15,40,32], index: 1, kind: input, shape index: {}]
  %s2 = inlined_call_operand.hbm [shape: f32[1,4], index: 2, kind: output, shape index: {}]
  %s3 = sld [smem:[#allocation0]]
  $region18: #{tpu_custom_call.1} parent=0
    _
  %s5 = ssub.s32 1, %s3
  %s6 = scalar_select 0, %s5, %s3
  $region1: #{tpu_custom_call.1} parent=0
    #allocation2 [shape = 'u8[512]{0}', space=vmem, size = 0x400, scoped, tag = 'output window, operand 0, single buffered']
    #allocation3 [shape = 's32[1]{0}', space=sflag, size = 0x4, scoped, tag = 'scoped memory for tpu_custom_call.1']
    %7 = vsyncpa [#allocation3], 0
    // Predicated region
    $region2: #{tpu_custom_call.1} parent=1 // pred_check
      _
    $region3: #{tpu_custom_call.1} parent=1 // pred_check_branch
      %9 = sbr.rel (0) target = $region5
    $region4: #{tpu_custom_call.1} parent=1 // pred_region
      _
    $region5: #{tpu_custom_call.1} parent=1 // pred_fallthru
      _
    // Predicated region
    $region6: #{tpu_custom_call.1} parent=1 // pred_check
      _
    $region7: #{tpu_custom_call.1} parent=1 // pred_check_branch
      %11 = sbr.rel (0) target = $region9
    $region8: #{tpu_custom_call.1} parent=1 // pred_region
      _
    $region9: #{tpu_custom_call.1} parent=1 // pred_fallthru
      _
    %s12 = scalar_lea.vmem %s1, 40
    %v13 = vld [vmem:[%s12] sm:$0xff]
    %v14 = vld [vmem:[%s12 + $0x20] sm:$0x1]
    %s15 = scalar_lea.vmem %s1, 80
    %v16 = vld [vmem:[%s15] sm:$0xf]
    %v17 = vld [vmem:[%s15 + $0x20] sm:$0x1]
    %s18 = scalar_lea.vmem %s1, 120
    %v19 = vld [vmem:[%s18] sm:$0xf]
    %v20 = vld [vmem:[%s18 + $0x20] sm:$0x1]
    %s21 = scalar_lea.vmem %s1, 160
    %v22 = vld [vmem:[%s21] sm:$0xf]
    %v23 = vld [vmem:[%s21 + $0x20] sm:$0x1]
    %s24 = scalar_lea.vmem %s1, 240
    %v25 = vld [vmem:[%s24] sm:$0xff]
    %v26 = vld [vmem:[%s24 + $0x8] sm:$0xf]
    %v27 = vld [vmem:[%s24 + $0x20] sm:$0x1]
    %s28 = scalar_lea.vmem %s1, 280
    %v29 = vld [vmem:[%s28] sm:$0xf]
    %v30 = vld [vmem:[%s28 + $0x20] sm:$0x1]
    %s31 = scalar_lea.vmem %s1, 320
    %v32 = vld [vmem:[%s31] sm:$0xf]
    %v33 = vld [vmem:[%s31 + $0x20] sm:$0x1]
    %s34 = scalar_lea.vmem %s1, 200
    %v35 = vld [vmem:[%s34] sm:$0xff]
    %v36 = vld [vmem:[%s34 + $0x8] sm:$0xf]
    %s37 = scalar_lea.vmem %s1, 560
    %v38 = vld [vmem:[%s37] sm:$0xf]
    %v39 = vld [vmem:[%s0] sm:$0xff]
    %v40 = vld [vmem:[%s1] sm:$0xff]
    %v41 = vld [vmem:[%s1 + $0x20] sm:$0x1]
    %v42 = vlaneseq
    %v43 = vshrl.u32 %v42, 7
    %v44 = vsub.s32 0, %v43
    %v45 = vrot.slane %v41, %v44
    %vm46 = vcmask 31744
    %v48 = vsel %vm46, %v39, 0
    %vm50 = vcmask 1043456
    %v52 = vsel %vm50, %v40, 0
    %54 = vmatprep.subr.mxu0 0.0
    %55 = vmatpush1.msra.mxu0 %v52
    %56 = vmatprep.subr.mxu0 0.0
    %57 = vmatpush1.msra.mxu0 0.0
    %58 = vmatprep.subr.mxu0 0.0
    %59 = vmatpush1.msra.mxu0 0.0
    %60 = vmatprep.subr.mxu0 0.0
    %61 = vmatpush1.msra.mxu0 0.0
    %62 = vmatprep.subr.mxu0 0.0
    %63 = vmatpush1.msra.mxu0 0.0
    %64 = vmatprep.subr.mxu0 0.0
    %65 = vmatpush1.msra.mxu0 0.0
    %66 = vmatprep.subr.mxu0 0.0
    %67 = vmatpush1.msra.mxu0 0.0
    %68 = vmatprep.subr.mxu0 0.0
    %69 = vmatpush1.msra.mxu0 0.0
    %70 = vmatprep.subr.mxu0 0.0
    %71 = vmatpush1.msra.mxu0 0.0
    %72 = vmatprep.subr.mxu0 0.0
    %73 = vmatpush1.msra.mxu0 0.0
    %74 = vmatprep.subr.mxu0 0.0
    %75 = vmatpush1.msra.mxu0 0.0
    %76 = vmatprep.subr.mxu0 0.0
    %77 = vmatpush1.msra.mxu0 0.0
    %78 = vmatprep.subr.mxu0 0.0
    %79 = vmatpush1.msra.mxu0 0.0
    %80 = vmatprep.subr.mxu0 0.0
    %81 = vmatpush1.msra.mxu0 0.0
    %82 = vmatprep.subr.mxu0 0.0
    %83 = vmatpush1.msra.mxu0 0.0
    %84 = vmatprep.subr.mxu0 0.0
    %85 = vmatpush1.msra.mxu0 0.0
    %86 = vmatprep.subr.mxu0 0.0
    %87 = vmatpush1.msra.mxu0 0.0
    %88 = vmatprep.subr.mxu0 0.0
    %89 = vmatpush1.msra.mxu0 0.0
    %90 = vmatprep.subr.mxu0 0.0
    %91 = vmatpush1.msra.mxu0 0.0
    %92 = vmatprep.subr.mxu0 0.0
    %93 = vmatpush1.msra.mxu0 0.0
    %94 = vmatprep.subr.mxu0 0.0
    %95 = vmatpush1.msra.mxu0 0.0
    %96 = vmatprep.subr.mxu0 0.0
    %97 = vmatpush1.msra.mxu0 0.0
    %98 = vmatprep.subr.mxu0 0.0
    %99 = vmatpush1.msra.mxu0 0.0
    %100 = vmatprep.subr.mxu0 0.0
    %101 = vmatpush1.msra.mxu0 0.0
    %102 = vmatprep.subr.mxu0 0.0
    %103 = vmatpush1.msra.mxu0 0.0
    %104 = vmatprep.subr.mxu0 0.0
    %105 = vmatpush1.msra.mxu0 0.0
    %106 = vmatprep.subr.mxu0 0.0
    %107 = vmatpush1.msra.mxu0 0.0
    %108 = vmatprep.subr.mxu0 0.0
    %109 = vmatpush1.msra.mxu0 0.0
    %110 = vmatprep.subr.mxu0 0.0
    %111 = vmatpush1.msra.mxu0 0.0
    %112 = vmatprep.subr.mxu0 0.0
    %113 = vmatpush1.msra.mxu0 0.0
    %114 = vmatprep.subr.mxu0 0.0
    %115 = vmatpush1.msra.mxu0 0.0
    %116 = vmatprep.subr.mxu0 0.0
    %117 = vmatpush1.msra.mxu0 0.0
    %118 = vmatprep.mubr.f32.mxu0 0.0
    %119 = vmatmul.mubr.f32.gmra.mrb[0].mxu0 %v48
    %v120 = vpop.f32.mrb[0].mxu0
    %v121 = vadd.f32 %v45, %v120
    %v122 = vpop.f32.mrb[0].mxu0
    %123 = vdwg.mxu0
    %v125 = vrot.slane %v36, 4
    %v127 = vadd.f32 %v35, %v125
    %v128 = vld [vmem:[%s34 + $0x20] sm:$0x1]
    %v129 = vlaneseq
    %v130 = vshrl.u32 %v129, 7
    %v131 = vsub.s32 0, %v130
    %v132 = vrot.slane %v128, %v131
    %v134 = vrot.slane %v127, 4
    %v135 = vsel %vm50, %v134, 0
    %137 = vmatprep.subr.mxu0 0.0
    %138 = vmatpush1.msra.mxu0 %v135
    %139 = vmatprep.subr.mxu0 0.0
    %140 = vmatpush1.msra.mxu0 0.0
    %141 = vmatprep.subr.mxu0 0.0
    %142 = vmatpush1.msra.mxu0 0.0
    %143 = vmatprep.subr.mxu0 0.0
    %144 = vmatpush1.msra.mxu0 0.0
    %145 = vmatprep.subr.mxu0 0.0
    %146 = vmatpush1.msra.mxu0 0.0
    %147 = vmatprep.subr.mxu0 0.0
    %148 = vmatpush1.msra.mxu0 0.0
    %149 = vmatprep.subr.mxu0 0.0
    %150 = vmatpush1.msra.mxu0 0.0
    %151 = vmatprep.subr.mxu0 0.0
    %152 = vmatpush1.msra.mxu0 0.0
    %153 = vmatprep.subr.mxu0 0.0
    %154 = vmatpush1.msra.mxu0 0.0
    %155 = vmatprep.subr.mxu0 0.0
    %156 = vmatpush1.msra.mxu0 0.0
    %157 = vmatprep.subr.mxu0 0.0
    %158 = vmatpush1.msra.mxu0 0.0
    %159 = vmatprep.subr.mxu0 0.0
    %160 = vmatpush1.msra.mxu0 0.0
    %161 = vmatprep.subr.mxu0 0.0
    %162 = vmatpush1.msra.mxu0 0.0
    %163 = vmatprep.subr.mxu0 0.0
    %164 = vmatpush1.msra.mxu0 0.0
    %165 = vmatprep.subr.mxu0 0.0
    %166 = vmatpush1.msra.mxu0 0.0
    %167 = vmatprep.subr.mxu0 0.0
    %168 = vmatpush1.msra.mxu0 0.0
    %169 = vmatprep.subr.mxu0 0.0
    %170 = vmatpush1.msra.mxu0 0.0
    %171 = vmatprep.subr.mxu0 0.0
    %172 = vmatpush1.msra.mxu0 0.0
    %173 = vmatprep.subr.mxu0 0.0
    %174 = vmatpush1.msra.mxu0 0.0
    %175 = vmatprep.subr.mxu0 0.0
    %176 = vmatpush1.msra.mxu0 0.0
    %177 = vmatprep.subr.mxu0 0.0
    %178 = vmatpush1.msra.mxu0 0.0
    %179 = vmatprep.subr.mxu0 0.0
    %180 = vmatpush1.msra.mxu0 0.0
    %181 = vmatprep.subr.mxu0 0.0
    %182 = vmatpush1.msra.mxu0 0.0
    %183 = vmatprep.subr.mxu0 0.0
    %184 = vmatpush1.msra.mxu0 0.0
    %185 = vmatprep.subr.mxu0 0.0
    %186 = vmatpush1.msra.mxu0 0.0
    %187 = vmatprep.subr.mxu0 0.0
    %188 = vmatpush1.msra.mxu0 0.0
    %189 = vmatprep.subr.mxu0 0.0
    %190 = vmatpush1.msra.mxu0 0.0
    %191 = vmatprep.subr.mxu0 0.0
    %192 = vmatpush1.msra.mxu0 0.0
    %193 = vmatprep.subr.mxu0 0.0
    %194 = vmatpush1.msra.mxu0 0.0
    %195 = vmatprep.subr.mxu0 0.0
    %196 = vmatpush1.msra.mxu0 0.0
    %197 = vmatprep.subr.mxu0 0.0
    %198 = vmatpush1.msra.mxu0 0.0
    %199 = vmatprep.subr.mxu0 0.0
    %200 = vmatpush1.msra.mxu0 0.0
    %201 = vmatprep.mubr.f32.mxu0 0.0
    %202 = vmatmul.mubr.f32.gmra.mrb[0].mxu0 %v48
    %v203 = vpop.f32.mrb[0].mxu0
    %v204 = vadd.f32 %v132, %v203
    %v205 = vpop.f32.mrb[0].mxu0
    %206 = vdwg.mxu0
    %v208 = vsel %vm46, 0.0, 0
    %v211 = vsel %vm50, %v38, 0
    %213 = vmatprep.subr.mxu0 0.0
    %214 = vmatpush1.msra.mxu0 %v211
    %215 = vmatprep.subr.mxu0 0.0
    %216 = vmatpush1.msra.mxu0 0.0
    %217 = vmatprep.subr.mxu0 0.0
    %218 = vmatpush1.msra.mxu0 0.0
    %219 = vmatprep.subr.mxu0 0.0
    %220 = vmatpush1.msra.mxu0 0.0
    %221 = vmatprep.subr.mxu0 0.0
    %222 = vmatpush1.msra.mxu0 0.0
    %223 = vmatprep.subr.mxu0 0.0
    %224 = vmatpush1.msra.mxu0 0.0
    %225 = vmatprep.subr.mxu0 0.0
    %226 = vmatpush1.msra.mxu0 0.0
    %227 = vmatprep.subr.mxu0 0.0
    %228 = vmatpush1.msra.mxu0 0.0
    %229 = vmatprep.subr.mxu0 0.0
    %230 = vmatpush1.msra.mxu0 0.0
    %231 = vmatprep.subr.mxu0 0.0
    %232 = vmatpush1.msra.mxu0 0.0
    %233 = vmatprep.subr.mxu0 0.0
    %234 = vmatpush1.msra.mxu0 0.0
    %235 = vmatprep.subr.mxu0 0.0
    %236 = vmatpush1.msra.mxu0 0.0
    %237 = vmatprep.subr.mxu0 0.0
    %238 = vmatpush1.msra.mxu0 0.0
    %239 = vmatprep.subr.mxu0 0.0
    %240 = vmatpush1.msra.mxu0 0.0
    %241 = vmatprep.subr.mxu0 0.0
    %242 = vmatpush1.msra.mxu0 0.0
    %243 = vmatprep.subr.mxu0 0.0
    %244 = vmatpush1.msra.mxu0 0.0
    %245 = vmatprep.subr.mxu0 0.0
    %246 = vmatpush1.msra.mxu0 0.0
    %247 = vmatprep.subr.mxu0 0.0
    %248 = vmatpush1.msra.mxu0 0.0
    %249 = vmatprep.subr.mxu0 0.0
    %250 = vmatpush1.msra.mxu0 0.0
    %251 = vmatprep.subr.mxu0 0.0
    %252 = vmatpush1.msra.mxu0 0.0
    %253 = vmatprep.subr.mxu0 0.0
    %254 = vmatpush1.msra.mxu0 0.0
    %255 = vmatprep.subr.mxu0 0.0
    %256 = vmatpush1.msra.mxu0 0.0
    %257 = vmatprep.subr.mxu0 0.0
    %258 = vmatpush1.msra.mxu0 0.0
    %259 = vmatprep.subr.mxu0 0.0
    %260 = vmatpush1.msra.mxu0 0.0
    %261 = vmatprep.subr.mxu0 0.0
    %262 = vmatpush1.msra.mxu0 0.0
    %263 = vmatprep.subr.mxu0 0.0
    %264 = vmatpush1.msra.mxu0 0.0
    %265 = vmatprep.subr.mxu0 0.0
    %266 = vmatpush1.msra.mxu0 0.0
    %267 = vmatprep.subr.mxu0 0.0
    %268 = vmatpush1.msra.mxu0 0.0
    %269 = vmatprep.subr.mxu0 0.0
    %270 = vmatpush1.msra.mxu0 0.0
    %271 = vmatprep.subr.mxu0 0.0
    %272 = vmatpush1.msra.mxu0 0.0
    %273 = vmatprep.subr.mxu0 0.0
    %274 = vmatpush1.msra.mxu0 0.0
    %275 = vmatprep.subr.mxu0 0.0
    %276 = vmatpush1.msra.mxu0 0.0
    %277 = vmatprep.mubr.f32.mxu0 0.0
    %278 = vmatmul.mubr.f32.gmra.mrb[0].mxu0 %v208
    %v279 = vpop.f32.mrb[0].mxu0
    %v280 = vadd.f32 0.0, %v279
    %v281 = vpop.f32.mrb[0].mxu0
    %282 = vdwg.mxu0
    %v283 = vadd.f32 %v121, %v280
    %v284 = vxor.u32 %v283, 2147483648
    %v285 = vmul.f32 %v284, 1.442695
    %v286 = vpow.pop %v285
    %v287 = vadd.f32 %v286, 1.0
    %v288 = vrcp.pop %v287
    %v289 = vmul.f32 1.0, %v288
    %vm290 = vcmask 64512
    %v292 = vsel %vm290, %v289, 0
    %294 = vmatprep.subr.mxu0 0.0
    %295 = vmatpush1.msra.mxu0 %v13
    %296 = vmatprep.subr.mxu0 0.0
    %297 = vmatpush1.msra.mxu0 0.0
    %298 = vmatprep.subr.mxu0 0.0
    %299 = vmatpush1.msra.mxu0 0.0
    %300 = vmatprep.subr.mxu0 0.0
    %301 = vmatpush1.msra.mxu0 0.0
    %302 = vmatprep.subr.mxu0 0.0
    %303 = vmatpush1.msra.mxu0 0.0
    %304 = vmatprep.subr.mxu0 0.0
    %305 = vmatpush1.msra.mxu0 0.0
    %306 = vmatprep.subr.mxu0 0.0
    %307 = vmatpush1.msra.mxu0 0.0
    %308 = vmatprep.subr.mxu0 0.0
    %309 = vmatpush1.msra.mxu0 0.0
    %310 = vmatprep.subr.mxu0 0.0
    %311 = vmatpush1.msra.mxu0 0.0
    %312 = vmatprep.subr.mxu0 0.0
    %313 = vmatpush1.msra.mxu0 0.0
    %314 = vmatprep.subr.mxu0 0.0
    %315 = vmatpush1.msra.mxu0 0.0
    %316 = vmatprep.subr.mxu0 0.0
    %317 = vmatpush1.msra.mxu0 0.0
    %318 = vmatprep.subr.mxu0 0.0
    %319 = vmatpush1.msra.mxu0 0.0
    %320 = vmatprep.subr.mxu0 0.0
    %321 = vmatpush1.msra.mxu0 0.0
    %322 = vmatprep.subr.mxu0 0.0
    %323 = vmatpush1.msra.mxu0 0.0
    %324 = vmatprep.subr.mxu0 0.0
    %325 = vmatpush1.msra.mxu0 0.0
    %326 = vmatprep.subr.mxu0 0.0
    %327 = vmatpush1.msra.mxu0 0.0
    %328 = vmatprep.subr.mxu0 0.0
    %329 = vmatpush1.msra.mxu0 0.0
    %330 = vmatprep.subr.mxu0 0.0
    %331 = vmatpush1.msra.mxu0 0.0
    %332 = vmatprep.subr.mxu0 0.0
    %333 = vmatpush1.msra.mxu0 0.0
    %334 = vmatprep.subr.mxu0 0.0
    %335 = vmatpush1.msra.mxu0 0.0
    %336 = vmatprep.subr.mxu0 0.0
    %337 = vmatpush1.msra.mxu0 0.0
    %338 = vmatprep.subr.mxu0 0.0
    %339 = vmatpush1.msra.mxu0 0.0
    %340 = vmatprep.subr.mxu0 0.0
    %341 = vmatpush1.msra.mxu0 0.0
    %342 = vmatprep.subr.mxu0 0.0
    %343 = vmatpush1.msra.mxu0 0.0
    %344 = vmatprep.subr.mxu0 0.0
    %345 = vmatpush1.msra.mxu0 0.0
    %346 = vmatprep.subr.mxu0 0.0
    %347 = vmatpush1.msra.mxu0 0.0
    %348 = vmatprep.subr.mxu0 0.0
    %349 = vmatpush1.msra.mxu0 0.0
    %350 = vmatprep.subr.mxu0 0.0
    %351 = vmatpush1.msra.mxu0 0.0
    %352 = vmatprep.subr.mxu0 0.0
    %353 = vmatpush1.msra.mxu0 0.0
    %354 = vmatprep.subr.mxu0 0.0
    %355 = vmatpush1.msra.mxu0 0.0
    %356 = vmatprep.subr.mxu0 0.0
    %357 = vmatpush1.msra.mxu0 0.0
    %358 = vmatprep.mubr.f32.mxu0 0.0
    %359 = vmatmul.mubr.f32.gmra.mrb[0].mxu0 %v292
    %v360 = vpop.f32.mrb[0].mxu0
    %v361 = vadd.f32 %v14, %v360
    %v362 = vpop.f32.mrb[0].mxu0
    %363 = vdwg.mxu0
    %v364 = vmax.f32 %v361, 0.0
    %v366 = vsel %vm46, %v364, 0
    %v369 = vsel %vm50, %v16, 0
    %371 = vmatprep.subr.mxu0 0.0
    %372 = vmatpush1.msra.mxu0 %v369
    %373 = vmatprep.subr.mxu0 0.0
    %374 = vmatpush1.msra.mxu0 0.0
    %375 = vmatprep.subr.mxu0 0.0
    %376 = vmatpush1.msra.mxu0 0.0
    %377 = vmatprep.subr.mxu0 0.0
    %378 = vmatpush1.msra.mxu0 0.0
    %379 = vmatprep.subr.mxu0 0.0
    %380 = vmatpush1.msra.mxu0 0.0
    %381 = vmatprep.subr.mxu0 0.0
    %382 = vmatpush1.msra.mxu0 0.0
    %383 = vmatprep.subr.mxu0 0.0
    %384 = vmatpush1.msra.mxu0 0.0
    %385 = vmatprep.subr.mxu0 0.0
    %386 = vmatpush1.msra.mxu0 0.0
    %387 = vmatprep.subr.mxu0 0.0
    %388 = vmatpush1.msra.mxu0 0.0
    %389 = vmatprep.subr.mxu0 0.0
    %390 = vmatpush1.msra.mxu0 0.0
    %391 = vmatprep.subr.mxu0 0.0
    %392 = vmatpush1.msra.mxu0 0.0
    %393 = vmatprep.subr.mxu0 0.0
    %394 = vmatpush1.msra.mxu0 0.0
    %395 = vmatprep.subr.mxu0 0.0
    %396 = vmatpush1.msra.mxu0 0.0
    %397 = vmatprep.subr.mxu0 0.0
    %398 = vmatpush1.msra.mxu0 0.0
    %399 = vmatprep.subr.mxu0 0.0
    %400 = vmatpush1.msra.mxu0 0.0
    %401 = vmatprep.subr.mxu0 0.0
    %402 = vmatpush1.msra.mxu0 0.0
    %403 = vmatprep.subr.mxu0 0.0
    %404 = vmatpush1.msra.mxu0 0.0
    %405 = vmatprep.subr.mxu0 0.0
    %406 = vmatpush1.msra.mxu0 0.0
    %407 = vmatprep.subr.mxu0 0.0
    %408 = vmatpush1.msra.mxu0 0.0
    %409 = vmatprep.subr.mxu0 0.0
    %410 = vmatpush1.msra.mxu0 0.0
    %411 = vmatprep.subr.mxu0 0.0
    %412 = vmatpush1.msra.mxu0 0.0
    %413 = vmatprep.subr.mxu0 0.0
    %414 = vmatpush1.msra.mxu0 0.0
    %415 = vmatprep.subr.mxu0 0.0
    %416 = vmatpush1.msra.mxu0 0.0
    %417 = vmatprep.subr.mxu0 0.0
    %418 = vmatpush1.msra.mxu0 0.0
    %419 = vmatprep.subr.mxu0 0.0
    %420 = vmatpush1.msra.mxu0 0.0
    %421 = vmatprep.subr.mxu0 0.0
    %422 = vmatpush1.msra.mxu0 0.0
    %423 = vmatprep.subr.mxu0 0.0
    %424 = vmatpush1.msra.mxu0 0.0
    %425 = vmatprep.subr.mxu0 0.0
    %426 = vmatpush1.msra.mxu0 0.0
    %427 = vmatprep.subr.mxu0 0.0
    %428 = vmatpush1.msra.mxu0 0.0
    %429 = vmatprep.subr.mxu0 0.0
    %430 = vmatpush1.msra.mxu0 0.0
    %431 = vmatprep.subr.mxu0 0.0
    %432 = vmatpush1.msra.mxu0 0.0
    %433 = vmatprep.subr.mxu0 0.0
    %434 = vmatpush1.msra.mxu0 0.0
    %435 = vmatprep.mubr.f32.mxu0 0.0
    %436 = vmatmul.mubr.f32.gmra.mrb[0].mxu0 %v366
    %v437 = vpop.f32.mrb[0].mxu0
    %v438 = vadd.f32 %v17, %v437
    %v439 = vpop.f32.mrb[0].mxu0
    %440 = vdwg.mxu0
    %v441 = vmax.f32 %v438, 0.0
    %v443 = vsel %vm46, %v441, 0
    %v446 = vsel %vm50, %v19, 0
    %448 = vmatprep.subr.mxu0 0.0
    %449 = vmatpush1.msra.mxu0 %v446
    %450 = vmatprep.subr.mxu0 0.0
    %451 = vmatpush1.msra.mxu0 0.0
    %452 = vmatprep.subr.mxu0 0.0
    %453 = vmatpush1.msra.mxu0 0.0
    %454 = vmatprep.subr.mxu0 0.0
    %455 = vmatpush1.msra.mxu0 0.0
    %456 = vmatprep.subr.mxu0 0.0
    %457 = vmatpush1.msra.mxu0 0.0
    %458 = vmatprep.subr.mxu0 0.0
    %459 = vmatpush1.msra.mxu0 0.0
    %460 = vmatprep.subr.mxu0 0.0
    %461 = vmatpush1.msra.mxu0 0.0
    %462 = vmatprep.subr.mxu0 0.0
    %463 = vmatpush1.msra.mxu0 0.0
    %464 = vmatprep.subr.mxu0 0.0
    %465 = vmatpush1.msra.mxu0 0.0
    %466 = vmatprep.subr.mxu0 0.0
    %467 = vmatpush1.msra.mxu0 0.0
    %468 = vmatprep.subr.mxu0 0.0
    %469 = vmatpush1.msra.mxu0 0.0
    %470 = vmatprep.subr.mxu0 0.0
    %471 = vmatpush1.msra.mxu0 0.0
    %472 = vmatprep.subr.mxu0 0.0
    %473 = vmatpush1.msra.mxu0 0.0
    %474 = vmatprep.subr.mxu0 0.0
    %475 = vmatpush1.msra.mxu0 0.0
    %476 = vmatprep.subr.mxu0 0.0
    %477 = vmatpush1.msra.mxu0 0.0
    %478 = vmatprep.subr.mxu0 0.0
    %479 = vmatpush1.msra.mxu0 0.0
    %480 = vmatprep.subr.mxu0 0.0
    %481 = vmatpush1.msra.mxu0 0.0
    %482 = vmatprep.subr.mxu0 0.0
    %483 = vmatpush1.msra.mxu0 0.0
    %484 = vmatprep.subr.mxu0 0.0
    %485 = vmatpush1.msra.mxu0 0.0
    %486 = vmatprep.subr.mxu0 0.0
    %487 = vmatpush1.msra.mxu0 0.0
    %488 = vmatprep.subr.mxu0 0.0
    %489 = vmatpush1.msra.mxu0 0.0
    %490 = vmatprep.subr.mxu0 0.0
    %491 = vmatpush1.msra.mxu0 0.0
    %492 = vmatprep.subr.mxu0 0.0
    %493 = vmatpush1.msra.mxu0 0.0
    %494 = vmatprep.subr.mxu0 0.0
    %495 = vmatpush1.msra.mxu0 0.0
    %496 = vmatprep.subr.mxu0 0.0
    %497 = vmatpush1.msra.mxu0 0.0
    %498 = vmatprep.subr.mxu0 0.0
    %499 = vmatpush1.msra.mxu0 0.0
    %500 = vmatprep.subr.mxu0 0.0
    %501 = vmatpush1.msra.mxu0 0.0
    %502 = vmatprep.subr.mxu0 0.0
    %503 = vmatpush1.msra.mxu0 0.0
    %504 = vmatprep.subr.mxu0 0.0
    %505 = vmatpush1.msra.mxu0 0.0
    %506 = vmatprep.subr.mxu0 0.0
    %507 = vmatpush1.msra.mxu0 0.0
    %508 = vmatprep.subr.mxu0 0.0
    %509 = vmatpush1.msra.mxu0 0.0
    %510 = vmatprep.subr.mxu0 0.0
    %511 = vmatpush1.msra.mxu0 0.0
    %512 = vmatprep.mubr.f32.mxu0 0.0
    %513 = vmatmul.mubr.f32.gmra.mrb[0].mxu0 %v443
    %v514 = vpop.f32.mrb[0].mxu0
    %v515 = vadd.f32 %v20, %v514
    %v516 = vpop.f32.mrb[0].mxu0
    %517 = vdwg.mxu0
    %v518 = vmax.f32 %v515, 0.0
    %v520 = vsel %vm46, %v518, 0
    %v523 = vsel %vm50, %v22, 0
    %525 = vmatprep.subr.mxu0 0.0
    %526 = vmatpush1.msra.mxu0 %v523
    %527 = vmatprep.subr.mxu0 0.0
    %528 = vmatpush1.msra.mxu0 0.0
    %529 = vmatprep.subr.mxu0 0.0
    %530 = vmatpush1.msra.mxu0 0.0
    %531 = vmatprep.subr.mxu0 0.0
    %532 = vmatpush1.msra.mxu0 0.0
    %533 = vmatprep.subr.mxu0 0.0
    %534 = vmatpush1.msra.mxu0 0.0
    %535 = vmatprep.subr.mxu0 0.0
    %536 = vmatpush1.msra.mxu0 0.0
    %537 = vmatprep.subr.mxu0 0.0
    %538 = vmatpush1.msra.mxu0 0.0
    %539 = vmatprep.subr.mxu0 0.0
    %540 = vmatpush1.msra.mxu0 0.0
    %541 = vmatprep.subr.mxu0 0.0
    %542 = vmatpush1.msra.mxu0 0.0
    %543 = vmatprep.subr.mxu0 0.0
    %544 = vmatpush1.msra.mxu0 0.0
    %545 = vmatprep.subr.mxu0 0.0
    %546 = vmatpush1.msra.mxu0 0.0
    %547 = vmatprep.subr.mxu0 0.0
    %548 = vmatpush1.msra.mxu0 0.0
    %549 = vmatprep.subr.mxu0 0.0
    %550 = vmatpush1.msra.mxu0 0.0
    %551 = vmatprep.subr.mxu0 0.0
    %552 = vmatpush1.msra.mxu0 0.0
    %553 = vmatprep.subr.mxu0 0.0
    %554 = vmatpush1.msra.mxu0 0.0
    %555 = vmatprep.subr.mxu0 0.0
    %556 = vmatpush1.msra.mxu0 0.0
    %557 = vmatprep.subr.mxu0 0.0
    %558 = vmatpush1.msra.mxu0 0.0
    %559 = vmatprep.subr.mxu0 0.0
    %560 = vmatpush1.msra.mxu0 0.0
    %561 = vmatprep.subr.mxu0 0.0
    %562 = vmatpush1.msra.mxu0 0.0
    %563 = vmatprep.subr.mxu0 0.0
    %564 = vmatpush1.msra.mxu0 0.0
    %565 = vmatprep.subr.mxu0 0.0
    %566 = vmatpush1.msra.mxu0 0.0
    %567 = vmatprep.subr.mxu0 0.0
    %568 = vmatpush1.msra.mxu0 0.0
    %569 = vmatprep.subr.mxu0 0.0
    %570 = vmatpush1.msra.mxu0 0.0
    %571 = vmatprep.subr.mxu0 0.0
    %572 = vmatpush1.msra.mxu0 0.0
    %573 = vmatprep.subr.mxu0 0.0
    %574 = vmatpush1.msra.mxu0 0.0
    %575 = vmatprep.subr.mxu0 0.0
    %576 = vmatpush1.msra.mxu0 0.0
    %577 = vmatprep.subr.mxu0 0.0
    %578 = vmatpush1.msra.mxu0 0.0
    %579 = vmatprep.subr.mxu0 0.0
    %580 = vmatpush1.msra.mxu0 0.0
    %581 = vmatprep.subr.mxu0 0.0
    %582 = vmatpush1.msra.mxu0 0.0
    %583 = vmatprep.subr.mxu0 0.0
    %584 = vmatpush1.msra.mxu0 0.0
    %585 = vmatprep.subr.mxu0 0.0
    %586 = vmatpush1.msra.mxu0 0.0
    %587 = vmatprep.subr.mxu0 0.0
    %588 = vmatpush1.msra.mxu0 0.0
    %589 = vmatprep.mubr.f32.mxu0 0.0
    %590 = vmatmul.mubr.f32.gmra.mrb[0].mxu0 %v520
    %v591 = vpop.f32.mrb[0].mxu0
    %v592 = vadd.f32 %v23, %v591
    %v593 = vpop.f32.mrb[0].mxu0
    %594 = vdwg.mxu0
    %v595 = vmax.f32 %v592, 0.0
    %v596 = vadd.f32 %v595, %v39
    %598 = vrot.lane.b32.xlu0 %v280, 120
    %v599 = vpop.permute.xlu0 %598
    %v601 = vadd.f32 %v204, %v599
    %v603 = vsel %vm46, %v595, 0
    %v605 = vsel %vm50, %v36, 0
    %607 = vmatprep.subr.mxu0 0.0
    %608 = vmatpush1.msra.mxu0 %v605
    %609 = vmatprep.subr.mxu0 0.0
    %610 = vmatpush1.msra.mxu0 0.0
    %611 = vmatprep.subr.mxu0 0.0
    %612 = vmatpush1.msra.mxu0 0.0
    %613 = vmatprep.subr.mxu0 0.0
    %614 = vmatpush1.msra.mxu0 0.0
    %615 = vmatprep.subr.mxu0 0.0
    %616 = vmatpush1.msra.mxu0 0.0
    %617 = vmatprep.subr.mxu0 0.0
    %618 = vmatpush1.msra.mxu0 0.0
    %619 = vmatprep.subr.mxu0 0.0
    %620 = vmatpush1.msra.mxu0 0.0
    %621 = vmatprep.subr.mxu0 0.0
    %622 = vmatpush1.msra.mxu0 0.0
    %623 = vmatprep.subr.mxu0 0.0
    %624 = vmatpush1.msra.mxu0 0.0
    %625 = vmatprep.subr.mxu0 0.0
    %626 = vmatpush1.msra.mxu0 0.0
    %627 = vmatprep.subr.mxu0 0.0
    %628 = vmatpush1.msra.mxu0 0.0
    %629 = vmatprep.subr.mxu0 0.0
    %630 = vmatpush1.msra.mxu0 0.0
    %631 = vmatprep.subr.mxu0 0.0
    %632 = vmatpush1.msra.mxu0 0.0
    %633 = vmatprep.subr.mxu0 0.0
    %634 = vmatpush1.msra.mxu0 0.0
    %635 = vmatprep.subr.mxu0 0.0
    %636 = vmatpush1.msra.mxu0 0.0
    %637 = vmatprep.subr.mxu0 0.0
    %638 = vmatpush1.msra.mxu0 0.0
    %639 = vmatprep.subr.mxu0 0.0
    %640 = vmatpush1.msra.mxu0 0.0
    %641 = vmatprep.subr.mxu0 0.0
    %642 = vmatpush1.msra.mxu0 0.0
    %643 = vmatprep.subr.mxu0 0.0
    %644 = vmatpush1.msra.mxu0 0.0
    %645 = vmatprep.subr.mxu0 0.0
    %646 = vmatpush1.msra.mxu0 0.0
    %647 = vmatprep.subr.mxu0 0.0
    %648 = vmatpush1.msra.mxu0 0.0
    %649 = vmatprep.subr.mxu0 0.0
    %650 = vmatpush1.msra.mxu0 0.0
    %651 = vmatprep.subr.mxu0 0.0
    %652 = vmatpush1.msra.mxu0 0.0
    %653 = vmatprep.subr.mxu0 0.0
    %654 = vmatpush1.msra.mxu0 0.0
    %655 = vmatprep.subr.mxu0 0.0
    %656 = vmatpush1.msra.mxu0 0.0
    %657 = vmatprep.subr.mxu0 0.0
    %658 = vmatpush1.msra.mxu0 0.0
    %659 = vmatprep.subr.mxu0 0.0
    %660 = vmatpush1.msra.mxu0 0.0
    %661 = vmatprep.subr.mxu0 0.0
    %662 = vmatpush1.msra.mxu0 0.0
    %663 = vmatprep.subr.mxu0 0.0
    %664 = vmatpush1.msra.mxu0 0.0
    %665 = vmatprep.subr.mxu0 0.0
    %666 = vmatpush1.msra.mxu0 0.0
    %667 = vmatprep.subr.mxu0 0.0
    %668 = vmatpush1.msra.mxu0 0.0
    %669 = vmatprep.subr.mxu0 0.0
    %670 = vmatpush1.msra.mxu0 0.0
    %671 = vmatprep.mubr.f32.mxu0 0.0
    %672 = vmatmul.mubr.f32.gmra.mrb[0].mxu0 %v603
    %v673 = vpop.f32.mrb[0].mxu0
    %v674 = vadd.f32 0.0, %v673
    %v675 = vpop.f32.mrb[0].mxu0
    %676 = vdwg.mxu0
    %v677 = vadd.f32 %v601, %v674
    %v678 = vmax.f32 %v677, 0.0
    %vm679 = vcmask 97280
    %v681 = vsel %vm679, %v678, 0
    %v684 = vsel %vm50, %v26, 0
    %686 = vmatprep.subr.mxu0 0.0
    %687 = vmatpush1.msra.mxu0 %v25
    %688 = vmatprep.subr.mxu0 0.0
    %689 = vmatpush1.msra.mxu0 %v684
    %690 = vmatprep.subr.mxu0 0.0
    %691 = vmatpush1.msra.mxu0 0.0
    %692 = vmatprep.subr.mxu0 0.0
    %693 = vmatpush1.msra.mxu0 0.0
    %694 = vmatprep.subr.mxu0 0.0
    %695 = vmatpush1.msra.mxu0 0.0
    %696 = vmatprep.subr.mxu0 0.0
    %697 = vmatpush1.msra.mxu0 0.0
    %698 = vmatprep.subr.mxu0 0.0
    %699 = vmatpush1.msra.mxu0 0.0
    %700 = vmatprep.subr.mxu0 0.0
    %701 = vmatpush1.msra.mxu0 0.0
    %702 = vmatprep.subr.mxu0 0.0
    %703 = vmatpush1.msra.mxu0 0.0
    %704 = vmatprep.subr.mxu0 0.0
    %705 = vmatpush1.msra.mxu0 0.0
    %706 = vmatprep.subr.mxu0 0.0
    %707 = vmatpush1.msra.mxu0 0.0
    %708 = vmatprep.subr.mxu0 0.0
    %709 = vmatpush1.msra.mxu0 0.0
    %710 = vmatprep.subr.mxu0 0.0
    %711 = vmatpush1.msra.mxu0 0.0
    %712 = vmatprep.subr.mxu0 0.0
    %713 = vmatpush1.msra.mxu0 0.0
    %714 = vmatprep.subr.mxu0 0.0
    %715 = vmatpush1.msra.mxu0 0.0
    %716 = vmatprep.subr.mxu0 0.0
    %717 = vmatpush1.msra.mxu0 0.0
    %718 = vmatprep.subr.mxu0 0.0
    %719 = vmatpush1.msra.mxu0 0.0
    %720 = vmatprep.subr.mxu0 0.0
    %721 = vmatpush1.msra.mxu0 0.0
    %722 = vmatprep.subr.mxu0 0.0
    %723 = vmatpush1.msra.mxu0 0.0
    %724 = vmatprep.subr.mxu0 0.0
    %725 = vmatpush1.msra.mxu0 0.0
    %726 = vmatprep.subr.mxu0 0.0
    %727 = vmatpush1.msra.mxu0 0.0
    %728 = vmatprep.subr.mxu0 0.0
    %729 = vmatpush1.msra.mxu0 0.0
    %730 = vmatprep.subr.mxu0 0.0
    %731 = vmatpush1.msra.mxu0 0.0
    %732 = vmatprep.subr.mxu0 0.0
    %733 = vmatpush1.msra.mxu0 0.0
    %734 = vmatprep.subr.mxu0 0.0
    %735 = vmatpush1.msra.mxu0 0.0
    %736 = vmatprep.subr.mxu0 0.0
    %737 = vmatpush1.msra.mxu0 0.0
    %738 = vmatprep.subr.mxu0 0.0
    %739 = vmatpush1.msra.mxu0 0.0
    %740 = vmatprep.subr.mxu0 0.0
    %741 = vmatpush1.msra.mxu0 0.0
    %742 = vmatprep.subr.mxu0 0.0
    %743 = vmatpush1.msra.mxu0 0.0
    %744 = vmatprep.subr.mxu0 0.0
    %745 = vmatpush1.msra.mxu0 0.0
    %746 = vmatprep.subr.mxu0 0.0
    %747 = vmatpush1.msra.mxu0 0.0
    %748 = vmatprep.subr.mxu0 0.0
    %749 = vmatpush1.msra.mxu0 0.0
    %750 = vmatprep.mubr.f32.mxu0 0.0
    %751 = vmatmul.mubr.f32.gmra.mrb[0].mxu0 %v681
    %v752 = vpop.f32.mrb[0].mxu0
    %v753 = vadd.f32 %v27, %v752
    %v754 = vpop.f32.mrb[0].mxu0
    %755 = vdwg.mxu0
    %v756 = vmax.f32 %v753, 0.0
    %v758 = vsel %vm46, %v756, 0
    %v761 = vsel %vm50, %v29, 0
    %763 = vmatprep.subr.mxu0 0.0
    %764 = vmatpush1.msra.mxu0 %v761
    %765 = vmatprep.subr.mxu0 0.0
    %766 = vmatpush1.msra.mxu0 0.0
    %767 = vmatprep.subr.mxu0 0.0
    %768 = vmatpush1.msra.mxu0 0.0
    %769 = vmatprep.subr.mxu0 0.0
    %770 = vmatpush1.msra.mxu0 0.0
    %771 = vmatprep.subr.mxu0 0.0
    %772 = vmatpush1.msra.mxu0 0.0
    %773 = vmatprep.subr.mxu0 0.0
    %774 = vmatpush1.msra.mxu0 0.0
    %775 = vmatprep.subr.mxu0 0.0
    %776 = vmatpush1.msra.mxu0 0.0
    %777 = vmatprep.subr.mxu0 0.0
    %778 = vmatpush1.msra.mxu0 0.0
    %779 = vmatprep.subr.mxu0 0.0
    %780 = vmatpush1.msra.mxu0 0.0
    %781 = vmatprep.subr.mxu0 0.0
    %782 = vmatpush1.msra.mxu0 0.0
    %783 = vmatprep.subr.mxu0 0.0
    %784 = vmatpush1.msra.mxu0 0.0
    %785 = vmatprep.subr.mxu0 0.0
    %786 = vmatpush1.msra.mxu0 0.0
    %787 = vmatprep.subr.mxu0 0.0
    %788 = vmatpush1.msra.mxu0 0.0
    %789 = vmatprep.subr.mxu0 0.0
    %790 = vmatpush1.msra.mxu0 0.0
    %791 = vmatprep.subr.mxu0 0.0
    %792 = vmatpush1.msra.mxu0 0.0
    %793 = vmatprep.subr.mxu0 0.0
    %794 = vmatpush1.msra.mxu0 0.0
    %795 = vmatprep.subr.mxu0 0.0
    %796 = vmatpush1.msra.mxu0 0.0
    %797 = vmatprep.subr.mxu0 0.0
    %798 = vmatpush1.msra.mxu0 0.0
    %799 = vmatprep.subr.mxu0 0.0
    %800 = vmatpush1.msra.mxu0 0.0
    %801 = vmatprep.subr.mxu0 0.0
    %802 = vmatpush1.msra.mxu0 0.0
    %803 = vmatprep.subr.mxu0 0.0
    %804 = vmatpush1.msra.mxu0 0.0
    %805 = vmatprep.subr.mxu0 0.0
    %806 = vmatpush1.msra.mxu0 0.0
    %807 = vmatprep.subr.mxu0 0.0
    %808 = vmatpush1.msra.mxu0 0.0
    %809 = vmatprep.subr.mxu0 0.0
    %810 = vmatpush1.msra.mxu0 0.0
    %811 = vmatprep.subr.mxu0 0.0
    %812 = vmatpush1.msra.mxu0 0.0
    %813 = vmatprep.subr.mxu0 0.0
    %814 = vmatpush1.msra.mxu0 0.0
    %815 = vmatprep.subr.mxu0 0.0
    %816 = vmatpush1.msra.mxu0 0.0
    %817 = vmatprep.subr.mxu0 0.0
    %818 = vmatpush1.msra.mxu0 0.0
    %819 = vmatprep.subr.mxu0 0.0
    %820 = vmatpush1.msra.mxu0 0.0
    %821 = vmatprep.subr.mxu0 0.0
    %822 = vmatpush1.msra.mxu0 0.0
    %823 = vmatprep.subr.mxu0 0.0
    %824 = vmatpush1.msra.mxu0 0.0
    %825 = vmatprep.subr.mxu0 0.0
    %826 = vmatpush1.msra.mxu0 0.0
    %827 = vmatprep.mubr.f32.mxu0 0.0
    %828 = vmatmul.mubr.f32.gmra.mrb[0].mxu0 %v758
    %v829 = vpop.f32.mrb[0].mxu0
    %v830 = vadd.f32 %v30, %v829
    %v831 = vpop.f32.mrb[0].mxu0
    %832 = vdwg.mxu0
    %v833 = vmax.f32 %v830, 0.0
    %v834 = vadd.f32 %v33, 0.0
    %v835 = vadd.f32 %v834, %v596
    %v837 = vsel %vm46, %v833, 0
    %v840 = vsel %vm50, %v32, 0
    %842 = vmatprep.subr.mxu0 0.0
    %843 = vmatpush1.msra.mxu0 %v840
    %844 = vmatprep.subr.mxu0 0.0
    %845 = vmatpush1.msra.mxu0 0.0
    %846 = vmatprep.subr.mxu0 0.0
    %847 = vmatpush1.msra.mxu0 0.0
    %848 = vmatprep.subr.mxu0 0.0
    %849 = vmatpush1.msra.mxu0 0.0
    %850 = vmatprep.subr.mxu0 0.0
    %851 = vmatpush1.msra.mxu0 0.0
    %852 = vmatprep.subr.mxu0 0.0
    %853 = vmatpush1.msra.mxu0 0.0
    %854 = vmatprep.subr.mxu0 0.0
    %855 = vmatpush1.msra.mxu0 0.0
    %856 = vmatprep.subr.mxu0 0.0
    %857 = vmatpush1.msra.mxu0 0.0
    %858 = vmatprep.subr.mxu0 0.0
    %859 = vmatpush1.msra.mxu0 0.0
    %860 = vmatprep.subr.mxu0 0.0
    %861 = vmatpush1.msra.mxu0 0.0
    %862 = vmatprep.subr.mxu0 0.0
    %863 = vmatpush1.msra.mxu0 0.0
    %864 = vmatprep.subr.mxu0 0.0
    %865 = vmatpush1.msra.mxu0 0.0
    %866 = vmatprep.subr.mxu0 0.0
    %867 = vmatpush1.msra.mxu0 0.0
    %868 = vmatprep.subr.mxu0 0.0
    %869 = vmatpush1.msra.mxu0 0.0
    %870 = vmatprep.subr.mxu0 0.0
    %871 = vmatpush1.msra.mxu0 0.0
    %872 = vmatprep.subr.mxu0 0.0
    %873 = vmatpush1.msra.mxu0 0.0
    %874 = vmatprep.subr.mxu0 0.0
    %875 = vmatpush1.msra.mxu0 0.0
    %876 = vmatprep.subr.mxu0 0.0
    %877 = vmatpush1.msra.mxu0 0.0
    %878 = vmatprep.subr.mxu0 0.0
    %879 = vmatpush1.msra.mxu0 0.0
    %880 = vmatprep.subr.mxu0 0.0
    %881 = vmatpush1.msra.mxu0 0.0
    %882 = vmatprep.subr.mxu0 0.0
    %883 = vmatpush1.msra.mxu0 0.0
    %884 = vmatprep.subr.mxu0 0.0
    %885 = vmatpush1.msra.mxu0 0.0
    %886 = vmatprep.subr.mxu0 0.0
    %887 = vmatpush1.msra.mxu0 0.0
    %888 = vmatprep.subr.mxu0 0.0
    %889 = vmatpush1.msra.mxu0 0.0
    %890 = vmatprep.subr.mxu0 0.0
    %891 = vmatpush1.msra.mxu0 0.0
    %892 = vmatprep.subr.mxu0 0.0
    %893 = vmatpush1.msra.mxu0 0.0
    %894 = vmatprep.subr.mxu0 0.0
    %895 = vmatpush1.msra.mxu0 0.0
    %896 = vmatprep.subr.mxu0 0.0
    %897 = vmatpush1.msra.mxu0 0.0
    %898 = vmatprep.subr.mxu0 0.0
    %899 = vmatpush1.msra.mxu0 0.0
    %900 = vmatprep.subr.mxu0 0.0
    %901 = vmatpush1.msra.mxu0 0.0
    %902 = vmatprep.subr.mxu0 0.0
    %903 = vmatpush1.msra.mxu0 0.0
    %904 = vmatprep.subr.mxu0 0.0
    %905 = vmatpush1.msra.mxu0 0.0
    %906 = vmatprep.mubr.f32.mxu0 0.0
    %907 = vmatmul.mubr.f32.gmra.mrb[0].mxu0 %v837
    %v908 = vpop.f32.mrb[0].mxu0
    %v909 = vadd.f32 %v835, %v908
    %v910 = vpop.f32.mrb[0].mxu0
    %911 = vdwg.mxu0
    %v913 = vsel %vm46, %v909, 0
    %915 = vmatprep.subr.mxu0 0.0
    %916 = vmatpush1.msra.mxu0 %v211
    %917 = vmatprep.subr.mxu0 0.0
    %918 = vmatpush1.msra.mxu0 0.0
    %919 = vmatprep.subr.mxu0 0.0
    %920 = vmatpush1.msra.mxu0 0.0
    %921 = vmatprep.subr.mxu0 0.0
    %922 = vmatpush1.msra.mxu0 0.0
    %923 = vmatprep.subr.mxu0 0.0
    %924 = vmatpush1.msra.mxu0 0.0
    %925 = vmatprep.subr.mxu0 0.0
    %926 = vmatpush1.msra.mxu0 0.0
    %927 = vmatprep.subr.mxu0 0.0
    %928 = vmatpush1.msra.mxu0 0.0
    %929 = vmatprep.subr.mxu0 0.0
    %930 = vmatpush1.msra.mxu0 0.0
    %931 = vmatprep.subr.mxu0 0.0
    %932 = vmatpush1.msra.mxu0 0.0
    %933 = vmatprep.subr.mxu0 0.0
    %934 = vmatpush1.msra.mxu0 0.0
    %935 = vmatprep.subr.mxu0 0.0
    %936 = vmatpush1.msra.mxu0 0.0
    %937 = vmatprep.subr.mxu0 0.0
    %938 = vmatpush1.msra.mxu0 0.0
    %939 = vmatprep.subr.mxu0 0.0
    %940 = vmatpush1.msra.mxu0 0.0
    %941 = vmatprep.subr.mxu0 0.0
    %942 = vmatpush1.msra.mxu0 0.0
    %943 = vmatprep.subr.mxu0 0.0
    %944 = vmatpush1.msra.mxu0 0.0
    %945 = vmatprep.subr.mxu0 0.0
    %946 = vmatpush1.msra.mxu0 0.0
    %947 = vmatprep.subr.mxu0 0.0
    %948 = vmatpush1.msra.mxu0 0.0
    %949 = vmatprep.subr.mxu0 0.0
    %950 = vmatpush1.msra.mxu0 0.0
    %951 = vmatprep.subr.mxu0 0.0
    %952 = vmatpush1.msra.mxu0 0.0
    %953 = vmatprep.subr.mxu0 0.0
    %954 = vmatpush1.msra.mxu0 0.0
    %955 = vmatprep.subr.mxu0 0.0
    %956 = vmatpush1.msra.mxu0 0.0
    %957 = vmatprep.subr.mxu0 0.0
    %958 = vmatpush1.msra.mxu0 0.0
    %959 = vmatprep.subr.mxu0 0.0
    %960 = vmatpush1.msra.mxu0 0.0
    %961 = vmatprep.subr.mxu0 0.0
    %962 = vmatpush1.msra.mxu0 0.0
    %963 = vmatprep.subr.mxu0 0.0
    %964 = vmatpush1.msra.mxu0 0.0
    %965 = vmatprep.subr.mxu0 0.0
    %966 = vmatpush1.msra.mxu0 0.0
    %967 = vmatprep.subr.mxu0 0.0
    %968 = vmatpush1.msra.mxu0 0.0
    %969 = vmatprep.subr.mxu0 0.0
    %970 = vmatpush1.msra.mxu0 0.0
    %971 = vmatprep.subr.mxu0 0.0
    %972 = vmatpush1.msra.mxu0 0.0
    %973 = vmatprep.subr.mxu0 0.0
    %974 = vmatpush1.msra.mxu0 0.0
    %975 = vmatprep.subr.mxu0 0.0
    %976 = vmatpush1.msra.mxu0 0.0
    %977 = vmatprep.subr.mxu0 0.0
    %978 = vmatpush1.msra.mxu0 0.0
    %979 = vmatprep.mubr.f32.mxu0 0.0
    %980 = vmatmul.mubr.f32.gmra.mrb[0].mxu0 %v913
    %v981 = vpop.f32.mrb[0].mxu0
    %v982 = vadd.f32 0.0, %v981
    %v983 = vpop.f32.mrb[0].mxu0
    %984 = vdwg.mxu0
    %v986 = vrot.slane %v982, 7
    %v988 = vadd.f32 %v121, %v986
    %v989 = vxor.u32 %v988, 2147483648
    %v990 = vmul.f32 %v989, 1.442695
    %v991 = vpow.pop %v990
    %v992 = vadd.f32 %v991, 1.0
    %v993 = vrcp.pop %v992
    %v994 = vmul.f32 1.0, %v993
    %v996 = vrot.slane %v994, 1
    %v997 = vsel %vm290, %v996, 0
    %999 = vmatprep.subr.mxu0 0.0
    %1000 = vmatpush1.msra.mxu0 %v13
    %1001 = vmatprep.subr.mxu0 0.0
    %1002 = vmatpush1.msra.mxu0 0.0
    %1003 = vmatprep.subr.mxu0 0.0
    %1004 = vmatpush1.msra.mxu0 0.0
    %1005 = vmatprep.subr.mxu0 0.0
    %1006 = vmatpush1.msra.mxu0 0.0
    %1007 = vmatprep.subr.mxu0 0.0
    %1008 = vmatpush1.msra.mxu0 0.0
    %1009 = vmatprep.subr.mxu0 0.0
    %1010 = vmatpush1.msra.mxu0 0.0
    %1011 = vmatprep.subr.mxu0 0.0
    %1012 = vmatpush1.msra.mxu0 0.0
    %1013 = vmatprep.subr.mxu0 0.0
    %1014 = vmatpush1.msra.mxu0 0.0
    %1015 = vmatprep.subr.mxu0 0.0
    %1016 = vmatpush1.msra.mxu0 0.0
    %1017 = vmatprep.subr.mxu0 0.0
    %1018 = vmatpush1.msra.mxu0 0.0
    %1019 = vmatprep.subr.mxu0 0.0
    %1020 = vmatpush1.msra.mxu0 0.0
    %1021 = vmatprep.subr.mxu0 0.0
    %1022 = vmatpush1.msra.mxu0 0.0
    %1023 = vmatprep.subr.mxu0 0.0
    %1024 = vmatpush1.msra.mxu0 0.0
    %1025 = vmatprep.subr.mxu0 0.0
    %1026 = vmatpush1.msra.mxu0 0.0
    %1027 = vmatprep.subr.mxu0 0.0
    %1028 = vmatpush1.msra.mxu0 0.0
    %1029 = vmatprep.subr.mxu0 0.0
    %1030 = vmatpush1.msra.mxu0 0.0
    %1031 = vmatprep.subr.mxu0 0.0
    %1032 = vmatpush1.msra.mxu0 0.0
    %1033 = vmatprep.subr.mxu0 0.0
    %1034 = vmatpush1.msra.mxu0 0.0
    %1035 = vmatprep.subr.mxu0 0.0
    %1036 = vmatpush1.msra.mxu0 0.0
    %1037 = vmatprep.subr.mxu0 0.0
    %1038 = vmatpush1.msra.mxu0 0.0
    %1039 = vmatprep.subr.mxu0 0.0
    %1040 = vmatpush1.msra.mxu0 0.0
    %1041 = vmatprep.subr.mxu0 0.0
    %1042 = vmatpush1.msra.mxu0 0.0
    %1043 = vmatprep.subr.mxu0 0.0
    %1044 = vmatpush1.msra.mxu0 0.0
    %1045 = vmatprep.subr.mxu0 0.0
    %1046 = vmatpush1.msra.mxu0 0.0
    %1047 = vmatprep.subr.mxu0 0.0
    %1048 = vmatpush1.msra.mxu0 0.0
    %1049 = vmatprep.subr.mxu0 0.0
    %1050 = vmatpush1.msra.mxu0 0.0
    %1051 = vmatprep.subr.mxu0 0.0
    %1052 = vmatpush1.msra.mxu0 0.0
    %1053 = vmatprep.subr.mxu0 0.0
    %1054 = vmatpush1.msra.mxu0 0.0
    %1055 = vmatprep.subr.mxu0 0.0
    %1056 = vmatpush1.msra.mxu0 0.0
    %1057 = vmatprep.subr.mxu0 0.0
    %1058 = vmatpush1.msra.mxu0 0.0
    %1059 = vmatprep.subr.mxu0 0.0
    %1060 = vmatpush1.msra.mxu0 0.0
    %1061 = vmatprep.subr.mxu0 0.0
    %1062 = vmatpush1.msra.mxu0 0.0
    %1063 = vmatprep.mubr.f32.mxu0 0.0
    %1064 = vmatmul.mubr.f32.gmra.mrb[0].mxu0 %v997
    %v1065 = vpop.f32.mrb[0].mxu0
    %v1066 = vadd.f32 %v14, %v1065
    %v1067 = vpop.f32.mrb[0].mxu0
    %1068 = vdwg.mxu0
    %v1069 = vmax.f32 %v1066, 0.0
    %v1071 = vsel %vm46, %v1069, 0
    %1073 = vmatprep.subr.mxu0 0.0
    %1074 = vmatpush1.msra.mxu0 %v369
    %1075 = vmatprep.subr.mxu0 0.0
    %1076 = vmatpush1.msra.mxu0 0.0
    %1077 = vmatprep.subr.mxu0 0.0
    %1078 = vmatpush1.msra.mxu0 0.0
    %1079 = vmatprep.subr.mxu0 0.0
    %1080 = vmatpush1.msra.mxu0 0.0
    %1081 = vmatprep.subr.mxu0 0.0
    %1082 = vmatpush1.msra.mxu0 0.0
    %1083 = vmatprep.subr.mxu0 0.0
    %1084 = vmatpush1.msra.mxu0 0.0
    %1085 = vmatprep.subr.mxu0 0.0
    %1086 = vmatpush1.msra.mxu0 0.0
    %1087 = vmatprep.subr.mxu0 0.0
    %1088 = vmatpush1.msra.mxu0 0.0
    %1089 = vmatprep.subr.mxu0 0.0
    %1090 = vmatpush1.msra.mxu0 0.0
    %1091 = vmatprep.subr.mxu0 0.0
    %1092 = vmatpush1.msra.mxu0 0.0
    %1093 = vmatprep.subr.mxu0 0.0
    %1094 = vmatpush1.msra.mxu0 0.0
    %1095 = vmatprep.subr.mxu0 0.0
    %1096 = vmatpush1.msra.mxu0 0.0
    %1097 = vmatprep.subr.mxu0 0.0
    %1098 = vmatpush1.msra.mxu0 0.0
    %1099 = vmatprep.subr.mxu0 0.0
    %1100 = vmatpush1.msra.mxu0 0.0
    %1101 = vmatprep.subr.mxu0 0.0
    %1102 = vmatpush1.msra.mxu0 0.0
    %1103 = vmatprep.subr.mxu0 0.0
    %1104 = vmatpush1.msra.mxu0 0.0
    %1105 = vmatprep.subr.mxu0 0.0
    %1106 = vmatpush1.msra.mxu0 0.0
    %1107 = vmatprep.subr.mxu0 0.0
    %1108 = vmatpush1.msra.mxu0 0.0
    %1109 = vmatprep.subr.mxu0 0.0
    %1110 = vmatpush1.msra.mxu0 0.0
    %1111 = vmatprep.subr.mxu0 0.0
    %1112 = vmatpush1.msra.mxu0 0.0
    %1113 = vmatprep.subr.mxu0 0.0
    %1114 = vmatpush1.msra.mxu0 0.0
    %1115 = vmatprep.subr.mxu0 0.0
    %1116 = vmatpush1.msra.mxu0 0.0
    %1117 = vmatprep.subr.mxu0 0.0
    %1118 = vmatpush1.msra.mxu0 0.0
    %1119 = vmatprep.subr.mxu0 0.0
    %1120 = vmatpush1.msra.mxu0 0.0
    %1121 = vmatprep.subr.mxu0 0.0
    %1122 = vmatpush1.msra.mxu0 0.0
    %1123 = vmatprep.subr.mxu0 0.0
    %1124 = vmatpush1.msra.mxu0 0.0
    %1125 = vmatprep.subr.mxu0 0.0
    %1126 = vmatpush1.msra.mxu0 0.0
    %1127 = vmatprep.subr.mxu0 0.0
    %1128 = vmatpush1.msra.mxu0 0.0
    %1129 = vmatprep.subr.mxu0 0.0
    %1130 = vmatpush1.msra.mxu0 0.0
    %1131 = vmatprep.subr.mxu0 0.0
    %1132 = vmatpush1.msra.mxu0 0.0
    %1133 = vmatprep.subr.mxu0 0.0
    %1134 = vmatpush1.msra.mxu0 0.0
    %1135 = vmatprep.subr.mxu0 0.0
    %1136 = vmatpush1.msra.mxu0 0.0
    %1137 = vmatprep.mubr.f32.mxu0 0.0
    %1138 = vmatmul.mubr.f32.gmra.mrb[0].mxu0 %v1071
    %v1139 = vpop.f32.mrb[0].mxu0
    %v1140 = vadd.f32 %v17, %v1139
    %v1141 = vpop.f32.mrb[0].mxu0
    %1142 = vdwg.mxu0
    %v1143 = vmax.f32 %v1140, 0.0
    %v1145 = vsel %vm46, %v1143, 0
    %1147 = vmatprep.subr.mxu0 0.0
    %1148 = vmatpush1.msra.mxu0 %v446
    %1149 = vmatprep.subr.mxu0 0.0
    %1150 = vmatpush1.msra.mxu0 0.0
    %1151 = vmatprep.subr.mxu0 0.0
    %1152 = vmatpush1.msra.mxu0 0.0
    %1153 = vmatprep.subr.mxu0 0.0
    %1154 = vmatpush1.msra.mxu0 0.0
    %1155 = vmatprep.subr.mxu0 0.0
    %1156 = vmatpush1.msra.mxu0 0.0
    %1157 = vmatprep.subr.mxu0 0.0
    %1158 = vmatpush1.msra.mxu0 0.0
    %1159 = vmatprep.subr.mxu0 0.0
    %1160 = vmatpush1.msra.mxu0 0.0
    %1161 = vmatprep.subr.mxu0 0.0
    %1162 = vmatpush1.msra.mxu0 0.0
    %1163 = vmatprep.subr.mxu0 0.0
    %1164 = vmatpush1.msra.mxu0 0.0
    %1165 = vmatprep.subr.mxu0 0.0
    %1166 = vmatpush1.msra.mxu0 0.0
    %1167 = vmatprep.subr.mxu0 0.0
    %1168 = vmatpush1.msra.mxu0 0.0
    %1169 = vmatprep.subr.mxu0 0.0
    %1170 = vmatpush1.msra.mxu0 0.0
    %1171 = vmatprep.subr.mxu0 0.0
    %1172 = vmatpush1.msra.mxu0 0.0
    %1173 = vmatprep.subr.mxu0 0.0
    %1174 = vmatpush1.msra.mxu0 0.0
    %1175 = vmatprep.subr.mxu0 0.0
    %1176 = vmatpush1.msra.mxu0 0.0
    %1177 = vmatprep.subr.mxu0 0.0
    %1178 = vmatpush1.msra.mxu0 0.0
    %1179 = vmatprep.subr.mxu0 0.0
    %1180 = vmatpush1.msra.mxu0 0.0
    %1181 = vmatprep.subr.mxu0 0.0
    %1182 = vmatpush1.msra.mxu0 0.0
    %1183 = vmatprep.subr.mxu0 0.0
    %1184 = vmatpush1.msra.mxu0 0.0
    %1185 = vmatprep.subr.mxu0 0.0
    %1186 = vmatpush1.msra.mxu0 0.0
    %1187 = vmatprep.subr.mxu0 0.0
    %1188 = vmatpush1.msra.mxu0 0.0
    %1189 = vmatprep.subr.mxu0 0.0
    %1190 = vmatpush1.msra.mxu0 0.0
    %1191 = vmatprep.subr.mxu0 0.0
    %1192 = vmatpush1.msra.mxu0 0.0
    %1193 = vmatprep.subr.mxu0 0.0
    %1194 = vmatpush1.msra.mxu0 0.0
    %1195 = vmatprep.subr.mxu0 0.0
    %1196 = vmatpush1.msra.mxu0 0.0
    %1197 = vmatprep.subr.mxu0 0.0
    %1198 = vmatpush1.msra.mxu0 0.0
    %1199 = vmatprep.subr.mxu0 0.0
    %1200 = vmatpush1.msra.mxu0 0.0
    %1201 = vmatprep.subr.mxu0 0.0
    %1202 = vmatpush1.msra.mxu0 0.0
    %1203 = vmatprep.subr.mxu0 0.0
    %1204 = vmatpush1.msra.mxu0 0.0
    %1205 = vmatprep.subr.mxu0 0.0
    %1206 = vmatpush1.msra.mxu0 0.0
    %1207 = vmatprep.subr.mxu0 0.0
    %1208 = vmatpush1.msra.mxu0 0.0
    %1209 = vmatprep.subr.mxu0 0.0
    %1210 = vmatpush1.msra.mxu0 0.0
    %1211 = vmatprep.mubr.f32.mxu0 0.0
    %1212 = vmatmul.mubr.f32.gmra.mrb[0].mxu0 %v1145
    %v1213 = vpop.f32.mrb[0].mxu0
    %v1214 = vadd.f32 %v20, %v1213
    %v1215 = vpop.f32.mrb[0].mxu0
    %1216 = vdwg.mxu0
    %v1217 = vmax.f32 %v1214, 0.0
    %v1219 = vsel %vm46, %v1217, 0
    %1221 = vmatprep.subr.mxu0 0.0
    %1222 = vmatpush1.msra.mxu0 %v523
    %1223 = vmatprep.subr.mxu0 0.0
    %1224 = vmatpush1.msra.mxu0 0.0
    %1225 = vmatprep.subr.mxu0 0.0
    %1226 = vmatpush1.msra.mxu0 0.0
    %1227 = vmatprep.subr.mxu0 0.0
    %1228 = vmatpush1.msra.mxu0 0.0
    %1229 = vmatprep.subr.mxu0 0.0
    %1230 = vmatpush1.msra.mxu0 0.0
    %1231 = vmatprep.subr.mxu0 0.0
    %1232 = vmatpush1.msra.mxu0 0.0
    %1233 = vmatprep.subr.mxu0 0.0
    %1234 = vmatpush1.msra.mxu0 0.0
    %1235 = vmatprep.subr.mxu0 0.0
    %1236 = vmatpush1.msra.mxu0 0.0
    %1237 = vmatprep.subr.mxu0 0.0
    %1238 = vmatpush1.msra.mxu0 0.0
    %1239 = vmatprep.subr.mxu0 0.0
    %1240 = vmatpush1.msra.mxu0 0.0
    %1241 = vmatprep.subr.mxu0 0.0
    %1242 = vmatpush1.msra.mxu0 0.0
    %1243 = vmatprep.subr.mxu0 0.0
    %1244 = vmatpush1.msra.mxu0 0.0
    %1245 = vmatprep.subr.mxu0 0.0
    %1246 = vmatpush1.msra.mxu0 0.0
    %1247 = vmatprep.subr.mxu0 0.0
    %1248 = vmatpush1.msra.mxu0 0.0
    %1249 = vmatprep.subr.mxu0 0.0
    %1250 = vmatpush1.msra.mxu0 0.0
    %1251 = vmatprep.subr.mxu0 0.0
    %1252 = vmatpush1.msra.mxu0 0.0
    %1253 = vmatprep.subr.mxu0 0.0
    %1254 = vmatpush1.msra.mxu0 0.0
    %1255 = vmatprep.subr.mxu0 0.0
    %1256 = vmatpush1.msra.mxu0 0.0
    %1257 = vmatprep.subr.mxu0 0.0
    %1258 = vmatpush1.msra.mxu0 0.0
    %1259 = vmatprep.subr.mxu0 0.0
    %1260 = vmatpush1.msra.mxu0 0.0
    %1261 = vmatprep.subr.mxu0 0.0
    %1262 = vmatpush1.msra.mxu0 0.0
    %1263 = vmatprep.subr.mxu0 0.0
    %1264 = vmatpush1.msra.mxu0 0.0
    %1265 = vmatprep.subr.mxu0 0.0
    %1266 = vmatpush1.msra.mxu0 0.0
    %1267 = vmatprep.subr.mxu0 0.0
    %1268 = vmatpush1.msra.mxu0 0.0
    %1269 = vmatprep.subr.mxu0 0.0
    %1270 = vmatpush1.msra.mxu0 0.0
    %1271 = vmatprep.subr.mxu0 0.0
    %1272 = vmatpush1.msra.mxu0 0.0
    %1273 = vmatprep.subr.mxu0 0.0
    %1274 = vmatpush1.msra.mxu0 0.0
    %1275 = vmatprep.subr.mxu0 0.0
    %1276 = vmatpush1.msra.mxu0 0.0
    %1277 = vmatprep.subr.mxu0 0.0
    %1278 = vmatpush1.msra.mxu0 0.0
    %1279 = vmatprep.subr.mxu0 0.0
    %1280 = vmatpush1.msra.mxu0 0.0
    %1281 = vmatprep.subr.mxu0 0.0
    %1282 = vmatpush1.msra.mxu0 0.0
    %1283 = vmatprep.subr.mxu0 0.0
    %1284 = vmatpush1.msra.mxu0 0.0
    %1285 = vmatprep.mubr.f32.mxu0 0.0
    %1286 = vmatmul.mubr.f32.gmra.mrb[0].mxu0 %v1219
    %v1287 = vpop.f32.mrb[0].mxu0
    %v1288 = vadd.f32 %v23, %v1287
    %v1289 = vpop.f32.mrb[0].mxu0
    %1290 = vdwg.mxu0
    %v1291 = vmax.f32 %v1288, 0.0
    %v1292 = vrot.slane %v39, 1
    %v1294 = vadd.f32 %v1291, %v1292
    %1295 = vrot.lane.b32.xlu0 %v986, 120
    %v1296 = vpop.permute.xlu0 %1295
    %v1298 = vadd.f32 %v204, %v1296
    %v1300 = vsel %vm46, %v1291, 0
    %1302 = vmatprep.subr.mxu0 0.0
    %1303 = vmatpush1.msra.mxu0 %v605
    %1304 = vmatprep.subr.mxu0 0.0
    %1305 = vmatpush1.msra.mxu0 0.0
    %1306 = vmatprep.subr.mxu0 0.0
    %1307 = vmatpush1.msra.mxu0 0.0
    %1308 = vmatprep.subr.mxu0 0.0
    %1309 = vmatpush1.msra.mxu0 0.0
    %1310 = vmatprep.subr.mxu0 0.0
    %1311 = vmatpush1.msra.mxu0 0.0
    %1312 = vmatprep.subr.mxu0 0.0
    %1313 = vmatpush1.msra.mxu0 0.0
    %1314 = vmatprep.subr.mxu0 0.0
    %1315 = vmatpush1.msra.mxu0 0.0
    %1316 = vmatprep.subr.mxu0 0.0
    %1317 = vmatpush1.msra.mxu0 0.0
    %1318 = vmatprep.subr.mxu0 0.0
    %1319 = vmatpush1.msra.mxu0 0.0
    %1320 = vmatprep.subr.mxu0 0.0
    %1321 = vmatpush1.msra.mxu0 0.0
    %1322 = vmatprep.subr.mxu0 0.0
    %1323 = vmatpush1.msra.mxu0 0.0
    %1324 = vmatprep.subr.mxu0 0.0
    %1325 = vmatpush1.msra.mxu0 0.0
    %1326 = vmatprep.subr.mxu0 0.0
    %1327 = vmatpush1.msra.mxu0 0.0
    %1328 = vmatprep.subr.mxu0 0.0
    %1329 = vmatpush1.msra.mxu0 0.0
    %1330 = vmatprep.subr.mxu0 0.0
    %1331 = vmatpush1.msra.mxu0 0.0
    %1332 = vmatprep.subr.mxu0 0.0
    %1333 = vmatpush1.msra.mxu0 0.0
    %1334 = vmatprep.subr.mxu0 0.0
    %1335 = vmatpush1.msra.mxu0 0.0
    %1336 = vmatprep.subr.mxu0 0.0
    %1337 = vmatpush1.msra.mxu0 0.0
    %1338 = vmatprep.subr.mxu0 0.0
    %1339 = vmatpush1.msra.mxu0 0.0
    %1340 = vmatprep.subr.mxu0 0.0
    %1341 = vmatpush1.msra.mxu0 0.0
    %1342 = vmatprep.subr.mxu0 0.0
    %1343 = vmatpush1.msra.mxu0 0.0
    %1344 = vmatprep.subr.mxu0 0.0
    %1345 = vmatpush1.msra.mxu0 0.0
    %1346 = vmatprep.subr.mxu0 0.0
    %1347 = vmatpush1.msra.mxu0 0.0
    %1348 = vmatprep.subr.mxu0 0.0
    %1349 = vmatpush1.msra.mxu0 0.0
    %1350 = vmatprep.subr.mxu0 0.0
    %1351 = vmatpush1.msra.mxu0 0.0
    %1352 = vmatprep.subr.mxu0 0.0
    %1353 = vmatpush1.msra.mxu0 0.0
    %1354 = vmatprep.subr.mxu0 0.0
    %1355 = vmatpush1.msra.mxu0 0.0
    %1356 = vmatprep.subr.mxu0 0.0
    %1357 = vmatpush1.msra.mxu0 0.0
    %1358 = vmatprep.subr.mxu0 0.0
    %1359 = vmatpush1.msra.mxu0 0.0
    %1360 = vmatprep.subr.mxu0 0.0
    %1361 = vmatpush1.msra.mxu0 0.0
    %1362 = vmatprep.subr.mxu0 0.0
    %1363 = vmatpush1.msra.mxu0 0.0
    %1364 = vmatprep.subr.mxu0 0.0
    %1365 = vmatpush1.msra.mxu0 0.0
    %1366 = vmatprep.mubr.f32.mxu0 0.0
    %1367 = vmatmul.mubr.f32.gmra.mrb[0].mxu0 %v1300
    %v1368 = vpop.f32.mrb[0].mxu0
    %v1369 = vadd.f32 0.0, %v1368
    %v1370 = vpop.f32.mrb[0].mxu0
    %1371 = vdwg.mxu0
    %v1373 = vrot.slane %v1369, 7
    %v1375 = vadd.f32 %v1298, %v1373
    %v1376 = vmax.f32 %v1375, 0.0
    %v1378 = vrot.slane %v1376, 1
    %v1379 = vsel %vm679, %v1378, 0
    %1381 = vmatprep.subr.mxu0 0.0
    %1382 = vmatpush1.msra.mxu0 %v25
    %1383 = vmatprep.subr.mxu0 0.0
    %1384 = vmatpush1.msra.mxu0 %v684
    %1385 = vmatprep.subr.mxu0 0.0
    %1386 = vmatpush1.msra.mxu0 0.0
    %1387 = vmatprep.subr.mxu0 0.0
    %1388 = vmatpush1.msra.mxu0 0.0
    %1389 = vmatprep.subr.mxu0 0.0
    %1390 = vmatpush1.msra.mxu0 0.0
    %1391 = vmatprep.subr.mxu0 0.0
    %1392 = vmatpush1.msra.mxu0 0.0
    %1393 = vmatprep.subr.mxu0 0.0
    %1394 = vmatpush1.msra.mxu0 0.0
    %1395 = vmatprep.subr.mxu0 0.0
    %1396 = vmatpush1.msra.mxu0 0.0
    %1397 = vmatprep.subr.mxu0 0.0
    %1398 = vmatpush1.msra.mxu0 0.0
    %1399 = vmatprep.subr.mxu0 0.0
    %1400 = vmatpush1.msra.mxu0 0.0
    %1401 = vmatprep.subr.mxu0 0.0
    %1402 = vmatpush1.msra.mxu0 0.0
    %1403 = vmatprep.subr.mxu0 0.0
    %1404 = vmatpush1.msra.mxu0 0.0
    %1405 = vmatprep.subr.mxu0 0.0
    %1406 = vmatpush1.msra.mxu0 0.0
    %1407 = vmatprep.subr.mxu0 0.0
    %1408 = vmatpush1.msra.mxu0 0.0
    %1409 = vmatprep.subr.mxu0 0.0
    %1410 = vmatpush1.msra.mxu0 0.0
    %1411 = vmatprep.subr.mxu0 0.0
    %1412 = vmatpush1.msra.mxu0 0.0
    %1413 = vmatprep.subr.mxu0 0.0
    %1414 = vmatpush1.msra.mxu0 0.0
    %1415 = vmatprep.subr.mxu0 0.0
    %1416 = vmatpush1.msra.mxu0 0.0
    %1417 = vmatprep.subr.mxu0 0.0
    %1418 = vmatpush1.msra.mxu0 0.0
    %1419 = vmatprep.subr.mxu0 0.0
    %1420 = vmatpush1.msra.mxu0 0.0
    %1421 = vmatprep.subr.mxu0 0.0
    %1422 = vmatpush1.msra.mxu0 0.0
    %1423 = vmatprep.subr.mxu0 0.0
    %1424 = vmatpush1.msra.mxu0 0.0
    %1425 = vmatprep.subr.mxu0 0.0
    %1426 = vmatpush1.msra.mxu0 0.0
    %1427 = vmatprep.subr.mxu0 0.0
    %1428 = vmatpush1.msra.mxu0 0.0
    %1429 = vmatprep.subr.mxu0 0.0
    %1430 = vmatpush1.msra.mxu0 0.0
    %1431 = vmatprep.subr.mxu0 0.0
    %1432 = vmatpush1.msra.mxu0 0.0
    %1433 = vmatprep.subr.mxu0 0.0
    %1434 = vmatpush1.msra.mxu0 0.0
    %1435 = vmatprep.subr.mxu0 0.0
    %1436 = vmatpush1.msra.mxu0 0.0
    %1437 = vmatprep.subr.mxu0 0.0
    %1438 = vmatpush1.msra.mxu0 0.0
    %1439 = vmatprep.subr.mxu0 0.0
    %1440 = vmatpush1.msra.mxu0 0.0
    %1441 = vmatprep.subr.mxu0 0.0
    %1442 = vmatpush1.msra.mxu0 0.0
    %1443 = vmatprep.subr.mxu0 0.0
    %1444 = vmatpush1.msra.mxu0 0.0
    %1445 = vmatprep.mubr.f32.mxu0 0.0
    %1446 = vmatmul.mubr.f32.gmra.mrb[0].mxu0 %v1379
    %v1447 = vpop.f32.mrb[0].mxu0
    %v1448 = vadd.f32 %v27, %v1447
    %v1449 = vpop.f32.mrb[0].mxu0
    %1450 = vdwg.mxu0
    %v1451 = vmax.f32 %v1448, 0.0
    %v1453 = vsel %vm46, %v1451, 0
    %1455 = vmatprep.subr.mxu0 0.0
    %1456 = vmatpush1.msra.mxu0 %v761
    %1457 = vmatprep.subr.mxu0 0.0
    %1458 = vmatpush1.msra.mxu0 0.0
    %1459 = vmatprep.subr.mxu0 0.0
    %1460 = vmatpush1.msra.mxu0 0.0
    %1461 = vmatprep.subr.mxu0 0.0
    %1462 = vmatpush1.msra.mxu0 0.0
    %1463 = vmatprep.subr.mxu0 0.0
    %1464 = vmatpush1.msra.mxu0 0.0
    %1465 = vmatprep.subr.mxu0 0.0
    %1466 = vmatpush1.msra.mxu0 0.0
    %1467 = vmatprep.subr.mxu0 0.0
    %1468 = vmatpush1.msra.mxu0 0.0
    %1469 = vmatprep.subr.mxu0 0.0
    %1470 = vmatpush1.msra.mxu0 0.0
    %1471 = vmatprep.subr.mxu0 0.0
    %1472 = vmatpush1.msra.mxu0 0.0
    %1473 = vmatprep.subr.mxu0 0.0
    %1474 = vmatpush1.msra.mxu0 0.0
    %1475 = vmatprep.subr.mxu0 0.0
    %1476 = vmatpush1.msra.mxu0 0.0
    %1477 = vmatprep.subr.mxu0 0.0
    %1478 = vmatpush1.msra.mxu0 0.0
    %1479 = vmatprep.subr.mxu0 0.0
    %1480 = vmatpush1.msra.mxu0 0.0
    %1481 = vmatprep.subr.mxu0 0.0
    %1482 = vmatpush1.msra.mxu0 0.0
    %1483 = vmatprep.subr.mxu0 0.0
    %1484 = vmatpush1.msra.mxu0 0.0
    %1485 = vmatprep.subr.mxu0 0.0
    %1486 = vmatpush1.msra.mxu0 0.0
    %1487 = vmatprep.subr.mxu0 0.0
    %1488 = vmatpush1.msra.mxu0 0.0
    %1489 = vmatprep.subr.mxu0 0.0
    %1490 = vmatpush1.msra.mxu0 0.0
    %1491 = vmatprep.subr.mxu0 0.0
    %1492 = vmatpush1.msra.mxu0 0.0
    %1493 = vmatprep.subr.mxu0 0.0
    %1494 = vmatpush1.msra.mxu0 0.0
    %1495 = vmatprep.subr.mxu0 0.0
    %1496 = vmatpush1.msra.mxu0 0.0
    %1497 = vmatprep.subr.mxu0 0.0
    %1498 = vmatpush1.msra.mxu0 0.0
    %1499 = vmatprep.subr.mxu0 0.0
    %1500 = vmatpush1.msra.mxu0 0.0
    %1501 = vmatprep.subr.mxu0 0.0
    %1502 = vmatpush1.msra.mxu0 0.0
    %1503 = vmatprep.subr.mxu0 0.0
    %1504 = vmatpush1.msra.mxu0 0.0
    %1505 = vmatprep.subr.mxu0 0.0
    %1506 = vmatpush1.msra.mxu0 0.0
    %1507 = vmatprep.subr.mxu0 0.0
    %1508 = vmatpush1.msra.mxu0 0.0
    %1509 = vmatprep.subr.mxu0 0.0
    %1510 = vmatpush1.msra.mxu0 0.0
    %1511 = vmatprep.subr.mxu0 0.0
    %1512 = vmatpush1.msra.mxu0 0.0
    %1513 = vmatprep.subr.mxu0 0.0
    %1514 = vmatpush1.msra.mxu0 0.0
    %1515 = vmatprep.subr.mxu0 0.0
    %1516 = vmatpush1.msra.mxu0 0.0
    %1517 = vmatprep.subr.mxu0 0.0
    %1518 = vmatpush1.msra.mxu0 0.0
    %1519 = vmatprep.mubr.f32.mxu0 0.0
    %1520 = vmatmul.mubr.f32.gmra.mrb[0].mxu0 %v1453
    %v1521 = vpop.f32.mrb[0].mxu0
    %v1522 = vadd.f32 %v30, %v1521
    %v1523 = vpop.f32.mrb[0].mxu0
    %1524 = vdwg.mxu0
    %v1525 = vmax.f32 %v1522, 0.0
    %v1526 = vadd.f32 %v33, %v909
    %v1527 = vadd.f32 %v1526, %v1294
    %v1529 = vsel %vm46, %v1525, 0
    %1531 = vmatprep.subr.mxu0 0.0
    %1532 = vmatpush1.msra.mxu0 %v840
    %1533 = vmatprep.subr.mxu0 0.0
    %1534 = vmatpush1.msra.mxu0 0.0
    %1535 = vmatprep.subr.mxu0 0.0
    %1536 = vmatpush1.msra.mxu0 0.0
    %1537 = vmatprep.subr.mxu0 0.0
    %1538 = vmatpush1.msra.mxu0 0.0
    %1539 = vmatprep.subr.mxu0 0.0
    %1540 = vmatpush1.msra.mxu0 0.0
    %1541 = vmatprep.subr.mxu0 0.0
    %1542 = vmatpush1.msra.mxu0 0.0
    %1543 = vmatprep.subr.mxu0 0.0
    %1544 = vmatpush1.msra.mxu0 0.0
    %1545 = vmatprep.subr.mxu0 0.0
    %1546 = vmatpush1.msra.mxu0 0.0
    %1547 = vmatprep.subr.mxu0 0.0
    %1548 = vmatpush1.msra.mxu0 0.0
    %1549 = vmatprep.subr.mxu0 0.0
    %1550 = vmatpush1.msra.mxu0 0.0
    %1551 = vmatprep.subr.mxu0 0.0
    %1552 = vmatpush1.msra.mxu0 0.0
    %1553 = vmatprep.subr.mxu0 0.0
    %1554 = vmatpush1.msra.mxu0 0.0
    %1555 = vmatprep.subr.mxu0 0.0
    %1556 = vmatpush1.msra.mxu0 0.0
    %1557 = vmatprep.subr.mxu0 0.0
    %1558 = vmatpush1.msra.mxu0 0.0
    %1559 = vmatprep.subr.mxu0 0.0
    %1560 = vmatpush1.msra.mxu0 0.0
    %1561 = vmatprep.subr.mxu0 0.0
    %1562 = vmatpush1.msra.mxu0 0.0
    %1563 = vmatprep.subr.mxu0 0.0
    %1564 = vmatpush1.msra.mxu0 0.0
    %1565 = vmatprep.subr.mxu0 0.0
    %1566 = vmatpush1.msra.mxu0 0.0
    %1567 = vmatprep.subr.mxu0 0.0
    %1568 = vmatpush1.msra.mxu0 0.0
    %1569 = vmatprep.subr.mxu0 0.0
    %1570 = vmatpush1.msra.mxu0 0.0
    %1571 = vmatprep.subr.mxu0 0.0
    %1572 = vmatpush1.msra.mxu0 0.0
    %1573 = vmatprep.subr.mxu0 0.0
    %1574 = vmatpush1.msra.mxu0 0.0
    %1575 = vmatprep.subr.mxu0 0.0
    %1576 = vmatpush1.msra.mxu0 0.0
    %1577 = vmatprep.subr.mxu0 0.0
    %1578 = vmatpush1.msra.mxu0 0.0
    %1579 = vmatprep.subr.mxu0 0.0
    %1580 = vmatpush1.msra.mxu0 0.0
    %1581 = vmatprep.subr.mxu0 0.0
    %1582 = vmatpush1.msra.mxu0 0.0
    %1583 = vmatprep.subr.mxu0 0.0
    %1584 = vmatpush1.msra.mxu0 0.0
    %1585 = vmatprep.subr.mxu0 0.0
    %1586 = vmatpush1.msra.mxu0 0.0
    %1587 = vmatprep.subr.mxu0 0.0
    %1588 = vmatpush1.msra.mxu0 0.0
    %1589 = vmatprep.subr.mxu0 0.0
    %1590 = vmatpush1.msra.mxu0 0.0
    %1591 = vmatprep.subr.mxu0 0.0
    %1592 = vmatpush1.msra.mxu0 0.0
    %1593 = vmatprep.subr.mxu0 0.0
    %1594 = vmatpush1.msra.mxu0 0.0
    %1595 = vmatprep.mubr.f32.mxu0 0.0
    %1596 = vmatmul.mubr.f32.gmra.mrb[0].mxu0 %v1529
    %v1597 = vpop.f32.mrb[0].mxu0
    %v1598 = vadd.f32 %v1527, %v1597
    %v1599 = vpop.f32.mrb[0].mxu0
    %1600 = vdwg.mxu0
    %v1602 = vsel %vm46, %v1598, 0
    %1604 = vmatprep.subr.mxu0 0.0
    %1605 = vmatpush1.msra.mxu0 %v211
    %1606 = vmatprep.subr.mxu0 0.0
    %1607 = vmatpush1.msra.mxu0 0.0
    %1608 = vmatprep.subr.mxu0 0.0
    %1609 = vmatpush1.msra.mxu0 0.0
    %1610 = vmatprep.subr.mxu0 0.0
    %1611 = vmatpush1.msra.mxu0 0.0
    %1612 = vmatprep.subr.mxu0 0.0
    %1613 = vmatpush1.msra.mxu0 0.0
    %1614 = vmatprep.subr.mxu0 0.0
    %1615 = vmatpush1.msra.mxu0 0.0
    %1616 = vmatprep.subr.mxu0 0.0
    %1617 = vmatpush1.msra.mxu0 0.0
    %1618 = vmatprep.subr.mxu0 0.0
    %1619 = vmatpush1.msra.mxu0 0.0
    %1620 = vmatprep.subr.mxu0 0.0
    %1621 = vmatpush1.msra.mxu0 0.0
    %1622 = vmatprep.subr.mxu0 0.0
    %1623 = vmatpush1.msra.mxu0 0.0
    %1624 = vmatprep.subr.mxu0 0.0
    %1625 = vmatpush1.msra.mxu0 0.0
    %1626 = vmatprep.subr.mxu0 0.0
    %1627 = vmatpush1.msra.mxu0 0.0
    %1628 = vmatprep.subr.mxu0 0.0
    %1629 = vmatpush1.msra.mxu0 0.0
    %1630 = vmatprep.subr.mxu0 0.0
    %1631 = vmatpush1.msra.mxu0 0.0
    %1632 = vmatprep.subr.mxu0 0.0
    %1633 = vmatpush1.msra.mxu0 0.0
    %1634 = vmatprep.subr.mxu0 0.0
    %1635 = vmatpush1.msra.mxu0 0.0
    %1636 = vmatprep.subr.mxu0 0.0
    %1637 = vmatpush1.msra.mxu0 0.0
    %1638 = vmatprep.subr.mxu0 0.0
    %1639 = vmatpush1.msra.mxu0 0.0
    %1640 = vmatprep.subr.mxu0 0.0
    %1641 = vmatpush1.msra.mxu0 0.0
    %1642 = vmatprep.subr.mxu0 0.0
    %1643 = vmatpush1.msra.mxu0 0.0
    %1644 = vmatprep.subr.mxu0 0.0
    %1645 = vmatpush1.msra.mxu0 0.0
    %1646 = vmatprep.subr.mxu0 0.0
    %1647 = vmatpush1.msra.mxu0 0.0
    %1648 = vmatprep.subr.mxu0 0.0
    %1649 = vmatpush1.msra.mxu0 0.0
    %1650 = vmatprep.subr.mxu0 0.0
    %1651 = vmatpush1.msra.mxu0 0.0
    %1652 = vmatprep.subr.mxu0 0.0
    %1653 = vmatpush1.msra.mxu0 0.0
    %1654 = vmatprep.subr.mxu0 0.0
    %1655 = vmatpush1.msra.mxu0 0.0
    %1656 = vmatprep.subr.mxu0 0.0
    %1657 = vmatpush1.msra.mxu0 0.0
    %1658 = vmatprep.subr.mxu0 0.0
    %1659 = vmatpush1.msra.mxu0 0.0
    %1660 = vmatprep.subr.mxu0 0.0
    %1661 = vmatpush1.msra.mxu0 0.0
    %1662 = vmatprep.subr.mxu0 0.0
    %1663 = vmatpush1.msra.mxu0 0.0
    %1664 = vmatprep.subr.mxu0 0.0
    %1665 = vmatpush1.msra.mxu0 0.0
    %1666 = vmatprep.subr.mxu0 0.0
    %1667 = vmatpush1.msra.mxu0 0.0
    %1668 = vmatprep.mubr.f32.mxu0 0.0
    %1669 = vmatmul.mubr.f32.gmra.mrb[0].mxu0 %v1602
    %v1670 = vpop.f32.mrb[0].mxu0
    %v1671 = vadd.f32 0.0, %v1670
    %v1672 = vpop.f32.mrb[0].mxu0
    %1673 = vdwg.mxu0
    %v1675 = vrot.slane %v1671, 6
    %v1677 = vadd.f32 %v121, %v1675
    %v1678 = vxor.u32 %v1677, 2147483648
    %v1679 = vmul.f32 %v1678, 1.442695
    %v1680 = vpow.pop %v1679
    %v1681 = vadd.f32 %v1680, 1.0
    %v1682 = vrcp.pop %v1681
    %v1683 = vmul.f32 1.0, %v1682
    %v1685 = vrot.slane %v1683, 2
    %v1686 = vsel %vm290, %v1685, 0
    %1688 = vmatprep.subr.mxu0 0.0
    %1689 = vmatpush1.msra.mxu0 %v13
    %1690 = vmatprep.subr.mxu0 0.0
    %1691 = vmatpush1.msra.mxu0 0.0
    %1692 = vmatprep.subr.mxu0 0.0
    %1693 = vmatpush1.msra.mxu0 0.0
    %1694 = vmatprep.subr.mxu0 0.0
    %1695 = vmatpush1.msra.mxu0 0.0
    %1696 = vmatprep.subr.mxu0 0.0
    %1697 = vmatpush1.msra.mxu0 0.0
    %1698 = vmatprep.subr.mxu0 0.0
    %1699 = vmatpush1.msra.mxu0 0.0
    %1700 = vmatprep.subr.mxu0 0.0
    %1701 = vmatpush1.msra.mxu0 0.0
    %1702 = vmatprep.subr.mxu0 0.0
    %1703 = vmatpush1.msra.mxu0 0.0
    %1704 = vmatprep.subr.mxu0 0.0
    %1705 = vmatpush1.msra.mxu0 0.0
    %1706 = vmatprep.subr.mxu0 0.0
    %1707 = vmatpush1.msra.mxu0 0.0
    %1708 = vmatprep.subr.mxu0 0.0
    %1709 = vmatpush1.msra.mxu0 0.0
    %1710 = vmatprep.subr.mxu0 0.0
    %1711 = vmatpush1.msra.mxu0 0.0
    %1712 = vmatprep.subr.mxu0 0.0
    %1713 = vmatpush1.msra.mxu0 0.0
    %1714 = vmatprep.subr.mxu0 0.0
    %1715 = vmatpush1.msra.mxu0 0.0
    %1716 = vmatprep.subr.mxu0 0.0
    %1717 = vmatpush1.msra.mxu0 0.0
    %1718 = vmatprep.subr.mxu0 0.0
    %1719 = vmatpush1.msra.mxu0 0.0
    %1720 = vmatprep.subr.mxu0 0.0
    %1721 = vmatpush1.msra.mxu0 0.0
    %1722 = vmatprep.subr.mxu0 0.0
    %1723 = vmatpush1.msra.mxu0 0.0
    %1724 = vmatprep.subr.mxu0 0.0
    %1725 = vmatpush1.msra.mxu0 0.0
    %1726 = vmatprep.subr.mxu0 0.0
    %1727 = vmatpush1.msra.mxu0 0.0
    %1728 = vmatprep.subr.mxu0 0.0
    %1729 = vmatpush1.msra.mxu0 0.0
    %1730 = vmatprep.subr.mxu0 0.0
    %1731 = vmatpush1.msra.mxu0 0.0
    %1732 = vmatprep.subr.mxu0 0.0
    %1733 = vmatpush1.msra.mxu0 0.0
    %1734 = vmatprep.subr.mxu0 0.0
    %1735 = vmatpush1.msra.mxu0 0.0
    %1736 = vmatprep.subr.mxu0 0.0
    %1737 = vmatpush1.msra.mxu0 0.0
    %1738 = vmatprep.subr.mxu0 0.0
    %1739 = vmatpush1.msra.mxu0 0.0
    %1740 = vmatprep.subr.mxu0 0.0
    %1741 = vmatpush1.msra.mxu0 0.0
    %1742 = vmatprep.subr.mxu0 0.0
    %1743 = vmatpush1.msra.mxu0 0.0
    %1744 = vmatprep.subr.mxu0 0.0
    %1745 = vmatpush1.msra.mxu0 0.0
    %1746 = vmatprep.subr.mxu0 0.0
    %1747 = vmatpush1.msra.mxu0 0.0
    %1748 = vmatprep.subr.mxu0 0.0
    %1749 = vmatpush1.msra.mxu0 0.0
    %1750 = vmatprep.subr.mxu0 0.0
    %1751 = vmatpush1.msra.mxu0 0.0
    %1752 = vmatprep.mubr.f32.mxu0 0.0
    %1753 = vmatmul.mubr.f32.gmra.mrb[0].mxu0 %v1686
    %v1754 = vpop.f32.mrb[0].mxu0
    %v1755 = vadd.f32 %v14, %v1754
    %v1756 = vpop.f32.mrb[0].mxu0
    %1757 = vdwg.mxu0
    %v1758 = vmax.f32 %v1755, 0.0
    %v1760 = vsel %vm46, %v1758, 0
    %1762 = vmatprep.subr.mxu0 0.0
    %1763 = vmatpush1.msra.mxu0 %v369
    %1764 = vmatprep.subr.mxu0 0.0
    %1765 = vmatpush1.msra.mxu0 0.0
    %1766 = vmatprep.subr.mxu0 0.0
    %1767 = vmatpush1.msra.mxu0 0.0
    %1768 = vmatprep.subr.mxu0 0.0
    %1769 = vmatpush1.msra.mxu0 0.0
    %1770 = vmatprep.subr.mxu0 0.0
    %1771 = vmatpush1.msra.mxu0 0.0
    %1772 = vmatprep.subr.mxu0 0.0
    %1773 = vmatpush1.msra.mxu0 0.0
    %1774 = vmatprep.subr.mxu0 0.0
    %1775 = vmatpush1.msra.mxu0 0.0
    %1776 = vmatprep.subr.mxu0 0.0
    %1777 = vmatpush1.msra.mxu0 0.0
    %1778 = vmatprep.subr.mxu0 0.0
    %1779 = vmatpush1.msra.mxu0 0.0
    %1780 = vmatprep.subr.mxu0 0.0
    %1781 = vmatpush1.msra.mxu0 0.0
    %1782 = vmatprep.subr.mxu0 0.0
    %1783 = vmatpush1.msra.mxu0 0.0
    %1784 = vmatprep.subr.mxu0 0.0
    %1785 = vmatpush1.msra.mxu0 0.0
    %1786 = vmatprep.subr.mxu0 0.0
    %1787 = vmatpush1.msra.mxu0 0.0
    %1788 = vmatprep.subr.mxu0 0.0
    %1789 = vmatpush1.msra.mxu0 0.0
    %1790 = vmatprep.subr.mxu0 0.0
    %1791 = vmatpush1.msra.mxu0 0.0
    %1792 = vmatprep.subr.mxu0 0.0
    %1793 = vmatpush1.msra.mxu0 0.0
    %1794 = vmatprep.subr.mxu0 0.0
    %1795 = vmatpush1.msra.mxu0 0.0
    %1796 = vmatprep.subr.mxu0 0.0
    %1797 = vmatpush1.msra.mxu0 0.0
    %1798 = vmatprep.subr.mxu0 0.0
    %1799 = vmatpush1.msra.mxu0 0.0
    %1800 = vmatprep.subr.mxu0 0.0
    %1801 = vmatpush1.msra.mxu0 0.0
    %1802 = vmatprep.subr.mxu0 0.0
    %1803 = vmatpush1.msra.mxu0 0.0
    %1804 = vmatprep.subr.mxu0 0.0
    %1805 = vmatpush1.msra.mxu0 0.0
    %1806 = vmatprep.subr.mxu0 0.0
    %1807 = vmatpush1.msra.mxu0 0.0
    %1808 = vmatprep.subr.mxu0 0.0
    %1809 = vmatpush1.msra.mxu0 0.0
    %1810 = vmatprep.subr.mxu0 0.0
    %1811 = vmatpush1.msra.mxu0 0.0
    %1812 = vmatprep.subr.mxu0 0.0
    %1813 = vmatpush1.msra.mxu0 0.0
    %1814 = vmatprep.subr.mxu0 0.0
    %1815 = vmatpush1.msra.mxu0 0.0
    %1816 = vmatprep.subr.mxu0 0.0
    %1817 = vmatpush1.msra.mxu0 0.0
    %1818 = vmatprep.subr.mxu0 0.0
    %1819 = vmatpush1.msra.mxu0 0.0
    %1820 = vmatprep.subr.mxu0 0.0
    %1821 = vmatpush1.msra.mxu0 0.0
    %1822 = vmatprep.subr.mxu0 0.0
    %1823 = vmatpush1.msra.mxu0 0.0
    %1824 = vmatprep.subr.mxu0 0.0
    %1825 = vmatpush1.msra.mxu0 0.0
    %1826 = vmatprep.mubr.f32.mxu0 0.0
    %1827 = vmatmul.mubr.f32.gmra.mrb[0].mxu0 %v1760
    %v1828 = vpop.f32.mrb[0].mxu0
    %v1829 = vadd.f32 %v17, %v1828
    %v1830 = vpop.f32.mrb[0].mxu0
    %1831 = vdwg.mxu0
    %v1832 = vmax.f32 %v1829, 0.0
    %v1834 = vsel %vm46, %v1832, 0
    %1836 = vmatprep.subr.mxu0 0.0
    %1837 = vmatpush1.msra.mxu0 %v446
    %1838 = vmatprep.subr.mxu0 0.0
    %1839 = vmatpush1.msra.mxu0 0.0
    %1840 = vmatprep.subr.mxu0 0.0
    %1841 = vmatpush1.msra.mxu0 0.0
    %1842 = vmatprep.subr.mxu0 0.0
    %1843 = vmatpush1.msra.mxu0 0.0
    %1844 = vmatprep.subr.mxu0 0.0
    %1845 = vmatpush1.msra.mxu0 0.0
    %1846 = vmatprep.subr.mxu0 0.0
    %1847 = vmatpush1.msra.mxu0 0.0
    %1848 = vmatprep.subr.mxu0 0.0
    %1849 = vmatpush1.msra.mxu0 0.0
    %1850 = vmatprep.subr.mxu0 0.0
    %1851 = vmatpush1.msra.mxu0 0.0
    %1852 = vmatprep.subr.mxu0 0.0
    %1853 = vmatpush1.msra.mxu0 0.0
    %1854 = vmatprep.subr.mxu0 0.0
    %1855 = vmatpush1.msra.mxu0 0.0
    %1856 = vmatprep.subr.mxu0 0.0
    %1857 = vmatpush1.msra.mxu0 0.0
    %1858 = vmatprep.subr.mxu0 0.0
    %1859 = vmatpush1.msra.mxu0 0.0
    %1860 = vmatprep.subr.mxu0 0.0
    %1861 = vmatpush1.msra.mxu0 0.0
    %1862 = vmatprep.subr.mxu0 0.0
    %1863 = vmatpush1.msra.mxu0 0.0
    %1864 = vmatprep.subr.mxu0 0.0
    %1865 = vmatpush1.msra.mxu0 0.0
    %1866 = vmatprep.subr.mxu0 0.0
    %1867 = vmatpush1.msra.mxu0 0.0
    %1868 = vmatprep.subr.mxu0 0.0
    %1869 = vmatpush1.msra.mxu0 0.0
    %1870 = vmatprep.subr.mxu0 0.0
    %1871 = vmatpush1.msra.mxu0 0.0
    %1872 = vmatprep.subr.mxu0 0.0
    %1873 = vmatpush1.msra.mxu0 0.0
    %1874 = vmatprep.subr.mxu0 0.0
    %1875 = vmatpush1.msra.mxu0 0.0
    %1876 = vmatprep.subr.mxu0 0.0
    %1877 = vmatpush1.msra.mxu0 0.0
    %1878 = vmatprep.subr.mxu0 0.0
    %1879 = vmatpush1.msra.mxu0 0.0
    %1880 = vmatprep.subr.mxu0 0.0
    %1881 = vmatpush1.msra.mxu0 0.0
    %1882 = vmatprep.subr.mxu0 0.0
    %1883 = vmatpush1.msra.mxu0 0.0
    %1884 = vmatprep.subr.mxu0 0.0
    %1885 = vmatpush1.msra.mxu0 0.0
    %1886 = vmatprep.subr.mxu0 0.0
    %1887 = vmatpush1.msra.mxu0 0.0
    %1888 = vmatprep.subr.mxu0 0.0
    %1889 = vmatpush1.msra.mxu0 0.0
    %1890 = vmatprep.subr.mxu0 0.0
    %1891 = vmatpush1.msra.mxu0 0.0
    %1892 = vmatprep.subr.mxu0 0.0
    %1893 = vmatpush1.msra.mxu0 0.0
    %1894 = vmatprep.subr.mxu0 0.0
    %1895 = vmatpush1.msra.mxu0 0.0
    %1896 = vmatprep.subr.mxu0 0.0
    %1897 = vmatpush1.msra.mxu0 0.0
    %1898 = vmatprep.subr.mxu0 0.0
    %1899 = vmatpush1.msra.mxu0 0.0
    %1900 = vmatprep.mubr.f32.mxu0 0.0
    %1901 = vmatmul.mubr.f32.gmra.mrb[0].mxu0 %v1834
    %v1902 = vpop.f32.mrb[0].mxu0
    %v1903 = vadd.f32 %v20, %v1902
    %v1904 = vpop.f32.mrb[0].mxu0
    %1905 = vdwg.mxu0
    %v1906 = vmax.f32 %v1903, 0.0
    %v1908 = vsel %vm46, %v1906, 0
    %1910 = vmatprep.subr.mxu0 0.0
    %1911 = vmatpush1.msra.mxu0 %v523
    %1912 = vmatprep.subr.mxu0 0.0
    %1913 = vmatpush1.msra.mxu0 0.0
    %1914 = vmatprep.subr.mxu0 0.0
    %1915 = vmatpush1.msra.mxu0 0.0
    %1916 = vmatprep.subr.mxu0 0.0
    %1917 = vmatpush1.msra.mxu0 0.0
    %1918 = vmatprep.subr.mxu0 0.0
    %1919 = vmatpush1.msra.mxu0 0.0
    %1920 = vmatprep.subr.mxu0 0.0
    %1921 = vmatpush1.msra.mxu0 0.0
    %1922 = vmatprep.subr.mxu0 0.0
    %1923 = vmatpush1.msra.mxu0 0.0
    %1924 = vmatprep.subr.mxu0 0.0
    %1925 = vmatpush1.msra.mxu0 0.0
    %1926 = vmatprep.subr.mxu0 0.0
    %1927 = vmatpush1.msra.mxu0 0.0
    %1928 = vmatprep.subr.mxu0 0.0
    %1929 = vmatpush1.msra.mxu0 0.0
    %1930 = vmatprep.subr.mxu0 0.0
    %1931 = vmatpush1.msra.mxu0 0.0
    %1932 = vmatprep.subr.mxu0 0.0
    %1933 = vmatpush1.msra.mxu0 0.0
    %1934 = vmatprep.subr.mxu0 0.0
    %1935 = vmatpush1.msra.mxu0 0.0
    %1936 = vmatprep.subr.mxu0 0.0
    %1937 = vmatpush1.msra.mxu0 0.0
    %1938 = vmatprep.subr.mxu0 0.0
    %1939 = vmatpush1.msra.mxu0 0.0
    %1940 = vmatprep.subr.mxu0 0.0
    %1941 = vmatpush1.msra.mxu0 0.0
    %1942 = vmatprep.subr.mxu0 0.0
    %1943 = vmatpush1.msra.mxu0 0.0
    %1944 = vmatprep.subr.mxu0 0.0
    %1945 = vmatpush1.msra.mxu0 0.0
    %1946 = vmatprep.subr.mxu0 0.0
    %1947 = vmatpush1.msra.mxu0 0.0
    %1948 = vmatprep.subr.mxu0 0.0
    %1949 = vmatpush1.msra.mxu0 0.0
    %1950 = vmatprep.subr.mxu0 0.0
    %1951 = vmatpush1.msra.mxu0 0.0
    %1952 = vmatprep.subr.mxu0 0.0
    %1953 = vmatpush1.msra.mxu0 0.0
    %1954 = vmatprep.subr.mxu0 0.0
    %1955 = vmatpush1.msra.mxu0 0.0
    %1956 = vmatprep.subr.mxu0 0.0
    %1957 = vmatpush1.msra.mxu0 0.0
    %1958 = vmatprep.subr.mxu0 0.0
    %1959 = vmatpush1.msra.mxu0 0.0
    %1960 = vmatprep.subr.mxu0 0.0
    %1961 = vmatpush1.msra.mxu0 0.0
    %1962 = vmatprep.subr.mxu0 0.0
    %1963 = vmatpush1.msra.mxu0 0.0
    %1964 = vmatprep.subr.mxu0 0.0
    %1965 = vmatpush1.msra.mxu0 0.0
    %1966 = vmatprep.subr.mxu0 0.0
    %1967 = vmatpush1.msra.mxu0 0.0
    %1968 = vmatprep.subr.mxu0 0.0
    %1969 = vmatpush1.msra.mxu0 0.0
    %1970 = vmatprep.subr.mxu0 0.0
    %1971 = vmatpush1.msra.mxu0 0.0
    %1972 = vmatprep.subr.mxu0 0.0
    %1973 = vmatpush1.msra.mxu0 0.0
    %1974 = vmatprep.mubr.f32.mxu0 0.0
    %1975 = vmatmul.mubr.f32.gmra.mrb[0].mxu0 %v1908
    %v1976 = vpop.f32.mrb[0].mxu0
    %v1977 = vadd.f32 %v23, %v1976
    %v1978 = vpop.f32.mrb[0].mxu0
    %1979 = vdwg.mxu0
    %v1980 = vmax.f32 %v1977, 0.0
    %v1981 = vrot.slane %v39, 2
    %v1983 = vadd.f32 %v1980, %v1981
    %1984 = vrot.lane.b32.xlu0 %v1675, 120
    %v1985 = vpop.permute.xlu0 %1984
    %v1987 = vadd.f32 %v204, %v1985
    %v1989 = vsel %vm46, %v1980, 0
    %1991 = vmatprep.subr.mxu0 0.0
    %1992 = vmatpush1.msra.mxu0 %v605
    %1993 = vmatprep.subr.mxu0 0.0
    %1994 = vmatpush1.msra.mxu0 0.0
    %1995 = vmatprep.subr.mxu0 0.0
    %1996 = vmatpush1.msra.mxu0 0.0
    %1997 = vmatprep.subr.mxu0 0.0
    %1998 = vmatpush1.msra.mxu0 0.0
    %1999 = vmatprep.subr.mxu0 0.0
    %2000 = vmatpush1.msra.mxu0 0.0
    %2001 = vmatprep.subr.mxu0 0.0
    %2002 = vmatpush1.msra.mxu0 0.0
    %2003 = vmatprep.subr.mxu0 0.0
    %2004 = vmatpush1.msra.mxu0 0.0
    %2005 = vmatprep.subr.mxu0 0.0
    %2006 = vmatpush1.msra.mxu0 0.0
    %2007 = vmatprep.subr.mxu0 0.0
    %2008 = vmatpush1.msra.mxu0 0.0
    %2009 = vmatprep.subr.mxu0 0.0
    %2010 = vmatpush1.msra.mxu0 0.0
    %2011 = vmatprep.subr.mxu0 0.0
    %2012 = vmatpush1.msra.mxu0 0.0
    %2013 = vmatprep.subr.mxu0 0.0
    %2014 = vmatpush1.msra.mxu0 0.0
    %2015 = vmatprep.subr.mxu0 0.0
    %2016 = vmatpush1.msra.mxu0 0.0
    %2017 = vmatprep.subr.mxu0 0.0
    %2018 = vmatpush1.msra.mxu0 0.0
    %2019 = vmatprep.subr.mxu0 0.0
    %2020 = vmatpush1.msra.mxu0 0.0
    %2021 = vmatprep.subr.mxu0 0.0
    %2022 = vmatpush1.msra.mxu0 0.0
    %2023 = vmatprep.subr.mxu0 0.0
    %2024 = vmatpush1.msra.mxu0 0.0
    %2025 = vmatprep.subr.mxu0 0.0
    %2026 = vmatpush1.msra.mxu0 0.0
    %2027 = vmatprep.subr.mxu0 0.0
    %2028 = vmatpush1.msra.mxu0 0.0
    %2029 = vmatprep.subr.mxu0 0.0
    %2030 = vmatpush1.msra.mxu0 0.0
    %2031 = vmatprep.subr.mxu0 0.0
    %2032 = vmatpush1.msra.mxu0 0.0
    %2033 = vmatprep.subr.mxu0 0.0
    %2034 = vmatpush1.msra.mxu0 0.0
    %2035 = vmatprep.subr.mxu0 0.0
    %2036 = vmatpush1.msra.mxu0 0.0
    %2037 = vmatprep.subr.mxu0 0.0
    %2038 = vmatpush1.msra.mxu0 0.0
    %2039 = vmatprep.subr.mxu0 0.0
    %2040 = vmatpush1.msra.mxu0 0.0
    %2041 = vmatprep.subr.mxu0 0.0
    %2042 = vmatpush1.msra.mxu0 0.0
    %2043 = vmatprep.subr.mxu0 0.0
    %2044 = vmatpush1.msra.mxu0 0.0
    %2045 = vmatprep.subr.mxu0 0.0
    %2046 = vmatpush1.msra.mxu0 0.0
    %2047 = vmatprep.subr.mxu0 0.0
    %2048 = vmatpush1.msra.mxu0 0.0
    %2049 = vmatprep.subr.mxu0 0.0
    %2050 = vmatpush1.msra.mxu0 0.0
    %2051 = vmatprep.subr.mxu0 0.0
    %2052 = vmatpush1.msra.mxu0 0.0
    %2053 = vmatprep.subr.mxu0 0.0
    %2054 = vmatpush1.msra.mxu0 0.0
    %2055 = vmatprep.mubr.f32.mxu0 0.0
    %2056 = vmatmul.mubr.f32.gmra.mrb[0].mxu0 %v1989
    %v2057 = vpop.f32.mrb[0].mxu0
    %v2058 = vadd.f32 0.0, %v2057
    %v2059 = vpop.f32.mrb[0].mxu0
    %2060 = vdwg.mxu0
    %v2062 = vrot.slane %v2058, 6
    %v2064 = vadd.f32 %v1987, %v2062
    %v2065 = vmax.f32 %v2064, 0.0
    %v2067 = vrot.slane %v2065, 2
    %v2068 = vsel %vm679, %v2067, 0
    %2070 = vmatprep.subr.mxu0 0.0
    %2071 = vmatpush1.msra.mxu0 %v25
    %2072 = vmatprep.subr.mxu0 0.0
    %2073 = vmatpush1.msra.mxu0 %v684
    %2074 = vmatprep.subr.mxu0 0.0
    %2075 = vmatpush1.msra.mxu0 0.0
    %2076 = vmatprep.subr.mxu0 0.0
    %2077 = vmatpush1.msra.mxu0 0.0
    %2078 = vmatprep.subr.mxu0 0.0
    %2079 = vmatpush1.msra.mxu0 0.0
    %2080 = vmatprep.subr.mxu0 0.0
    %2081 = vmatpush1.msra.mxu0 0.0
    %2082 = vmatprep.subr.mxu0 0.0
    %2083 = vmatpush1.msra.mxu0 0.0
    %2084 = vmatprep.subr.mxu0 0.0
    %2085 = vmatpush1.msra.mxu0 0.0
    %2086 = vmatprep.subr.mxu0 0.0
    %2087 = vmatpush1.msra.mxu0 0.0
    %2088 = vmatprep.subr.mxu0 0.0
    %2089 = vmatpush1.msra.mxu0 0.0
    %2090 = vmatprep.subr.mxu0 0.0
    %2091 = vmatpush1.msra.mxu0 0.0
    %2092 = vmatprep.subr.mxu0 0.0
    %2093 = vmatpush1.msra.mxu0 0.0
    %2094 = vmatprep.subr.mxu0 0.0
    %2095 = vmatpush1.msra.mxu0 0.0
    %2096 = vmatprep.subr.mxu0 0.0
    %2097 = vmatpush1.msra.mxu0 0.0
    %2098 = vmatprep.subr.mxu0 0.0
    %2099 = vmatpush1.msra.mxu0 0.0
    %2100 = vmatprep.subr.mxu0 0.0
    %2101 = vmatpush1.msra.mxu0 0.0
    %2102 = vmatprep.subr.mxu0 0.0
    %2103 = vmatpush1.msra.mxu0 0.0
    %2104 = vmatprep.subr.mxu0 0.0
    %2105 = vmatpush1.msra.mxu0 0.0
    %2106 = vmatprep.subr.mxu0 0.0
    %2107 = vmatpush1.msra.mxu0 0.0
    %2108 = vmatprep.subr.mxu0 0.0
    %2109 = vmatpush1.msra.mxu0 0.0
    %2110 = vmatprep.subr.mxu0 0.0
    %2111 = vmatpush1.msra.mxu0 0.0
    %2112 = vmatprep.subr.mxu0 0.0
    %2113 = vmatpush1.msra.mxu0 0.0
    %2114 = vmatprep.subr.mxu0 0.0
    %2115 = vmatpush1.msra.mxu0 0.0
    %2116 = vmatprep.subr.mxu0 0.0
    %2117 = vmatpush1.msra.mxu0 0.0
    %2118 = vmatprep.subr.mxu0 0.0
    %2119 = vmatpush1.msra.mxu0 0.0
    %2120 = vmatprep.subr.mxu0 0.0
    %2121 = vmatpush1.msra.mxu0 0.0
    %2122 = vmatprep.subr.mxu0 0.0
    %2123 = vmatpush1.msra.mxu0 0.0
    %2124 = vmatprep.subr.mxu0 0.0
    %2125 = vmatpush1.msra.mxu0 0.0
    %2126 = vmatprep.subr.mxu0 0.0
    %2127 = vmatpush1.msra.mxu0 0.0
    %2128 = vmatprep.subr.mxu0 0.0
    %2129 = vmatpush1.msra.mxu0 0.0
    %2130 = vmatprep.subr.mxu0 0.0
    %2131 = vmatpush1.msra.mxu0 0.0
    %2132 = vmatprep.subr.mxu0 0.0
    %2133 = vmatpush1.msra.mxu0 0.0
    %2134 = vmatprep.mubr.f32.mxu0 0.0
    %2135 = vmatmul.mubr.f32.gmra.mrb[0].mxu0 %v2068
    %v2136 = vpop.f32.mrb[0].mxu0
    %v2137 = vadd.f32 %v27, %v2136
    %v2138 = vpop.f32.mrb[0].mxu0
    %2139 = vdwg.mxu0
    %v2140 = vmax.f32 %v2137, 0.0
    %v2142 = vsel %vm46, %v2140, 0
    %2144 = vmatprep.subr.mxu0 0.0
    %2145 = vmatpush1.msra.mxu0 %v761
    %2146 = vmatprep.subr.mxu0 0.0
    %2147 = vmatpush1.msra.mxu0 0.0
    %2148 = vmatprep.subr.mxu0 0.0
    %2149 = vmatpush1.msra.mxu0 0.0
    %2150 = vmatprep.subr.mxu0 0.0
    %2151 = vmatpush1.msra.mxu0 0.0
    %2152 = vmatprep.subr.mxu0 0.0
    %2153 = vmatpush1.msra.mxu0 0.0
    %2154 = vmatprep.subr.mxu0 0.0
    %2155 = vmatpush1.msra.mxu0 0.0
    %2156 = vmatprep.subr.mxu0 0.0
    %2157 = vmatpush1.msra.mxu0 0.0
    %2158 = vmatprep.subr.mxu0 0.0
    %2159 = vmatpush1.msra.mxu0 0.0
    %2160 = vmatprep.subr.mxu0 0.0
    %2161 = vmatpush1.msra.mxu0 0.0
    %2162 = vmatprep.subr.mxu0 0.0
    %2163 = vmatpush1.msra.mxu0 0.0
    %2164 = vmatprep.subr.mxu0 0.0
    %2165 = vmatpush1.msra.mxu0 0.0
    %2166 = vmatprep.subr.mxu0 0.0
    %2167 = vmatpush1.msra.mxu0 0.0
    %2168 = vmatprep.subr.mxu0 0.0
    %2169 = vmatpush1.msra.mxu0 0.0
    %2170 = vmatprep.subr.mxu0 0.0
    %2171 = vmatpush1.msra.mxu0 0.0
    %2172 = vmatprep.subr.mxu0 0.0
    %2173 = vmatpush1.msra.mxu0 0.0
    %2174 = vmatprep.subr.mxu0 0.0
    %2175 = vmatpush1.msra.mxu0 0.0
    %2176 = vmatprep.subr.mxu0 0.0
    %2177 = vmatpush1.msra.mxu0 0.0
    %2178 = vmatprep.subr.mxu0 0.0
    %2179 = vmatpush1.msra.mxu0 0.0
    %2180 = vmatprep.subr.mxu0 0.0
    %2181 = vmatpush1.msra.mxu0 0.0
    %2182 = vmatprep.subr.mxu0 0.0
    %2183 = vmatpush1.msra.mxu0 0.0
    %2184 = vmatprep.subr.mxu0 0.0
    %2185 = vmatpush1.msra.mxu0 0.0
    %2186 = vmatprep.subr.mxu0 0.0
    %2187 = vmatpush1.msra.mxu0 0.0
    %2188 = vmatprep.subr.mxu0 0.0
    %2189 = vmatpush1.msra.mxu0 0.0
    %2190 = vmatprep.subr.mxu0 0.0
    %2191 = vmatpush1.msra.mxu0 0.0
    %2192 = vmatprep.subr.mxu0 0.0
    %2193 = vmatpush1.msra.mxu0 0.0
    %2194 = vmatprep.subr.mxu0 0.0
    %2195 = vmatpush1.msra.mxu0 0.0
    %2196 = vmatprep.subr.mxu0 0.0
    %2197 = vmatpush1.msra.mxu0 0.0
    %2198 = vmatprep.subr.mxu0 0.0
    %2199 = vmatpush1.msra.mxu0 0.0
    %2200 = vmatprep.subr.mxu0 0.0
    %2201 = vmatpush1.msra.mxu0 0.0
    %2202 = vmatprep.subr.mxu0 0.0
    %2203 = vmatpush1.msra.mxu0 0.0
    %2204 = vmatprep.subr.mxu0 0.0
    %2205 = vmatpush1.msra.mxu0 0.0
    %2206 = vmatprep.subr.mxu0 0.0
    %2207 = vmatpush1.msra.mxu0 0.0
    %2208 = vmatprep.mubr.f32.mxu0 0.0
    %2209 = vmatmul.mubr.f32.gmra.mrb[0].mxu0 %v2142
    %v2210 = vpop.f32.mrb[0].mxu0
    %v2211 = vadd.f32 %v30, %v2210
    %v2212 = vpop.f32.mrb[0].mxu0
    %2213 = vdwg.mxu0
    %v2214 = vmax.f32 %v2211, 0.0
    %v2215 = vadd.f32 %v33, %v1598
    %v2216 = vadd.f32 %v2215, %v1983
    %v2218 = vsel %vm46, %v2214, 0
    %2220 = vmatprep.subr.mxu0 0.0
    %2221 = vmatpush1.msra.mxu0 %v840
    %2222 = vmatprep.subr.mxu0 0.0
    %2223 = vmatpush1.msra.mxu0 0.0
    %2224 = vmatprep.subr.mxu0 0.0
    %2225 = vmatpush1.msra.mxu0 0.0
    %2226 = vmatprep.subr.mxu0 0.0
    %2227 = vmatpush1.msra.mxu0 0.0
    %2228 = vmatprep.subr.mxu0 0.0
    %2229 = vmatpush1.msra.mxu0 0.0
    %2230 = vmatprep.subr.mxu0 0.0
    %2231 = vmatpush1.msra.mxu0 0.0
    %2232 = vmatprep.subr.mxu0 0.0
    %2233 = vmatpush1.msra.mxu0 0.0
    %2234 = vmatprep.subr.mxu0 0.0
    %2235 = vmatpush1.msra.mxu0 0.0
    %2236 = vmatprep.subr.mxu0 0.0
    %2237 = vmatpush1.msra.mxu0 0.0
    %2238 = vmatprep.subr.mxu0 0.0
    %2239 = vmatpush1.msra.mxu0 0.0
    %2240 = vmatprep.subr.mxu0 0.0
    %2241 = vmatpush1.msra.mxu0 0.0
    %2242 = vmatprep.subr.mxu0 0.0
    %2243 = vmatpush1.msra.mxu0 0.0
    %2244 = vmatprep.subr.mxu0 0.0
    %2245 = vmatpush1.msra.mxu0 0.0
    %2246 = vmatprep.subr.mxu0 0.0
    %2247 = vmatpush1.msra.mxu0 0.0
    %2248 = vmatprep.subr.mxu0 0.0
    %2249 = vmatpush1.msra.mxu0 0.0
    %2250 = vmatprep.subr.mxu0 0.0
    %2251 = vmatpush1.msra.mxu0 0.0
    %2252 = vmatprep.subr.mxu0 0.0
    %2253 = vmatpush1.msra.mxu0 0.0
    %2254 = vmatprep.subr.mxu0 0.0
    %2255 = vmatpush1.msra.mxu0 0.0
    %2256 = vmatprep.subr.mxu0 0.0
    %2257 = vmatpush1.msra.mxu0 0.0
    %2258 = vmatprep.subr.mxu0 0.0
    %2259 = vmatpush1.msra.mxu0 0.0
    %2260 = vmatprep.subr.mxu0 0.0
    %2261 = vmatpush1.msra.mxu0 0.0
    %2262 = vmatprep.subr.mxu0 0.0
    %2263 = vmatpush1.msra.mxu0 0.0
    %2264 = vmatprep.subr.mxu0 0.0
    %2265 = vmatpush1.msra.mxu0 0.0
    %2266 = vmatprep.subr.mxu0 0.0
    %2267 = vmatpush1.msra.mxu0 0.0
    %2268 = vmatprep.subr.mxu0 0.0
    %2269 = vmatpush1.msra.mxu0 0.0
    %2270 = vmatprep.subr.mxu0 0.0
    %2271 = vmatpush1.msra.mxu0 0.0
    %2272 = vmatprep.subr.mxu0 0.0
    %2273 = vmatpush1.msra.mxu0 0.0
    %2274 = vmatprep.subr.mxu0 0.0
    %2275 = vmatpush1.msra.mxu0 0.0
    %2276 = vmatprep.subr.mxu0 0.0
    %2277 = vmatpush1.msra.mxu0 0.0
    %2278 = vmatprep.subr.mxu0 0.0
    %2279 = vmatpush1.msra.mxu0 0.0
    %2280 = vmatprep.subr.mxu0 0.0
    %2281 = vmatpush1.msra.mxu0 0.0
    %2282 = vmatprep.subr.mxu0 0.0
    %2283 = vmatpush1.msra.mxu0 0.0
    %2284 = vmatprep.mubr.f32.mxu0 0.0
    %2285 = vmatmul.mubr.f32.gmra.mrb[0].mxu0 %v2218
    %v2286 = vpop.f32.mrb[0].mxu0
    %v2287 = vadd.f32 %v2216, %v2286
    %v2288 = vpop.f32.mrb[0].mxu0
    %2289 = vdwg.mxu0
    %v2291 = vsel %vm46, %v2287, 0
    %2293 = vmatprep.subr.mxu0 0.0
    %2294 = vmatpush1.msra.mxu0 %v211
    %2295 = vmatprep.subr.mxu0 0.0
    %2296 = vmatpush1.msra.mxu0 0.0
    %2297 = vmatprep.subr.mxu0 0.0
    %2298 = vmatpush1.msra.mxu0 0.0
    %2299 = vmatprep.subr.mxu0 0.0
    %2300 = vmatpush1.msra.mxu0 0.0
    %2301 = vmatprep.subr.mxu0 0.0
    %2302 = vmatpush1.msra.mxu0 0.0
    %2303 = vmatprep.subr.mxu0 0.0
    %2304 = vmatpush1.msra.mxu0 0.0
    %2305 = vmatprep.subr.mxu0 0.0
    %2306 = vmatpush1.msra.mxu0 0.0
    %2307 = vmatprep.subr.mxu0 0.0
    %2308 = vmatpush1.msra.mxu0 0.0
    %2309 = vmatprep.subr.mxu0 0.0
    %2310 = vmatpush1.msra.mxu0 0.0
    %2311 = vmatprep.subr.mxu0 0.0
    %2312 = vmatpush1.msra.mxu0 0.0
    %2313 = vmatprep.subr.mxu0 0.0
    %2314 = vmatpush1.msra.mxu0 0.0
    %2315 = vmatprep.subr.mxu0 0.0
    %2316 = vmatpush1.msra.mxu0 0.0
    %2317 = vmatprep.subr.mxu0 0.0
    %2318 = vmatpush1.msra.mxu0 0.0
    %2319 = vmatprep.subr.mxu0 0.0
    %2320 = vmatpush1.msra.mxu0 0.0
    %2321 = vmatprep.subr.mxu0 0.0
    %2322 = vmatpush1.msra.mxu0 0.0
    %2323 = vmatprep.subr.mxu0 0.0
    %2324 = vmatpush1.msra.mxu0 0.0
    %2325 = vmatprep.subr.mxu0 0.0
    %2326 = vmatpush1.msra.mxu0 0.0
    %2327 = vmatprep.subr.mxu0 0.0
    %2328 = vmatpush1.msra.mxu0 0.0
    %2329 = vmatprep.subr.mxu0 0.0
    %2330 = vmatpush1.msra.mxu0 0.0
    %2331 = vmatprep.subr.mxu0 0.0
    %2332 = vmatpush1.msra.mxu0 0.0
    %2333 = vmatprep.subr.mxu0 0.0
    %2334 = vmatpush1.msra.mxu0 0.0
    %2335 = vmatprep.subr.mxu0 0.0
    %2336 = vmatpush1.msra.mxu0 0.0
    %2337 = vmatprep.subr.mxu0 0.0
    %2338 = vmatpush1.msra.mxu0 0.0
    %2339 = vmatprep.subr.mxu0 0.0
    %2340 = vmatpush1.msra.mxu0 0.0
    %2341 = vmatprep.subr.mxu0 0.0
    %2342 = vmatpush1.msra.mxu0 0.0
    %2343 = vmatprep.subr.mxu0 0.0
    %2344 = vmatpush1.msra.mxu0 0.0
    %2345 = vmatprep.subr.mxu0 0.0
    %2346 = vmatpush1.msra.mxu0 0.0
    %2347 = vmatprep.subr.mxu0 0.0
    %2348 = vmatpush1.msra.mxu0 0.0
    %2349 = vmatprep.subr.mxu0 0.0
    %2350 = vmatpush1.msra.mxu0 0.0
    %2351 = vmatprep.subr.mxu0 0.0
    %2352 = vmatpush1.msra.mxu0 0.0
    %2353 = vmatprep.subr.mxu0 0.0
    %2354 = vmatpush1.msra.mxu0 0.0
    %2355 = vmatprep.subr.mxu0 0.0
    %2356 = vmatpush1.msra.mxu0 0.0
    %2357 = vmatprep.mubr.f32.mxu0 0.0
    %2358 = vmatmul.mubr.f32.gmra.mrb[0].mxu0 %v2291
    %v2359 = vpop.f32.mrb[0].mxu0
    %v2360 = vadd.f32 0.0, %v2359
    %v2361 = vpop.f32.mrb[0].mxu0
    %2362 = vdwg.mxu0
    %v2364 = vrot.slane %v2360, 5
    %v2366 = vadd.f32 %v121, %v2364
    %v2367 = vxor.u32 %v2366, 2147483648
    %v2368 = vmul.f32 %v2367, 1.442695
    %v2369 = vpow.pop %v2368
    %v2370 = vadd.f32 %v2369, 1.0
    %v2371 = vrcp.pop %v2370
    %v2372 = vmul.f32 1.0, %v2371
    %v2374 = vrot.slane %v2372, 3
    %v2375 = vsel %vm290, %v2374, 0
    %2377 = vmatprep.subr.mxu0 0.0
    %2378 = vmatpush1.msra.mxu0 %v13
    %2379 = vmatprep.subr.mxu0 0.0
    %2380 = vmatpush1.msra.mxu0 0.0
    %2381 = vmatprep.subr.mxu0 0.0
    %2382 = vmatpush1.msra.mxu0 0.0
    %2383 = vmatprep.subr.mxu0 0.0
    %2384 = vmatpush1.msra.mxu0 0.0
    %2385 = vmatprep.subr.mxu0 0.0
    %2386 = vmatpush1.msra.mxu0 0.0
    %2387 = vmatprep.subr.mxu0 0.0
    %2388 = vmatpush1.msra.mxu0 0.0
    %2389 = vmatprep.subr.mxu0 0.0
    %2390 = vmatpush1.msra.mxu0 0.0
    %2391 = vmatprep.subr.mxu0 0.0
    %2392 = vmatpush1.msra.mxu0 0.0
    %2393 = vmatprep.subr.mxu0 0.0
    %2394 = vmatpush1.msra.mxu0 0.0
    %2395 = vmatprep.subr.mxu0 0.0
    %2396 = vmatpush1.msra.mxu0 0.0
    %2397 = vmatprep.subr.mxu0 0.0
    %2398 = vmatpush1.msra.mxu0 0.0
    %2399 = vmatprep.subr.mxu0 0.0
    %2400 = vmatpush1.msra.mxu0 0.0
    %2401 = vmatprep.subr.mxu0 0.0
    %2402 = vmatpush1.msra.mxu0 0.0
    %2403 = vmatprep.subr.mxu0 0.0
    %2404 = vmatpush1.msra.mxu0 0.0
    %2405 = vmatprep.subr.mxu0 0.0
    %2406 = vmatpush1.msra.mxu0 0.0
    %2407 = vmatprep.subr.mxu0 0.0
    %2408 = vmatpush1.msra.mxu0 0.0
    %2409 = vmatprep.subr.mxu0 0.0
    %2410 = vmatpush1.msra.mxu0 0.0
    %2411 = vmatprep.subr.mxu0 0.0
    %2412 = vmatpush1.msra.mxu0 0.0
    %2413 = vmatprep.subr.mxu0 0.0
    %2414 = vmatpush1.msra.mxu0 0.0
    %2415 = vmatprep.subr.mxu0 0.0
    %2416 = vmatpush1.msra.mxu0 0.0
    %2417 = vmatprep.subr.mxu0 0.0
    %2418 = vmatpush1.msra.mxu0 0.0
    %2419 = vmatprep.subr.mxu0 0.0
    %2420 = vmatpush1.msra.mxu0 0.0
    %2421 = vmatprep.subr.mxu0 0.0
    %2422 = vmatpush1.msra.mxu0 0.0
    %2423 = vmatprep.subr.mxu0 0.0
    %2424 = vmatpush1.msra.mxu0 0.0
    %2425 = vmatprep.subr.mxu0 0.0
    %2426 = vmatpush1.msra.mxu0 0.0
    %2427 = vmatprep.subr.mxu0 0.0
    %2428 = vmatpush1.msra.mxu0 0.0
    %2429 = vmatprep.subr.mxu0 0.0
    %2430 = vmatpush1.msra.mxu0 0.0
    %2431 = vmatprep.subr.mxu0 0.0
    %2432 = vmatpush1.msra.mxu0 0.0
    %2433 = vmatprep.subr.mxu0 0.0
    %2434 = vmatpush1.msra.mxu0 0.0
    %2435 = vmatprep.subr.mxu0 0.0
    %2436 = vmatpush1.msra.mxu0 0.0
    %2437 = vmatprep.subr.mxu0 0.0
    %2438 = vmatpush1.msra.mxu0 0.0
    %2439 = vmatprep.subr.mxu0 0.0
    %2440 = vmatpush1.msra.mxu0 0.0
    %2441 = vmatprep.mubr.f32.mxu0 0.0
    %2442 = vmatmul.mubr.f32.gmra.mrb[0].mxu0 %v2375
    %v2443 = vpop.f32.mrb[0].mxu0
    %v2444 = vadd.f32 %v14, %v2443
    %v2445 = vpop.f32.mrb[0].mxu0
    %2446 = vdwg.mxu0
    %v2447 = vmax.f32 %v2444, 0.0
    %v2449 = vsel %vm46, %v2447, 0
    %2451 = vmatprep.subr.mxu0 0.0
    %2452 = vmatpush1.msra.mxu0 %v369
    %2453 = vmatprep.subr.mxu0 0.0
    %2454 = vmatpush1.msra.mxu0 0.0
    %2455 = vmatprep.subr.mxu0 0.0
    %2456 = vmatpush1.msra.mxu0 0.0
    %2457 = vmatprep.subr.mxu0 0.0
    %2458 = vmatpush1.msra.mxu0 0.0
    %2459 = vmatprep.subr.mxu0 0.0
    %2460 = vmatpush1.msra.mxu0 0.0
    %2461 = vmatprep.subr.mxu0 0.0
    %2462 = vmatpush1.msra.mxu0 0.0
    %2463 = vmatprep.subr.mxu0 0.0
    %2464 = vmatpush1.msra.mxu0 0.0
    %2465 = vmatprep.subr.mxu0 0.0
    %2466 = vmatpush1.msra.mxu0 0.0
    %2467 = vmatprep.subr.mxu0 0.0
    %2468 = vmatpush1.msra.mxu0 0.0
    %2469 = vmatprep.subr.mxu0 0.0
    %2470 = vmatpush1.msra.mxu0 0.0
    %2471 = vmatprep.subr.mxu0 0.0
    %2472 = vmatpush1.msra.mxu0 0.0
    %2473 = vmatprep.subr.mxu0 0.0
    %2474 = vmatpush1.msra.mxu0 0.0
    %2475 = vmatprep.subr.mxu0 0.0
    %2476 = vmatpush1.msra.mxu0 0.0
    %2477 = vmatprep.subr.mxu0 0.0
    %2478 = vmatpush1.msra.mxu0 0.0
    %2479 = vmatprep.subr.mxu0 0.0
    %2480 = vmatpush1.msra.mxu0 0.0
    %2481 = vmatprep.subr.mxu0 0.0
    %2482 = vmatpush1.msra.mxu0 0.0
    %2483 = vmatprep.subr.mxu0 0.0
    %2484 = vmatpush1.msra.mxu0 0.0
    %2485 = vmatprep.subr.mxu0 0.0
    %2486 = vmatpush1.msra.mxu0 0.0
    %2487 = vmatprep.subr.mxu0 0.0
    %2488 = vmatpush1.msra.mxu0 0.0
    %2489 = vmatprep.subr.mxu0 0.0
    %2490 = vmatpush1.msra.mxu0 0.0
    %2491 = vmatprep.subr.mxu0 0.0
    %2492 = vmatpush1.msra.mxu0 0.0
    %2493 = vmatprep.subr.mxu0 0.0
    %2494 = vmatpush1.msra.mxu0 0.0
    %2495 = vmatprep.subr.mxu0 0.0
    %2496 = vmatpush1.msra.mxu0 0.0
    %2497 = vmatprep.subr.mxu0 0.0
    %2498 = vmatpush1.msra.mxu0 0.0
    %2499 = vmatprep.subr.mxu0 0.0
    %2500 = vmatpush1.msra.mxu0 0.0
    %2501 = vmatprep.subr.mxu0 0.0
    %2502 = vmatpush1.msra.mxu0 0.0
    %2503 = vmatprep.subr.mxu0 0.0
    %2504 = vmatpush1.msra.mxu0 0.0
    %2505 = vmatprep.subr.mxu0 0.0
    %2506 = vmatpush1.msra.mxu0 0.0
    %2507 = vmatprep.subr.mxu0 0.0
    %2508 = vmatpush1.msra.mxu0 0.0
    %2509 = vmatprep.subr.mxu0 0.0
    %2510 = vmatpush1.msra.mxu0 0.0
    %2511 = vmatprep.subr.mxu0 0.0
    %2512 = vmatpush1.msra.mxu0 0.0
    %2513 = vmatprep.subr.mxu0 0.0
    %2514 = vmatpush1.msra.mxu0 0.0
    %2515 = vmatprep.mubr.f32.mxu0 0.0
    %2516 = vmatmul.mubr.f32.gmra.mrb[0].mxu0 %v2449
    %v2517 = vpop.f32.mrb[0].mxu0
    %v2518 = vadd.f32 %v17, %v2517
    %v2519 = vpop.f32.mrb[0].mxu0
    %2520 = vdwg.mxu0
    %v2521 = vmax.f32 %v2518, 0.0
    %v2523 = vsel %vm46, %v2521, 0
    %2525 = vmatprep.subr.mxu0 0.0
    %2526 = vmatpush1.msra.mxu0 %v446
    %2527 = vmatprep.subr.mxu0 0.0
    %2528 = vmatpush1.msra.mxu0 0.0
    %2529 = vmatprep.subr.mxu0 0.0
    %2530 = vmatpush1.msra.mxu0 0.0
    %2531 = vmatprep.subr.mxu0 0.0
    %2532 = vmatpush1.msra.mxu0 0.0
    %2533 = vmatprep.subr.mxu0 0.0
    %2534 = vmatpush1.msra.mxu0 0.0
    %2535 = vmatprep.subr.mxu0 0.0
    %2536 = vmatpush1.msra.mxu0 0.0
    %2537 = vmatprep.subr.mxu0 0.0
    %2538 = vmatpush1.msra.mxu0 0.0
    %2539 = vmatprep.subr.mxu0 0.0
    %2540 = vmatpush1.msra.mxu0 0.0
    %2541 = vmatprep.subr.mxu0 0.0
    %2542 = vmatpush1.msra.mxu0 0.0
    %2543 = vmatprep.subr.mxu0 0.0
    %2544 = vmatpush1.msra.mxu0 0.0
    %2545 = vmatprep.subr.mxu0 0.0
    %2546 = vmatpush1.msra.mxu0 0.0
    %2547 = vmatprep.subr.mxu0 0.0
    %2548 = vmatpush1.msra.mxu0 0.0
    %2549 = vmatprep.subr.mxu0 0.0
    %2550 = vmatpush1.msra.mxu0 0.0
    %2551 = vmatprep.subr.mxu0 0.0
    %2552 = vmatpush1.msra.mxu0 0.0
    %2553 = vmatprep.subr.mxu0 0.0
    %2554 = vmatpush1.msra.mxu0 0.0
    %2555 = vmatprep.subr.mxu0 0.0
    %2556 = vmatpush1.msra.mxu0 0.0
    %2557 = vmatprep.subr.mxu0 0.0
    %2558 = vmatpush1.msra.mxu0 0.0
    %2559 = vmatprep.subr.mxu0 0.0
    %2560 = vmatpush1.msra.mxu0 0.0
    %2561 = vmatprep.subr.mxu0 0.0
    %2562 = vmatpush1.msra.mxu0 0.0
    %2563 = vmatprep.subr.mxu0 0.0
    %2564 = vmatpush1.msra.mxu0 0.0
    %2565 = vmatprep.subr.mxu0 0.0
    %2566 = vmatpush1.msra.mxu0 0.0
    %2567 = vmatprep.subr.mxu0 0.0
    %2568 = vmatpush1.msra.mxu0 0.0
    %2569 = vmatprep.subr.mxu0 0.0
    %2570 = vmatpush1.msra.mxu0 0.0
    %2571 = vmatprep.subr.mxu0 0.0
    %2572 = vmatpush1.msra.mxu0 0.0
    %2573 = vmatprep.subr.mxu0 0.0
    %2574 = vmatpush1.msra.mxu0 0.0
    %2575 = vmatprep.subr.mxu0 0.0
    %2576 = vmatpush1.msra.mxu0 0.0
    %2577 = vmatprep.subr.mxu0 0.0
    %2578 = vmatpush1.msra.mxu0 0.0
    %2579 = vmatprep.subr.mxu0 0.0
    %2580 = vmatpush1.msra.mxu0 0.0
    %2581 = vmatprep.subr.mxu0 0.0
    %2582 = vmatpush1.msra.mxu0 0.0
    %2583 = vmatprep.subr.mxu0 0.0
    %2584 = vmatpush1.msra.mxu0 0.0
    %2585 = vmatprep.subr.mxu0 0.0
    %2586 = vmatpush1.msra.mxu0 0.0
    %2587 = vmatprep.subr.mxu0 0.0
    %2588 = vmatpush1.msra.mxu0 0.0
    %2589 = vmatprep.mubr.f32.mxu0 0.0
    %2590 = vmatmul.mubr.f32.gmra.mrb[0].mxu0 %v2523
    %v2591 = vpop.f32.mrb[0].mxu0
    %v2592 = vadd.f32 %v20, %v2591
    %v2593 = vpop.f32.mrb[0].mxu0
    %2594 = vdwg.mxu0
    %v2595 = vmax.f32 %v2592, 0.0
    %v2597 = vsel %vm46, %v2595, 0
    %2599 = vmatprep.subr.mxu0 0.0
    %2600 = vmatpush1.msra.mxu0 %v523
    %2601 = vmatprep.subr.mxu0 0.0
    %2602 = vmatpush1.msra.mxu0 0.0
    %2603 = vmatprep.subr.mxu0 0.0
    %2604 = vmatpush1.msra.mxu0 0.0
    %2605 = vmatprep.subr.mxu0 0.0
    %2606 = vmatpush1.msra.mxu0 0.0
    %2607 = vmatprep.subr.mxu0 0.0
    %2608 = vmatpush1.msra.mxu0 0.0
    %2609 = vmatprep.subr.mxu0 0.0
    %2610 = vmatpush1.msra.mxu0 0.0
    %2611 = vmatprep.subr.mxu0 0.0
    %2612 = vmatpush1.msra.mxu0 0.0
    %2613 = vmatprep.subr.mxu0 0.0
    %2614 = vmatpush1.msra.mxu0 0.0
    %2615 = vmatprep.subr.mxu0 0.0
    %2616 = vmatpush1.msra.mxu0 0.0
    %2617 = vmatprep.subr.mxu0 0.0
    %2618 = vmatpush1.msra.mxu0 0.0
    %2619 = vmatprep.subr.mxu0 0.0
    %2620 = vmatpush1.msra.mxu0 0.0
    %2621 = vmatprep.subr.mxu0 0.0
    %2622 = vmatpush1.msra.mxu0 0.0
    %2623 = vmatprep.subr.mxu0 0.0
    %2624 = vmatpush1.msra.mxu0 0.0
    %2625 = vmatprep.subr.mxu0 0.0
    %2626 = vmatpush1.msra.mxu0 0.0
    %2627 = vmatprep.subr.mxu0 0.0
    %2628 = vmatpush1.msra.mxu0 0.0
    %2629 = vmatprep.subr.mxu0 0.0
    %2630 = vmatpush1.msra.mxu0 0.0
    %2631 = vmatprep.subr.mxu0 0.0
    %2632 = vmatpush1.msra.mxu0 0.0
    %2633 = vmatprep.subr.mxu0 0.0
    %2634 = vmatpush1.msra.mxu0 0.0
    %2635 = vmatprep.subr.mxu0 0.0
    %2636 = vmatpush1.msra.mxu0 0.0
    %2637 = vmatprep.subr.mxu0 0.0
    %2638 = vmatpush1.msra.mxu0 0.0
    %2639 = vmatprep.subr.mxu0 0.0
    %2640 = vmatpush1.msra.mxu0 0.0
    %2641 = vmatprep.subr.mxu0 0.0
    %2642 = vmatpush1.msra.mxu0 0.0
    %2643 = vmatprep.subr.mxu0 0.0
    %2644 = vmatpush1.msra.mxu0 0.0
    %2645 = vmatprep.subr.mxu0 0.0
    %2646 = vmatpush1.msra.mxu0 0.0
    %2647 = vmatprep.subr.mxu0 0.0
    %2648 = vmatpush1.msra.mxu0 0.0
    %2649 = vmatprep.subr.mxu0 0.0
    %2650 = vmatpush1.msra.mxu0 0.0
    %2651 = vmatprep.subr.mxu0 0.0
    %2652 = vmatpush1.msra.mxu0 0.0
    %2653 = vmatprep.subr.mxu0 0.0
    %2654 = vmatpush1.msra.mxu0 0.0
    %2655 = vmatprep.subr.mxu0 0.0
    %2656 = vmatpush1.msra.mxu0 0.0
    %2657 = vmatprep.subr.mxu0 0.0
    %2658 = vmatpush1.msra.mxu0 0.0
    %2659 = vmatprep.subr.mxu0 0.0
    %2660 = vmatpush1.msra.mxu0 0.0
    %2661 = vmatprep.subr.mxu0 0.0
    %2662 = vmatpush1.msra.mxu0 0.0
    %2663 = vmatprep.mubr.f32.mxu0 0.0
    %2664 = vmatmul.mubr.f32.gmra.mrb[0].mxu0 %v2597
    %v2665 = vpop.f32.mrb[0].mxu0
    %v2666 = vadd.f32 %v23, %v2665
    %v2667 = vpop.f32.mrb[0].mxu0
    %2668 = vdwg.mxu0
    %v2669 = vmax.f32 %v2666, 0.0
    %v2670 = vrot.slane %v39, 3
    %v2672 = vadd.f32 %v2669, %v2670
    %2673 = vrot.lane.b32.xlu0 %v2364, 120
    %v2674 = vpop.permute.xlu0 %2673
    %v2676 = vadd.f32 %v204, %v2674
    %v2678 = vsel %vm46, %v2669, 0
    %2680 = vmatprep.subr.mxu0 0.0
    %2681 = vmatpush1.msra.mxu0 %v605
    %2682 = vmatprep.subr.mxu0 0.0
    %2683 = vmatpush1.msra.mxu0 0.0
    %2684 = vmatprep.subr.mxu0 0.0
    %2685 = vmatpush1.msra.mxu0 0.0
    %2686 = vmatprep.subr.mxu0 0.0
    %2687 = vmatpush1.msra.mxu0 0.0
    %2688 = vmatprep.subr.mxu0 0.0
    %2689 = vmatpush1.msra.mxu0 0.0
    %2690 = vmatprep.subr.mxu0 0.0
    %2691 = vmatpush1.msra.mxu0 0.0
    %2692 = vmatprep.subr.mxu0 0.0
    %2693 = vmatpush1.msra.mxu0 0.0
    %2694 = vmatprep.subr.mxu0 0.0
    %2695 = vmatpush1.msra.mxu0 0.0
    %2696 = vmatprep.subr.mxu0 0.0
    %2697 = vmatpush1.msra.mxu0 0.0
    %2698 = vmatprep.subr.mxu0 0.0
    %2699 = vmatpush1.msra.mxu0 0.0
    %2700 = vmatprep.subr.mxu0 0.0
    %2701 = vmatpush1.msra.mxu0 0.0
    %2702 = vmatprep.subr.mxu0 0.0
    %2703 = vmatpush1.msra.mxu0 0.0
    %2704 = vmatprep.subr.mxu0 0.0
    %2705 = vmatpush1.msra.mxu0 0.0
    %2706 = vmatprep.subr.mxu0 0.0
    %2707 = vmatpush1.msra.mxu0 0.0
    %2708 = vmatprep.subr.mxu0 0.0
    %2709 = vmatpush1.msra.mxu0 0.0
    %2710 = vmatprep.subr.mxu0 0.0
    %2711 = vmatpush1.msra.mxu0 0.0
    %2712 = vmatprep.subr.mxu0 0.0
    %2713 = vmatpush1.msra.mxu0 0.0
    %2714 = vmatprep.subr.mxu0 0.0
    %2715 = vmatpush1.msra.mxu0 0.0
    %2716 = vmatprep.subr.mxu0 0.0
    %2717 = vmatpush1.msra.mxu0 0.0
    %2718 = vmatprep.subr.mxu0 0.0
    %2719 = vmatpush1.msra.mxu0 0.0
    %2720 = vmatprep.subr.mxu0 0.0
    %2721 = vmatpush1.msra.mxu0 0.0
    %2722 = vmatprep.subr.mxu0 0.0
    %2723 = vmatpush1.msra.mxu0 0.0
    %2724 = vmatprep.subr.mxu0 0.0
    %2725 = vmatpush1.msra.mxu0 0.0
    %2726 = vmatprep.subr.mxu0 0.0
    %2727 = vmatpush1.msra.mxu0 0.0
    %2728 = vmatprep.subr.mxu0 0.0
    %2729 = vmatpush1.msra.mxu0 0.0
    %2730 = vmatprep.subr.mxu0 0.0
    %2731 = vmatpush1.msra.mxu0 0.0
    %2732 = vmatprep.subr.mxu0 0.0
    %2733 = vmatpush1.msra.mxu0 0.0
    %2734 = vmatprep.subr.mxu0 0.0
    %2735 = vmatpush1.msra.mxu0 0.0
    %2736 = vmatprep.subr.mxu0 0.0
    %2737 = vmatpush1.msra.mxu0 0.0
    %2738 = vmatprep.subr.mxu0 0.0
    %2739 = vmatpush1.msra.mxu0 0.0
    %2740 = vmatprep.subr.mxu0 0.0
    %2741 = vmatpush1.msra.mxu0 0.0
    %2742 = vmatprep.subr.mxu0 0.0
    %2743 = vmatpush1.msra.mxu0 0.0
    %2744 = vmatprep.mubr.f32.mxu0 0.0
    %2745 = vmatmul.mubr.f32.gmra.mrb[0].mxu0 %v2678
    %v2746 = vpop.f32.mrb[0].mxu0
    %v2747 = vadd.f32 0.0, %v2746
    %v2748 = vpop.f32.mrb[0].mxu0
    %2749 = vdwg.mxu0
    %v2751 = vrot.slane %v2747, 5
    %v2753 = vadd.f32 %v2676, %v2751
    %v2754 = vmax.f32 %v2753, 0.0
    %v2756 = vrot.slane %v2754, 3
    %v2757 = vsel %vm679, %v2756, 0
    %2759 = vmatprep.subr.mxu0 0.0
    %2760 = vmatpush1.msra.mxu0 %v25
    %2761 = vmatprep.subr.mxu0 0.0
    %2762 = vmatpush1.msra.mxu0 %v684
    %2763 = vmatprep.subr.mxu0 0.0
    %2764 = vmatpush1.msra.mxu0 0.0
    %2765 = vmatprep.subr.mxu0 0.0
    %2766 = vmatpush1.msra.mxu0 0.0
    %2767 = vmatprep.subr.mxu0 0.0
    %2768 = vmatpush1.msra.mxu0 0.0
    %2769 = vmatprep.subr.mxu0 0.0
    %2770 = vmatpush1.msra.mxu0 0.0
    %2771 = vmatprep.subr.mxu0 0.0
    %2772 = vmatpush1.msra.mxu0 0.0
    %2773 = vmatprep.subr.mxu0 0.0
    %2774 = vmatpush1.msra.mxu0 0.0
    %2775 = vmatprep.subr.mxu0 0.0
    %2776 = vmatpush1.msra.mxu0 0.0
    %2777 = vmatprep.subr.mxu0 0.0
    %2778 = vmatpush1.msra.mxu0 0.0
    %2779 = vmatprep.subr.mxu0 0.0
    %2780 = vmatpush1.msra.mxu0 0.0
    %2781 = vmatprep.subr.mxu0 0.0
    %2782 = vmatpush1.msra.mxu0 0.0
    %2783 = vmatprep.subr.mxu0 0.0
    %2784 = vmatpush1.msra.mxu0 0.0
    %2785 = vmatprep.subr.mxu0 0.0
    %2786 = vmatpush1.msra.mxu0 0.0
    %2787 = vmatprep.subr.mxu0 0.0
    %2788 = vmatpush1.msra.mxu0 0.0
    %2789 = vmatprep.subr.mxu0 0.0
    %2790 = vmatpush1.msra.mxu0 0.0
    %2791 = vmatprep.subr.mxu0 0.0
    %2792 = vmatpush1.msra.mxu0 0.0
    %2793 = vmatprep.subr.mxu0 0.0
    %2794 = vmatpush1.msra.mxu0 0.0
    %2795 = vmatprep.subr.mxu0 0.0
    %2796 = vmatpush1.msra.mxu0 0.0
    %2797 = vmatprep.subr.mxu0 0.0
    %2798 = vmatpush1.msra.mxu0 0.0
    %2799 = vmatprep.subr.mxu0 0.0
    %2800 = vmatpush1.msra.mxu0 0.0
    %2801 = vmatprep.subr.mxu0 0.0
    %2802 = vmatpush1.msra.mxu0 0.0
    %2803 = vmatprep.subr.mxu0 0.0
    %2804 = vmatpush1.msra.mxu0 0.0
    %2805 = vmatprep.subr.mxu0 0.0
    %2806 = vmatpush1.msra.mxu0 0.0
    %2807 = vmatprep.subr.mxu0 0.0
    %2808 = vmatpush1.msra.mxu0 0.0
    %2809 = vmatprep.subr.mxu0 0.0
    %2810 = vmatpush1.msra.mxu0 0.0
    %2811 = vmatprep.subr.mxu0 0.0
    %2812 = vmatpush1.msra.mxu0 0.0
    %2813 = vmatprep.subr.mxu0 0.0
    %2814 = vmatpush1.msra.mxu0 0.0
    %2815 = vmatprep.subr.mxu0 0.0
    %2816 = vmatpush1.msra.mxu0 0.0
    %2817 = vmatprep.subr.mxu0 0.0
    %2818 = vmatpush1.msra.mxu0 0.0
    %2819 = vmatprep.subr.mxu0 0.0
    %2820 = vmatpush1.msra.mxu0 0.0
    %2821 = vmatprep.subr.mxu0 0.0
    %2822 = vmatpush1.msra.mxu0 0.0
    %2823 = vmatprep.mubr.f32.mxu0 0.0
    %2824 = vmatmul.mubr.f32.gmra.mrb[0].mxu0 %v2757
    %v2825 = vpop.f32.mrb[0].mxu0
    %v2826 = vadd.f32 %v27, %v2825
    %v2827 = vpop.f32.mrb[0].mxu0
    %2828 = vdwg.mxu0
    %v2829 = vmax.f32 %v2826, 0.0
    %v2831 = vsel %vm46, %v2829, 0
    %2833 = vmatprep.subr.mxu0 0.0
    %2834 = vmatpush1.msra.mxu0 %v761
    %2835 = vmatprep.subr.mxu0 0.0
    %2836 = vmatpush1.msra.mxu0 0.0
    %2837 = vmatprep.subr.mxu0 0.0
    %2838 = vmatpush1.msra.mxu0 0.0
    %2839 = vmatprep.subr.mxu0 0.0
    %2840 = vmatpush1.msra.mxu0 0.0
    %2841 = vmatprep.subr.mxu0 0.0
    %2842 = vmatpush1.msra.mxu0 0.0
    %2843 = vmatprep.subr.mxu0 0.0
    %2844 = vmatpush1.msra.mxu0 0.0
    %2845 = vmatprep.subr.mxu0 0.0
    %2846 = vmatpush1.msra.mxu0 0.0
    %2847 = vmatprep.subr.mxu0 0.0
    %2848 = vmatpush1.msra.mxu0 0.0
    %2849 = vmatprep.subr.mxu0 0.0
    %2850 = vmatpush1.msra.mxu0 0.0
    %2851 = vmatprep.subr.mxu0 0.0
    %2852 = vmatpush1.msra.mxu0 0.0
    %2853 = vmatprep.subr.mxu0 0.0
    %2854 = vmatpush1.msra.mxu0 0.0
    %2855 = vmatprep.subr.mxu0 0.0
    %2856 = vmatpush1.msra.mxu0 0.0
    %2857 = vmatprep.subr.mxu0 0.0
    %2858 = vmatpush1.msra.mxu0 0.0
    %2859 = vmatprep.subr.mxu0 0.0
    %2860 = vmatpush1.msra.mxu0 0.0
    %2861 = vmatprep.subr.mxu0 0.0
    %2862 = vmatpush1.msra.mxu0 0.0
    %2863 = vmatprep.subr.mxu0 0.0
    %2864 = vmatpush1.msra.mxu0 0.0
    %2865 = vmatprep.subr.mxu0 0.0
    %2866 = vmatpush1.msra.mxu0 0.0
    %2867 = vmatprep.subr.mxu0 0.0
    %2868 = vmatpush1.msra.mxu0 0.0
    %2869 = vmatprep.subr.mxu0 0.0
    %2870 = vmatpush1.msra.mxu0 0.0
    %2871 = vmatprep.subr.mxu0 0.0
    %2872 = vmatpush1.msra.mxu0 0.0
    %2873 = vmatprep.subr.mxu0 0.0
    %2874 = vmatpush1.msra.mxu0 0.0
    %2875 = vmatprep.subr.mxu0 0.0
    %2876 = vmatpush1.msra.mxu0 0.0
    %2877 = vmatprep.subr.mxu0 0.0
    %2878 = vmatpush1.msra.mxu0 0.0
    %2879 = vmatprep.subr.mxu0 0.0
    %2880 = vmatpush1.msra.mxu0 0.0
    %2881 = vmatprep.subr.mxu0 0.0
    %2882 = vmatpush1.msra.mxu0 0.0
    %2883 = vmatprep.subr.mxu0 0.0
    %2884 = vmatpush1.msra.mxu0 0.0
    %2885 = vmatprep.subr.mxu0 0.0
    %2886 = vmatpush1.msra.mxu0 0.0
    %2887 = vmatprep.subr.mxu0 0.0
    %2888 = vmatpush1.msra.mxu0 0.0
    %2889 = vmatprep.subr.mxu0 0.0
    %2890 = vmatpush1.msra.mxu0 0.0
    %2891 = vmatprep.subr.mxu0 0.0
    %2892 = vmatpush1.msra.mxu0 0.0
    %2893 = vmatprep.subr.mxu0 0.0
    %2894 = vmatpush1.msra.mxu0 0.0
    %2895 = vmatprep.subr.mxu0 0.0
    %2896 = vmatpush1.msra.mxu0 0.0
    %2897 = vmatprep.mubr.f32.mxu0 0.0
    %2898 = vmatmul.mubr.f32.gmra.mrb[0].mxu0 %v2831
    %v2899 = vpop.f32.mrb[0].mxu0
    %v2900 = vadd.f32 %v30, %v2899
    %v2901 = vpop.f32.mrb[0].mxu0
    %2902 = vdwg.mxu0
    %v2903 = vmax.f32 %v2900, 0.0
    %v2904 = vadd.f32 %v33, %v2287
    %v2905 = vadd.f32 %v2904, %v2672
    %v2907 = vsel %vm46, %v2903, 0
    %2909 = vmatprep.subr.mxu0 0.0
    %2910 = vmatpush1.msra.mxu0 %v840
    %2911 = vmatprep.subr.mxu0 0.0
    %2912 = vmatpush1.msra.mxu0 0.0
    %2913 = vmatprep.subr.mxu0 0.0
    %2914 = vmatpush1.msra.mxu0 0.0
    %2915 = vmatprep.subr.mxu0 0.0
    %2916 = vmatpush1.msra.mxu0 0.0
    %2917 = vmatprep.subr.mxu0 0.0
    %2918 = vmatpush1.msra.mxu0 0.0
    %2919 = vmatprep.subr.mxu0 0.0
    %2920 = vmatpush1.msra.mxu0 0.0
    %2921 = vmatprep.subr.mxu0 0.0
    %2922 = vmatpush1.msra.mxu0 0.0
    %2923 = vmatprep.subr.mxu0 0.0
    %2924 = vmatpush1.msra.mxu0 0.0
    %2925 = vmatprep.subr.mxu0 0.0
    %2926 = vmatpush1.msra.mxu0 0.0
    %2927 = vmatprep.subr.mxu0 0.0
    %2928 = vmatpush1.msra.mxu0 0.0
    %2929 = vmatprep.subr.mxu0 0.0
    %2930 = vmatpush1.msra.mxu0 0.0
    %2931 = vmatprep.subr.mxu0 0.0
    %2932 = vmatpush1.msra.mxu0 0.0
    %2933 = vmatprep.subr.mxu0 0.0
    %2934 = vmatpush1.msra.mxu0 0.0
    %2935 = vmatprep.subr.mxu0 0.0
    %2936 = vmatpush1.msra.mxu0 0.0
    %2937 = vmatprep.subr.mxu0 0.0
    %2938 = vmatpush1.msra.mxu0 0.0
    %2939 = vmatprep.subr.mxu0 0.0
    %2940 = vmatpush1.msra.mxu0 0.0
    %2941 = vmatprep.subr.mxu0 0.0
    %2942 = vmatpush1.msra.mxu0 0.0
    %2943 = vmatprep.subr.mxu0 0.0
    %2944 = vmatpush1.msra.mxu0 0.0
    %2945 = vmatprep.subr.mxu0 0.0
    %2946 = vmatpush1.msra.mxu0 0.0
    %2947 = vmatprep.subr.mxu0 0.0
    %2948 = vmatpush1.msra.mxu0 0.0
    %2949 = vmatprep.subr.mxu0 0.0
    %2950 = vmatpush1.msra.mxu0 0.0
    %2951 = vmatprep.subr.mxu0 0.0
    %2952 = vmatpush1.msra.mxu0 0.0
    %2953 = vmatprep.subr.mxu0 0.0
    %2954 = vmatpush1.msra.mxu0 0.0
    %2955 = vmatprep.subr.mxu0 0.0
    %2956 = vmatpush1.msra.mxu0 0.0
    %2957 = vmatprep.subr.mxu0 0.0
    %2958 = vmatpush1.msra.mxu0 0.0
    %2959 = vmatprep.subr.mxu0 0.0
    %2960 = vmatpush1.msra.mxu0 0.0
    %2961 = vmatprep.subr.mxu0 0.0
    %2962 = vmatpush1.msra.mxu0 0.0
    %2963 = vmatprep.subr.mxu0 0.0
    %2964 = vmatpush1.msra.mxu0 0.0
    %2965 = vmatprep.subr.mxu0 0.0
    %2966 = vmatpush1.msra.mxu0 0.0
    %2967 = vmatprep.subr.mxu0 0.0
    %2968 = vmatpush1.msra.mxu0 0.0
    %2969 = vmatprep.subr.mxu0 0.0
    %2970 = vmatpush1.msra.mxu0 0.0
    %2971 = vmatprep.subr.mxu0 0.0
    %2972 = vmatpush1.msra.mxu0 0.0
    %2973 = vmatprep.mubr.f32.mxu0 0.0
    %2974 = vmatmul.mubr.f32.gmra.mrb[0].mxu0 %v2907
    %v2975 = vpop.f32.mrb[0].mxu0
    %v2976 = vadd.f32 %v2905, %v2975
    %v2977 = vpop.f32.mrb[0].mxu0
    %2978 = vdwg.mxu0
    %v2980 = vsel %vm46, %v2976, 0
    %2982 = vmatprep.subr.mxu0 0.0
    %2983 = vmatpush1.msra.mxu0 %v211
    %2984 = vmatprep.subr.mxu0 0.0
    %2985 = vmatpush1.msra.mxu0 0.0
    %2986 = vmatprep.subr.mxu0 0.0
    %2987 = vmatpush1.msra.mxu0 0.0
    %2988 = vmatprep.subr.mxu0 0.0
    %2989 = vmatpush1.msra.mxu0 0.0
    %2990 = vmatprep.subr.mxu0 0.0
    %2991 = vmatpush1.msra.mxu0 0.0
    %2992 = vmatprep.subr.mxu0 0.0
    %2993 = vmatpush1.msra.mxu0 0.0
    %2994 = vmatprep.subr.mxu0 0.0
    %2995 = vmatpush1.msra.mxu0 0.0
    %2996 = vmatprep.subr.mxu0 0.0
    %2997 = vmatpush1.msra.mxu0 0.0
    %2998 = vmatprep.subr.mxu0 0.0
    %2999 = vmatpush1.msra.mxu0 0.0
    %3000 = vmatprep.subr.mxu0 0.0
    %3001 = vmatpush1.msra.mxu0 0.0
    %3002 = vmatprep.subr.mxu0 0.0
    %3003 = vmatpush1.msra.mxu0 0.0
    %3004 = vmatprep.subr.mxu0 0.0
    %3005 = vmatpush1.msra.mxu0 0.0
    %3006 = vmatprep.subr.mxu0 0.0
    %3007 = vmatpush1.msra.mxu0 0.0
    %3008 = vmatprep.subr.mxu0 0.0
    %3009 = vmatpush1.msra.mxu0 0.0
    %3010 = vmatprep.subr.mxu0 0.0
    %3011 = vmatpush1.msra.mxu0 0.0
    %3012 = vmatprep.subr.mxu0 0.0
    %3013 = vmatpush1.msra.mxu0 0.0
    %3014 = vmatprep.subr.mxu0 0.0
    %3015 = vmatpush1.msra.mxu0 0.0
    %3016 = vmatprep.subr.mxu0 0.0
    %3017 = vmatpush1.msra.mxu0 0.0
    %3018 = vmatprep.subr.mxu0 0.0
    %3019 = vmatpush1.msra.mxu0 0.0
    %3020 = vmatprep.subr.mxu0 0.0
    %3021 = vmatpush1.msra.mxu0 0.0
    %3022 = vmatprep.subr.mxu0 0.0
    %3023 = vmatpush1.msra.mxu0 0.0
    %3024 = vmatprep.subr.mxu0 0.0
    %3025 = vmatpush1.msra.mxu0 0.0
    %3026 = vmatprep.subr.mxu0 0.0
    %3027 = vmatpush1.msra.mxu0 0.0
    %3028 = vmatprep.subr.mxu0 0.0
    %3029 = vmatpush1.msra.mxu0 0.0
    %3030 = vmatprep.subr.mxu0 0.0
    %3031 = vmatpush1.msra.mxu0 0.0
    %3032 = vmatprep.subr.mxu0 0.0
    %3033 = vmatpush1.msra.mxu0 0.0
    %3034 = vmatprep.subr.mxu0 0.0
    %3035 = vmatpush1.msra.mxu0 0.0
    %3036 = vmatprep.subr.mxu0 0.0
    %3037 = vmatpush1.msra.mxu0 0.0
    %3038 = vmatprep.subr.mxu0 0.0
    %3039 = vmatpush1.msra.mxu0 0.0
    %3040 = vmatprep.subr.mxu0 0.0
    %3041 = vmatpush1.msra.mxu0 0.0
    %3042 = vmatprep.subr.mxu0 0.0
    %3043 = vmatpush1.msra.mxu0 0.0
    %3044 = vmatprep.subr.mxu0 0.0
    %3045 = vmatpush1.msra.mxu0 0.0
    %3046 = vmatprep.mubr.f32.mxu0 0.0
    %3047 = vmatmul.mubr.f32.gmra.mrb[0].mxu0 %v2980
    %v3048 = vpop.f32.mrb[0].mxu0
    %v3049 = vadd.f32 0.0, %v3048
    %v3050 = vpop.f32.mrb[0].mxu0
    %3051 = vdwg.mxu0
    %v3053 = vrot.slane %v3049, 4
    %v3055 = vadd.f32 %v121, %v3053
    %v3056 = vxor.u32 %v3055, 2147483648
    %v3057 = vmul.f32 %v3056, 1.442695
    %v3058 = vpow.pop %v3057
    %v3059 = vadd.f32 %v3058, 1.0
    %v3060 = vrcp.pop %v3059
    %v3061 = vmul.f32 1.0, %v3060
    %v3063 = vrot.slane %v3061, 4
    %v3064 = vsel %vm290, %v3063, 0
    %3066 = vmatprep.subr.mxu0 0.0
    %3067 = vmatpush1.msra.mxu0 %v13
    %3068 = vmatprep.subr.mxu0 0.0
    %3069 = vmatpush1.msra.mxu0 0.0
    %3070 = vmatprep.subr.mxu0 0.0
    %3071 = vmatpush1.msra.mxu0 0.0
    %3072 = vmatprep.subr.mxu0 0.0
    %3073 = vmatpush1.msra.mxu0 0.0
    %3074 = vmatprep.subr.mxu0 0.0
    %3075 = vmatpush1.msra.mxu0 0.0
    %3076 = vmatprep.subr.mxu0 0.0
    %3077 = vmatpush1.msra.mxu0 0.0
    %3078 = vmatprep.subr.mxu0 0.0
    %3079 = vmatpush1.msra.mxu0 0.0
    %3080 = vmatprep.subr.mxu0 0.0
    %3081 = vmatpush1.msra.mxu0 0.0
    %3082 = vmatprep.subr.mxu0 0.0
    %3083 = vmatpush1.msra.mxu0 0.0
    %3084 = vmatprep.subr.mxu0 0.0
    %3085 = vmatpush1.msra.mxu0 0.0
    %3086 = vmatprep.subr.mxu0 0.0
    %3087 = vmatpush1.msra.mxu0 0.0
    %3088 = vmatprep.subr.mxu0 0.0
    %3089 = vmatpush1.msra.mxu0 0.0
    %3090 = vmatprep.subr.mxu0 0.0
    %3091 = vmatpush1.msra.mxu0 0.0
    %3092 = vmatprep.subr.mxu0 0.0
    %3093 = vmatpush1.msra.mxu0 0.0
    %3094 = vmatprep.subr.mxu0 0.0
    %3095 = vmatpush1.msra.mxu0 0.0
    %3096 = vmatprep.subr.mxu0 0.0
    %3097 = vmatpush1.msra.mxu0 0.0
    %3098 = vmatprep.subr.mxu0 0.0
    %3099 = vmatpush1.msra.mxu0 0.0
    %3100 = vmatprep.subr.mxu0 0.0
    %3101 = vmatpush1.msra.mxu0 0.0
    %3102 = vmatprep.subr.mxu0 0.0
    %3103 = vmatpush1.msra.mxu0 0.0
    %3104 = vmatprep.subr.mxu0 0.0
    %3105 = vmatpush1.msra.mxu0 0.0
    %3106 = vmatprep.subr.mxu0 0.0
    %3107 = vmatpush1.msra.mxu0 0.0
    %3108 = vmatprep.subr.mxu0 0.0
    %3109 = vmatpush1.msra.mxu0 0.0
    %3110 = vmatprep.subr.mxu0 0.0
    %3111 = vmatpush1.msra.mxu0 0.0
    %3112 = vmatprep.subr.mxu0 0.0
    %3113 = vmatpush1.msra.mxu0 0.0
    %3114 = vmatprep.subr.mxu0 0.0
    %3115 = vmatpush1.msra.mxu0 0.0
    %3116 = vmatprep.subr.mxu0 0.0
    %3117 = vmatpush1.msra.mxu0 0.0
    %3118 = vmatprep.subr.mxu0 0.0
    %3119 = vmatpush1.msra.mxu0 0.0
    %3120 = vmatprep.subr.mxu0 0.0
    %3121 = vmatpush1.msra.mxu0 0.0
    %3122 = vmatprep.subr.mxu0 0.0
    %3123 = vmatpush1.msra.mxu0 0.0
    %3124 = vmatprep.subr.mxu0 0.0
    %3125 = vmatpush1.msra.mxu0 0.0
    %3126 = vmatprep.subr.mxu0 0.0
    %3127 = vmatpush1.msra.mxu0 0.0
    %3128 = vmatprep.subr.mxu0 0.0
    %3129 = vmatpush1.msra.mxu0 0.0
    %3130 = vmatprep.mubr.f32.mxu0 0.0
    %3131 = vmatmul.mubr.f32.gmra.mrb[0].mxu0 %v3064
    %v3132 = vpop.f32.mrb[0].mxu0
    %v3133 = vadd.f32 %v14, %v3132
    %v3134 = vpop.f32.mrb[0].mxu0
    %3135 = vdwg.mxu0
    %v3136 = vmax.f32 %v3133, 0.0
    %v3138 = vsel %vm46, %v3136, 0
    %3140 = vmatprep.subr.mxu0 0.0
    %3141 = vmatpush1.msra.mxu0 %v369
    %3142 = vmatprep.subr.mxu0 0.0
    %3143 = vmatpush1.msra.mxu0 0.0
    %3144 = vmatprep.subr.mxu0 0.0
    %3145 = vmatpush1.msra.mxu0 0.0
    %3146 = vmatprep.subr.mxu0 0.0
    %3147 = vmatpush1.msra.mxu0 0.0
    %3148 = vmatprep.subr.mxu0 0.0
    %3149 = vmatpush1.msra.mxu0 0.0
    %3150 = vmatprep.subr.mxu0 0.0
    %3151 = vmatpush1.msra.mxu0 0.0
    %3152 = vmatprep.subr.mxu0 0.0
    %3153 = vmatpush1.msra.mxu0 0.0
    %3154 = vmatprep.subr.mxu0 0.0
    %3155 = vmatpush1.msra.mxu0 0.0
    %3156 = vmatprep.subr.mxu0 0.0
    %3157 = vmatpush1.msra.mxu0 0.0
    %3158 = vmatprep.subr.mxu0 0.0
    %3159 = vmatpush1.msra.mxu0 0.0
    %3160 = vmatprep.subr.mxu0 0.0
    %3161 = vmatpush1.msra.mxu0 0.0
    %3162 = vmatprep.subr.mxu0 0.0
    %3163 = vmatpush1.msra.mxu0 0.0
    %3164 = vmatprep.subr.mxu0 0.0
    %3165 = vmatpush1.msra.mxu0 0.0
    %3166 = vmatprep.subr.mxu0 0.0
    %3167 = vmatpush1.msra.mxu0 0.0
    %3168 = vmatprep.subr.mxu0 0.0
    %3169 = vmatpush1.msra.mxu0 0.0
    %3170 = vmatprep.subr.mxu0 0.0
    %3171 = vmatpush1.msra.mxu0 0.0
    %3172 = vmatprep.subr.mxu0 0.0
    %3173 = vmatpush1.msra.mxu0 0.0
    %3174 = vmatprep.subr.mxu0 0.0
    %3175 = vmatpush1.msra.mxu0 0.0
    %3176 = vmatprep.subr.mxu0 0.0
    %3177 = vmatpush1.msra.mxu0 0.0
    %3178 = vmatprep.subr.mxu0 0.0
    %3179 = vmatpush1.msra.mxu0 0.0
    %3180 = vmatprep.subr.mxu0 0.0
    %3181 = vmatpush1.msra.mxu0 0.0
    %3182 = vmatprep.subr.mxu0 0.0
    %3183 = vmatpush1.msra.mxu0 0.0
    %3184 = vmatprep.subr.mxu0 0.0
    %3185 = vmatpush1.msra.mxu0 0.0
    %3186 = vmatprep.subr.mxu0 0.0
    %3187 = vmatpush1.msra.mxu0 0.0
    %3188 = vmatprep.subr.mxu0 0.0
    %3189 = vmatpush1.msra.mxu0 0.0
    %3190 = vmatprep.subr.mxu0 0.0
    %3191 = vmatpush1.msra.mxu0 0.0
    %3192 = vmatprep.subr.mxu0 0.0
    %3193 = vmatpush1.msra.mxu0 0.0
    %3194 = vmatprep.subr.mxu0 0.0
    %3195 = vmatpush1.msra.mxu0 0.0
    %3196 = vmatprep.subr.mxu0 0.0
    %3197 = vmatpush1.msra.mxu0 0.0
    %3198 = vmatprep.subr.mxu0 0.0
    %3199 = vmatpush1.msra.mxu0 0.0
    %3200 = vmatprep.subr.mxu0 0.0
    %3201 = vmatpush1.msra.mxu0 0.0
    %3202 = vmatprep.subr.mxu0 0.0
    %3203 = vmatpush1.msra.mxu0 0.0
    %3204 = vmatprep.mubr.f32.mxu0 0.0
    %3205 = vmatmul.mubr.f32.gmra.mrb[0].mxu0 %v3138
    %v3206 = vpop.f32.mrb[0].mxu0
    %v3207 = vadd.f32 %v17, %v3206
    %v3208 = vpop.f32.mrb[0].mxu0
    %3209 = vdwg.mxu0
    %v3210 = vmax.f32 %v3207, 0.0
    %v3212 = vsel %vm46, %v3210, 0
    %3214 = vmatprep.subr.mxu0 0.0
    %3215 = vmatpush1.msra.mxu0 %v446
    %3216 = vmatprep.subr.mxu0 0.0
    %3217 = vmatpush1.msra.mxu0 0.0
    %3218 = vmatprep.subr.mxu0 0.0
    %3219 = vmatpush1.msra.mxu0 0.0
    %3220 = vmatprep.subr.mxu0 0.0
    %3221 = vmatpush1.msra.mxu0 0.0
    %3222 = vmatprep.subr.mxu0 0.0
    %3223 = vmatpush1.msra.mxu0 0.0
    %3224 = vmatprep.subr.mxu0 0.0
    %3225 = vmatpush1.msra.mxu0 0.0
    %3226 = vmatprep.subr.mxu0 0.0
    %3227 = vmatpush1.msra.mxu0 0.0
    %3228 = vmatprep.subr.mxu0 0.0
    %3229 = vmatpush1.msra.mxu0 0.0
    %3230 = vmatprep.subr.mxu0 0.0
    %3231 = vmatpush1.msra.mxu0 0.0
    %3232 = vmatprep.subr.mxu0 0.0
    %3233 = vmatpush1.msra.mxu0 0.0
    %3234 = vmatprep.subr.mxu0 0.0
    %3235 = vmatpush1.msra.mxu0 0.0
    %3236 = vmatprep.subr.mxu0 0.0
    %3237 = vmatpush1.msra.mxu0 0.0
    %3238 = vmatprep.subr.mxu0 0.0
    %3239 = vmatpush1.msra.mxu0 0.0
    %3240 = vmatprep.subr.mxu0 0.0
    %3241 = vmatpush1.msra.mxu0 0.0
    %3242 = vmatprep.subr.mxu0 0.0
    %3243 = vmatpush1.msra.mxu0 0.0
    %3244 = vmatprep.subr.mxu0 0.0
    %3245 = vmatpush1.msra.mxu0 0.0
    %3246 = vmatprep.subr.mxu0 0.0
    %3247 = vmatpush1.msra.mxu0 0.0
    %3248 = vmatprep.subr.mxu0 0.0
    %3249 = vmatpush1.msra.mxu0 0.0
    %3250 = vmatprep.subr.mxu0 0.0
    %3251 = vmatpush1.msra.mxu0 0.0
    %3252 = vmatprep.subr.mxu0 0.0
    %3253 = vmatpush1.msra.mxu0 0.0
    %3254 = vmatprep.subr.mxu0 0.0
    %3255 = vmatpush1.msra.mxu0 0.0
    %3256 = vmatprep.subr.mxu0 0.0
    %3257 = vmatpush1.msra.mxu0 0.0
    %3258 = vmatprep.subr.mxu0 0.0
    %3259 = vmatpush1.msra.mxu0 0.0
    %3260 = vmatprep.subr.mxu0 0.0
    %3261 = vmatpush1.msra.mxu0 0.0
    %3262 = vmatprep.subr.mxu0 0.0
    %3263 = vmatpush1.msra.mxu0 0.0
    %3264 = vmatprep.subr.mxu0 0.0
    %3265 = vmatpush1.msra.mxu0 0.0
    %3266 = vmatprep.subr.mxu0 0.0
    %3267 = vmatpush1.msra.mxu0 0.0
    %3268 = vmatprep.subr.mxu0 0.0
    %3269 = vmatpush1.msra.mxu0 0.0
    %3270 = vmatprep.subr.mxu0 0.0
    %3271 = vmatpush1.msra.mxu0 0.0
    %3272 = vmatprep.subr.mxu0 0.0
    %3273 = vmatpush1.msra.mxu0 0.0
    %3274 = vmatprep.subr.mxu0 0.0
    %3275 = vmatpush1.msra.mxu0 0.0
    %3276 = vmatprep.subr.mxu0 0.0
    %3277 = vmatpush1.msra.mxu0 0.0
    %3278 = vmatprep.mubr.f32.mxu0 0.0
    %3279 = vmatmul.mubr.f32.gmra.mrb[0].mxu0 %v3212
    %v3280 = vpop.f32.mrb[0].mxu0
    %v3281 = vadd.f32 %v20, %v3280
    %v3282 = vpop.f32.mrb[0].mxu0
    %3283 = vdwg.mxu0
    %v3284 = vmax.f32 %v3281, 0.0
    %v3286 = vsel %vm46, %v3284, 0
    %3288 = vmatprep.subr.mxu0 0.0
    %3289 = vmatpush1.msra.mxu0 %v523
    %3290 = vmatprep.subr.mxu0 0.0
    %3291 = vmatpush1.msra.mxu0 0.0
    %3292 = vmatprep.subr.mxu0 0.0
    %3293 = vmatpush1.msra.mxu0 0.0
    %3294 = vmatprep.subr.mxu0 0.0
    %3295 = vmatpush1.msra.mxu0 0.0
    %3296 = vmatprep.subr.mxu0 0.0
    %3297 = vmatpush1.msra.mxu0 0.0
    %3298 = vmatprep.subr.mxu0 0.0
    %3299 = vmatpush1.msra.mxu0 0.0
    %3300 = vmatprep.subr.mxu0 0.0
    %3301 = vmatpush1.msra.mxu0 0.0
    %3302 = vmatprep.subr.mxu0 0.0
    %3303 = vmatpush1.msra.mxu0 0.0
    %3304 = vmatprep.subr.mxu0 0.0
    %3305 = vmatpush1.msra.mxu0 0.0
    %3306 = vmatprep.subr.mxu0 0.0
    %3307 = vmatpush1.msra.mxu0 0.0
    %3308 = vmatprep.subr.mxu0 0.0
    %3309 = vmatpush1.msra.mxu0 0.0
    %3310 = vmatprep.subr.mxu0 0.0
    %3311 = vmatpush1.msra.mxu0 0.0
    %3312 = vmatprep.subr.mxu0 0.0
    %3313 = vmatpush1.msra.mxu0 0.0
    %3314 = vmatprep.subr.mxu0 0.0
    %3315 = vmatpush1.msra.mxu0 0.0
    %3316 = vmatprep.subr.mxu0 0.0
    %3317 = vmatpush1.msra.mxu0 0.0
    %3318 = vmatprep.subr.mxu0 0.0
    %3319 = vmatpush1.msra.mxu0 0.0
    %3320 = vmatprep.subr.mxu0 0.0
    %3321 = vmatpush1.msra.mxu0 0.0
    %3322 = vmatprep.subr.mxu0 0.0
    %3323 = vmatpush1.msra.mxu0 0.0
    %3324 = vmatprep.subr.mxu0 0.0
    %3325 = vmatpush1.msra.mxu0 0.0
    %3326 = vmatprep.subr.mxu0 0.0
    %3327 = vmatpush1.msra.mxu0 0.0
    %3328 = vmatprep.subr.mxu0 0.0
    %3329 = vmatpush1.msra.mxu0 0.0
    %3330 = vmatprep.subr.mxu0 0.0
    %3331 = vmatpush1.msra.mxu0 0.0
    %3332 = vmatprep.subr.mxu0 0.0
    %3333 = vmatpush1.msra.mxu0 0.0
    %3334 = vmatprep.subr.mxu0 0.0
    %3335 = vmatpush1.msra.mxu0 0.0
    %3336 = vmatprep.subr.mxu0 0.0
    %3337 = vmatpush1.msra.mxu0 0.0
    %3338 = vmatprep.subr.mxu0 0.0
    %3339 = vmatpush1.msra.mxu0 0.0
    %3340 = vmatprep.subr.mxu0 0.0
    %3341 = vmatpush1.msra.mxu0 0.0
    %3342 = vmatprep.subr.mxu0 0.0
    %3343 = vmatpush1.msra.mxu0 0.0
    %3344 = vmatprep.subr.mxu0 0.0
    %3345 = vmatpush1.msra.mxu0 0.0
    %3346 = vmatprep.subr.mxu0 0.0
    %3347 = vmatpush1.msra.mxu0 0.0
    %3348 = vmatprep.subr.mxu0 0.0
    %3349 = vmatpush1.msra.mxu0 0.0
    %3350 = vmatprep.subr.mxu0 0.0
    %3351 = vmatpush1.msra.mxu0 0.0
    %3352 = vmatprep.mubr.f32.mxu0 0.0
    %3353 = vmatmul.mubr.f32.gmra.mrb[0].mxu0 %v3286
    %v3354 = vpop.f32.mrb[0].mxu0
    %v3355 = vadd.f32 %v23, %v3354
    %v3356 = vpop.f32.mrb[0].mxu0
    %3357 = vdwg.mxu0
    %v3358 = vmax.f32 %v3355, 0.0
    %v3359 = vrot.slane %v39, 4
    %v3361 = vadd.f32 %v3358, %v3359
    %3362 = vrot.lane.b32.xlu0 %v3053, 120
    %v3363 = vpop.permute.xlu0 %3362
    %v3365 = vadd.f32 %v204, %v3363
    %v3367 = vsel %vm46, %v3358, 0
    %3369 = vmatprep.subr.mxu0 0.0
    %3370 = vmatpush1.msra.mxu0 %v605
    %3371 = vmatprep.subr.mxu0 0.0
    %3372 = vmatpush1.msra.mxu0 0.0
    %3373 = vmatprep.subr.mxu0 0.0
    %3374 = vmatpush1.msra.mxu0 0.0
    %3375 = vmatprep.subr.mxu0 0.0
    %3376 = vmatpush1.msra.mxu0 0.0
    %3377 = vmatprep.subr.mxu0 0.0
    %3378 = vmatpush1.msra.mxu0 0.0
    %3379 = vmatprep.subr.mxu0 0.0
    %3380 = vmatpush1.msra.mxu0 0.0
    %3381 = vmatprep.subr.mxu0 0.0
    %3382 = vmatpush1.msra.mxu0 0.0
    %3383 = vmatprep.subr.mxu0 0.0
    %3384 = vmatpush1.msra.mxu0 0.0
    %3385 = vmatprep.subr.mxu0 0.0
    %3386 = vmatpush1.msra.mxu0 0.0
    %3387 = vmatprep.subr.mxu0 0.0
    %3388 = vmatpush1.msra.mxu0 0.0
    %3389 = vmatprep.subr.mxu0 0.0
    %3390 = vmatpush1.msra.mxu0 0.0
    %3391 = vmatprep.subr.mxu0 0.0
    %3392 = vmatpush1.msra.mxu0 0.0
    %3393 = vmatprep.subr.mxu0 0.0
    %3394 = vmatpush1.msra.mxu0 0.0
    %3395 = vmatprep.subr.mxu0 0.0
    %3396 = vmatpush1.msra.mxu0 0.0
    %3397 = vmatprep.subr.mxu0 0.0
    %3398 = vmatpush1.msra.mxu0 0.0
    %3399 = vmatprep.subr.mxu0 0.0
    %3400 = vmatpush1.msra.mxu0 0.0
    %3401 = vmatprep.subr.mxu0 0.0
    %3402 = vmatpush1.msra.mxu0 0.0
    %3403 = vmatprep.subr.mxu0 0.0
    %3404 = vmatpush1.msra.mxu0 0.0
    %3405 = vmatprep.subr.mxu0 0.0
    %3406 = vmatpush1.msra.mxu0 0.0
    %3407 = vmatprep.subr.mxu0 0.0
    %3408 = vmatpush1.msra.mxu0 0.0
    %3409 = vmatprep.subr.mxu0 0.0
    %3410 = vmatpush1.msra.mxu0 0.0
    %3411 = vmatprep.subr.mxu0 0.0
    %3412 = vmatpush1.msra.mxu0 0.0
    %3413 = vmatprep.subr.mxu0 0.0
    %3414 = vmatpush1.msra.mxu0 0.0
    %3415 = vmatprep.subr.mxu0 0.0
    %3416 = vmatpush1.msra.mxu0 0.0
    %3417 = vmatprep.subr.mxu0 0.0
    %3418 = vmatpush1.msra.mxu0 0.0
    %3419 = vmatprep.subr.mxu0 0.0
    %3420 = vmatpush1.msra.mxu0 0.0
    %3421 = vmatprep.subr.mxu0 0.0
    %3422 = vmatpush1.msra.mxu0 0.0
    %3423 = vmatprep.subr.mxu0 0.0
    %3424 = vmatpush1.msra.mxu0 0.0
    %3425 = vmatprep.subr.mxu0 0.0
    %3426 = vmatpush1.msra.mxu0 0.0
    %3427 = vmatprep.subr.mxu0 0.0
    %3428 = vmatpush1.msra.mxu0 0.0
    %3429 = vmatprep.subr.mxu0 0.0
    %3430 = vmatpush1.msra.mxu0 0.0
    %3431 = vmatprep.subr.mxu0 0.0
    %3432 = vmatpush1.msra.mxu0 0.0
    %3433 = vmatprep.mubr.f32.mxu0 0.0
    %3434 = vmatmul.mubr.f32.gmra.mrb[0].mxu0 %v3367
    %v3435 = vpop.f32.mrb[0].mxu0
    %v3436 = vadd.f32 0.0, %v3435
    %v3437 = vpop.f32.mrb[0].mxu0
    %3438 = vdwg.mxu0
    %v3440 = vrot.slane %v3436, 4
    %v3442 = vadd.f32 %v3365, %v3440
    %v3443 = vmax.f32 %v3442, 0.0
    %v3445 = vrot.slane %v3443, 4
    %v3446 = vsel %vm679, %v3445, 0
    %3448 = vmatprep.subr.mxu0 0.0
    %3449 = vmatpush1.msra.mxu0 %v25
    %3450 = vmatprep.subr.mxu0 0.0
    %3451 = vmatpush1.msra.mxu0 %v684
    %3452 = vmatprep.subr.mxu0 0.0
    %3453 = vmatpush1.msra.mxu0 0.0
    %3454 = vmatprep.subr.mxu0 0.0
    %3455 = vmatpush1.msra.mxu0 0.0
    %3456 = vmatprep.subr.mxu0 0.0
    %3457 = vmatpush1.msra.mxu0 0.0
    %3458 = vmatprep.subr.mxu0 0.0
    %3459 = vmatpush1.msra.mxu0 0.0
    %3460 = vmatprep.subr.mxu0 0.0
    %3461 = vmatpush1.msra.mxu0 0.0
    %3462 = vmatprep.subr.mxu0 0.0
    %3463 = vmatpush1.msra.mxu0 0.0
    %3464 = vmatprep.subr.mxu0 0.0
    %3465 = vmatpush1.msra.mxu0 0.0
    %3466 = vmatprep.subr.mxu0 0.0
    %3467 = vmatpush1.msra.mxu0 0.0
    %3468 = vmatprep.subr.mxu0 0.0
    %3469 = vmatpush1.msra.mxu0 0.0
    %3470 = vmatprep.subr.mxu0 0.0
    %3471 = vmatpush1.msra.mxu0 0.0
    %3472 = vmatprep.subr.mxu0 0.0
    %3473 = vmatpush1.msra.mxu0 0.0
    %3474 = vmatprep.subr.mxu0 0.0
    %3475 = vmatpush1.msra.mxu0 0.0
    %3476 = vmatprep.subr.mxu0 0.0
    %3477 = vmatpush1.msra.mxu0 0.0
    %3478 = vmatprep.subr.mxu0 0.0
    %3479 = vmatpush1.msra.mxu0 0.0
    %3480 = vmatprep.subr.mxu0 0.0
    %3481 = vmatpush1.msra.mxu0 0.0
    %3482 = vmatprep.subr.mxu0 0.0
    %3483 = vmatpush1.msra.mxu0 0.0
    %3484 = vmatprep.subr.mxu0 0.0
    %3485 = vmatpush1.msra.mxu0 0.0
    %3486 = vmatprep.subr.mxu0 0.0
    %3487 = vmatpush1.msra.mxu0 0.0
    %3488 = vmatprep.subr.mxu0 0.0
    %3489 = vmatpush1.msra.mxu0 0.0
    %3490 = vmatprep.subr.mxu0 0.0
    %3491 = vmatpush1.msra.mxu0 0.0
    %3492 = vmatprep.subr.mxu0 0.0
    %3493 = vmatpush1.msra.mxu0 0.0
    %3494 = vmatprep.subr.mxu0 0.0
    %3495 = vmatpush1.msra.mxu0 0.0
    %3496 = vmatprep.subr.mxu0 0.0
    %3497 = vmatpush1.msra.mxu0 0.0
    %3498 = vmatprep.subr.mxu0 0.0
    %3499 = vmatpush1.msra.mxu0 0.0
    %3500 = vmatprep.subr.mxu0 0.0
    %3501 = vmatpush1.msra.mxu0 0.0
    %3502 = vmatprep.subr.mxu0 0.0
    %3503 = vmatpush1.msra.mxu0 0.0
    %3504 = vmatprep.subr.mxu0 0.0
    %3505 = vmatpush1.msra.mxu0 0.0
    %3506 = vmatprep.subr.mxu0 0.0
    %3507 = vmatpush1.msra.mxu0 0.0
    %3508 = vmatprep.subr.mxu0 0.0
    %3509 = vmatpush1.msra.mxu0 0.0
    %3510 = vmatprep.subr.mxu0 0.0
    %3511 = vmatpush1.msra.mxu0 0.0
    %3512 = vmatprep.mubr.f32.mxu0 0.0
    %3513 = vmatmul.mubr.f32.gmra.mrb[0].mxu0 %v3446
    %v3514 = vpop.f32.mrb[0].mxu0
    %v3515 = vadd.f32 %v27, %v3514
    %v3516 = vpop.f32.mrb[0].mxu0
    %3517 = vdwg.mxu0
    %v3518 = vmax.f32 %v3515, 0.0
    %v3520 = vsel %vm46, %v3518, 0
    %3522 = vmatprep.subr.mxu0 0.0
    %3523 = vmatpush1.msra.mxu0 %v761
    %3524 = vmatprep.subr.mxu0 0.0
    %3525 = vmatpush1.msra.mxu0 0.0
    %3526 = vmatprep.subr.mxu0 0.0
    %3527 = vmatpush1.msra.mxu0 0.0
    %3528 = vmatprep.subr.mxu0 0.0
    %3529 = vmatpush1.msra.mxu0 0.0
    %3530 = vmatprep.subr.mxu0 0.0
    %3531 = vmatpush1.msra.mxu0 0.0
    %3532 = vmatprep.subr.mxu0 0.0
    %3533 = vmatpush1.msra.mxu0 0.0
    %3534 = vmatprep.subr.mxu0 0.0
    %3535 = vmatpush1.msra.mxu0 0.0
    %3536 = vmatprep.subr.mxu0 0.0
    %3537 = vmatpush1.msra.mxu0 0.0
    %3538 = vmatprep.subr.mxu0 0.0
    %3539 = vmatpush1.msra.mxu0 0.0
    %3540 = vmatprep.subr.mxu0 0.0
    %3541 = vmatpush1.msra.mxu0 0.0
    %3542 = vmatprep.subr.mxu0 0.0
    %3543 = vmatpush1.msra.mxu0 0.0
    %3544 = vmatprep.subr.mxu0 0.0
    %3545 = vmatpush1.msra.mxu0 0.0
    %3546 = vmatprep.subr.mxu0 0.0
    %3547 = vmatpush1.msra.mxu0 0.0
    %3548 = vmatprep.subr.mxu0 0.0
    %3549 = vmatpush1.msra.mxu0 0.0
    %3550 = vmatprep.subr.mxu0 0.0
    %3551 = vmatpush1.msra.mxu0 0.0
    %3552 = vmatprep.subr.mxu0 0.0
    %3553 = vmatpush1.msra.mxu0 0.0
    %3554 = vmatprep.subr.mxu0 0.0
    %3555 = vmatpush1.msra.mxu0 0.0
    %3556 = vmatprep.subr.mxu0 0.0
    %3557 = vmatpush1.msra.mxu0 0.0
    %3558 = vmatprep.subr.mxu0 0.0
    %3559 = vmatpush1.msra.mxu0 0.0
    %3560 = vmatprep.subr.mxu0 0.0
    %3561 = vmatpush1.msra.mxu0 0.0
    %3562 = vmatprep.subr.mxu0 0.0
    %3563 = vmatpush1.msra.mxu0 0.0
    %3564 = vmatprep.subr.mxu0 0.0
    %3565 = vmatpush1.msra.mxu0 0.0
    %3566 = vmatprep.subr.mxu0 0.0
    %3567 = vmatpush1.msra.mxu0 0.0
    %3568 = vmatprep.subr.mxu0 0.0
    %3569 = vmatpush1.msra.mxu0 0.0
    %3570 = vmatprep.subr.mxu0 0.0
    %3571 = vmatpush1.msra.mxu0 0.0
    %3572 = vmatprep.subr.mxu0 0.0
    %3573 = vmatpush1.msra.mxu0 0.0
    %3574 = vmatprep.subr.mxu0 0.0
    %3575 = vmatpush1.msra.mxu0 0.0
    %3576 = vmatprep.subr.mxu0 0.0
    %3577 = vmatpush1.msra.mxu0 0.0
    %3578 = vmatprep.subr.mxu0 0.0
    %3579 = vmatpush1.msra.mxu0 0.0
    %3580 = vmatprep.subr.mxu0 0.0
    %3581 = vmatpush1.msra.mxu0 0.0
    %3582 = vmatprep.subr.mxu0 0.0
    %3583 = vmatpush1.msra.mxu0 0.0
    %3584 = vmatprep.subr.mxu0 0.0
    %3585 = vmatpush1.msra.mxu0 0.0
    %3586 = vmatprep.mubr.f32.mxu0 0.0
    %3587 = vmatmul.mubr.f32.gmra.mrb[0].mxu0 %v3520
    %v3588 = vpop.f32.mrb[0].mxu0
    %v3589 = vadd.f32 %v30, %v3588
    %v3590 = vpop.f32.mrb[0].mxu0
    %3591 = vdwg.mxu0
    %v3592 = vmax.f32 %v3589, 0.0
    %v3593 = vadd.f32 %v33, %v2976
    %v3594 = vadd.f32 %v3593, %v3361
    %v3596 = vsel %vm46, %v3592, 0
    %3598 = vmatprep.subr.mxu0 0.0
    %3599 = vmatpush1.msra.mxu0 %v840
    %3600 = vmatprep.subr.mxu0 0.0
    %3601 = vmatpush1.msra.mxu0 0.0
    %3602 = vmatprep.subr.mxu0 0.0
    %3603 = vmatpush1.msra.mxu0 0.0
    %3604 = vmatprep.subr.mxu0 0.0
    %3605 = vmatpush1.msra.mxu0 0.0
    %3606 = vmatprep.subr.mxu0 0.0
    %3607 = vmatpush1.msra.mxu0 0.0
    %3608 = vmatprep.subr.mxu0 0.0
    %3609 = vmatpush1.msra.mxu0 0.0
    %3610 = vmatprep.subr.mxu0 0.0
    %3611 = vmatpush1.msra.mxu0 0.0
    %3612 = vmatprep.subr.mxu0 0.0
    %3613 = vmatpush1.msra.mxu0 0.0
    %3614 = vmatprep.subr.mxu0 0.0
    %3615 = vmatpush1.msra.mxu0 0.0
    %3616 = vmatprep.subr.mxu0 0.0
    %3617 = vmatpush1.msra.mxu0 0.0
    %3618 = vmatprep.subr.mxu0 0.0
    %3619 = vmatpush1.msra.mxu0 0.0
    %3620 = vmatprep.subr.mxu0 0.0
    %3621 = vmatpush1.msra.mxu0 0.0
    %3622 = vmatprep.subr.mxu0 0.0
    %3623 = vmatpush1.msra.mxu0 0.0
    %3624 = vmatprep.subr.mxu0 0.0
    %3625 = vmatpush1.msra.mxu0 0.0
    %3626 = vmatprep.subr.mxu0 0.0
    %3627 = vmatpush1.msra.mxu0 0.0
    %3628 = vmatprep.subr.mxu0 0.0
    %3629 = vmatpush1.msra.mxu0 0.0
    %3630 = vmatprep.subr.mxu0 0.0
    %3631 = vmatpush1.msra.mxu0 0.0
    %3632 = vmatprep.subr.mxu0 0.0
    %3633 = vmatpush1.msra.mxu0 0.0
    %3634 = vmatprep.subr.mxu0 0.0
    %3635 = vmatpush1.msra.mxu0 0.0
    %3636 = vmatprep.subr.mxu0 0.0
    %3637 = vmatpush1.msra.mxu0 0.0
    %3638 = vmatprep.subr.mxu0 0.0
    %3639 = vmatpush1.msra.mxu0 0.0
    %3640 = vmatprep.subr.mxu0 0.0
    %3641 = vmatpush1.msra.mxu0 0.0
    %3642 = vmatprep.subr.mxu0 0.0
    %3643 = vmatpush1.msra.mxu0 0.0
    %3644 = vmatprep.subr.mxu0 0.0
    %3645 = vmatpush1.msra.mxu0 0.0
    %3646 = vmatprep.subr.mxu0 0.0
    %3647 = vmatpush1.msra.mxu0 0.0
    %3648 = vmatprep.subr.mxu0 0.0
    %3649 = vmatpush1.msra.mxu0 0.0
    %3650 = vmatprep.subr.mxu0 0.0
    %3651 = vmatpush1.msra.mxu0 0.0
    %3652 = vmatprep.subr.mxu0 0.0
    %3653 = vmatpush1.msra.mxu0 0.0
    %3654 = vmatprep.subr.mxu0 0.0
    %3655 = vmatpush1.msra.mxu0 0.0
    %3656 = vmatprep.subr.mxu0 0.0
    %3657 = vmatpush1.msra.mxu0 0.0
    %3658 = vmatprep.subr.mxu0 0.0
    %3659 = vmatpush1.msra.mxu0 0.0
    %3660 = vmatprep.subr.mxu0 0.0
    %3661 = vmatpush1.msra.mxu0 0.0
    %3662 = vmatprep.mubr.f32.mxu0 0.0
    %3663 = vmatmul.mubr.f32.gmra.mrb[0].mxu0 %v3596
    %v3664 = vpop.f32.mrb[0].mxu0
    %v3665 = vadd.f32 %v3594, %v3664
    %v3666 = vpop.f32.mrb[0].mxu0
    %3667 = vdwg.mxu0
    %v3669 = vsel %vm46, %v3665, 0
    %3671 = vmatprep.subr.mxu0 0.0
    %3672 = vmatpush1.msra.mxu0 %v211
    %3673 = vmatprep.subr.mxu0 0.0
    %3674 = vmatpush1.msra.mxu0 0.0
    %3675 = vmatprep.subr.mxu0 0.0
    %3676 = vmatpush1.msra.mxu0 0.0
    %3677 = vmatprep.subr.mxu0 0.0
    %3678 = vmatpush1.msra.mxu0 0.0
    %3679 = vmatprep.subr.mxu0 0.0
    %3680 = vmatpush1.msra.mxu0 0.0
    %3681 = vmatprep.subr.mxu0 0.0
    %3682 = vmatpush1.msra.mxu0 0.0
    %3683 = vmatprep.subr.mxu0 0.0
    %3684 = vmatpush1.msra.mxu0 0.0
    %3685 = vmatprep.subr.mxu0 0.0
    %3686 = vmatpush1.msra.mxu0 0.0
    %3687 = vmatprep.subr.mxu0 0.0
    %3688 = vmatpush1.msra.mxu0 0.0
    %3689 = vmatprep.subr.mxu0 0.0
    %3690 = vmatpush1.msra.mxu0 0.0
    %3691 = vmatprep.subr.mxu0 0.0
    %3692 = vmatpush1.msra.mxu0 0.0
    %3693 = vmatprep.subr.mxu0 0.0
    %3694 = vmatpush1.msra.mxu0 0.0
    %3695 = vmatprep.subr.mxu0 0.0
    %3696 = vmatpush1.msra.mxu0 0.0
    %3697 = vmatprep.subr.mxu0 0.0
    %3698 = vmatpush1.msra.mxu0 0.0
    %3699 = vmatprep.subr.mxu0 0.0
    %3700 = vmatpush1.msra.mxu0 0.0
    %3701 = vmatprep.subr.mxu0 0.0
    %3702 = vmatpush1.msra.mxu0 0.0
    %3703 = vmatprep.subr.mxu0 0.0
    %3704 = vmatpush1.msra.mxu0 0.0
    %3705 = vmatprep.subr.mxu0 0.0
    %3706 = vmatpush1.msra.mxu0 0.0
    %3707 = vmatprep.subr.mxu0 0.0
    %3708 = vmatpush1.msra.mxu0 0.0
    %3709 = vmatprep.subr.mxu0 0.0
    %3710 = vmatpush1.msra.mxu0 0.0
    %3711 = vmatprep.subr.mxu0 0.0
    %3712 = vmatpush1.msra.mxu0 0.0
    %3713 = vmatprep.subr.mxu0 0.0
    %3714 = vmatpush1.msra.mxu0 0.0
    %3715 = vmatprep.subr.mxu0 0.0
    %3716 = vmatpush1.msra.mxu0 0.0
    %3717 = vmatprep.subr.mxu0 0.0
    %3718 = vmatpush1.msra.mxu0 0.0
    %3719 = vmatprep.subr.mxu0 0.0
    %3720 = vmatpush1.msra.mxu0 0.0
    %3721 = vmatprep.subr.mxu0 0.0
    %3722 = vmatpush1.msra.mxu0 0.0
    %3723 = vmatprep.subr.mxu0 0.0
    %3724 = vmatpush1.msra.mxu0 0.0
    %3725 = vmatprep.subr.mxu0 0.0
    %3726 = vmatpush1.msra.mxu0 0.0
    %3727 = vmatprep.subr.mxu0 0.0
    %3728 = vmatpush1.msra.mxu0 0.0
    %3729 = vmatprep.subr.mxu0 0.0
    %3730 = vmatpush1.msra.mxu0 0.0
    %3731 = vmatprep.subr.mxu0 0.0
    %3732 = vmatpush1.msra.mxu0 0.0
    %3733 = vmatprep.subr.mxu0 0.0
    %3734 = vmatpush1.msra.mxu0 0.0
    %3735 = vmatprep.mubr.f32.mxu0 0.0
    %3736 = vmatmul.mubr.f32.gmra.mrb[0].mxu0 %v3669
    %v3737 = vpop.f32.mrb[0].mxu0
    %v3738 = vadd.f32 0.0, %v3737
    %v3739 = vpop.f32.mrb[0].mxu0
    %3740 = vdwg.mxu0
    %v3742 = vrot.slane %v3738, 3
    %v3744 = vadd.f32 %v121, %v3742
    %v3745 = vxor.u32 %v3744, 2147483648
    %v3746 = vmul.f32 %v3745, 1.442695
    %v3747 = vpow.pop %v3746
    %v3748 = vadd.f32 %v3747, 1.0
    %v3749 = vrcp.pop %v3748
    %v3750 = vmul.f32 1.0, %v3749
    %v3752 = vrot.slane %v3750, 5
    %v3753 = vsel %vm290, %v3752, 0
    %3755 = vmatprep.subr.mxu0 0.0
    %3756 = vmatpush1.msra.mxu0 %v13
    %3757 = vmatprep.subr.mxu0 0.0
    %3758 = vmatpush1.msra.mxu0 0.0
    %3759 = vmatprep.subr.mxu0 0.0
    %3760 = vmatpush1.msra.mxu0 0.0
    %3761 = vmatprep.subr.mxu0 0.0
    %3762 = vmatpush1.msra.mxu0 0.0
    %3763 = vmatprep.subr.mxu0 0.0
    %3764 = vmatpush1.msra.mxu0 0.0
    %3765 = vmatprep.subr.mxu0 0.0
    %3766 = vmatpush1.msra.mxu0 0.0
    %3767 = vmatprep.subr.mxu0 0.0
    %3768 = vmatpush1.msra.mxu0 0.0
    %3769 = vmatprep.subr.mxu0 0.0
    %3770 = vmatpush1.msra.mxu0 0.0
    %3771 = vmatprep.subr.mxu0 0.0
    %3772 = vmatpush1.msra.mxu0 0.0
    %3773 = vmatprep.subr.mxu0 0.0
    %3774 = vmatpush1.msra.mxu0 0.0
    %3775 = vmatprep.subr.mxu0 0.0
    %3776 = vmatpush1.msra.mxu0 0.0
    %3777 = vmatprep.subr.mxu0 0.0
    %3778 = vmatpush1.msra.mxu0 0.0
    %3779 = vmatprep.subr.mxu0 0.0
    %3780 = vmatpush1.msra.mxu0 0.0
    %3781 = vmatprep.subr.mxu0 0.0
    %3782 = vmatpush1.msra.mxu0 0.0
    %3783 = vmatprep.subr.mxu0 0.0
    %3784 = vmatpush1.msra.mxu0 0.0
    %3785 = vmatprep.subr.mxu0 0.0
    %3786 = vmatpush1.msra.mxu0 0.0
    %3787 = vmatprep.subr.mxu0 0.0
    %3788 = vmatpush1.msra.mxu0 0.0
    %3789 = vmatprep.subr.mxu0 0.0
    %3790 = vmatpush1.msra.mxu0 0.0
    %3791 = vmatprep.subr.mxu0 0.0
    %3792 = vmatpush1.msra.mxu0 0.0
    %3793 = vmatprep.subr.mxu0 0.0
    %3794 = vmatpush1.msra.mxu0 0.0
    %3795 = vmatprep.subr.mxu0 0.0
    %3796 = vmatpush1.msra.mxu0 0.0
    %3797 = vmatprep.subr.mxu0 0.0
    %3798 = vmatpush1.msra.mxu0 0.0
    %3799 = vmatprep.subr.mxu0 0.0
    %3800 = vmatpush1.msra.mxu0 0.0
    %3801 = vmatprep.subr.mxu0 0.0
    %3802 = vmatpush1.msra.mxu0 0.0
    %3803 = vmatprep.subr.mxu0 0.0
    %3804 = vmatpush1.msra.mxu0 0.0
    %3805 = vmatprep.subr.mxu0 0.0
    %3806 = vmatpush1.msra.mxu0 0.0
    %3807 = vmatprep.subr.mxu0 0.0
    %3808 = vmatpush1.msra.mxu0 0.0
    %3809 = vmatprep.subr.mxu0 0.0
    %3810 = vmatpush1.msra.mxu0 0.0
    %3811 = vmatprep.subr.mxu0 0.0
    %3812 = vmatpush1.msra.mxu0 0.0
    %3813 = vmatprep.subr.mxu0 0.0
    %3814 = vmatpush1.msra.mxu0 0.0
    %3815 = vmatprep.subr.mxu0 0.0
    %3816 = vmatpush1.msra.mxu0 0.0
    %3817 = vmatprep.subr.mxu0 0.0
    %3818 = vmatpush1.msra.mxu0 0.0
    %3819 = vmatprep.mubr.f32.mxu0 0.0
    %3820 = vmatmul.mubr.f32.gmra.mrb[0].mxu0 %v3753
    %v3821 = vpop.f32.mrb[0].mxu0
    %v3822 = vadd.f32 %v14, %v3821
    %v3823 = vpop.f32.mrb[0].mxu0
    %3824 = vdwg.mxu0
    %v3825 = vmax.f32 %v3822, 0.0
    %v3827 = vsel %vm46, %v3825, 0
    %3829 = vmatprep.subr.mxu0 0.0
    %3830 = vmatpush1.msra.mxu0 %v369
    %3831 = vmatprep.subr.mxu0 0.0
    %3832 = vmatpush1.msra.mxu0 0.0
    %3833 = vmatprep.subr.mxu0 0.0
    %3834 = vmatpush1.msra.mxu0 0.0
    %3835 = vmatprep.subr.mxu0 0.0
    %3836 = vmatpush1.msra.mxu0 0.0
    %3837 = vmatprep.subr.mxu0 0.0
    %3838 = vmatpush1.msra.mxu0 0.0
    %3839 = vmatprep.subr.mxu0 0.0
    %3840 = vmatpush1.msra.mxu0 0.0
    %3841 = vmatprep.subr.mxu0 0.0
    %3842 = vmatpush1.msra.mxu0 0.0
    %3843 = vmatprep.subr.mxu0 0.0
    %3844 = vmatpush1.msra.mxu0 0.0
    %3845 = vmatprep.subr.mxu0 0.0
    %3846 = vmatpush1.msra.mxu0 0.0
    %3847 = vmatprep.subr.mxu0 0.0
    %3848 = vmatpush1.msra.mxu0 0.0
    %3849 = vmatprep.subr.mxu0 0.0
    %3850 = vmatpush1.msra.mxu0 0.0
    %3851 = vmatprep.subr.mxu0 0.0
    %3852 = vmatpush1.msra.mxu0 0.0
    %3853 = vmatprep.subr.mxu0 0.0
    %3854 = vmatpush1.msra.mxu0 0.0
    %3855 = vmatprep.subr.mxu0 0.0
    %3856 = vmatpush1.msra.mxu0 0.0
    %3857 = vmatprep.subr.mxu0 0.0
    %3858 = vmatpush1.msra.mxu0 0.0
    %3859 = vmatprep.subr.mxu0 0.0
    %3860 = vmatpush1.msra.mxu0 0.0
    %3861 = vmatprep.subr.mxu0 0.0
    %3862 = vmatpush1.msra.mxu0 0.0
    %3863 = vmatprep.subr.mxu0 0.0
    %3864 = vmatpush1.msra.mxu0 0.0
    %3865 = vmatprep.subr.mxu0 0.0
    %3866 = vmatpush1.msra.mxu0 0.0
    %3867 = vmatprep.subr.mxu0 0.0
    %3868 = vmatpush1.msra.mxu0 0.0
    %3869 = vmatprep.subr.mxu0 0.0
    %3870 = vmatpush1.msra.mxu0 0.0
    %3871 = vmatprep.subr.mxu0 0.0
    %3872 = vmatpush1.msra.mxu0 0.0
    %3873 = vmatprep.subr.mxu0 0.0
    %3874 = vmatpush1.msra.mxu0 0.0
    %3875 = vmatprep.subr.mxu0 0.0
    %3876 = vmatpush1.msra.mxu0 0.0
    %3877 = vmatprep.subr.mxu0 0.0
    %3878 = vmatpush1.msra.mxu0 0.0
    %3879 = vmatprep.subr.mxu0 0.0
    %3880 = vmatpush1.msra.mxu0 0.0
    %3881 = vmatprep.subr.mxu0 0.0
    %3882 = vmatpush1.msra.mxu0 0.0
    %3883 = vmatprep.subr.mxu0 0.0
    %3884 = vmatpush1.msra.mxu0 0.0
    %3885 = vmatprep.subr.mxu0 0.0
    %3886 = vmatpush1.msra.mxu0 0.0
    %3887 = vmatprep.subr.mxu0 0.0
    %3888 = vmatpush1.msra.mxu0 0.0
    %3889 = vmatprep.subr.mxu0 0.0
    %3890 = vmatpush1.msra.mxu0 0.0
    %3891 = vmatprep.subr.mxu0 0.0
    %3892 = vmatpush1.msra.mxu0 0.0
    %3893 = vmatprep.mubr.f32.mxu0 0.0
    %3894 = vmatmul.mubr.f32.gmra.mrb[0].mxu0 %v3827
    %v3895 = vpop.f32.mrb[0].mxu0
    %v3896 = vadd.f32 %v17, %v3895
    %v3897 = vpop.f32.mrb[0].mxu0
    %3898 = vdwg.mxu0
    %v3899 = vmax.f32 %v3896, 0.0
    %v3901 = vsel %vm46, %v3899, 0
    %3903 = vmatprep.subr.mxu0 0.0
    %3904 = vmatpush1.msra.mxu0 %v446
    %3905 = vmatprep.subr.mxu0 0.0
    %3906 = vmatpush1.msra.mxu0 0.0
    %3907 = vmatprep.subr.mxu0 0.0
    %3908 = vmatpush1.msra.mxu0 0.0
    %3909 = vmatprep.subr.mxu0 0.0
    %3910 = vmatpush1.msra.mxu0 0.0
    %3911 = vmatprep.subr.mxu0 0.0
    %3912 = vmatpush1.msra.mxu0 0.0
    %3913 = vmatprep.subr.mxu0 0.0
    %3914 = vmatpush1.msra.mxu0 0.0
    %3915 = vmatprep.subr.mxu0 0.0
    %3916 = vmatpush1.msra.mxu0 0.0
    %3917 = vmatprep.subr.mxu0 0.0
    %3918 = vmatpush1.msra.mxu0 0.0
    %3919 = vmatprep.subr.mxu0 0.0
    %3920 = vmatpush1.msra.mxu0 0.0
    %3921 = vmatprep.subr.mxu0 0.0
    %3922 = vmatpush1.msra.mxu0 0.0
    %3923 = vmatprep.subr.mxu0 0.0
    %3924 = vmatpush1.msra.mxu0 0.0
    %3925 = vmatprep.subr.mxu0 0.0
    %3926 = vmatpush1.msra.mxu0 0.0
    %3927 = vmatprep.subr.mxu0 0.0
    %3928 = vmatpush1.msra.mxu0 0.0
    %3929 = vmatprep.subr.mxu0 0.0
    %3930 = vmatpush1.msra.mxu0 0.0
    %3931 = vmatprep.subr.mxu0 0.0
    %3932 = vmatpush1.msra.mxu0 0.0
    %3933 = vmatprep.subr.mxu0 0.0
    %3934 = vmatpush1.msra.mxu0 0.0
    %3935 = vmatprep.subr.mxu0 0.0
    %3936 = vmatpush1.msra.mxu0 0.0
    %3937 = vmatprep.subr.mxu0 0.0
    %3938 = vmatpush1.msra.mxu0 0.0
    %3939 = vmatprep.subr.mxu0 0.0
    %3940 = vmatpush1.msra.mxu0 0.0
    %3941 = vmatprep.subr.mxu0 0.0
    %3942 = vmatpush1.msra.mxu0 0.0
    %3943 = vmatprep.subr.mxu0 0.0
    %3944 = vmatpush1.msra.mxu0 0.0
    %3945 = vmatprep.subr.mxu0 0.0
    %3946 = vmatpush1.msra.mxu0 0.0
    %3947 = vmatprep.subr.mxu0 0.0
    %3948 = vmatpush1.msra.mxu0 0.0
    %3949 = vmatprep.subr.mxu0 0.0
    %3950 = vmatpush1.msra.mxu0 0.0
    %3951 = vmatprep.subr.mxu0 0.0
    %3952 = vmatpush1.msra.mxu0 0.0
    %3953 = vmatprep.subr.mxu0 0.0
    %3954 = vmatpush1.msra.mxu0 0.0
    %3955 = vmatprep.subr.mxu0 0.0
    %3956 = vmatpush1.msra.mxu0 0.0
    %3957 = vmatprep.subr.mxu0 0.0
    %3958 = vmatpush1.msra.mxu0 0.0
    %3959 = vmatprep.subr.mxu0 0.0
    %3960 = vmatpush1.msra.mxu0 0.0
    %3961 = vmatprep.subr.mxu0 0.0
    %3962 = vmatpush1.msra.mxu0 0.0
    %3963 = vmatprep.subr.mxu0 0.0
    %3964 = vmatpush1.msra.mxu0 0.0
    %3965 = vmatprep.subr.mxu0 0.0
    %3966 = vmatpush1.msra.mxu0 0.0
    %3967 = vmatprep.mubr.f32.mxu0 0.0
    %3968 = vmatmul.mubr.f32.gmra.mrb[0].mxu0 %v3901
    %v3969 = vpop.f32.mrb[0].mxu0
    %v3970 = vadd.f32 %v20, %v3969
    %v3971 = vpop.f32.mrb[0].mxu0
    %3972 = vdwg.mxu0
    %v3973 = vmax.f32 %v3970, 0.0
    %v3975 = vsel %vm46, %v3973, 0
    %3977 = vmatprep.subr.mxu0 0.0
    %3978 = vmatpush1.msra.mxu0 %v523
    %3979 = vmatprep.subr.mxu0 0.0
    %3980 = vmatpush1.msra.mxu0 0.0
    %3981 = vmatprep.subr.mxu0 0.0
    %3982 = vmatpush1.msra.mxu0 0.0
    %3983 = vmatprep.subr.mxu0 0.0
    %3984 = vmatpush1.msra.mxu0 0.0
    %3985 = vmatprep.subr.mxu0 0.0
    %3986 = vmatpush1.msra.mxu0 0.0
    %3987 = vmatprep.subr.mxu0 0.0
    %3988 = vmatpush1.msra.mxu0 0.0
    %3989 = vmatprep.subr.mxu0 0.0
    %3990 = vmatpush1.msra.mxu0 0.0
    %3991 = vmatprep.subr.mxu0 0.0
    %3992 = vmatpush1.msra.mxu0 0.0
    %3993 = vmatprep.subr.mxu0 0.0
    %3994 = vmatpush1.msra.mxu0 0.0
    %3995 = vmatprep.subr.mxu0 0.0
    %3996 = vmatpush1.msra.mxu0 0.0
    %3997 = vmatprep.subr.mxu0 0.0
    %3998 = vmatpush1.msra.mxu0 0.0
    %3999 = vmatprep.subr.mxu0 0.0
    %4000 = vmatpush1.msra.mxu0 0.0
    %4001 = vmatprep.subr.mxu0 0.0
    %4002 = vmatpush1.msra.mxu0 0.0
    %4003 = vmatprep.subr.mxu0 0.0
    %4004 = vmatpush1.msra.mxu0 0.0
    %4005 = vmatprep.subr.mxu0 0.0
    %4006 = vmatpush1.msra.mxu0 0.0
    %4007 = vmatprep.subr.mxu0 0.0
    %4008 = vmatpush1.msra.mxu0 0.0
    %4009 = vmatprep.subr.mxu0 0.0
    %4010 = vmatpush1.msra.mxu0 0.0
    %4011 = vmatprep.subr.mxu0 0.0
    %4012 = vmatpush1.msra.mxu0 0.0
    %4013 = vmatprep.subr.mxu0 0.0
    %4014 = vmatpush1.msra.mxu0 0.0
    %4015 = vmatprep.subr.mxu0 0.0
    %4016 = vmatpush1.msra.mxu0 0.0
    %4017 = vmatprep.subr.mxu0 0.0
    %4018 = vmatpush1.msra.mxu0 0.0
    %4019 = vmatprep.subr.mxu0 0.0
    %4020 = vmatpush1.msra.mxu0 0.0
    %4021 = vmatprep.subr.mxu0 0.0
    %4022 = vmatpush1.msra.mxu0 0.0
    %4023 = vmatprep.subr.mxu0 0.0
    %4024 = vmatpush1.msra.mxu0 0.0
    %4025 = vmatprep.subr.mxu0 0.0
    %4026 = vmatpush1.msra.mxu0 0.0
    %4027 = vmatprep.subr.mxu0 0.0
    %4028 = vmatpush1.msra.mxu0 0.0
    %4029 = vmatprep.subr.mxu0 0.0
    %4030 = vmatpush1.msra.mxu0 0.0
    %4031 = vmatprep.subr.mxu0 0.0
    %4032 = vmatpush1.msra.mxu0 0.0
    %4033 = vmatprep.subr.mxu0 0.0
    %4034 = vmatpush1.msra.mxu0 0.0
    %4035 = vmatprep.subr.mxu0 0.0
    %4036 = vmatpush1.msra.mxu0 0.0
    %4037 = vmatprep.subr.mxu0 0.0
    %4038 = vmatpush1.msra.mxu0 0.0
    %4039 = vmatprep.subr.mxu0 0.0
    %4040 = vmatpush1.msra.mxu0 0.0
    %4041 = vmatprep.mubr.f32.mxu0 0.0
    %4042 = vmatmul.mubr.f32.gmra.mrb[0].mxu0 %v3975
    %v4043 = vpop.f32.mrb[0].mxu0
    %v4044 = vadd.f32 %v23, %v4043
    %v4045 = vpop.f32.mrb[0].mxu0
    %4046 = vdwg.mxu0
    %v4047 = vmax.f32 %v4044, 0.0
    %v4048 = vrot.slane %v39, 5
    %v4050 = vadd.f32 %v4047, %v4048
    %4051 = vrot.lane.b32.xlu0 %v3742, 120
    %v4052 = vpop.permute.xlu0 %4051
    %v4054 = vadd.f32 %v204, %v4052
    %v4056 = vsel %vm46, %v4047, 0
    %4058 = vmatprep.subr.mxu0 0.0
    %4059 = vmatpush1.msra.mxu0 %v605
    %4060 = vmatprep.subr.mxu0 0.0
    %4061 = vmatpush1.msra.mxu0 0.0
    %4062 = vmatprep.subr.mxu0 0.0
    %4063 = vmatpush1.msra.mxu0 0.0
    %4064 = vmatprep.subr.mxu0 0.0
    %4065 = vmatpush1.msra.mxu0 0.0
    %4066 = vmatprep.subr.mxu0 0.0
    %4067 = vmatpush1.msra.mxu0 0.0
    %4068 = vmatprep.subr.mxu0 0.0
    %4069 = vmatpush1.msra.mxu0 0.0
    %4070 = vmatprep.subr.mxu0 0.0
    %4071 = vmatpush1.msra.mxu0 0.0
    %4072 = vmatprep.subr.mxu0 0.0
    %4073 = vmatpush1.msra.mxu0 0.0
    %4074 = vmatprep.subr.mxu0 0.0
    %4075 = vmatpush1.msra.mxu0 0.0
    %4076 = vmatprep.subr.mxu0 0.0
    %4077 = vmatpush1.msra.mxu0 0.0
    %4078 = vmatprep.subr.mxu0 0.0
    %4079 = vmatpush1.msra.mxu0 0.0
    %4080 = vmatprep.subr.mxu0 0.0
    %4081 = vmatpush1.msra.mxu0 0.0
    %4082 = vmatprep.subr.mxu0 0.0
    %4083 = vmatpush1.msra.mxu0 0.0
    %4084 = vmatprep.subr.mxu0 0.0
    %4085 = vmatpush1.msra.mxu0 0.0
    %4086 = vmatprep.subr.mxu0 0.0
    %4087 = vmatpush1.msra.mxu0 0.0
    %4088 = vmatprep.subr.mxu0 0.0
    %4089 = vmatpush1.msra.mxu0 0.0
    %4090 = vmatprep.subr.mxu0 0.0
    %4091 = vmatpush1.msra.mxu0 0.0
    %4092 = vmatprep.subr.mxu0 0.0
    %4093 = vmatpush1.msra.mxu0 0.0
    %4094 = vmatprep.subr.mxu0 0.0
    %4095 = vmatpush1.msra.mxu0 0.0
    %4096 = vmatprep.subr.mxu0 0.0
    %4097 = vmatpush1.msra.mxu0 0.0
    %4098 = vmatprep.subr.mxu0 0.0
    %4099 = vmatpush1.msra.mxu0 0.0
    %4100 = vmatprep.subr.mxu0 0.0
    %4101 = vmatpush1.msra.mxu0 0.0
    %4102 = vmatprep.subr.mxu0 0.0
    %4103 = vmatpush1.msra.mxu0 0.0
    %4104 = vmatprep.subr.mxu0 0.0
    %4105 = vmatpush1.msra.mxu0 0.0
    %4106 = vmatprep.subr.mxu0 0.0
    %4107 = vmatpush1.msra.mxu0 0.0
    %4108 = vmatprep.subr.mxu0 0.0
    %4109 = vmatpush1.msra.mxu0 0.0
    %4110 = vmatprep.subr.mxu0 0.0
    %4111 = vmatpush1.msra.mxu0 0.0
    %4112 = vmatprep.subr.mxu0 0.0
    %4113 = vmatpush1.msra.mxu0 0.0
    %4114 = vmatprep.subr.mxu0 0.0
    %4115 = vmatpush1.msra.mxu0 0.0
    %4116 = vmatprep.subr.mxu0 0.0
    %4117 = vmatpush1.msra.mxu0 0.0
    %4118 = vmatprep.subr.mxu0 0.0
    %4119 = vmatpush1.msra.mxu0 0.0
    %4120 = vmatprep.subr.mxu0 0.0
    %4121 = vmatpush1.msra.mxu0 0.0
    %4122 = vmatprep.mubr.f32.mxu0 0.0
    %4123 = vmatmul.mubr.f32.gmra.mrb[0].mxu0 %v4056
    %v4124 = vpop.f32.mrb[0].mxu0
    %v4125 = vadd.f32 0.0, %v4124
    %v4126 = vpop.f32.mrb[0].mxu0
    %4127 = vdwg.mxu0
    %v4129 = vrot.slane %v4125, 3
    %v4131 = vadd.f32 %v4054, %v4129
    %v4132 = vmax.f32 %v4131, 0.0
    %v4134 = vrot.slane %v4132, 5
    %v4135 = vsel %vm679, %v4134, 0
    %4137 = vmatprep.subr.mxu0 0.0
    %4138 = vmatpush1.msra.mxu0 %v25
    %4139 = vmatprep.subr.mxu0 0.0
    %4140 = vmatpush1.msra.mxu0 %v684
    %4141 = vmatprep.subr.mxu0 0.0
    %4142 = vmatpush1.msra.mxu0 0.0
    %4143 = vmatprep.subr.mxu0 0.0
    %4144 = vmatpush1.msra.mxu0 0.0
    %4145 = vmatprep.subr.mxu0 0.0
    %4146 = vmatpush1.msra.mxu0 0.0
    %4147 = vmatprep.subr.mxu0 0.0
    %4148 = vmatpush1.msra.mxu0 0.0
    %4149 = vmatprep.subr.mxu0 0.0
    %4150 = vmatpush1.msra.mxu0 0.0
    %4151 = vmatprep.subr.mxu0 0.0
    %4152 = vmatpush1.msra.mxu0 0.0
    %4153 = vmatprep.subr.mxu0 0.0
    %4154 = vmatpush1.msra.mxu0 0.0
    %4155 = vmatprep.subr.mxu0 0.0
    %4156 = vmatpush1.msra.mxu0 0.0
    %4157 = vmatprep.subr.mxu0 0.0
    %4158 = vmatpush1.msra.mxu0 0.0
    %4159 = vmatprep.subr.mxu0 0.0
    %4160 = vmatpush1.msra.mxu0 0.0
    %4161 = vmatprep.subr.mxu0 0.0
    %4162 = vmatpush1.msra.mxu0 0.0
    %4163 = vmatprep.subr.mxu0 0.0
    %4164 = vmatpush1.msra.mxu0 0.0
    %4165 = vmatprep.subr.mxu0 0.0
    %4166 = vmatpush1.msra.mxu0 0.0
    %4167 = vmatprep.subr.mxu0 0.0
    %4168 = vmatpush1.msra.mxu0 0.0
    %4169 = vmatprep.subr.mxu0 0.0
    %4170 = vmatpush1.msra.mxu0 0.0
    %4171 = vmatprep.subr.mxu0 0.0
    %4172 = vmatpush1.msra.mxu0 0.0
    %4173 = vmatprep.subr.mxu0 0.0
    %4174 = vmatpush1.msra.mxu0 0.0
    %4175 = vmatprep.subr.mxu0 0.0
    %4176 = vmatpush1.msra.mxu0 0.0
    %4177 = vmatprep.subr.mxu0 0.0
    %4178 = vmatpush1.msra.mxu0 0.0
    %4179 = vmatprep.subr.mxu0 0.0
    %4180 = vmatpush1.msra.mxu0 0.0
    %4181 = vmatprep.subr.mxu0 0.0
    %4182 = vmatpush1.msra.mxu0 0.0
    %4183 = vmatprep.subr.mxu0 0.0
    %4184 = vmatpush1.msra.mxu0 0.0
    %4185 = vmatprep.subr.mxu0 0.0
    %4186 = vmatpush1.msra.mxu0 0.0
    %4187 = vmatprep.subr.mxu0 0.0
    %4188 = vmatpush1.msra.mxu0 0.0
    %4189 = vmatprep.subr.mxu0 0.0
    %4190 = vmatpush1.msra.mxu0 0.0
    %4191 = vmatprep.subr.mxu0 0.0
    %4192 = vmatpush1.msra.mxu0 0.0
    %4193 = vmatprep.subr.mxu0 0.0
    %4194 = vmatpush1.msra.mxu0 0.0
    %4195 = vmatprep.subr.mxu0 0.0
    %4196 = vmatpush1.msra.mxu0 0.0
    %4197 = vmatprep.subr.mxu0 0.0
    %4198 = vmatpush1.msra.mxu0 0.0
    %4199 = vmatprep.subr.mxu0 0.0
    %4200 = vmatpush1.msra.mxu0 0.0
    %4201 = vmatprep.mubr.f32.mxu0 0.0
    %4202 = vmatmul.mubr.f32.gmra.mrb[0].mxu0 %v4135
    %v4203 = vpop.f32.mrb[0].mxu0
    %v4204 = vadd.f32 %v27, %v4203
    %v4205 = vpop.f32.mrb[0].mxu0
    %4206 = vdwg.mxu0
    %v4207 = vmax.f32 %v4204, 0.0
    %v4209 = vsel %vm46, %v4207, 0
    %4211 = vmatprep.subr.mxu0 0.0
    %4212 = vmatpush1.msra.mxu0 %v761
    %4213 = vmatprep.subr.mxu0 0.0
    %4214 = vmatpush1.msra.mxu0 0.0
    %4215 = vmatprep.subr.mxu0 0.0
    %4216 = vmatpush1.msra.mxu0 0.0
    %4217 = vmatprep.subr.mxu0 0.0
    %4218 = vmatpush1.msra.mxu0 0.0
    %4219 = vmatprep.subr.mxu0 0.0
    %4220 = vmatpush1.msra.mxu0 0.0
    %4221 = vmatprep.subr.mxu0 0.0
    %4222 = vmatpush1.msra.mxu0 0.0
    %4223 = vmatprep.subr.mxu0 0.0
    %4224 = vmatpush1.msra.mxu0 0.0
    %4225 = vmatprep.subr.mxu0 0.0
    %4226 = vmatpush1.msra.mxu0 0.0
    %4227 = vmatprep.subr.mxu0 0.0
    %4228 = vmatpush1.msra.mxu0 0.0
    %4229 = vmatprep.subr.mxu0 0.0
    %4230 = vmatpush1.msra.mxu0 0.0
    %4231 = vmatprep.subr.mxu0 0.0
    %4232 = vmatpush1.msra.mxu0 0.0
    %4233 = vmatprep.subr.mxu0 0.0
    %4234 = vmatpush1.msra.mxu0 0.0
    %4235 = vmatprep.subr.mxu0 0.0
    %4236 = vmatpush1.msra.mxu0 0.0
    %4237 = vmatprep.subr.mxu0 0.0
    %4238 = vmatpush1.msra.mxu0 0.0
    %4239 = vmatprep.subr.mxu0 0.0
    %4240 = vmatpush1.msra.mxu0 0.0
    %4241 = vmatprep.subr.mxu0 0.0
    %4242 = vmatpush1.msra.mxu0 0.0
    %4243 = vmatprep.subr.mxu0 0.0
    %4244 = vmatpush1.msra.mxu0 0.0
    %4245 = vmatprep.subr.mxu0 0.0
    %4246 = vmatpush1.msra.mxu0 0.0
    %4247 = vmatprep.subr.mxu0 0.0
    %4248 = vmatpush1.msra.mxu0 0.0
    %4249 = vmatprep.subr.mxu0 0.0
    %4250 = vmatpush1.msra.mxu0 0.0
    %4251 = vmatprep.subr.mxu0 0.0
    %4252 = vmatpush1.msra.mxu0 0.0
    %4253 = vmatprep.subr.mxu0 0.0
    %4254 = vmatpush1.msra.mxu0 0.0
    %4255 = vmatprep.subr.mxu0 0.0
    %4256 = vmatpush1.msra.mxu0 0.0
    %4257 = vmatprep.subr.mxu0 0.0
    %4258 = vmatpush1.msra.mxu0 0.0
    %4259 = vmatprep.subr.mxu0 0.0
    %4260 = vmatpush1.msra.mxu0 0.0
    %4261 = vmatprep.subr.mxu0 0.0
    %4262 = vmatpush1.msra.mxu0 0.0
    %4263 = vmatprep.subr.mxu0 0.0
    %4264 = vmatpush1.msra.mxu0 0.0
    %4265 = vmatprep.subr.mxu0 0.0
    %4266 = vmatpush1.msra.mxu0 0.0
    %4267 = vmatprep.subr.mxu0 0.0
    %4268 = vmatpush1.msra.mxu0 0.0
    %4269 = vmatprep.subr.mxu0 0.0
    %4270 = vmatpush1.msra.mxu0 0.0
    %4271 = vmatprep.subr.mxu0 0.0
    %4272 = vmatpush1.msra.mxu0 0.0
    %4273 = vmatprep.subr.mxu0 0.0
    %4274 = vmatpush1.msra.mxu0 0.0
    %4275 = vmatprep.mubr.f32.mxu0 0.0
    %4276 = vmatmul.mubr.f32.gmra.mrb[0].mxu0 %v4209
    %v4277 = vpop.f32.mrb[0].mxu0
    %v4278 = vadd.f32 %v30, %v4277
    %v4279 = vpop.f32.mrb[0].mxu0
    %4280 = vdwg.mxu0
    %v4281 = vmax.f32 %v4278, 0.0
    %v4282 = vadd.f32 %v33, %v3665
    %v4283 = vadd.f32 %v4282, %v4050
    %v4285 = vsel %vm46, %v4281, 0
    %4287 = vmatprep.subr.mxu0 0.0
    %4288 = vmatpush1.msra.mxu0 %v840
    %4289 = vmatprep.subr.mxu0 0.0
    %4290 = vmatpush1.msra.mxu0 0.0
    %4291 = vmatprep.subr.mxu0 0.0
    %4292 = vmatpush1.msra.mxu0 0.0
    %4293 = vmatprep.subr.mxu0 0.0
    %4294 = vmatpush1.msra.mxu0 0.0
    %4295 = vmatprep.subr.mxu0 0.0
    %4296 = vmatpush1.msra.mxu0 0.0
    %4297 = vmatprep.subr.mxu0 0.0
    %4298 = vmatpush1.msra.mxu0 0.0
    %4299 = vmatprep.subr.mxu0 0.0
    %4300 = vmatpush1.msra.mxu0 0.0
    %4301 = vmatprep.subr.mxu0 0.0
    %4302 = vmatpush1.msra.mxu0 0.0
    %4303 = vmatprep.subr.mxu0 0.0
    %4304 = vmatpush1.msra.mxu0 0.0
    %4305 = vmatprep.subr.mxu0 0.0
    %4306 = vmatpush1.msra.mxu0 0.0
    %4307 = vmatprep.subr.mxu0 0.0
    %4308 = vmatpush1.msra.mxu0 0.0
    %4309 = vmatprep.subr.mxu0 0.0
    %4310 = vmatpush1.msra.mxu0 0.0
    %4311 = vmatprep.subr.mxu0 0.0
    %4312 = vmatpush1.msra.mxu0 0.0
    %4313 = vmatprep.subr.mxu0 0.0
    %4314 = vmatpush1.msra.mxu0 0.0
    %4315 = vmatprep.subr.mxu0 0.0
    %4316 = vmatpush1.msra.mxu0 0.0
    %4317 = vmatprep.subr.mxu0 0.0
    %4318 = vmatpush1.msra.mxu0 0.0
    %4319 = vmatprep.subr.mxu0 0.0
    %4320 = vmatpush1.msra.mxu0 0.0
    %4321 = vmatprep.subr.mxu0 0.0
    %4322 = vmatpush1.msra.mxu0 0.0
    %4323 = vmatprep.subr.mxu0 0.0
    %4324 = vmatpush1.msra.mxu0 0.0
    %4325 = vmatprep.subr.mxu0 0.0
    %4326 = vmatpush1.msra.mxu0 0.0
    %4327 = vmatprep.subr.mxu0 0.0
    %4328 = vmatpush1.msra.mxu0 0.0
    %4329 = vmatprep.subr.mxu0 0.0
    %4330 = vmatpush1.msra.mxu0 0.0
    %4331 = vmatprep.subr.mxu0 0.0
    %4332 = vmatpush1.msra.mxu0 0.0
    %4333 = vmatprep.subr.mxu0 0.0
    %4334 = vmatpush1.msra.mxu0 0.0
    %4335 = vmatprep.subr.mxu0 0.0
    %4336 = vmatpush1.msra.mxu0 0.0
    %4337 = vmatprep.subr.mxu0 0.0
    %4338 = vmatpush1.msra.mxu0 0.0
    %4339 = vmatprep.subr.mxu0 0.0
    %4340 = vmatpush1.msra.mxu0 0.0
    %4341 = vmatprep.subr.mxu0 0.0
    %4342 = vmatpush1.msra.mxu0 0.0
    %4343 = vmatprep.subr.mxu0 0.0
    %4344 = vmatpush1.msra.mxu0 0.0
    %4345 = vmatprep.subr.mxu0 0.0
    %4346 = vmatpush1.msra.mxu0 0.0
    %4347 = vmatprep.subr.mxu0 0.0
    %4348 = vmatpush1.msra.mxu0 0.0
    %4349 = vmatprep.subr.mxu0 0.0
    %4350 = vmatpush1.msra.mxu0 0.0
    %4351 = vmatprep.mubr.f32.mxu0 0.0
    %4352 = vmatmul.mubr.f32.gmra.mrb[0].mxu0 %v4285
    %v4353 = vpop.f32.mrb[0].mxu0
    %v4354 = vadd.f32 %v4283, %v4353
    %v4355 = vpop.f32.mrb[0].mxu0
    %4356 = vdwg.mxu0
    %v4358 = vsel %vm46, %v4354, 0
    %4360 = vmatprep.subr.mxu0 0.0
    %4361 = vmatpush1.msra.mxu0 %v211
    %4362 = vmatprep.subr.mxu0 0.0
    %4363 = vmatpush1.msra.mxu0 0.0
    %4364 = vmatprep.subr.mxu0 0.0
    %4365 = vmatpush1.msra.mxu0 0.0
    %4366 = vmatprep.subr.mxu0 0.0
    %4367 = vmatpush1.msra.mxu0 0.0
    %4368 = vmatprep.subr.mxu0 0.0
    %4369 = vmatpush1.msra.mxu0 0.0
    %4370 = vmatprep.subr.mxu0 0.0
    %4371 = vmatpush1.msra.mxu0 0.0
    %4372 = vmatprep.subr.mxu0 0.0
    %4373 = vmatpush1.msra.mxu0 0.0
    %4374 = vmatprep.subr.mxu0 0.0
    %4375 = vmatpush1.msra.mxu0 0.0
    %4376 = vmatprep.subr.mxu0 0.0
    %4377 = vmatpush1.msra.mxu0 0.0
    %4378 = vmatprep.subr.mxu0 0.0
    %4379 = vmatpush1.msra.mxu0 0.0
    %4380 = vmatprep.subr.mxu0 0.0
    %4381 = vmatpush1.msra.mxu0 0.0
    %4382 = vmatprep.subr.mxu0 0.0
    %4383 = vmatpush1.msra.mxu0 0.0
    %4384 = vmatprep.subr.mxu0 0.0
    %4385 = vmatpush1.msra.mxu0 0.0
    %4386 = vmatprep.subr.mxu0 0.0
    %4387 = vmatpush1.msra.mxu0 0.0
    %4388 = vmatprep.subr.mxu0 0.0
    %4389 = vmatpush1.msra.mxu0 0.0
    %4390 = vmatprep.subr.mxu0 0.0
    %4391 = vmatpush1.msra.mxu0 0.0
    %4392 = vmatprep.subr.mxu0 0.0
    %4393 = vmatpush1.msra.mxu0 0.0
    %4394 = vmatprep.subr.mxu0 0.0
    %4395 = vmatpush1.msra.mxu0 0.0
    %4396 = vmatprep.subr.mxu0 0.0
    %4397 = vmatpush1.msra.mxu0 0.0
    %4398 = vmatprep.subr.mxu0 0.0
    %4399 = vmatpush1.msra.mxu0 0.0
    %4400 = vmatprep.subr.mxu0 0.0
    %4401 = vmatpush1.msra.mxu0 0.0
    %4402 = vmatprep.subr.mxu0 0.0
    %4403 = vmatpush1.msra.mxu0 0.0
    %4404 = vmatprep.subr.mxu0 0.0
    %4405 = vmatpush1.msra.mxu0 0.0
    %4406 = vmatprep.subr.mxu0 0.0
    %4407 = vmatpush1.msra.mxu0 0.0
    %4408 = vmatprep.subr.mxu0 0.0
    %4409 = vmatpush1.msra.mxu0 0.0
    %4410 = vmatprep.subr.mxu0 0.0
    %4411 = vmatpush1.msra.mxu0 0.0
    %4412 = vmatprep.subr.mxu0 0.0
    %4413 = vmatpush1.msra.mxu0 0.0
    %4414 = vmatprep.subr.mxu0 0.0
    %4415 = vmatpush1.msra.mxu0 0.0
    %4416 = vmatprep.subr.mxu0 0.0
    %4417 = vmatpush1.msra.mxu0 0.0
    %4418 = vmatprep.subr.mxu0 0.0
    %4419 = vmatpush1.msra.mxu0 0.0
    %4420 = vmatprep.subr.mxu0 0.0
    %4421 = vmatpush1.msra.mxu0 0.0
    %4422 = vmatprep.subr.mxu0 0.0
    %4423 = vmatpush1.msra.mxu0 0.0
    %4424 = vmatprep.mubr.f32.mxu0 0.0
    %4425 = vmatmul.mubr.f32.gmra.mrb[0].mxu0 %v4358
    %v4426 = vpop.f32.mrb[0].mxu0
    %v4427 = vadd.f32 0.0, %v4426
    %v4428 = vpop.f32.mrb[0].mxu0
    %4429 = vdwg.mxu0
    %v4431 = vrot.slane %v4427, 2
    %v4433 = vadd.f32 %v121, %v4431
    %v4434 = vxor.u32 %v4433, 2147483648
    %v4435 = vmul.f32 %v4434, 1.442695
    %v4436 = vpow.pop %v4435
    %v4437 = vadd.f32 %v4436, 1.0
    %v4438 = vrcp.pop %v4437
    %v4439 = vmul.f32 1.0, %v4438
    %v4441 = vrot.slane %v4439, 6
    %v4442 = vsel %vm290, %v4441, 0
    %4444 = vmatprep.subr.mxu0 0.0
    %4445 = vmatpush1.msra.mxu0 %v13
    %4446 = vmatprep.subr.mxu0 0.0
    %4447 = vmatpush1.msra.mxu0 0.0
    %4448 = vmatprep.subr.mxu0 0.0
    %4449 = vmatpush1.msra.mxu0 0.0
    %4450 = vmatprep.subr.mxu0 0.0
    %4451 = vmatpush1.msra.mxu0 0.0
    %4452 = vmatprep.subr.mxu0 0.0
    %4453 = vmatpush1.msra.mxu0 0.0
    %4454 = vmatprep.subr.mxu0 0.0
    %4455 = vmatpush1.msra.mxu0 0.0
    %4456 = vmatprep.subr.mxu0 0.0
    %4457 = vmatpush1.msra.mxu0 0.0
    %4458 = vmatprep.subr.mxu0 0.0
    %4459 = vmatpush1.msra.mxu0 0.0
    %4460 = vmatprep.subr.mxu0 0.0
    %4461 = vmatpush1.msra.mxu0 0.0
    %4462 = vmatprep.subr.mxu0 0.0
    %4463 = vmatpush1.msra.mxu0 0.0
    %4464 = vmatprep.subr.mxu0 0.0
    %4465 = vmatpush1.msra.mxu0 0.0
    %4466 = vmatprep.subr.mxu0 0.0
    %4467 = vmatpush1.msra.mxu0 0.0
    %4468 = vmatprep.subr.mxu0 0.0
    %4469 = vmatpush1.msra.mxu0 0.0
    %4470 = vmatprep.subr.mxu0 0.0
    %4471 = vmatpush1.msra.mxu0 0.0
    %4472 = vmatprep.subr.mxu0 0.0
    %4473 = vmatpush1.msra.mxu0 0.0
    %4474 = vmatprep.subr.mxu0 0.0
    %4475 = vmatpush1.msra.mxu0 0.0
    %4476 = vmatprep.subr.mxu0 0.0
    %4477 = vmatpush1.msra.mxu0 0.0
    %4478 = vmatprep.subr.mxu0 0.0
    %4479 = vmatpush1.msra.mxu0 0.0
    %4480 = vmatprep.subr.mxu0 0.0
    %4481 = vmatpush1.msra.mxu0 0.0
    %4482 = vmatprep.subr.mxu0 0.0
    %4483 = vmatpush1.msra.mxu0 0.0
    %4484 = vmatprep.subr.mxu0 0.0
    %4485 = vmatpush1.msra.mxu0 0.0
    %4486 = vmatprep.subr.mxu0 0.0
    %4487 = vmatpush1.msra.mxu0 0.0
    %4488 = vmatprep.subr.mxu0 0.0
    %4489 = vmatpush1.msra.mxu0 0.0
    %4490 = vmatprep.subr.mxu0 0.0
    %4491 = vmatpush1.msra.mxu0 0.0
    %4492 = vmatprep.subr.mxu0 0.0
    %4493 = vmatpush1.msra.mxu0 0.0
    %4494 = vmatprep.subr.mxu0 0.0
    %4495 = vmatpush1.msra.mxu0 0.0
    %4496 = vmatprep.subr.mxu0 0.0
    %4497 = vmatpush1.msra.mxu0 0.0
    %4498 = vmatprep.subr.mxu0 0.0
    %4499 = vmatpush1.msra.mxu0 0.0
    %4500 = vmatprep.subr.mxu0 0.0
    %4501 = vmatpush1.msra.mxu0 0.0
    %4502 = vmatprep.subr.mxu0 0.0
    %4503 = vmatpush1.msra.mxu0 0.0
    %4504 = vmatprep.subr.mxu0 0.0
    %4505 = vmatpush1.msra.mxu0 0.0
    %4506 = vmatprep.subr.mxu0 0.0
    %4507 = vmatpush1.msra.mxu0 0.0
    %4508 = vmatprep.mubr.f32.mxu0 0.0
    %4509 = vmatmul.mubr.f32.gmra.mrb[0].mxu0 %v4442
    %v4510 = vpop.f32.mrb[0].mxu0
    %v4511 = vadd.f32 %v14, %v4510
    %v4512 = vpop.f32.mrb[0].mxu0
    %4513 = vdwg.mxu0
    %v4514 = vmax.f32 %v4511, 0.0
    %v4516 = vsel %vm46, %v4514, 0
    %4518 = vmatprep.subr.mxu0 0.0
    %4519 = vmatpush1.msra.mxu0 %v369
    %4520 = vmatprep.subr.mxu0 0.0
    %4521 = vmatpush1.msra.mxu0 0.0
    %4522 = vmatprep.subr.mxu0 0.0
    %4523 = vmatpush1.msra.mxu0 0.0
    %4524 = vmatprep.subr.mxu0 0.0
    %4525 = vmatpush1.msra.mxu0 0.0
    %4526 = vmatprep.subr.mxu0 0.0
    %4527 = vmatpush1.msra.mxu0 0.0
    %4528 = vmatprep.subr.mxu0 0.0
    %4529 = vmatpush1.msra.mxu0 0.0
    %4530 = vmatprep.subr.mxu0 0.0
    %4531 = vmatpush1.msra.mxu0 0.0
    %4532 = vmatprep.subr.mxu0 0.0
    %4533 = vmatpush1.msra.mxu0 0.0
    %4534 = vmatprep.subr.mxu0 0.0
    %4535 = vmatpush1.msra.mxu0 0.0
    %4536 = vmatprep.subr.mxu0 0.0
    %4537 = vmatpush1.msra.mxu0 0.0
    %4538 = vmatprep.subr.mxu0 0.0
    %4539 = vmatpush1.msra.mxu0 0.0
    %4540 = vmatprep.subr.mxu0 0.0
    %4541 = vmatpush1.msra.mxu0 0.0
    %4542 = vmatprep.subr.mxu0 0.0
    %4543 = vmatpush1.msra.mxu0 0.0
    %4544 = vmatprep.subr.mxu0 0.0
    %4545 = vmatpush1.msra.mxu0 0.0
    %4546 = vmatprep.subr.mxu0 0.0
    %4547 = vmatpush1.msra.mxu0 0.0
    %4548 = vmatprep.subr.mxu0 0.0
    %4549 = vmatpush1.msra.mxu0 0.0
    %4550 = vmatprep.subr.mxu0 0.0
    %4551 = vmatpush1.msra.mxu0 0.0
    %4552 = vmatprep.subr.mxu0 0.0
    %4553 = vmatpush1.msra.mxu0 0.0
    %4554 = vmatprep.subr.mxu0 0.0
    %4555 = vmatpush1.msra.mxu0 0.0
    %4556 = vmatprep.subr.mxu0 0.0
    %4557 = vmatpush1.msra.mxu0 0.0
    %4558 = vmatprep.subr.mxu0 0.0
    %4559 = vmatpush1.msra.mxu0 0.0
    %4560 = vmatprep.subr.mxu0 0.0
    %4561 = vmatpush1.msra.mxu0 0.0
    %4562 = vmatprep.subr.mxu0 0.0
    %4563 = vmatpush1.msra.mxu0 0.0
    %4564 = vmatprep.subr.mxu0 0.0
    %4565 = vmatpush1.msra.mxu0 0.0
    %4566 = vmatprep.subr.mxu0 0.0
    %4567 = vmatpush1.msra.mxu0 0.0
    %4568 = vmatprep.subr.mxu0 0.0
    %4569 = vmatpush1.msra.mxu0 0.0
    %4570 = vmatprep.subr.mxu0 0.0
    %4571 = vmatpush1.msra.mxu0 0.0
    %4572 = vmatprep.subr.mxu0 0.0
    %4573 = vmatpush1.msra.mxu0 0.0
    %4574 = vmatprep.subr.mxu0 0.0
    %4575 = vmatpush1.msra.mxu0 0.0
    %4576 = vmatprep.subr.mxu0 0.0
    %4577 = vmatpush1.msra.mxu0 0.0
    %4578 = vmatprep.subr.mxu0 0.0
    %4579 = vmatpush1.msra.mxu0 0.0
    %4580 = vmatprep.subr.mxu0 0.0
    %4581 = vmatpush1.msra.mxu0 0.0
    %4582 = vmatprep.mubr.f32.mxu0 0.0
    %4583 = vmatmul.mubr.f32.gmra.mrb[0].mxu0 %v4516
    %v4584 = vpop.f32.mrb[0].mxu0
    %v4585 = vadd.f32 %v17, %v4584
    %v4586 = vpop.f32.mrb[0].mxu0
    %4587 = vdwg.mxu0
    %v4588 = vmax.f32 %v4585, 0.0
    %v4590 = vsel %vm46, %v4588, 0
    %4592 = vmatprep.subr.mxu0 0.0
    %4593 = vmatpush1.msra.mxu0 %v446
    %4594 = vmatprep.subr.mxu0 0.0
    %4595 = vmatpush1.msra.mxu0 0.0
    %4596 = vmatprep.subr.mxu0 0.0
    %4597 = vmatpush1.msra.mxu0 0.0
    %4598 = vmatprep.subr.mxu0 0.0
    %4599 = vmatpush1.msra.mxu0 0.0
    %4600 = vmatprep.subr.mxu0 0.0
    %4601 = vmatpush1.msra.mxu0 0.0
    %4602 = vmatprep.subr.mxu0 0.0
    %4603 = vmatpush1.msra.mxu0 0.0
    %4604 = vmatprep.subr.mxu0 0.0
    %4605 = vmatpush1.msra.mxu0 0.0
    %4606 = vmatprep.subr.mxu0 0.0
    %4607 = vmatpush1.msra.mxu0 0.0
    %4608 = vmatprep.subr.mxu0 0.0
    %4609 = vmatpush1.msra.mxu0 0.0
    %4610 = vmatprep.subr.mxu0 0.0
    %4611 = vmatpush1.msra.mxu0 0.0
    %4612 = vmatprep.subr.mxu0 0.0
    %4613 = vmatpush1.msra.mxu0 0.0
    %4614 = vmatprep.subr.mxu0 0.0
    %4615 = vmatpush1.msra.mxu0 0.0
    %4616 = vmatprep.subr.mxu0 0.0
    %4617 = vmatpush1.msra.mxu0 0.0
    %4618 = vmatprep.subr.mxu0 0.0
    %4619 = vmatpush1.msra.mxu0 0.0
    %4620 = vmatprep.subr.mxu0 0.0
    %4621 = vmatpush1.msra.mxu0 0.0
    %4622 = vmatprep.subr.mxu0 0.0
    %4623 = vmatpush1.msra.mxu0 0.0
    %4624 = vmatprep.subr.mxu0 0.0
    %4625 = vmatpush1.msra.mxu0 0.0
    %4626 = vmatprep.subr.mxu0 0.0
    %4627 = vmatpush1.msra.mxu0 0.0
    %4628 = vmatprep.subr.mxu0 0.0
    %4629 = vmatpush1.msra.mxu0 0.0
    %4630 = vmatprep.subr.mxu0 0.0
    %4631 = vmatpush1.msra.mxu0 0.0
    %4632 = vmatprep.subr.mxu0 0.0
    %4633 = vmatpush1.msra.mxu0 0.0
    %4634 = vmatprep.subr.mxu0 0.0
    %4635 = vmatpush1.msra.mxu0 0.0
    %4636 = vmatprep.subr.mxu0 0.0
    %4637 = vmatpush1.msra.mxu0 0.0
    %4638 = vmatprep.subr.mxu0 0.0
    %4639 = vmatpush1.msra.mxu0 0.0
    %4640 = vmatprep.subr.mxu0 0.0
    %4641 = vmatpush1.msra.mxu0 0.0
    %4642 = vmatprep.subr.mxu0 0.0
    %4643 = vmatpush1.msra.mxu0 0.0
    %4644 = vmatprep.subr.mxu0 0.0
    %4645 = vmatpush1.msra.mxu0 0.0
    %4646 = vmatprep.subr.mxu0 0.0
    %4647 = vmatpush1.msra.mxu0 0.0
    %4648 = vmatprep.subr.mxu0 0.0
    %4649 = vmatpush1.msra.mxu0 0.0
    %4650 = vmatprep.subr.mxu0 0.0
    %4651 = vmatpush1.msra.mxu0 0.0
    %4652 = vmatprep.subr.mxu0 0.0
    %4653 = vmatpush1.msra.mxu0 0.0
    %4654 = vmatprep.subr.mxu0 0.0
    %4655 = vmatpush1.msra.mxu0 0.0
    %4656 = vmatprep.mubr.f32.mxu0 0.0
    %4657 = vmatmul.mubr.f32.gmra.mrb[0].mxu0 %v4590
    %v4658 = vpop.f32.mrb[0].mxu0
    %v4659 = vadd.f32 %v20, %v4658
    %v4660 = vpop.f32.mrb[0].mxu0
    %4661 = vdwg.mxu0
    %v4662 = vmax.f32 %v4659, 0.0
    %v4664 = vsel %vm46, %v4662, 0
    %4666 = vmatprep.subr.mxu0 0.0
    %4667 = vmatpush1.msra.mxu0 %v523
    %4668 = vmatprep.subr.mxu0 0.0
    %4669 = vmatpush1.msra.mxu0 0.0
    %4670 = vmatprep.subr.mxu0 0.0
    %4671 = vmatpush1.msra.mxu0 0.0
    %4672 = vmatprep.subr.mxu0 0.0
    %4673 = vmatpush1.msra.mxu0 0.0
    %4674 = vmatprep.subr.mxu0 0.0
    %4675 = vmatpush1.msra.mxu0 0.0
    %4676 = vmatprep.subr.mxu0 0.0
    %4677 = vmatpush1.msra.mxu0 0.0
    %4678 = vmatprep.subr.mxu0 0.0
    %4679 = vmatpush1.msra.mxu0 0.0
    %4680 = vmatprep.subr.mxu0 0.0
    %4681 = vmatpush1.msra.mxu0 0.0
    %4682 = vmatprep.subr.mxu0 0.0
    %4683 = vmatpush1.msra.mxu0 0.0
    %4684 = vmatprep.subr.mxu0 0.0
    %4685 = vmatpush1.msra.mxu0 0.0
    %4686 = vmatprep.subr.mxu0 0.0
    %4687 = vmatpush1.msra.mxu0 0.0
    %4688 = vmatprep.subr.mxu0 0.0
    %4689 = vmatpush1.msra.mxu0 0.0
    %4690 = vmatprep.subr.mxu0 0.0
    %4691 = vmatpush1.msra.mxu0 0.0
    %4692 = vmatprep.subr.mxu0 0.0
    %4693 = vmatpush1.msra.mxu0 0.0
    %4694 = vmatprep.subr.mxu0 0.0
    %4695 = vmatpush1.msra.mxu0 0.0
    %4696 = vmatprep.subr.mxu0 0.0
    %4697 = vmatpush1.msra.mxu0 0.0
    %4698 = vmatprep.subr.mxu0 0.0
    %4699 = vmatpush1.msra.mxu0 0.0
    %4700 = vmatprep.subr.mxu0 0.0
    %4701 = vmatpush1.msra.mxu0 0.0
    %4702 = vmatprep.subr.mxu0 0.0
    %4703 = vmatpush1.msra.mxu0 0.0
    %4704 = vmatprep.subr.mxu0 0.0
    %4705 = vmatpush1.msra.mxu0 0.0
    %4706 = vmatprep.subr.mxu0 0.0
    %4707 = vmatpush1.msra.mxu0 0.0
    %4708 = vmatprep.subr.mxu0 0.0
    %4709 = vmatpush1.msra.mxu0 0.0
    %4710 = vmatprep.subr.mxu0 0.0
    %4711 = vmatpush1.msra.mxu0 0.0
    %4712 = vmatprep.subr.mxu0 0.0
    %4713 = vmatpush1.msra.mxu0 0.0
    %4714 = vmatprep.subr.mxu0 0.0
    %4715 = vmatpush1.msra.mxu0 0.0
    %4716 = vmatprep.subr.mxu0 0.0
    %4717 = vmatpush1.msra.mxu0 0.0
    %4718 = vmatprep.subr.mxu0 0.0
    %4719 = vmatpush1.msra.mxu0 0.0
    %4720 = vmatprep.subr.mxu0 0.0
    %4721 = vmatpush1.msra.mxu0 0.0
    %4722 = vmatprep.subr.mxu0 0.0
    %4723 = vmatpush1.msra.mxu0 0.0
    %4724 = vmatprep.subr.mxu0 0.0
    %4725 = vmatpush1.msra.mxu0 0.0
    %4726 = vmatprep.subr.mxu0 0.0
    %4727 = vmatpush1.msra.mxu0 0.0
    %4728 = vmatprep.subr.mxu0 0.0
    %4729 = vmatpush1.msra.mxu0 0.0
    %4730 = vmatprep.mubr.f32.mxu0 0.0
    %4731 = vmatmul.mubr.f32.gmra.mrb[0].mxu0 %v4664
    %v4732 = vpop.f32.mrb[0].mxu0
    %v4733 = vadd.f32 %v23, %v4732
    %v4734 = vpop.f32.mrb[0].mxu0
    %4735 = vdwg.mxu0
    %v4736 = vmax.f32 %v4733, 0.0
    %v4737 = vrot.slane %v39, 6
    %v4739 = vadd.f32 %v4736, %v4737
    %4740 = vrot.lane.b32.xlu0 %v4431, 120
    %v4741 = vpop.permute.xlu0 %4740
    %v4743 = vadd.f32 %v204, %v4741
    %v4745 = vsel %vm46, %v4736, 0
    %4747 = vmatprep.subr.mxu0 0.0
    %4748 = vmatpush1.msra.mxu0 %v605
    %4749 = vmatprep.subr.mxu0 0.0
    %4750 = vmatpush1.msra.mxu0 0.0
    %4751 = vmatprep.subr.mxu0 0.0
    %4752 = vmatpush1.msra.mxu0 0.0
    %4753 = vmatprep.subr.mxu0 0.0
    %4754 = vmatpush1.msra.mxu0 0.0
    %4755 = vmatprep.subr.mxu0 0.0
    %4756 = vmatpush1.msra.mxu0 0.0
    %4757 = vmatprep.subr.mxu0 0.0
    %4758 = vmatpush1.msra.mxu0 0.0
    %4759 = vmatprep.subr.mxu0 0.0
    %4760 = vmatpush1.msra.mxu0 0.0
    %4761 = vmatprep.subr.mxu0 0.0
    %4762 = vmatpush1.msra.mxu0 0.0
    %4763 = vmatprep.subr.mxu0 0.0
    %4764 = vmatpush1.msra.mxu0 0.0
    %4765 = vmatprep.subr.mxu0 0.0
    %4766 = vmatpush1.msra.mxu0 0.0
    %4767 = vmatprep.subr.mxu0 0.0
    %4768 = vmatpush1.msra.mxu0 0.0
    %4769 = vmatprep.subr.mxu0 0.0
    %4770 = vmatpush1.msra.mxu0 0.0
    %4771 = vmatprep.subr.mxu0 0.0
    %4772 = vmatpush1.msra.mxu0 0.0
    %4773 = vmatprep.subr.mxu0 0.0
    %4774 = vmatpush1.msra.mxu0 0.0
    %4775 = vmatprep.subr.mxu0 0.0
    %4776 = vmatpush1.msra.mxu0 0.0
    %4777 = vmatprep.subr.mxu0 0.0
    %4778 = vmatpush1.msra.mxu0 0.0
    %4779 = vmatprep.subr.mxu0 0.0
    %4780 = vmatpush1.msra.mxu0 0.0
    %4781 = vmatprep.subr.mxu0 0.0
    %4782 = vmatpush1.msra.mxu0 0.0
    %4783 = vmatprep.subr.mxu0 0.0
    %4784 = vmatpush1.msra.mxu0 0.0
    %4785 = vmatprep.subr.mxu0 0.0
    %4786 = vmatpush1.msra.mxu0 0.0
    %4787 = vmatprep.subr.mxu0 0.0
    %4788 = vmatpush1.msra.mxu0 0.0
    %4789 = vmatprep.subr.mxu0 0.0
    %4790 = vmatpush1.msra.mxu0 0.0
    %4791 = vmatprep.subr.mxu0 0.0
    %4792 = vmatpush1.msra.mxu0 0.0
    %4793 = vmatprep.subr.mxu0 0.0
    %4794 = vmatpush1.msra.mxu0 0.0
    %4795 = vmatprep.subr.mxu0 0.0
    %4796 = vmatpush1.msra.mxu0 0.0
    %4797 = vmatprep.subr.mxu0 0.0
    %4798 = vmatpush1.msra.mxu0 0.0
    %4799 = vmatprep.subr.mxu0 0.0
    %4800 = vmatpush1.msra.mxu0 0.0
    %4801 = vmatprep.subr.mxu0 0.0
    %4802 = vmatpush1.msra.mxu0 0.0
    %4803 = vmatprep.subr.mxu0 0.0
    %4804 = vmatpush1.msra.mxu0 0.0
    %4805 = vmatprep.subr.mxu0 0.0
    %4806 = vmatpush1.msra.mxu0 0.0
    %4807 = vmatprep.subr.mxu0 0.0
    %4808 = vmatpush1.msra.mxu0 0.0
    %4809 = vmatprep.subr.mxu0 0.0
    %4810 = vmatpush1.msra.mxu0 0.0
    %4811 = vmatprep.mubr.f32.mxu0 0.0
    %4812 = vmatmul.mubr.f32.gmra.mrb[0].mxu0 %v4745
    %v4813 = vpop.f32.mrb[0].mxu0
    %v4814 = vadd.f32 0.0, %v4813
    %v4815 = vpop.f32.mrb[0].mxu0
    %4816 = vdwg.mxu0
    %v4818 = vrot.slane %v4814, 2
    %v4820 = vadd.f32 %v4743, %v4818
    %v4821 = vmax.f32 %v4820, 0.0
    %v4823 = vrot.slane %v4821, 6
    %v4824 = vsel %vm679, %v4823, 0
    %4826 = vmatprep.subr.mxu0 0.0
    %4827 = vmatpush1.msra.mxu0 %v25
    %4828 = vmatprep.subr.mxu0 0.0
    %4829 = vmatpush1.msra.mxu0 %v684
    %4830 = vmatprep.subr.mxu0 0.0
    %4831 = vmatpush1.msra.mxu0 0.0
    %4832 = vmatprep.subr.mxu0 0.0
    %4833 = vmatpush1.msra.mxu0 0.0
    %4834 = vmatprep.subr.mxu0 0.0
    %4835 = vmatpush1.msra.mxu0 0.0
    %4836 = vmatprep.subr.mxu0 0.0
    %4837 = vmatpush1.msra.mxu0 0.0
    %4838 = vmatprep.subr.mxu0 0.0
    %4839 = vmatpush1.msra.mxu0 0.0
    %4840 = vmatprep.subr.mxu0 0.0
    %4841 = vmatpush1.msra.mxu0 0.0
    %4842 = vmatprep.subr.mxu0 0.0
    %4843 = vmatpush1.msra.mxu0 0.0
    %4844 = vmatprep.subr.mxu0 0.0
    %4845 = vmatpush1.msra.mxu0 0.0
    %4846 = vmatprep.subr.mxu0 0.0
    %4847 = vmatpush1.msra.mxu0 0.0
    %4848 = vmatprep.subr.mxu0 0.0
    %4849 = vmatpush1.msra.mxu0 0.0
    %4850 = vmatprep.subr.mxu0 0.0
    %4851 = vmatpush1.msra.mxu0 0.0
    %4852 = vmatprep.subr.mxu0 0.0
    %4853 = vmatpush1.msra.mxu0 0.0
    %4854 = vmatprep.subr.mxu0 0.0
    %4855 = vmatpush1.msra.mxu0 0.0
    %4856 = vmatprep.subr.mxu0 0.0
    %4857 = vmatpush1.msra.mxu0 0.0
    %4858 = vmatprep.subr.mxu0 0.0
    %4859 = vmatpush1.msra.mxu0 0.0
    %4860 = vmatprep.subr.mxu0 0.0
    %4861 = vmatpush1.msra.mxu0 0.0
    %4862 = vmatprep.subr.mxu0 0.0
    %4863 = vmatpush1.msra.mxu0 0.0
    %4864 = vmatprep.subr.mxu0 0.0
    %4865 = vmatpush1.msra.mxu0 0.0
    %4866 = vmatprep.subr.mxu0 0.0
    %4867 = vmatpush1.msra.mxu0 0.0
    %4868 = vmatprep.subr.mxu0 0.0
    %4869 = vmatpush1.msra.mxu0 0.0
    %4870 = vmatprep.subr.mxu0 0.0
    %4871 = vmatpush1.msra.mxu0 0.0
    %4872 = vmatprep.subr.mxu0 0.0
    %4873 = vmatpush1.msra.mxu0 0.0
    %4874 = vmatprep.subr.mxu0 0.0
    %4875 = vmatpush1.msra.mxu0 0.0
    %4876 = vmatprep.subr.mxu0 0.0
    %4877 = vmatpush1.msra.mxu0 0.0
    %4878 = vmatprep.subr.mxu0 0.0
    %4879 = vmatpush1.msra.mxu0 0.0
    %4880 = vmatprep.subr.mxu0 0.0
    %4881 = vmatpush1.msra.mxu0 0.0
    %4882 = vmatprep.subr.mxu0 0.0
    %4883 = vmatpush1.msra.mxu0 0.0
    %4884 = vmatprep.subr.mxu0 0.0
    %4885 = vmatpush1.msra.mxu0 0.0
    %4886 = vmatprep.subr.mxu0 0.0
    %4887 = vmatpush1.msra.mxu0 0.0
    %4888 = vmatprep.subr.mxu0 0.0
    %4889 = vmatpush1.msra.mxu0 0.0
    %4890 = vmatprep.mubr.f32.mxu0 0.0
    %4891 = vmatmul.mubr.f32.gmra.mrb[0].mxu0 %v4824
    %v4892 = vpop.f32.mrb[0].mxu0
    %v4893 = vadd.f32 %v27, %v4892
    %v4894 = vpop.f32.mrb[0].mxu0
    %4895 = vdwg.mxu0
    %v4896 = vmax.f32 %v4893, 0.0
    %v4898 = vsel %vm46, %v4896, 0
    %4900 = vmatprep.subr.mxu0 0.0
    %4901 = vmatpush1.msra.mxu0 %v761
    %4902 = vmatprep.subr.mxu0 0.0
    %4903 = vmatpush1.msra.mxu0 0.0
    %4904 = vmatprep.subr.mxu0 0.0
    %4905 = vmatpush1.msra.mxu0 0.0
    %4906 = vmatprep.subr.mxu0 0.0
    %4907 = vmatpush1.msra.mxu0 0.0
    %4908 = vmatprep.subr.mxu0 0.0
    %4909 = vmatpush1.msra.mxu0 0.0
    %4910 = vmatprep.subr.mxu0 0.0
    %4911 = vmatpush1.msra.mxu0 0.0
    %4912 = vmatprep.subr.mxu0 0.0
    %4913 = vmatpush1.msra.mxu0 0.0
    %4914 = vmatprep.subr.mxu0 0.0
    %4915 = vmatpush1.msra.mxu0 0.0
    %4916 = vmatprep.subr.mxu0 0.0
    %4917 = vmatpush1.msra.mxu0 0.0
    %4918 = vmatprep.subr.mxu0 0.0
    %4919 = vmatpush1.msra.mxu0 0.0
    %4920 = vmatprep.subr.mxu0 0.0
    %4921 = vmatpush1.msra.mxu0 0.0
    %4922 = vmatprep.subr.mxu0 0.0
    %4923 = vmatpush1.msra.mxu0 0.0
    %4924 = vmatprep.subr.mxu0 0.0
    %4925 = vmatpush1.msra.mxu0 0.0
    %4926 = vmatprep.subr.mxu0 0.0
    %4927 = vmatpush1.msra.mxu0 0.0
    %4928 = vmatprep.subr.mxu0 0.0
    %4929 = vmatpush1.msra.mxu0 0.0
    %4930 = vmatprep.subr.mxu0 0.0
    %4931 = vmatpush1.msra.mxu0 0.0
    %4932 = vmatprep.subr.mxu0 0.0
    %4933 = vmatpush1.msra.mxu0 0.0
    %4934 = vmatprep.subr.mxu0 0.0
    %4935 = vmatpush1.msra.mxu0 0.0
    %4936 = vmatprep.subr.mxu0 0.0
    %4937 = vmatpush1.msra.mxu0 0.0
    %4938 = vmatprep.subr.mxu0 0.0
    %4939 = vmatpush1.msra.mxu0 0.0
    %4940 = vmatprep.subr.mxu0 0.0
    %4941 = vmatpush1.msra.mxu0 0.0
    %4942 = vmatprep.subr.mxu0 0.0
    %4943 = vmatpush1.msra.mxu0 0.0
    %4944 = vmatprep.subr.mxu0 0.0
    %4945 = vmatpush1.msra.mxu0 0.0
    %4946 = vmatprep.subr.mxu0 0.0
    %4947 = vmatpush1.msra.mxu0 0.0
    %4948 = vmatprep.subr.mxu0 0.0
    %4949 = vmatpush1.msra.mxu0 0.0
    %4950 = vmatprep.subr.mxu0 0.0
    %4951 = vmatpush1.msra.mxu0 0.0
    %4952 = vmatprep.subr.mxu0 0.0
    %4953 = vmatpush1.msra.mxu0 0.0
    %4954 = vmatprep.subr.mxu0 0.0
    %4955 = vmatpush1.msra.mxu0 0.0
    %4956 = vmatprep.subr.mxu0 0.0
    %4957 = vmatpush1.msra.mxu0 0.0
    %4958 = vmatprep.subr.mxu0 0.0
    %4959 = vmatpush1.msra.mxu0 0.0
    %4960 = vmatprep.subr.mxu0 0.0
    %4961 = vmatpush1.msra.mxu0 0.0
    %4962 = vmatprep.subr.mxu0 0.0
    %4963 = vmatpush1.msra.mxu0 0.0
    %4964 = vmatprep.mubr.f32.mxu0 0.0
    %4965 = vmatmul.mubr.f32.gmra.mrb[0].mxu0 %v4898
    %v4966 = vpop.f32.mrb[0].mxu0
    %v4967 = vadd.f32 %v30, %v4966
    %v4968 = vpop.f32.mrb[0].mxu0
    %4969 = vdwg.mxu0
    %v4970 = vmax.f32 %v4967, 0.0
    %v4971 = vadd.f32 %v33, %v4354
    %v4972 = vadd.f32 %v4971, %v4739
    %v4974 = vsel %vm46, %v4970, 0
    %4976 = vmatprep.subr.mxu0 0.0
    %4977 = vmatpush1.msra.mxu0 %v840
    %4978 = vmatprep.subr.mxu0 0.0
    %4979 = vmatpush1.msra.mxu0 0.0
    %4980 = vmatprep.subr.mxu0 0.0
    %4981 = vmatpush1.msra.mxu0 0.0
    %4982 = vmatprep.subr.mxu0 0.0
    %4983 = vmatpush1.msra.mxu0 0.0
    %4984 = vmatprep.subr.mxu0 0.0
    %4985 = vmatpush1.msra.mxu0 0.0
    %4986 = vmatprep.subr.mxu0 0.0
    %4987 = vmatpush1.msra.mxu0 0.0
    %4988 = vmatprep.subr.mxu0 0.0
    %4989 = vmatpush1.msra.mxu0 0.0
    %4990 = vmatprep.subr.mxu0 0.0
    %4991 = vmatpush1.msra.mxu0 0.0
    %4992 = vmatprep.subr.mxu0 0.0
    %4993 = vmatpush1.msra.mxu0 0.0
    %4994 = vmatprep.subr.mxu0 0.0
    %4995 = vmatpush1.msra.mxu0 0.0
    %4996 = vmatprep.subr.mxu0 0.0
    %4997 = vmatpush1.msra.mxu0 0.0
    %4998 = vmatprep.subr.mxu0 0.0
    %4999 = vmatpush1.msra.mxu0 0.0
    %5000 = vmatprep.subr.mxu0 0.0
    %5001 = vmatpush1.msra.mxu0 0.0
    %5002 = vmatprep.subr.mxu0 0.0
    %5003 = vmatpush1.msra.mxu0 0.0
    %5004 = vmatprep.subr.mxu0 0.0
    %5005 = vmatpush1.msra.mxu0 0.0
    %5006 = vmatprep.subr.mxu0 0.0
    %5007 = vmatpush1.msra.mxu0 0.0
    %5008 = vmatprep.subr.mxu0 0.0
    %5009 = vmatpush1.msra.mxu0 0.0
    %5010 = vmatprep.subr.mxu0 0.0
    %5011 = vmatpush1.msra.mxu0 0.0
    %5012 = vmatprep.subr.mxu0 0.0
    %5013 = vmatpush1.msra.mxu0 0.0
    %5014 = vmatprep.subr.mxu0 0.0
    %5015 = vmatpush1.msra.mxu0 0.0
    %5016 = vmatprep.subr.mxu0 0.0
    %5017 = vmatpush1.msra.mxu0 0.0
    %5018 = vmatprep.subr.mxu0 0.0
    %5019 = vmatpush1.msra.mxu0 0.0
    %5020 = vmatprep.subr.mxu0 0.0
    %5021 = vmatpush1.msra.mxu0 0.0
    %5022 = vmatprep.subr.mxu0 0.0
    %5023 = vmatpush1.msra.mxu0 0.0
    %5024 = vmatprep.subr.mxu0 0.0
    %5025 = vmatpush1.msra.mxu0 0.0
    %5026 = vmatprep.subr.mxu0 0.0
    %5027 = vmatpush1.msra.mxu0 0.0
    %5028 = vmatprep.subr.mxu0 0.0
    %5029 = vmatpush1.msra.mxu0 0.0
    %5030 = vmatprep.subr.mxu0 0.0
    %5031 = vmatpush1.msra.mxu0 0.0
    %5032 = vmatprep.subr.mxu0 0.0
    %5033 = vmatpush1.msra.mxu0 0.0
    %5034 = vmatprep.subr.mxu0 0.0
    %5035 = vmatpush1.msra.mxu0 0.0
    %5036 = vmatprep.subr.mxu0 0.0
    %5037 = vmatpush1.msra.mxu0 0.0
    %5038 = vmatprep.subr.mxu0 0.0
    %5039 = vmatpush1.msra.mxu0 0.0
    %5040 = vmatprep.mubr.f32.mxu0 0.0
    %5041 = vmatmul.mubr.f32.gmra.mrb[0].mxu0 %v4974
    %v5042 = vpop.f32.mrb[0].mxu0
    %v5043 = vadd.f32 %v4972, %v5042
    %v5044 = vpop.f32.mrb[0].mxu0
    %5045 = vdwg.mxu0
    %v5047 = vsel %vm46, %v5043, 0
    %5049 = vmatprep.subr.mxu0 0.0
    %5050 = vmatpush1.msra.mxu0 %v211
    %5051 = vmatprep.subr.mxu0 0.0
    %5052 = vmatpush1.msra.mxu0 0.0
    %5053 = vmatprep.subr.mxu0 0.0
    %5054 = vmatpush1.msra.mxu0 0.0
    %5055 = vmatprep.subr.mxu0 0.0
    %5056 = vmatpush1.msra.mxu0 0.0
    %5057 = vmatprep.subr.mxu0 0.0
    %5058 = vmatpush1.msra.mxu0 0.0
    %5059 = vmatprep.subr.mxu0 0.0
    %5060 = vmatpush1.msra.mxu0 0.0
    %5061 = vmatprep.subr.mxu0 0.0
    %5062 = vmatpush1.msra.mxu0 0.0
    %5063 = vmatprep.subr.mxu0 0.0
    %5064 = vmatpush1.msra.mxu0 0.0
    %5065 = vmatprep.subr.mxu0 0.0
    %5066 = vmatpush1.msra.mxu0 0.0
    %5067 = vmatprep.subr.mxu0 0.0
    %5068 = vmatpush1.msra.mxu0 0.0
    %5069 = vmatprep.subr.mxu0 0.0
    %5070 = vmatpush1.msra.mxu0 0.0
    %5071 = vmatprep.subr.mxu0 0.0
    %5072 = vmatpush1.msra.mxu0 0.0
    %5073 = vmatprep.subr.mxu0 0.0
    %5074 = vmatpush1.msra.mxu0 0.0
    %5075 = vmatprep.subr.mxu0 0.0
    %5076 = vmatpush1.msra.mxu0 0.0
    %5077 = vmatprep.subr.mxu0 0.0
    %5078 = vmatpush1.msra.mxu0 0.0
    %5079 = vmatprep.subr.mxu0 0.0
    %5080 = vmatpush1.msra.mxu0 0.0
    %5081 = vmatprep.subr.mxu0 0.0
    %5082 = vmatpush1.msra.mxu0 0.0
    %5083 = vmatprep.subr.mxu0 0.0
    %5084 = vmatpush1.msra.mxu0 0.0
    %5085 = vmatprep.subr.mxu0 0.0
    %5086 = vmatpush1.msra.mxu0 0.0
    %5087 = vmatprep.subr.mxu0 0.0
    %5088 = vmatpush1.msra.mxu0 0.0
    %5089 = vmatprep.subr.mxu0 0.0
    %5090 = vmatpush1.msra.mxu0 0.0
    %5091 = vmatprep.subr.mxu0 0.0
    %5092 = vmatpush1.msra.mxu0 0.0
    %5093 = vmatprep.subr.mxu0 0.0
    %5094 = vmatpush1.msra.mxu0 0.0
    %5095 = vmatprep.subr.mxu0 0.0
    %5096 = vmatpush1.msra.mxu0 0.0
    %5097 = vmatprep.subr.mxu0 0.0
    %5098 = vmatpush1.msra.mxu0 0.0
    %5099 = vmatprep.subr.mxu0 0.0
    %5100 = vmatpush1.msra.mxu0 0.0
    %5101 = vmatprep.subr.mxu0 0.0
    %5102 = vmatpush1.msra.mxu0 0.0
    %5103 = vmatprep.subr.mxu0 0.0
    %5104 = vmatpush1.msra.mxu0 0.0
    %5105 = vmatprep.subr.mxu0 0.0
    %5106 = vmatpush1.msra.mxu0 0.0
    %5107 = vmatprep.subr.mxu0 0.0
    %5108 = vmatpush1.msra.mxu0 0.0
    %5109 = vmatprep.subr.mxu0 0.0
    %5110 = vmatpush1.msra.mxu0 0.0
    %5111 = vmatprep.subr.mxu0 0.0
    %5112 = vmatpush1.msra.mxu0 0.0
    %5113 = vmatprep.mubr.f32.mxu0 0.0
    %5114 = vmatmul.mubr.f32.gmra.mrb[0].mxu0 %v5047
    %v5115 = vpop.f32.mrb[0].mxu0
    %v5116 = vadd.f32 0.0, %v5115
    %v5117 = vpop.f32.mrb[0].mxu0
    %5118 = vdwg.mxu0
    %v5120 = vrot.slane %v5116, 1
    %v5122 = vadd.f32 %v121, %v5120
    %v5123 = vxor.u32 %v5122, 2147483648
    %v5124 = vmul.f32 %v5123, 1.442695
    %v5125 = vpow.pop %v5124
    %v5126 = vadd.f32 %v5125, 1.0
    %v5127 = vrcp.pop %v5126
    %v5128 = vmul.f32 1.0, %v5127
    %v5130 = vrot.slane %v5128, 7
    %v5131 = vsel %vm290, %v5130, 0
    %5133 = vmatprep.subr.mxu0 0.0
    %5134 = vmatpush1.msra.mxu0 %v13
    %5135 = vmatprep.subr.mxu0 0.0
    %5136 = vmatpush1.msra.mxu0 0.0
    %5137 = vmatprep.subr.mxu0 0.0
    %5138 = vmatpush1.msra.mxu0 0.0
    %5139 = vmatprep.subr.mxu0 0.0
    %5140 = vmatpush1.msra.mxu0 0.0
    %5141 = vmatprep.subr.mxu0 0.0
    %5142 = vmatpush1.msra.mxu0 0.0
    %5143 = vmatprep.subr.mxu0 0.0
    %5144 = vmatpush1.msra.mxu0 0.0
    %5145 = vmatprep.subr.mxu0 0.0
    %5146 = vmatpush1.msra.mxu0 0.0
    %5147 = vmatprep.subr.mxu0 0.0
    %5148 = vmatpush1.msra.mxu0 0.0
    %5149 = vmatprep.subr.mxu0 0.0
    %5150 = vmatpush1.msra.mxu0 0.0
    %5151 = vmatprep.subr.mxu0 0.0
    %5152 = vmatpush1.msra.mxu0 0.0
    %5153 = vmatprep.subr.mxu0 0.0
    %5154 = vmatpush1.msra.mxu0 0.0
    %5155 = vmatprep.subr.mxu0 0.0
    %5156 = vmatpush1.msra.mxu0 0.0
    %5157 = vmatprep.subr.mxu0 0.0
    %5158 = vmatpush1.msra.mxu0 0.0
    %5159 = vmatprep.subr.mxu0 0.0
    %5160 = vmatpush1.msra.mxu0 0.0
    %5161 = vmatprep.subr.mxu0 0.0
    %5162 = vmatpush1.msra.mxu0 0.0
    %5163 = vmatprep.subr.mxu0 0.0
    %5164 = vmatpush1.msra.mxu0 0.0
    %5165 = vmatprep.subr.mxu0 0.0
    %5166 = vmatpush1.msra.mxu0 0.0
    %5167 = vmatprep.subr.mxu0 0.0
    %5168 = vmatpush1.msra.mxu0 0.0
    %5169 = vmatprep.subr.mxu0 0.0
    %5170 = vmatpush1.msra.mxu0 0.0
    %5171 = vmatprep.subr.mxu0 0.0
    %5172 = vmatpush1.msra.mxu0 0.0
    %5173 = vmatprep.subr.mxu0 0.0
    %5174 = vmatpush1.msra.mxu0 0.0
    %5175 = vmatprep.subr.mxu0 0.0
    %5176 = vmatpush1.msra.mxu0 0.0
    %5177 = vmatprep.subr.mxu0 0.0
    %5178 = vmatpush1.msra.mxu0 0.0
    %5179 = vmatprep.subr.mxu0 0.0
    %5180 = vmatpush1.msra.mxu0 0.0
    %5181 = vmatprep.subr.mxu0 0.0
    %5182 = vmatpush1.msra.mxu0 0.0
    %5183 = vmatprep.subr.mxu0 0.0
    %5184 = vmatpush1.msra.mxu0 0.0
    %5185 = vmatprep.subr.mxu0 0.0
    %5186 = vmatpush1.msra.mxu0 0.0
    %5187 = vmatprep.subr.mxu0 0.0
    %5188 = vmatpush1.msra.mxu0 0.0
    %5189 = vmatprep.subr.mxu0 0.0
    %5190 = vmatpush1.msra.mxu0 0.0
    %5191 = vmatprep.subr.mxu0 0.0
    %5192 = vmatpush1.msra.mxu0 0.0
    %5193 = vmatprep.subr.mxu0 0.0
    %5194 = vmatpush1.msra.mxu0 0.0
    %5195 = vmatprep.subr.mxu0 0.0
    %5196 = vmatpush1.msra.mxu0 0.0
    %5197 = vmatprep.mubr.f32.mxu0 0.0
    %5198 = vmatmul.mubr.f32.gmra.mrb[0].mxu0 %v5131
    %v5199 = vpop.f32.mrb[0].mxu0
    %v5200 = vadd.f32 %v14, %v5199
    %v5201 = vpop.f32.mrb[0].mxu0
    %5202 = vdwg.mxu0
    %v5203 = vmax.f32 %v5200, 0.0
    %v5205 = vsel %vm46, %v5203, 0
    %5207 = vmatprep.subr.mxu0 0.0
    %5208 = vmatpush1.msra.mxu0 %v369
    %5209 = vmatprep.subr.mxu0 0.0
    %5210 = vmatpush1.msra.mxu0 0.0
    %5211 = vmatprep.subr.mxu0 0.0
    %5212 = vmatpush1.msra.mxu0 0.0
    %5213 = vmatprep.subr.mxu0 0.0
    %5214 = vmatpush1.msra.mxu0 0.0
    %5215 = vmatprep.subr.mxu0 0.0
    %5216 = vmatpush1.msra.mxu0 0.0
    %5217 = vmatprep.subr.mxu0 0.0
    %5218 = vmatpush1.msra.mxu0 0.0
    %5219 = vmatprep.subr.mxu0 0.0
    %5220 = vmatpush1.msra.mxu0 0.0
    %5221 = vmatprep.subr.mxu0 0.0
    %5222 = vmatpush1.msra.mxu0 0.0
    %5223 = vmatprep.subr.mxu0 0.0
    %5224 = vmatpush1.msra.mxu0 0.0
    %5225 = vmatprep.subr.mxu0 0.0
    %5226 = vmatpush1.msra.mxu0 0.0
    %5227 = vmatprep.subr.mxu0 0.0
    %5228 = vmatpush1.msra.mxu0 0.0
    %5229 = vmatprep.subr.mxu0 0.0
    %5230 = vmatpush1.msra.mxu0 0.0
    %5231 = vmatprep.subr.mxu0 0.0
    %5232 = vmatpush1.msra.mxu0 0.0
    %5233 = vmatprep.subr.mxu0 0.0
    %5234 = vmatpush1.msra.mxu0 0.0
    %5235 = vmatprep.subr.mxu0 0.0
    %5236 = vmatpush1.msra.mxu0 0.0
    %5237 = vmatprep.subr.mxu0 0.0
    %5238 = vmatpush1.msra.mxu0 0.0
    %5239 = vmatprep.subr.mxu0 0.0
    %5240 = vmatpush1.msra.mxu0 0.0
    %5241 = vmatprep.subr.mxu0 0.0
    %5242 = vmatpush1.msra.mxu0 0.0
    %5243 = vmatprep.subr.mxu0 0.0
    %5244 = vmatpush1.msra.mxu0 0.0
    %5245 = vmatprep.subr.mxu0 0.0
    %5246 = vmatpush1.msra.mxu0 0.0
    %5247 = vmatprep.subr.mxu0 0.0
    %5248 = vmatpush1.msra.mxu0 0.0
    %5249 = vmatprep.subr.mxu0 0.0
    %5250 = vmatpush1.msra.mxu0 0.0
    %5251 = vmatprep.subr.mxu0 0.0
    %5252 = vmatpush1.msra.mxu0 0.0
    %5253 = vmatprep.subr.mxu0 0.0
    %5254 = vmatpush1.msra.mxu0 0.0
    %5255 = vmatprep.subr.mxu0 0.0
    %5256 = vmatpush1.msra.mxu0 0.0
    %5257 = vmatprep.subr.mxu0 0.0
    %5258 = vmatpush1.msra.mxu0 0.0
    %5259 = vmatprep.subr.mxu0 0.0
    %5260 = vmatpush1.msra.mxu0 0.0
    %5261 = vmatprep.subr.mxu0 0.0
    %5262 = vmatpush1.msra.mxu0 0.0
    %5263 = vmatprep.subr.mxu0 0.0
    %5264 = vmatpush1.msra.mxu0 0.0
    %5265 = vmatprep.subr.mxu0 0.0
    %5266 = vmatpush1.msra.mxu0 0.0
    %5267 = vmatprep.subr.mxu0 0.0
    %5268 = vmatpush1.msra.mxu0 0.0
    %5269 = vmatprep.subr.mxu0 0.0
    %5270 = vmatpush1.msra.mxu0 0.0
    %5271 = vmatprep.mubr.f32.mxu0 0.0
    %5272 = vmatmul.mubr.f32.gmra.mrb[0].mxu0 %v5205
    %v5273 = vpop.f32.mrb[0].mxu0
    %v5274 = vadd.f32 %v17, %v5273
    %v5275 = vpop.f32.mrb[0].mxu0
    %5276 = vdwg.mxu0
    %v5277 = vmax.f32 %v5274, 0.0
    %v5279 = vsel %vm46, %v5277, 0
    %5281 = vmatprep.subr.mxu0 0.0
    %5282 = vmatpush1.msra.mxu0 %v446
    %5283 = vmatprep.subr.mxu0 0.0
    %5284 = vmatpush1.msra.mxu0 0.0
    %5285 = vmatprep.subr.mxu0 0.0
    %5286 = vmatpush1.msra.mxu0 0.0
    %5287 = vmatprep.subr.mxu0 0.0
    %5288 = vmatpush1.msra.mxu0 0.0
    %5289 = vmatprep.subr.mxu0 0.0
    %5290 = vmatpush1.msra.mxu0 0.0
    %5291 = vmatprep.subr.mxu0 0.0
    %5292 = vmatpush1.msra.mxu0 0.0
    %5293 = vmatprep.subr.mxu0 0.0
    %5294 = vmatpush1.msra.mxu0 0.0
    %5295 = vmatprep.subr.mxu0 0.0
    %5296 = vmatpush1.msra.mxu0 0.0
    %5297 = vmatprep.subr.mxu0 0.0
    %5298 = vmatpush1.msra.mxu0 0.0
    %5299 = vmatprep.subr.mxu0 0.0
    %5300 = vmatpush1.msra.mxu0 0.0
    %5301 = vmatprep.subr.mxu0 0.0
    %5302 = vmatpush1.msra.mxu0 0.0
    %5303 = vmatprep.subr.mxu0 0.0
    %5304 = vmatpush1.msra.mxu0 0.0
    %5305 = vmatprep.subr.mxu0 0.0
    %5306 = vmatpush1.msra.mxu0 0.0
    %5307 = vmatprep.subr.mxu0 0.0
    %5308 = vmatpush1.msra.mxu0 0.0
    %5309 = vmatprep.subr.mxu0 0.0
    %5310 = vmatpush1.msra.mxu0 0.0
    %5311 = vmatprep.subr.mxu0 0.0
    %5312 = vmatpush1.msra.mxu0 0.0
    %5313 = vmatprep.subr.mxu0 0.0
    %5314 = vmatpush1.msra.mxu0 0.0
    %5315 = vmatprep.subr.mxu0 0.0
    %5316 = vmatpush1.msra.mxu0 0.0
    %5317 = vmatprep.subr.mxu0 0.0
    %5318 = vmatpush1.msra.mxu0 0.0
    %5319 = vmatprep.subr.mxu0 0.0
    %5320 = vmatpush1.msra.mxu0 0.0
    %5321 = vmatprep.subr.mxu0 0.0
    %5322 = vmatpush1.msra.mxu0 0.0
    %5323 = vmatprep.subr.mxu0 0.0
    %5324 = vmatpush1.msra.mxu0 0.0
    %5325 = vmatprep.subr.mxu0 0.0
    %5326 = vmatpush1.msra.mxu0 0.0
    %5327 = vmatprep.subr.mxu0 0.0
    %5328 = vmatpush1.msra.mxu0 0.0
    %5329 = vmatprep.subr.mxu0 0.0
    %5330 = vmatpush1.msra.mxu0 0.0
    %5331 = vmatprep.subr.mxu0 0.0
    %5332 = vmatpush1.msra.mxu0 0.0
    %5333 = vmatprep.subr.mxu0 0.0
    %5334 = vmatpush1.msra.mxu0 0.0
    %5335 = vmatprep.subr.mxu0 0.0
    %5336 = vmatpush1.msra.mxu0 0.0
    %5337 = vmatprep.subr.mxu0 0.0
    %5338 = vmatpush1.msra.mxu0 0.0
    %5339 = vmatprep.subr.mxu0 0.0
    %5340 = vmatpush1.msra.mxu0 0.0
    %5341 = vmatprep.subr.mxu0 0.0
    %5342 = vmatpush1.msra.mxu0 0.0
    %5343 = vmatprep.subr.mxu0 0.0
    %5344 = vmatpush1.msra.mxu0 0.0
    %5345 = vmatprep.mubr.f32.mxu0 0.0
    %5346 = vmatmul.mubr.f32.gmra.mrb[0].mxu0 %v5279
    %v5347 = vpop.f32.mrb[0].mxu0
    %v5348 = vadd.f32 %v20, %v5347
    %v5349 = vpop.f32.mrb[0].mxu0
    %5350 = vdwg.mxu0
    %v5351 = vmax.f32 %v5348, 0.0
    %v5353 = vsel %vm46, %v5351, 0
    %5355 = vmatprep.subr.mxu0 0.0
    %5356 = vmatpush1.msra.mxu0 %v523
    %5357 = vmatprep.subr.mxu0 0.0
    %5358 = vmatpush1.msra.mxu0 0.0
    %5359 = vmatprep.subr.mxu0 0.0
    %5360 = vmatpush1.msra.mxu0 0.0
    %5361 = vmatprep.subr.mxu0 0.0
    %5362 = vmatpush1.msra.mxu0 0.0
    %5363 = vmatprep.subr.mxu0 0.0
    %5364 = vmatpush1.msra.mxu0 0.0
    %5365 = vmatprep.subr.mxu0 0.0
    %5366 = vmatpush1.msra.mxu0 0.0
    %5367 = vmatprep.subr.mxu0 0.0
    %5368 = vmatpush1.msra.mxu0 0.0
    %5369 = vmatprep.subr.mxu0 0.0
    %5370 = vmatpush1.msra.mxu0 0.0
    %5371 = vmatprep.subr.mxu0 0.0
    %5372 = vmatpush1.msra.mxu0 0.0
    %5373 = vmatprep.subr.mxu0 0.0
    %5374 = vmatpush1.msra.mxu0 0.0
    %5375 = vmatprep.subr.mxu0 0.0
    %5376 = vmatpush1.msra.mxu0 0.0
    %5377 = vmatprep.subr.mxu0 0.0
    %5378 = vmatpush1.msra.mxu0 0.0
    %5379 = vmatprep.subr.mxu0 0.0
    %5380 = vmatpush1.msra.mxu0 0.0
    %5381 = vmatprep.subr.mxu0 0.0
    %5382 = vmatpush1.msra.mxu0 0.0
    %5383 = vmatprep.subr.mxu0 0.0
    %5384 = vmatpush1.msra.mxu0 0.0
    %5385 = vmatprep.subr.mxu0 0.0
    %5386 = vmatpush1.msra.mxu0 0.0
    %5387 = vmatprep.subr.mxu0 0.0
    %5388 = vmatpush1.msra.mxu0 0.0
    %5389 = vmatprep.subr.mxu0 0.0
    %5390 = vmatpush1.msra.mxu0 0.0
    %5391 = vmatprep.subr.mxu0 0.0
    %5392 = vmatpush1.msra.mxu0 0.0
    %5393 = vmatprep.subr.mxu0 0.0
    %5394 = vmatpush1.msra.mxu0 0.0
    %5395 = vmatprep.subr.mxu0 0.0
    %5396 = vmatpush1.msra.mxu0 0.0
    %5397 = vmatprep.subr.mxu0 0.0
    %5398 = vmatpush1.msra.mxu0 0.0
    %5399 = vmatprep.subr.mxu0 0.0
    %5400 = vmatpush1.msra.mxu0 0.0
    %5401 = vmatprep.subr.mxu0 0.0
    %5402 = vmatpush1.msra.mxu0 0.0
    %5403 = vmatprep.subr.mxu0 0.0
    %5404 = vmatpush1.msra.mxu0 0.0
    %5405 = vmatprep.subr.mxu0 0.0
    %5406 = vmatpush1.msra.mxu0 0.0
    %5407 = vmatprep.subr.mxu0 0.0
    %5408 = vmatpush1.msra.mxu0 0.0
    %5409 = vmatprep.subr.mxu0 0.0
    %5410 = vmatpush1.msra.mxu0 0.0
    %5411 = vmatprep.subr.mxu0 0.0
    %5412 = vmatpush1.msra.mxu0 0.0
    %5413 = vmatprep.subr.mxu0 0.0
    %5414 = vmatpush1.msra.mxu0 0.0
    %5415 = vmatprep.subr.mxu0 0.0
    %5416 = vmatpush1.msra.mxu0 0.0
    %5417 = vmatprep.subr.mxu0 0.0
    %5418 = vmatpush1.msra.mxu0 0.0
    %5419 = vmatprep.mubr.f32.mxu0 0.0
    %5420 = vmatmul.mubr.f32.gmra.mrb[0].mxu0 %v5353
    %v5421 = vpop.f32.mrb[0].mxu0
    %v5422 = vadd.f32 %v23, %v5421
    %v5423 = vpop.f32.mrb[0].mxu0
    %5424 = vdwg.mxu0
    %v5425 = vmax.f32 %v5422, 0.0
    %v5426 = vrot.slane %v39, 7
    %v5428 = vadd.f32 %v5425, %v5426
    %s5429 = scalar_lea.vmem %s1, 360
    %v5430 = vld [vmem:[%s5429] sm:$0xf]
    %v5431 = vld [vmem:[%s5429 + $0x20] sm:$0x1]
    %v5433 = vsel %vm46, %v5428, 0
    %v5436 = vsel %vm50, %v5430, 0
    %5438 = vmatprep.subr.mxu0 0.0
    %5439 = vmatpush1.msra.mxu0 %v5436
    %5440 = vmatprep.subr.mxu0 0.0
    %5441 = vmatpush1.msra.mxu0 0.0
    %5442 = vmatprep.subr.mxu0 0.0
    %5443 = vmatpush1.msra.mxu0 0.0
    %5444 = vmatprep.subr.mxu0 0.0
    %5445 = vmatpush1.msra.mxu0 0.0
    %5446 = vmatprep.subr.mxu0 0.0
    %5447 = vmatpush1.msra.mxu0 0.0
    %5448 = vmatprep.subr.mxu0 0.0
    %5449 = vmatpush1.msra.mxu0 0.0
    %5450 = vmatprep.subr.mxu0 0.0
    %5451 = vmatpush1.msra.mxu0 0.0
    %5452 = vmatprep.subr.mxu0 0.0
    %5453 = vmatpush1.msra.mxu0 0.0
    %5454 = vmatprep.subr.mxu0 0.0
    %5455 = vmatpush1.msra.mxu0 0.0
    %5456 = vmatprep.subr.mxu0 0.0
    %5457 = vmatpush1.msra.mxu0 0.0
    %5458 = vmatprep.subr.mxu0 0.0
    %5459 = vmatpush1.msra.mxu0 0.0
    %5460 = vmatprep.subr.mxu0 0.0
    %5461 = vmatpush1.msra.mxu0 0.0
    %5462 = vmatprep.subr.mxu0 0.0
    %5463 = vmatpush1.msra.mxu0 0.0
    %5464 = vmatprep.subr.mxu0 0.0
    %5465 = vmatpush1.msra.mxu0 0.0
    %5466 = vmatprep.subr.mxu0 0.0
    %5467 = vmatpush1.msra.mxu0 0.0
    %5468 = vmatprep.subr.mxu0 0.0
    %5469 = vmatpush1.msra.mxu0 0.0
    %5470 = vmatprep.subr.mxu0 0.0
    %5471 = vmatpush1.msra.mxu0 0.0
    %5472 = vmatprep.subr.mxu0 0.0
    %5473 = vmatpush1.msra.mxu0 0.0
    %5474 = vmatprep.subr.mxu0 0.0
    %5475 = vmatpush1.msra.mxu0 0.0
    %5476 = vmatprep.subr.mxu0 0.0
    %5477 = vmatpush1.msra.mxu0 0.0
    %5478 = vmatprep.subr.mxu0 0.0
    %5479 = vmatpush1.msra.mxu0 0.0
    %5480 = vmatprep.subr.mxu0 0.0
    %5481 = vmatpush1.msra.mxu0 0.0
    %5482 = vmatprep.subr.mxu0 0.0
    %5483 = vmatpush1.msra.mxu0 0.0
    %5484 = vmatprep.subr.mxu0 0.0
    %5485 = vmatpush1.msra.mxu0 0.0
    %5486 = vmatprep.subr.mxu0 0.0
    %5487 = vmatpush1.msra.mxu0 0.0
    %5488 = vmatprep.subr.mxu0 0.0
    %5489 = vmatpush1.msra.mxu0 0.0
    %5490 = vmatprep.subr.mxu0 0.0
    %5491 = vmatpush1.msra.mxu0 0.0
    %5492 = vmatprep.subr.mxu0 0.0
    %5493 = vmatpush1.msra.mxu0 0.0
    %5494 = vmatprep.subr.mxu0 0.0
    %5495 = vmatpush1.msra.mxu0 0.0
    %5496 = vmatprep.subr.mxu0 0.0
    %5497 = vmatpush1.msra.mxu0 0.0
    %5498 = vmatprep.subr.mxu0 0.0
    %5499 = vmatpush1.msra.mxu0 0.0
    %5500 = vmatprep.subr.mxu0 0.0
    %5501 = vmatpush1.msra.mxu0 0.0
    %5502 = vmatprep.mubr.f32.mxu0 0.0
    %5503 = vmatmul.mubr.f32.gmra.mrb[0].mxu0 %v5433
    %v5504 = vpop.f32.mrb[0].mxu0
    %v5505 = vadd.f32 %v5431, %v5504
    %v5506 = vpop.f32.mrb[0].mxu0
    %5507 = vdwg.mxu0
    %v5508 = vmax.f32 %v5505, 0.0
    %s5509 = scalar_lea.vmem %s1, 400
    %v5510 = vld [vmem:[%s5509] sm:$0xf]
    %v5511 = vld [vmem:[%s5509 + $0x20] sm:$0x1]
    %v5513 = vsel %vm46, %v5508, 0
    %v5516 = vsel %vm50, %v5510, 0
    %5518 = vmatprep.subr.mxu0 0.0
    %5519 = vmatpush1.msra.mxu0 %v5516
    %5520 = vmatprep.subr.mxu0 0.0
    %5521 = vmatpush1.msra.mxu0 0.0
    %5522 = vmatprep.subr.mxu0 0.0
    %5523 = vmatpush1.msra.mxu0 0.0
    %5524 = vmatprep.subr.mxu0 0.0
    %5525 = vmatpush1.msra.mxu0 0.0
    %5526 = vmatprep.subr.mxu0 0.0
    %5527 = vmatpush1.msra.mxu0 0.0
    %5528 = vmatprep.subr.mxu0 0.0
    %5529 = vmatpush1.msra.mxu0 0.0
    %5530 = vmatprep.subr.mxu0 0.0
    %5531 = vmatpush1.msra.mxu0 0.0
    %5532 = vmatprep.subr.mxu0 0.0
    %5533 = vmatpush1.msra.mxu0 0.0
    %5534 = vmatprep.subr.mxu0 0.0
    %5535 = vmatpush1.msra.mxu0 0.0
    %5536 = vmatprep.subr.mxu0 0.0
    %5537 = vmatpush1.msra.mxu0 0.0
    %5538 = vmatprep.subr.mxu0 0.0
    %5539 = vmatpush1.msra.mxu0 0.0
    %5540 = vmatprep.subr.mxu0 0.0
    %5541 = vmatpush1.msra.mxu0 0.0
    %5542 = vmatprep.subr.mxu0 0.0
    %5543 = vmatpush1.msra.mxu0 0.0
    %5544 = vmatprep.subr.mxu0 0.0
    %5545 = vmatpush1.msra.mxu0 0.0
    %5546 = vmatprep.subr.mxu0 0.0
    %5547 = vmatpush1.msra.mxu0 0.0
    %5548 = vmatprep.subr.mxu0 0.0
    %5549 = vmatpush1.msra.mxu0 0.0
    %5550 = vmatprep.subr.mxu0 0.0
    %5551 = vmatpush1.msra.mxu0 0.0
    %5552 = vmatprep.subr.mxu0 0.0
    %5553 = vmatpush1.msra.mxu0 0.0
    %5554 = vmatprep.subr.mxu0 0.0
    %5555 = vmatpush1.msra.mxu0 0.0
    %5556 = vmatprep.subr.mxu0 0.0
    %5557 = vmatpush1.msra.mxu0 0.0
    %5558 = vmatprep.subr.mxu0 0.0
    %5559 = vmatpush1.msra.mxu0 0.0
    %5560 = vmatprep.subr.mxu0 0.0
    %5561 = vmatpush1.msra.mxu0 0.0
    %5562 = vmatprep.subr.mxu0 0.0
    %5563 = vmatpush1.msra.mxu0 0.0
    %5564 = vmatprep.subr.mxu0 0.0
    %5565 = vmatpush1.msra.mxu0 0.0
    %5566 = vmatprep.subr.mxu0 0.0
    %5567 = vmatpush1.msra.mxu0 0.0
    %5568 = vmatprep.subr.mxu0 0.0
    %5569 = vmatpush1.msra.mxu0 0.0
    %5570 = vmatprep.subr.mxu0 0.0
    %5571 = vmatpush1.msra.mxu0 0.0
    %5572 = vmatprep.subr.mxu0 0.0
    %5573 = vmatpush1.msra.mxu0 0.0
    %5574 = vmatprep.subr.mxu0 0.0
    %5575 = vmatpush1.msra.mxu0 0.0
    %5576 = vmatprep.subr.mxu0 0.0
    %5577 = vmatpush1.msra.mxu0 0.0
    %5578 = vmatprep.subr.mxu0 0.0
    %5579 = vmatpush1.msra.mxu0 0.0
    %5580 = vmatprep.subr.mxu0 0.0
    %5581 = vmatpush1.msra.mxu0 0.0
    %5582 = vmatprep.mubr.f32.mxu0 0.0
    %5583 = vmatmul.mubr.f32.gmra.mrb[0].mxu0 %v5513
    %v5584 = vpop.f32.mrb[0].mxu0
    %v5585 = vadd.f32 %v5511, %v5584
    %v5586 = vpop.f32.mrb[0].mxu0
    %5587 = vdwg.mxu0
    %v5588 = vmax.f32 %v5585, 0.0
    %s5589 = scalar_lea.vmem %s1, 440
    %v5590 = vld [vmem:[%s5589] sm:$0xf]
    %v5591 = vld [vmem:[%s5589 + $0x20] sm:$0x1]
    %v5593 = vsel %vm46, %v5588, 0
    %v5596 = vsel %vm50, %v5590, 0
    %5598 = vmatprep.subr.mxu0 0.0
    %5599 = vmatpush1.msra.mxu0 %v5596
    %5600 = vmatprep.subr.mxu0 0.0
    %5601 = vmatpush1.msra.mxu0 0.0
    %5602 = vmatprep.subr.mxu0 0.0
    %5603 = vmatpush1.msra.mxu0 0.0
    %5604 = vmatprep.subr.mxu0 0.0
    %5605 = vmatpush1.msra.mxu0 0.0
    %5606 = vmatprep.subr.mxu0 0.0
    %5607 = vmatpush1.msra.mxu0 0.0
    %5608 = vmatprep.subr.mxu0 0.0
    %5609 = vmatpush1.msra.mxu0 0.0
    %5610 = vmatprep.subr.mxu0 0.0
    %5611 = vmatpush1.msra.mxu0 0.0
    %5612 = vmatprep.subr.mxu0 0.0
    %5613 = vmatpush1.msra.mxu0 0.0
    %5614 = vmatprep.subr.mxu0 0.0
    %5615 = vmatpush1.msra.mxu0 0.0
    %5616 = vmatprep.subr.mxu0 0.0
    %5617 = vmatpush1.msra.mxu0 0.0
    %5618 = vmatprep.subr.mxu0 0.0
    %5619 = vmatpush1.msra.mxu0 0.0
    %5620 = vmatprep.subr.mxu0 0.0
    %5621 = vmatpush1.msra.mxu0 0.0
    %5622 = vmatprep.subr.mxu0 0.0
    %5623 = vmatpush1.msra.mxu0 0.0
    %5624 = vmatprep.subr.mxu0 0.0
    %5625 = vmatpush1.msra.mxu0 0.0
    %5626 = vmatprep.subr.mxu0 0.0
    %5627 = vmatpush1.msra.mxu0 0.0
    %5628 = vmatprep.subr.mxu0 0.0
    %5629 = vmatpush1.msra.mxu0 0.0
    %5630 = vmatprep.subr.mxu0 0.0
    %5631 = vmatpush1.msra.mxu0 0.0
    %5632 = vmatprep.subr.mxu0 0.0
    %5633 = vmatpush1.msra.mxu0 0.0
    %5634 = vmatprep.subr.mxu0 0.0
    %5635 = vmatpush1.msra.mxu0 0.0
    %5636 = vmatprep.subr.mxu0 0.0
    %5637 = vmatpush1.msra.mxu0 0.0
    %5638 = vmatprep.subr.mxu0 0.0
    %5639 = vmatpush1.msra.mxu0 0.0
    %5640 = vmatprep.subr.mxu0 0.0
    %5641 = vmatpush1.msra.mxu0 0.0
    %5642 = vmatprep.subr.mxu0 0.0
    %5643 = vmatpush1.msra.mxu0 0.0
    %5644 = vmatprep.subr.mxu0 0.0
    %5645 = vmatpush1.msra.mxu0 0.0
    %5646 = vmatprep.subr.mxu0 0.0
    %5647 = vmatpush1.msra.mxu0 0.0
    %5648 = vmatprep.subr.mxu0 0.0
    %5649 = vmatpush1.msra.mxu0 0.0
    %5650 = vmatprep.subr.mxu0 0.0
    %5651 = vmatpush1.msra.mxu0 0.0
    %5652 = vmatprep.subr.mxu0 0.0
    %5653 = vmatpush1.msra.mxu0 0.0
    %5654 = vmatprep.subr.mxu0 0.0
    %5655 = vmatpush1.msra.mxu0 0.0
    %5656 = vmatprep.subr.mxu0 0.0
    %5657 = vmatpush1.msra.mxu0 0.0
    %5658 = vmatprep.subr.mxu0 0.0
    %5659 = vmatpush1.msra.mxu0 0.0
    %5660 = vmatprep.subr.mxu0 0.0
    %5661 = vmatpush1.msra.mxu0 0.0
    %5662 = vmatprep.mubr.f32.mxu0 0.0
    %5663 = vmatmul.mubr.f32.gmra.mrb[0].mxu0 %v5593
    %v5664 = vpop.f32.mrb[0].mxu0
    %v5665 = vadd.f32 %v5591, %v5664
    %v5666 = vpop.f32.mrb[0].mxu0
    %5667 = vdwg.mxu0
    %v5668 = vmax.f32 %v5665, 0.0
    %s5669 = scalar_lea.vmem %s1, 480
    %v5670 = vld [vmem:[%s5669] sm:$0xff]
    %v5671 = vld [vmem:[%s5669 + $0x20] sm:$0x1]
    %v5673 = vsel %vm290, %v5668, 0
    %5675 = vmatprep.subr.mxu0 0.0
    %5676 = vmatpush1.msra.mxu0 %v5670
    %5677 = vmatprep.subr.mxu0 0.0
    %5678 = vmatpush1.msra.mxu0 0.0
    %5679 = vmatprep.subr.mxu0 0.0
    %5680 = vmatpush1.msra.mxu0 0.0
    %5681 = vmatprep.subr.mxu0 0.0
    %5682 = vmatpush1.msra.mxu0 0.0
    %5683 = vmatprep.subr.mxu0 0.0
    %5684 = vmatpush1.msra.mxu0 0.0
    %5685 = vmatprep.subr.mxu0 0.0
    %5686 = vmatpush1.msra.mxu0 0.0
    %5687 = vmatprep.subr.mxu0 0.0
    %5688 = vmatpush1.msra.mxu0 0.0
    %5689 = vmatprep.subr.mxu0 0.0
    %5690 = vmatpush1.msra.mxu0 0.0
    %5691 = vmatprep.subr.mxu0 0.0
    %5692 = vmatpush1.msra.mxu0 0.0
    %5693 = vmatprep.subr.mxu0 0.0
    %5694 = vmatpush1.msra.mxu0 0.0
    %5695 = vmatprep.subr.mxu0 0.0
    %5696 = vmatpush1.msra.mxu0 0.0
    %5697 = vmatprep.subr.mxu0 0.0
    %5698 = vmatpush1.msra.mxu0 0.0
    %5699 = vmatprep.subr.mxu0 0.0
    %5700 = vmatpush1.msra.mxu0 0.0
    %5701 = vmatprep.subr.mxu0 0.0
    %5702 = vmatpush1.msra.mxu0 0.0
    %5703 = vmatprep.subr.mxu0 0.0
    %5704 = vmatpush1.msra.mxu0 0.0
    %5705 = vmatprep.subr.mxu0 0.0
    %5706 = vmatpush1.msra.mxu0 0.0
    %5707 = vmatprep.subr.mxu0 0.0
    %5708 = vmatpush1.msra.mxu0 0.0
    %5709 = vmatprep.subr.mxu0 0.0
    %5710 = vmatpush1.msra.mxu0 0.0
    %5711 = vmatprep.subr.mxu0 0.0
    %5712 = vmatpush1.msra.mxu0 0.0
    %5713 = vmatprep.subr.mxu0 0.0
    %5714 = vmatpush1.msra.mxu0 0.0
    %5715 = vmatprep.subr.mxu0 0.0
    %5716 = vmatpush1.msra.mxu0 0.0
    %5717 = vmatprep.subr.mxu0 0.0
    %5718 = vmatpush1.msra.mxu0 0.0
    %5719 = vmatprep.subr.mxu0 0.0
    %5720 = vmatpush1.msra.mxu0 0.0
    %5721 = vmatprep.subr.mxu0 0.0
    %5722 = vmatpush1.msra.mxu0 0.0
    %5723 = vmatprep.subr.mxu0 0.0
    %5724 = vmatpush1.msra.mxu0 0.0
    %5725 = vmatprep.subr.mxu0 0.0
    %5726 = vmatpush1.msra.mxu0 0.0
    %5727 = vmatprep.subr.mxu0 0.0
    %5728 = vmatpush1.msra.mxu0 0.0
    %5729 = vmatprep.subr.mxu0 0.0
    %5730 = vmatpush1.msra.mxu0 0.0
    %5731 = vmatprep.subr.mxu0 0.0
    %5732 = vmatpush1.msra.mxu0 0.0
    %5733 = vmatprep.subr.mxu0 0.0
    %5734 = vmatpush1.msra.mxu0 0.0
    %5735 = vmatprep.subr.mxu0 0.0
    %5736 = vmatpush1.msra.mxu0 0.0
    %5737 = vmatprep.subr.mxu0 0.0
    %5738 = vmatpush1.msra.mxu0 0.0
    %5739 = vmatprep.mubr.f32.mxu0 0.0
    %5740 = vmatmul.mubr.f32.gmra.mrb[0].mxu0 %v5673
    %v5741 = vpop.f32.mrb[0].mxu0
    %v5742 = vadd.f32 %v5671, %v5741
    %v5743 = vpop.f32.mrb[0].mxu0
    %5744 = vdwg.mxu0
    %vm5745 = vcmask 253952
    %v5746 = vsel %vm5745, %v5742, -inf
    %5747 = vmax.xlane.f32.xlu0 %v5746
    %v5748 = vpop.xlane.xlu0 %5747
    %v5749 = vsub.f32 %v5742, %v5748
    %v5750 = vmul.f32 %v5749, 1.442695
    %v5751 = vpow.pop %v5750
    %v5752 = vsel %vm5745, %v5751, 0.0
    %5753 = vadd.xlane.f32.xlu0 %v5752
    %v5754 = vpop.xlane.xlu0 %5753
    %v5755 = vrcp.pop %v5754
    %v5756 = vmul.f32 %v5751, %v5755
    %s5757 = scalar_lea.vmem %s1, 520
    %v5758 = vld [vmem:[%s5757] sm:$0xff]
    %v5759 = vld [vmem:[%s5757 + $0x8] sm:$0xff]
    %v5760 = vld [vmem:[%s5757 + $0x10] sm:$0xff]
    %v5761 = vld [vmem:[%s5757 + $0x18] sm:$0xff]
    %v5762 = vld [vmem:[%s5757 + $0x20] sm:$0x1]
    %vm5763 = vcmask 261120
    %v5765 = vsel %vm5763, %v5756, 0
    %5767 = vmatprep.subr.mxu0 0.0
    %5768 = vmatpush1.msra.mxu0 %v5758
    %5769 = vmatprep.subr.mxu0 0.0
    %5770 = vmatpush1.msra.mxu0 %v5759
    %5771 = vmatprep.subr.mxu0 0.0
    %5772 = vmatpush1.msra.mxu0 %v5760
    %5773 = vmatprep.subr.mxu0 0.0
    %5774 = vmatpush1.msra.mxu0 %v5761
    %5775 = vmatprep.subr.mxu0 0.0
    %5776 = vmatpush1.msra.mxu0 0.0
    %5777 = vmatprep.subr.mxu0 0.0
    %5778 = vmatpush1.msra.mxu0 0.0
    %5779 = vmatprep.subr.mxu0 0.0
    %5780 = vmatpush1.msra.mxu0 0.0
    %5781 = vmatprep.subr.mxu0 0.0
    %5782 = vmatpush1.msra.mxu0 0.0
    %5783 = vmatprep.subr.mxu0 0.0
    %5784 = vmatpush1.msra.mxu0 0.0
    %5785 = vmatprep.subr.mxu0 0.0
    %5786 = vmatpush1.msra.mxu0 0.0
    %5787 = vmatprep.subr.mxu0 0.0
    %5788 = vmatpush1.msra.mxu0 0.0
    %5789 = vmatprep.subr.mxu0 0.0
    %5790 = vmatpush1.msra.mxu0 0.0
    %5791 = vmatprep.subr.mxu0 0.0
    %5792 = vmatpush1.msra.mxu0 0.0
    %5793 = vmatprep.subr.mxu0 0.0
    %5794 = vmatpush1.msra.mxu0 0.0
    %5795 = vmatprep.subr.mxu0 0.0
    %5796 = vmatpush1.msra.mxu0 0.0
    %5797 = vmatprep.subr.mxu0 0.0
    %5798 = vmatpush1.msra.mxu0 0.0
    %5799 = vmatprep.subr.mxu0 0.0
    %5800 = vmatpush1.msra.mxu0 0.0
    %5801 = vmatprep.subr.mxu0 0.0
    %5802 = vmatpush1.msra.mxu0 0.0
    %5803 = vmatprep.subr.mxu0 0.0
    %5804 = vmatpush1.msra.mxu0 0.0
    %5805 = vmatprep.subr.mxu0 0.0
    %5806 = vmatpush1.msra.mxu0 0.0
    %5807 = vmatprep.subr.mxu0 0.0
    %5808 = vmatpush1.msra.mxu0 0.0
    %5809 = vmatprep.subr.mxu0 0.0
    %5810 = vmatpush1.msra.mxu0 0.0
    %5811 = vmatprep.subr.mxu0 0.0
    %5812 = vmatpush1.msra.mxu0 0.0
    %5813 = vmatprep.subr.mxu0 0.0
    %5814 = vmatpush1.msra.mxu0 0.0
    %5815 = vmatprep.subr.mxu0 0.0
    %5816 = vmatpush1.msra.mxu0 0.0
    %5817 = vmatprep.subr.mxu0 0.0
    %5818 = vmatpush1.msra.mxu0 0.0
    %5819 = vmatprep.subr.mxu0 0.0
    %5820 = vmatpush1.msra.mxu0 0.0
    %5821 = vmatprep.subr.mxu0 0.0
    %5822 = vmatpush1.msra.mxu0 0.0
    %5823 = vmatprep.subr.mxu0 0.0
    %5824 = vmatpush1.msra.mxu0 0.0
    %5825 = vmatprep.subr.mxu0 0.0
    %5826 = vmatpush1.msra.mxu0 0.0
    %5827 = vmatprep.subr.mxu0 0.0
    %5828 = vmatpush1.msra.mxu0 0.0
    %5829 = vmatprep.subr.mxu0 0.0
    %5830 = vmatpush1.msra.mxu0 0.0
    %5831 = vmatprep.mubr.f32.mxu0 0.0
    %5832 = vmatmul.mubr.f32.gmra.mrb[0].mxu0 %v5765
    %v5833 = vpop.f32.mrb[0].mxu0
    %v5834 = vadd.f32 %v5762, %v5833
    %v5835 = vpop.f32.mrb[0].mxu0
    %5836 = vdwg.mxu0
    %vm5837 = vcmask 24576
    %5838 = vst.msk [vmem:[#allocation2] sm:$0x1] %vm5837, %v5834
    // Predicated region
    $region10: #{tpu_custom_call.1} parent=1 // pred_check
      _
    $region11: #{tpu_custom_call.1} parent=1 // pred_check_branch
      %5840 = sbr.rel (0) target = $region13
    $region12: #{tpu_custom_call.1} parent=1 // pred_region
      %s5842 = ssub.s32 16, 16
      %5843 = vsyncadd [#allocation3], %s5842
      %s5845 = sshll.u32 [#allocation2], 4
      %s5846 = int_to_ptr.vmem [resolvable:$true] %s5845
      %5848 = dma.vmem_to_hbm [thread:$0]  %s5846, 16, %s2, [#allocation3]
    $region13: #{tpu_custom_call.1} parent=1 // pred_fallthru
      _
    // Predicated region
    $region14: #{tpu_custom_call.1} parent=1 // pred_check
      _
    $region15: #{tpu_custom_call.1} parent=1 // pred_check_branch
      %5850 = sbr.rel (0) target = $region17
    $region16: #{tpu_custom_call.1} parent=1 // pred_region
      %5851 = dma.done [#allocation3], 16
    $region17: #{tpu_custom_call.1} parent=1 // pred_fallthru
      _
    %5852 = vsyncpa [#allocation3], 1

</llo_original>
